<compile_context>
chip_gen: v7x
topology: tpu7x:2x2x1
jax: 0.10.0
libtpu: 0.0.40
codegen_flags: <defaults>
</compile_context>

<pallas_src>
import jax
import jax.numpy as jnp
from jax.experimental import pallas as pl
from jax.experimental.pallas import tpu as pltpu


def _sigmoid(v):
    return 1.0 / (1.0 + jnp.exp(-v))


# ----------------------------------------------------------------------------
# Pallas kernels
# ----------------------------------------------------------------------------
def _conv_pool_relu_scse(p_ref, wT_ref, b_ref, cw1_ref, cb1_ref, cw2_ref,
                         cb2_ref, swT_ref, sb_ref, eavg_ref, eones_ref):
    """Fused conv (one folded matmul over all 4 pool offsets) + MaxPool2 +
    bias + ReLU + scSE for one block of Bt samples, in transposed layout.

    Shapes (C = out channels, K = kh*kw*cin, L = Bt*HW_pooled):
      p_ref  (K, 4*L) bf16   pool-fused im2col patches, offset-major lanes
      wT_ref (C, K)   bf16   conv weight, transposed
      b_ref  (C, 1)   f32    conv bias
      cw1/cb1 (Cr,C)/(Cr,1), cw2/cb2 (C,Cr)/(C,1)   cSE MLP (pref in cb1)
      swT/sb  (1,C)/(1,1)                            sSE 1x1 conv (pref in sb)
      eavg   (L, Bt) f32   block-diag per-sample averaging matrix
      eones  (Bt, L) f32   block-diag per-sample broadcast matrix
    Returns the gated activations (C, L) in f32.
    """
    L = eones_ref.shape[1]
    # One MXU matmul for all samples and all 4 pool offsets.
    z = jnp.dot(wT_ref[...], p_ref[...], preferred_element_type=jnp.float32)
    # 2x2 max-pool == elementwise max over the 4 offset lane-chunks.
    m = jnp.maximum(jnp.maximum(z[:, 0:L], z[:, L:2 * L]),
                    jnp.maximum(z[:, 2 * L:3 * L], z[:, 3 * L:4 * L]))
    y = jnp.maximum(m + b_ref[...], 0.0)                              # (C, L)

    # cSE: per-sample global average pool via a block-diagonal matmul.
    pooled = jnp.dot(y, eavg_ref[...], preferred_element_type=jnp.float32)
    hid = jnp.maximum(
        jnp.dot(cw1_ref[...], pooled, preferred_element_type=jnp.float32)
        + cb1_ref[...], 0.0)
    g_c = _sigmoid(
        jnp.dot(cw2_ref[...], hid, preferred_element_type=jnp.float32)
        + cb2_ref[...])                                               # (C, Bt)
    g_cf = jnp.dot(g_c, eones_ref[...], preferred_element_type=jnp.float32)

    # sSE: per-position gate from a 1x1 conv (C -> 1) + sigmoid.
    g_s = _sigmoid(
        jnp.dot(swT_ref[...], y, preferred_element_type=jnp.float32)
        + sb_ref[...])                                                # (1, L)

    # Single gate multiply (micro-opt from review).
    return y * (g_cf + g_s)


def layer1_kernel(p_ref, wT_ref, b_ref, cw1_ref, cb1_ref, cw2_ref, cb2_ref,
                  swT_ref, sb_ref, eavg_ref, eones_ref, o_ref):
    o_ref[...] = _conv_pool_relu_scse(
        p_ref, wT_ref, b_ref, cw1_ref, cb1_ref, cw2_ref, cb2_ref,
        swT_ref, sb_ref, eavg_ref, eones_ref).astype(o_ref.dtype)


def layer2_fc_kernel(p_ref, wT_ref, b_ref, cw1_ref, cb1_ref, cw2_ref, cb2_ref,
                     swT_ref, sb_ref, eavg_ref, eones_ref,
                     w3p_ref, b3_ref, whT_ref, bh_ref, o_ref):
    """conv2+pool+ReLU+scSE2 fused with Linear(720,50)+ReLU and the packed
    private heads (50->20).  Layer-2 lanes are position-major (p, sample), so
    the CHW-flatten Linear is 36 accumulated dots over contiguous slices."""
    y2 = _conv_pool_relu_scse(
        p_ref, wT_ref, b_ref, cw1_ref, cb1_ref, cw2_ref, cb2_ref,
        swT_ref, sb_ref, eavg_ref, eones_ref)         # (20, 36*Bt) f32
    bt = o_ref.shape[-1]
    n_pos, n_hidden, _ = w3p_ref.shape                 # (36, 50, 20)
    y2b = y2.astype(jnp.bfloat16)
    acc = jnp.zeros((n_hidden, bt), jnp.float32)
    for p in range(n_pos):
        acc = acc + jnp.dot(w3p_ref[p], y2b[:, p * bt:(p + 1) * bt],
                            preferred_element_type=jnp.float32)
    h = jnp.maximum(acc + b3_ref[...], 0.0).astype(jnp.bfloat16)   # (50, Bt)
    o_ref[...] = (jnp.dot(whT_ref[...], h, preferred_element_type=jnp.float32)
                  + bh_ref[...])                                   # (20, Bt)


# ----------------------------------------------------------------------------
# pallas_call wrappers
# ----------------------------------------------------------------------------
def _const_spec(a):
    nd = a.ndim
    return pl.BlockSpec(a.shape, lambda i, _n=nd: (0,) * _n)


_COMPILER_PARAMS = pltpu.CompilerParams(
    dimension_semantics=("parallel",),            # batch-block axis
    vmem_limit_bytes=48 * 1024 * 1024)


def conv_scse_layer1(p, *ws, bt, hw, cout):
    NB, K, L4 = p.shape
    L = bt * hw
    return pl.pallas_call(
        layer1_kernel,
        out_shape=jax.ShapeDtypeStruct((NB, cout, L), jnp.bfloat16),
        grid=(NB,),
        in_specs=[pl.BlockSpec((None, K, L4), lambda i: (i, 0, 0))]
                 + [_const_spec(w) for w in ws],
        out_specs=pl.BlockSpec((None, cout, L), lambda i: (i, 0, 0)),
        compiler_params=_COMPILER_PARAMS,
    )(p, *ws)


def conv_scse_fc(p, *ws, bt, n_logits):
    NB, K, L4 = p.shape
    return pl.pallas_call(
        layer2_fc_kernel,
        out_shape=jax.ShapeDtypeStruct((NB, n_logits, bt), jnp.float32),
        grid=(NB,),
        in_specs=[pl.BlockSpec((None, K, L4), lambda i: (i, 0, 0))]
                 + [_const_spec(w) for w in ws],
        out_specs=pl.BlockSpec((None, n_logits, bt), lambda i: (i, 0, 0)),
        compiler_params=_COMPILER_PARAMS,
    )(p, *ws)


# ----------------------------------------------------------------------------
# Glue: pool-fused im2col in the transposed layout (pure JAX data reorg)
# ----------------------------------------------------------------------------
def build_pooled_patches(x_nhwc, bt, order, k=5):
    """Per block of bt samples: (K, 4*bt*HW) patches, lanes ordered
    'bp' -> (offset, sample, position)   (used by layer 1)
    'pb' -> (offset, position, sample)   (used by layer 2 so the fused FC can
                                          slice contiguous per-position cols).
    Returns ((NB, K, 4*bt*HW) bf16, (PH, PW))."""
    Bp, H, W, Cin = x_nhwc.shape
    OH, OW = H - k + 1, W - k + 1
    PH, PW = OH // 2, OW // 2
    HW, K = PH * PW, k * k * Cin
    NB = Bp // bt
    offs = []
    for di in range(2):
        for dj in range(2):
            taps = [x_nhwc[:, di + kh: di + kh + 2 * PH: 2,
                           dj + kw: dj + kw + 2 * PW: 2, :]
                    for kh in range(k) for kw in range(k)]
            t = jnp.stack(taps, axis=3)                 # (Bp, PH, PW, k*k, Cin)
            offs.append(t.reshape(Bp, HW, K))
    P = jnp.stack(offs, axis=0).reshape(4, NB, bt, HW, K)
    if order == 'bp':
        P = P.transpose(1, 4, 0, 2, 3)                  # (NB, K, 4, bt, HW)
    else:
        P = P.transpose(1, 4, 0, 3, 2)                  # (NB, K, 4, HW, bt)
    return P.reshape(NB, K, 4 * bt * HW).astype(jnp.bfloat16), (PH, PW)


def block_gate_matrices(bt, hw, order):
    """Block-diagonal (L,bt) averaging and (bt,L) broadcast matrices matching
    the lane ordering used for that layer."""
    lane = jnp.arange(bt * hw)
    sid = lane // hw if order == 'bp' else lane % bt
    onehot = (sid[:, None] == jnp.arange(bt)[None, :]).astype(jnp.float32)
    return onehot / float(hw), onehot.T


# ----------------------------------------------------------------------------
# One-time parameter prep: bf16 / transposed / packed weights
# ----------------------------------------------------------------------------
def prepare_params(params):
    bf16 = jnp.bfloat16
    prep = {}
    prep['w1T'] = params['w1'].reshape(-1, 10).T.astype(bf16)      # (10, 25*Cin)
    prep['b1c'] = params['b1'].reshape(10, 1)
    prep['w2T'] = params['w2'].reshape(-1, 20).T.astype(bf16)      # (20, 250)
    prep['b2c'] = params['b2'].reshape(20, 1)
    # share3 weight: CHW-flatten rows -> per-pooled-position (36, 50, 20).
    prep['w3p'] = (params['w3'].reshape(20, 36, 50)
                   .transpose(1, 2, 0).astype(bf16))               # (36, 50, 20)
    prep['b3c'] = params['b3'].reshape(50, 1)
    prep['whT'] = jnp.concatenate([params['wl'], params['wr']],
                                  axis=1).T.astype(bf16)           # (20, 50)
    prep['bhc'] = jnp.concatenate([params['bl'], params['br']],
                                  axis=1).reshape(20, 1)
    for i in (1, 2):
        prep[f'cse{i}_cw1T'] = params[f'cse{i}_w1'].T              # (Cr, C)
        prep[f'cse{i}_cb1T'] = params[f'cse{i}_b1'].T              # (Cr, 1)
        prep[f'cse{i}_p1'] = params[f'cse{i}_p1']                  # (2, Cr)
        prep[f'cse{i}_cw2T'] = params[f'cse{i}_w2'].T              # (C, Cr)
        prep[f'cse{i}_cb2T'] = params[f'cse{i}_b2'].T              # (C, 1)
        prep[f'sse{i}_swT'] = params[f'sse{i}_w'].T                # (1, C)
        prep[f'sse{i}_p'] = params[f'sse{i}_p']                    # (2, 1)
        prep[f'sse{i}_sb'] = params[f'sse{i}_b']                   # (1, 1)
    return prep


# ----------------------------------------------------------------------------
# Full forward
# ----------------------------------------------------------------------------
def multi_lenet_attention_forward(x_nchw, prep, pref, block_b=8):
    B = x_nchw.shape[0]
    nb = -(-B // block_b)
    bp = nb * block_b
    x = jnp.transpose(x_nchw, (0, 2, 3, 1)).astype(jnp.bfloat16)   # NCHW->NHWC
    if bp != B:
        x = jnp.pad(x, ((0, bp - B), (0, 0), (0, 0), (0, 0)))
    pref_row = pref.reshape(1, 2).astype(jnp.float32)

    # Fold the additive preference contribution into the scSE biases once per
    # forward; the kernels never see the preference directly.
    cb1_1 = prep['cse1_cb1T'] + (pref_row @ prep['cse1_p1']).T
    sb_1 = prep['sse1_sb'] + pref_row @ prep['sse1_p']
    cb1_2 = prep['cse2_cb1T'] + (pref_row @ prep['cse2_p1']).T
    sb_2 = prep['sse2_sb'] + pref_row @ prep['sse2_p']

    # --- shared1 + scse1 (one pallas_call, Bt samples per grid step) ---
    p1, (ph1, pw1) = build_pooled_patches(x, block_b, order='bp')
    hw1 = ph1 * pw1
    e1a, e1o = block_gate_matrices(block_b, hw1, order='bp')
    y1t = conv_scse_layer1(
        p1, prep['w1T'], prep['b1c'],
        prep['cse1_cw1T'], cb1_1, prep['cse1_cw2T'], prep['cse1_cb2T'],
        prep['sse1_swT'], sb_1, e1a, e1o,
        bt=block_b, hw=hw1, cout=10)                 # (NB, 10, Bt*hw1) bf16

    # Lane order (sample, ph, pw) -> NHWC for layer-2 patch building.
    x1 = (y1t.reshape(nb, 10, block_b, ph1, pw1)
              .transpose(0, 2, 3, 4, 1)
              .reshape(bp, ph1, pw1, 10))

    # --- shared2 + scse2 + share3 + packed private heads (one pallas_call) ---
    p2, (ph2, pw2) = build_pooled_patches(x1, block_b, order='pb')
    hw2 = ph2 * pw2
    e2a, e2o = block_gate_matrices(block_b, hw2, order='pb')
    logits_t = conv_scse_fc(
        p2, prep['w2T'], prep['b2c'],
        prep['cse2_cw1T'], cb1_2, prep['cse2_cw2T'], prep['cse2_cb2T'],
        prep['sse2_swT'], sb_2, e2a, e2o,
        prep['w3p'], prep['b3c'], prep['whT'], prep['bhc'],
        bt=block_b, n_logits=20)                     # (NB, 20, Bt) f32

    logits = logits_t.transpose(0, 2, 1).reshape(bp, 20)[:B]
    return dict(logits_l=logits[:, :10], logits_r=logits[:, 10:])


# ----------------------------------------------------------------------------
# Pure-JAX reference (same bf16 operand / f32 accumulation quantization points)
# ----------------------------------------------------------------------------
def ref_forward(x_nchw, params, pref):
    f32, bf16 = jnp.float32, jnp.bfloat16
    x = jnp.transpose(x_nchw, (0, 2, 3, 1)).astype(bf16)
    pref_row = pref.reshape(1, 2).astype(f32)

    def conv(x, w):
        return jax.lax.conv_general_dilated(
            x.astype(bf16), w.astype(bf16), (1, 1), 'VALID',
            dimension_numbers=('NHWC', 'HWIO', 'NHWC'),
            preferred_element_type=f32)

    def maxpool(x):
        return jax.lax.reduce_window(x, -jnp.inf, jax.lax.max,
                                     (1, 2, 2, 1), (1, 2, 2, 1), 'VALID')

    def scse(x, cw1, cp1, cb1, cw2, cb2, sw, sp, sb):
        pooled = jnp.mean(x, axis=(1, 2))                          # (B, C)
        h = jnp.maximum(pooled @ cw1 + pref_row @ cp1 + cb1, 0.0)
        g_c = _sigmoid(h @ cw2 + cb2)                              # (B, C)
        g_s = _sigmoid(jnp.einsum('bhwc,cd->bhwd', x, sw)
                       + (pref_row @ sp) + sb)                     # (B,H,W,1)
        return x * g_c[:, None, None, :] + x * g_s

    z1 = jnp.maximum(maxpool(conv(x, params['w1'])) + params['b1'], 0.0)
    x1 = scse(z1, params['cse1_w1'], params['cse1_p1'], params['cse1_b1'],
              params['cse1_w2'], params['cse1_b2'],
              params['sse1_w'], params['sse1_p'], params['sse1_b']).astype(bf16)
    z2 = jnp.maximum(maxpool(conv(x1, params['w2'])) + params['b2'], 0.0)
    x2 = scse(z2, params['cse2_w1'], params['cse2_p1'], params['cse2_b1'],
              params['cse2_w2'], params['cse2_b2'],
              params['sse2_w'], params['sse2_p'], params['sse2_b'])

    B = x2.shape[0]
    flat = jnp.transpose(x2, (0, 3, 1, 2)).reshape(B, -1).astype(bf16)  # CHW
    h = jnp.maximum(
        jnp.dot(flat, params['w3'].astype(bf16), preferred_element_type=f32)
        + params['b3'], 0.0)
    l = jnp.dot(h.astype(bf16), params['wl'].astype(bf16),
                preferred_element_type=f32) + params['bl']
    r = jnp.dot(h.astype(bf16), params['wr'].astype(bf16),
                preferred_element_type=f32) + params['br']
    return l, r


# ----------------------------------------------------------------------------
# Deterministic parameter init (shapes from the module's __init__)
# ----------------------------------------------------------------------------
def init_params(key, in_ch=1):
    ks = iter(jax.random.split(key, 32))

    def unif(shape, fan_in):
        bound = 1.0 / jnp.sqrt(float(fan_in))
        return jax.random.uniform(next(ks), shape, jnp.float32, -bound, bound)

    p = {}
    p['w1'] = unif((5, 5, in_ch, 10), 5 * 5 * in_ch)   # Conv2d(dim0, 10, 5)
    p['b1'] = unif((1, 10), 5 * 5 * in_ch)
    p['w2'] = unif((5, 5, 10, 20), 5 * 5 * 10)         # Conv2d(10, 20, 5)
    p['b2'] = unif((1, 20), 5 * 5 * 10)
    p['w3'] = unif((720, 50), 720)                     # Linear(720, 50)
    p['b3'] = unif((1, 50), 720)
    p['wl'] = unif((50, 10), 50)                       # private_left
    p['bl'] = unif((1, 10), 50)
    p['wr'] = unif((50, 10), 50)                       # private_right
    p['br'] = unif((1, 10), 50)
    # scSE blocks (cSE MLP with reduction 2 + sSE 1x1 conv), preference
    # entering each gate through a small learned projection.
    for i, C in ((1, 10), (2, 20)):
        Cr = C // 2
        p[f'cse{i}_w1'] = unif((C, Cr), C)
        p[f'cse{i}_p1'] = unif((2, Cr), 2)
        p[f'cse{i}_b1'] = unif((1, Cr), C)
        p[f'cse{i}_w2'] = unif((Cr, C), Cr)
        p[f'cse{i}_b2'] = unif((1, C), Cr)
        p[f'sse{i}_w'] = unif((C, 1), C)
        p[f'sse{i}_p'] = unif((2, 1), 2)
        p[f'sse{i}_b'] = unif((1, 1), C)
    return p


if __name__ == "__main__":
    key = jax.random.PRNGKey(0)
    kx, kp = jax.random.split(key)

    # dim[0] = 1 input channel; 36x36 so conv5->pool2->conv5->pool2 gives
    # 20 * 6 * 6 = 720 = Linear in-features (scSE h=16 / h=6 also match).
    B, C, H, W = 2, 1, 36, 36
    x = jax.random.normal(kx, (B, C, H, W), jnp.float32)
    pref = jnp.array([0.3, 0.7], jnp.float32)  # stands in for gl.get_value('preference')
    params = init_params(kp, in_ch=C)
    prep = prepare_params(params)              # one-time weight prep

    fwd = jax.jit(lambda xx, pp: multi_lenet_attention_forward(xx, prep, pp,
                                                               block_b=8))
    out = fwd(x, pref)
    jax.block_until_ready(out)

    assert out['logits_l'].shape == (B, 10)
    assert out['logits_r'].shape == (B, 10)

    ref_l, ref_r = ref_forward(x, params, pref)
    ok = (bool(jnp.allclose(out['logits_l'], ref_l, atol=1e-2, rtol=1e-2)) and
          bool(jnp.allclose(out['logits_r'], ref_r, atol=1e-2, rtol=1e-2)))

    if ok:
        print("KERNEL_OK")
    else:
        print("MISMATCH")
</pallas_src>

<mosaic_0001>
module attributes {stable_mosaic.version = 11 : i64} {
  func.func @layer1_kernel(%arg0: i32, %arg1: memref<1x25x8192xbf16, #tpu.memory_space<vmem>>, %arg2: memref<10x25xbf16, #tpu.memory_space<vmem>>, %arg3: memref<10x1xf32, #tpu.memory_space<vmem>>, %arg4: memref<5x10xf32, #tpu.memory_space<vmem>>, %arg5: memref<5x1xf32, #tpu.memory_space<vmem>>, %arg6: memref<10x5xf32, #tpu.memory_space<vmem>>, %arg7: memref<10x1xf32, #tpu.memory_space<vmem>>, %arg8: memref<1x10xf32, #tpu.memory_space<vmem>>, %arg9: memref<1x1xf32, #tpu.memory_space<vmem>>, %arg10: memref<2048x8xf32, #tpu.memory_space<vmem>>, %arg11: memref<8x2048xf32, #tpu.memory_space<vmem>>, %arg12: memref<1x10x2048xbf16, #tpu.memory_space<vmem>>) attributes {dimension_semantics = [#tpu.dimension_semantics<parallel>], iteration_bounds = array<i64: 1>, scalar_prefetch = 0 : i64, scratch_operands = 0 : i64, tpu.core_type = #tpu.core_type<tc>, window_params = [{transform_indices = @transform_0, window_bounds = array<i64: 1, 25, 8192>}, {pipeline_mode = #tpu.pipeline_mode<synchronous>, transform_indices = @transform_1, window_bounds = array<i64: 10, 25>}, {pipeline_mode = #tpu.pipeline_mode<synchronous>, transform_indices = @transform_2, window_bounds = array<i64: 10, 1>}, {pipeline_mode = #tpu.pipeline_mode<synchronous>, transform_indices = @transform_3, window_bounds = array<i64: 5, 10>}, {pipeline_mode = #tpu.pipeline_mode<synchronous>, transform_indices = @transform_4, window_bounds = array<i64: 5, 1>}, {pipeline_mode = #tpu.pipeline_mode<synchronous>, transform_indices = @transform_5, window_bounds = array<i64: 10, 5>}, {pipeline_mode = #tpu.pipeline_mode<synchronous>, transform_indices = @transform_6, window_bounds = array<i64: 10, 1>}, {pipeline_mode = #tpu.pipeline_mode<synchronous>, transform_indices = @transform_7, window_bounds = array<i64: 1, 10>}, {pipeline_mode = #tpu.pipeline_mode<synchronous>, transform_indices = @transform_8, window_bounds = array<i64: 1, 1>}, {pipeline_mode = #tpu.pipeline_mode<synchronous>, transform_indices = @transform_9, window_bounds = array<i64: 2048, 8>}, {pipeline_mode = #tpu.pipeline_mode<synchronous>, transform_indices = @transform_10, window_bounds = array<i64: 8, 2048>}, {transform_indices = @transform_11, window_bounds = array<i64: 1, 10, 2048>}]} {
    %c0 = arith.constant 0 : index
    %c0_0 = arith.constant 0 : index
    %0 = vector.load %arg2[%c0, %c0_0] : memref<10x25xbf16, #tpu.memory_space<vmem>>, vector<10x25xbf16>
    %c0_1 = arith.constant 0 : index
    %c0_2 = arith.constant 0 : index
    %c0_3 = arith.constant 0 : index
    %1 = vector.load %arg1[%c0_1, %c0_2, %c0_3] : memref<1x25x8192xbf16, #tpu.memory_space<vmem>>, vector<1x25x8192xbf16>
    %2 = vector.shape_cast %1 : vector<1x25x8192xbf16> to vector<25x8192xbf16>
    %cst = arith.constant dense<0.000000e+00> : vector<10x8192xf32>
    %3 = tpu.matmul %0, %2, %cst {dimension_numbers = #tpu.dot_dimension_numbers<[1], [0], [0], [1], [0, 0, 1, 1], [], []>} : vector<10x25xbf16>, vector<25x8192xbf16>, vector<10x8192xf32> -> vector<10x8192xf32>
    %4 = vector.extract_strided_slice %3 {offsets = [0, 0], sizes = [10, 2048], strides = [1, 1]} : vector<10x8192xf32> to vector<10x2048xf32>
    %5 = vector.extract_strided_slice %3 {offsets = [0, 2048], sizes = [10, 2048], strides = [1, 1]} : vector<10x8192xf32> to vector<10x2048xf32>
    %6 = arith.maximumf %4, %5 : vector<10x2048xf32>
    %7 = vector.extract_strided_slice %3 {offsets = [0, 4096], sizes = [10, 2048], strides = [1, 1]} : vector<10x8192xf32> to vector<10x2048xf32>
    %8 = vector.extract_strided_slice %3 {offsets = [0, 6144], sizes = [10, 2048], strides = [1, 1]} : vector<10x8192xf32> to vector<10x2048xf32>
    %9 = arith.maximumf %7, %8 : vector<10x2048xf32>
    %10 = arith.maximumf %6, %9 : vector<10x2048xf32>
    %c0_4 = arith.constant 0 : index
    %c0_5 = arith.constant 0 : index
    %11 = vector.load %arg3[%c0_4, %c0_5] : memref<10x1xf32, #tpu.memory_space<vmem>>, vector<10x1xf32>
    %12 = vector.broadcast %11 : vector<10x1xf32> to vector<10x2048xf32>
    %13 = arith.addf %10, %12 : vector<10x2048xf32>
    %cst_6 = arith.constant 0.000000e+00 : f32
    %14 = vector.broadcast %cst_6 : f32 to vector<10x2048xf32>
    %15 = arith.maximumf %13, %14 : vector<10x2048xf32>
    %c0_7 = arith.constant 0 : index
    %c0_8 = arith.constant 0 : index
    %16 = vector.load %arg10[%c0_7, %c0_8] : memref<2048x8xf32, #tpu.memory_space<vmem>>, vector<2048x8xf32>
    %cst_9 = arith.constant dense<0.000000e+00> : vector<10x8xf32>
    %17 = tpu.matmul %15, %16, %cst_9 {dimension_numbers = #tpu.dot_dimension_numbers<[1], [0], [0], [1], [0, 0, 1, 1], [], []>} : vector<10x2048xf32>, vector<2048x8xf32>, vector<10x8xf32> -> vector<10x8xf32>
    %c0_10 = arith.constant 0 : index
    %c0_11 = arith.constant 0 : index
    %18 = vector.load %arg4[%c0_10, %c0_11] : memref<5x10xf32, #tpu.memory_space<vmem>>, vector<5x10xf32>
    %cst_12 = arith.constant dense<0.000000e+00> : vector<5x8xf32>
    %19 = tpu.matmul %18, %17, %cst_12 {dimension_numbers = #tpu.dot_dimension_numbers<[1], [0], [0], [1], [0, 0, 1, 1], [], []>} : vector<5x10xf32>, vector<10x8xf32>, vector<5x8xf32> -> vector<5x8xf32>
    %c0_13 = arith.constant 0 : index
    %c0_14 = arith.constant 0 : index
    %20 = vector.load %arg5[%c0_13, %c0_14] : memref<5x1xf32, #tpu.memory_space<vmem>>, vector<5x1xf32>
    %21 = vector.broadcast %20 : vector<5x1xf32> to vector<5x8xf32>
    %22 = arith.addf %19, %21 : vector<5x8xf32>
    %cst_15 = arith.constant 0.000000e+00 : f32
    %23 = vector.broadcast %cst_15 : f32 to vector<5x8xf32>
    %24 = arith.maximumf %22, %23 : vector<5x8xf32>
    %c0_16 = arith.constant 0 : index
    %c0_17 = arith.constant 0 : index
    %25 = vector.load %arg6[%c0_16, %c0_17] : memref<10x5xf32, #tpu.memory_space<vmem>>, vector<10x5xf32>
    %cst_18 = arith.constant dense<0.000000e+00> : vector<10x8xf32>
    %26 = tpu.matmul %25, %24, %cst_18 {dimension_numbers = #tpu.dot_dimension_numbers<[1], [0], [0], [1], [0, 0, 1, 1], [], []>} : vector<10x5xf32>, vector<5x8xf32>, vector<10x8xf32> -> vector<10x8xf32>
    %c0_19 = arith.constant 0 : index
    %c0_20 = arith.constant 0 : index
    %27 = vector.load %arg7[%c0_19, %c0_20] : memref<10x1xf32, #tpu.memory_space<vmem>>, vector<10x1xf32>
    %28 = vector.broadcast %27 : vector<10x1xf32> to vector<10x8xf32>
    %29 = arith.addf %26, %28 : vector<10x8xf32>
    %cst_21 = arith.constant 0.000000e+00 : f32
    %30 = vector.broadcast %cst_21 : f32 to vector<10x8xf32>
    %31 = arith.subf %30, %29 : vector<10x8xf32>
    %32 = math.exp %31 : vector<10x8xf32>
    %cst_22 = arith.constant 1.000000e+00 : f32
    %33 = vector.broadcast %cst_22 : f32 to vector<10x8xf32>
    %34 = arith.addf %33, %32 : vector<10x8xf32>
    %cst_23 = arith.constant 1.000000e+00 : f32
    %35 = vector.broadcast %cst_23 : f32 to vector<10x8xf32>
    %36 = arith.divf %35, %34 : vector<10x8xf32>
    %c0_24 = arith.constant 0 : index
    %c0_25 = arith.constant 0 : index
    %37 = vector.load %arg11[%c0_24, %c0_25] : memref<8x2048xf32, #tpu.memory_space<vmem>>, vector<8x2048xf32>
    %cst_26 = arith.constant dense<0.000000e+00> : vector<10x2048xf32>
    %38 = tpu.matmul %36, %37, %cst_26 {dimension_numbers = #tpu.dot_dimension_numbers<[1], [0], [0], [1], [0, 0, 1, 1], [], []>} : vector<10x8xf32>, vector<8x2048xf32>, vector<10x2048xf32> -> vector<10x2048xf32>
    %c0_27 = arith.constant 0 : index
    %c0_28 = arith.constant 0 : index
    %39 = vector.load %arg8[%c0_27, %c0_28] : memref<1x10xf32, #tpu.memory_space<vmem>>, vector<1x10xf32>
    %cst_29 = arith.constant dense<0.000000e+00> : vector<1x2048xf32>
    %40 = tpu.matmul %39, %15, %cst_29 {dimension_numbers = #tpu.dot_dimension_numbers<[1], [0], [0], [1], [0, 0, 1, 1], [], []>} : vector<1x10xf32>, vector<10x2048xf32>, vector<1x2048xf32> -> vector<1x2048xf32>
    %c0_30 = arith.constant 0 : index
    %c0_31 = arith.constant 0 : index
    %41 = vector.load %arg9[%c0_30, %c0_31] : memref<1x1xf32, #tpu.memory_space<vmem>>, vector<1x1xf32>
    %42 = vector.broadcast %41 : vector<1x1xf32> to vector<1x2048xf32>
    %43 = arith.addf %40, %42 : vector<1x2048xf32>
    %cst_32 = arith.constant 0.000000e+00 : f32
    %44 = vector.broadcast %cst_32 : f32 to vector<1x2048xf32>
    %45 = arith.subf %44, %43 : vector<1x2048xf32>
    %46 = math.exp %45 : vector<1x2048xf32>
    %cst_33 = arith.constant 1.000000e+00 : f32
    %47 = vector.broadcast %cst_33 : f32 to vector<1x2048xf32>
    %48 = arith.addf %47, %46 : vector<1x2048xf32>
    %cst_34 = arith.constant 1.000000e+00 : f32
    %49 = vector.broadcast %cst_34 : f32 to vector<1x2048xf32>
    %50 = arith.divf %49, %48 : vector<1x2048xf32>
    %51 = vector.broadcast %50 : vector<1x2048xf32> to vector<10x2048xf32>
    %52 = arith.addf %38, %51 : vector<10x2048xf32>
    %53 = arith.mulf %15, %52 : vector<10x2048xf32>
    %54 = arith.truncf %53 : vector<10x2048xf32> to vector<10x2048xbf16>
    %c0_35 = arith.constant 0 : index
    %c0_36 = arith.constant 0 : index
    %c0_37 = arith.constant 0 : index
    %55 = vector.load %arg12[%c0_35, %c0_36, %c0_37] : memref<1x10x2048xbf16, #tpu.memory_space<vmem>>, vector<1x10x2048xbf16>
    %56 = vector.shape_cast %55 : vector<1x10x2048xbf16> to vector<10x2048xbf16>
    %57 = vector.shape_cast %54 : vector<10x2048xbf16> to vector<1x10x2048xbf16>
    tpu.vector_store %arg12[%c0_35, %c0_36, %c0_37], %57 {strides = array<i32>} : memref<1x10x2048xbf16, #tpu.memory_space<vmem>>, vector<1x10x2048xbf16>,
    return
  }
  func.func @transform_0(%arg0: i32) -> (i32, i32, i32) {
    %c0_i32 = arith.constant 0 : i32
    %c0_i32_0 = arith.constant 0 : i32
    %c0_i32_1 = arith.constant 0 : i32
    return %arg0, %c0_i32, %c0_i32_0 : i32, i32, i32
  }
  func.func @transform_1(%arg0: i32) -> (i32, i32) {
    %c0_i32 = arith.constant 0 : i32
    %c0_i32_0 = arith.constant 0 : i32
    %c0_i32_1 = arith.constant 0 : i32
    return %c0_i32, %c0_i32_0 : i32, i32
  }
  func.func @transform_2(%arg0: i32) -> (i32, i32) {
    %c0_i32 = arith.constant 0 : i32
    %c0_i32_0 = arith.constant 0 : i32
    %c0_i32_1 = arith.constant 0 : i32
    return %c0_i32, %c0_i32_0 : i32, i32
  }
  func.func @transform_3(%arg0: i32) -> (i32, i32) {
    %c0_i32 = arith.constant 0 : i32
    %c0_i32_0 = arith.constant 0 : i32
    %c0_i32_1 = arith.constant 0 : i32
    return %c0_i32, %c0_i32_0 : i32, i32
  }
  func.func @transform_4(%arg0: i32) -> (i32, i32) {
    %c0_i32 = arith.constant 0 : i32
    %c0_i32_0 = arith.constant 0 : i32
    %c0_i32_1 = arith.constant 0 : i32
    return %c0_i32, %c0_i32_0 : i32, i32
  }
  func.func @transform_5(%arg0: i32) -> (i32, i32) {
    %c0_i32 = arith.constant 0 : i32
    %c0_i32_0 = arith.constant 0 : i32
    %c0_i32_1 = arith.constant 0 : i32
    return %c0_i32, %c0_i32_0 : i32, i32
  }
  func.func @transform_6(%arg0: i32) -> (i32, i32) {
    %c0_i32 = arith.constant 0 : i32
    %c0_i32_0 = arith.constant 0 : i32
    %c0_i32_1 = arith.constant 0 : i32
    return %c0_i32, %c0_i32_0 : i32, i32
  }
  func.func @transform_7(%arg0: i32) -> (i32, i32) {
    %c0_i32 = arith.constant 0 : i32
    %c0_i32_0 = arith.constant 0 : i32
    %c0_i32_1 = arith.constant 0 : i32
    return %c0_i32, %c0_i32_0 : i32, i32
  }
  func.func @transform_8(%arg0: i32) -> (i32, i32) {
    %c0_i32 = arith.constant 0 : i32
    %c0_i32_0 = arith.constant 0 : i32
    %c0_i32_1 = arith.constant 0 : i32
    return %c0_i32, %c0_i32_0 : i32, i32
  }
  func.func @transform_9(%arg0: i32) -> (i32, i32) {
    %c0_i32 = arith.constant 0 : i32
    %c0_i32_0 = arith.constant 0 : i32
    %c0_i32_1 = arith.constant 0 : i32
    return %c0_i32, %c0_i32_0 : i32, i32
  }
  func.func @transform_10(%arg0: i32) -> (i32, i32) {
    %c0_i32 = arith.constant 0 : i32
    %c0_i32_0 = arith.constant 0 : i32
    %c0_i32_1 = arith.constant 0 : i32
    return %c0_i32, %c0_i32_0 : i32, i32
  }
  func.func @transform_11(%arg0: i32) -> (i32, i32, i32) {
    %c0_i32 = arith.constant 0 : i32
    %c0_i32_0 = arith.constant 0 : i32
    %c0_i32_1 = arith.constant 0 : i32
    return %arg0, %c0_i32, %c0_i32_0 : i32, i32, i32
  }
}

module attributes {stable_mosaic.version = 11 : i64} {
  func.func @layer2_fc_kernel(%arg0: i32, %arg1: memref<1x250x1152xbf16, #tpu.memory_space<vmem>>, %arg2: memref<20x250xbf16, #tpu.memory_space<vmem>>, %arg3: memref<20x1xf32, #tpu.memory_space<vmem>>, %arg4: memref<10x20xf32, #tpu.memory_space<vmem>>, %arg5: memref<10x1xf32, #tpu.memory_space<vmem>>, %arg6: memref<20x10xf32, #tpu.memory_space<vmem>>, %arg7: memref<20x1xf32, #tpu.memory_space<vmem>>, %arg8: memref<1x20xf32, #tpu.memory_space<vmem>>, %arg9: memref<1x1xf32, #tpu.memory_space<vmem>>, %arg10: memref<288x8xf32, #tpu.memory_space<vmem>>, %arg11: memref<8x288xf32, #tpu.memory_space<vmem>>, %arg12: memref<36x50x20xbf16, #tpu.memory_space<vmem>>, %arg13: memref<50x1xf32, #tpu.memory_space<vmem>>, %arg14: memref<20x50xbf16, #tpu.memory_space<vmem>>, %arg15: memref<20x1xf32, #tpu.memory_space<vmem>>, %arg16: memref<1x20x8xf32, #tpu.memory_space<vmem>>) attributes {dimension_semantics = [#tpu.dimension_semantics<parallel>], iteration_bounds = array<i64: 1>, scalar_prefetch = 0 : i64, scratch_operands = 0 : i64, tpu.core_type = #tpu.core_type<tc>, window_params = [{transform_indices = @transform_0, window_bounds = array<i64: 1, 250, 1152>}, {pipeline_mode = #tpu.pipeline_mode<synchronous>, transform_indices = @transform_1, window_bounds = array<i64: 20, 250>}, {pipeline_mode = #tpu.pipeline_mode<synchronous>, transform_indices = @transform_2, window_bounds = array<i64: 20, 1>}, {pipeline_mode = #tpu.pipeline_mode<synchronous>, transform_indices = @transform_3, window_bounds = array<i64: 10, 20>}, {pipeline_mode = #tpu.pipeline_mode<synchronous>, transform_indices = @transform_4, window_bounds = array<i64: 10, 1>}, {pipeline_mode = #tpu.pipeline_mode<synchronous>, transform_indices = @transform_5, window_bounds = array<i64: 20, 10>}, {pipeline_mode = #tpu.pipeline_mode<synchronous>, transform_indices = @transform_6, window_bounds = array<i64: 20, 1>}, {pipeline_mode = #tpu.pipeline_mode<synchronous>, transform_indices = @transform_7, window_bounds = array<i64: 1, 20>}, {pipeline_mode = #tpu.pipeline_mode<synchronous>, transform_indices = @transform_8, window_bounds = array<i64: 1, 1>}, {pipeline_mode = #tpu.pipeline_mode<synchronous>, transform_indices = @transform_9, window_bounds = array<i64: 288, 8>}, {pipeline_mode = #tpu.pipeline_mode<synchronous>, transform_indices = @transform_10, window_bounds = array<i64: 8, 288>}, {pipeline_mode = #tpu.pipeline_mode<synchronous>, transform_indices = @transform_11, window_bounds = array<i64: 36, 50, 20>}, {pipeline_mode = #tpu.pipeline_mode<synchronous>, transform_indices = @transform_12, window_bounds = array<i64: 50, 1>}, {pipeline_mode = #tpu.pipeline_mode<synchronous>, transform_indices = @transform_13, window_bounds = array<i64: 20, 50>}, {pipeline_mode = #tpu.pipeline_mode<synchronous>, transform_indices = @transform_14, window_bounds = array<i64: 20, 1>}, {transform_indices = @transform_15, window_bounds = array<i64: 1, 20, 8>}]} {
    %c0 = arith.constant 0 : index
    %c0_0 = arith.constant 0 : index
    %0 = vector.load %arg2[%c0, %c0_0] : memref<20x250xbf16, #tpu.memory_space<vmem>>, vector<20x250xbf16>
    %c0_1 = arith.constant 0 : index
    %c0_2 = arith.constant 0 : index
    %c0_3 = arith.constant 0 : index
    %1 = vector.load %arg1[%c0_1, %c0_2, %c0_3] : memref<1x250x1152xbf16, #tpu.memory_space<vmem>>, vector<1x250x1152xbf16>
    %2 = vector.shape_cast %1 : vector<1x250x1152xbf16> to vector<250x1152xbf16>
    %cst = arith.constant dense<0.000000e+00> : vector<20x1152xf32>
    %3 = tpu.matmul %0, %2, %cst {dimension_numbers = #tpu.dot_dimension_numbers<[1], [0], [0], [1], [0, 0, 1, 1], [], []>} : vector<20x250xbf16>, vector<250x1152xbf16>, vector<20x1152xf32> -> vector<20x1152xf32>
    %4 = vector.extract_strided_slice %3 {offsets = [0, 0], sizes = [20, 288], strides = [1, 1]} : vector<20x1152xf32> to vector<20x288xf32>
    %5 = vector.extract_strided_slice %3 {offsets = [0, 288], sizes = [20, 288], strides = [1, 1]} : vector<20x1152xf32> to vector<20x288xf32>
    %6 = arith.maximumf %4, %5 : vector<20x288xf32>
    %7 = vector.extract_strided_slice %3 {offsets = [0, 576], sizes = [20, 288], strides = [1, 1]} : vector<20x1152xf32> to vector<20x288xf32>
    %8 = vector.extract_strided_slice %3 {offsets = [0, 864], sizes = [20, 288], strides = [1, 1]} : vector<20x1152xf32> to vector<20x288xf32>
    %9 = arith.maximumf %7, %8 : vector<20x288xf32>
    %10 = arith.maximumf %6, %9 : vector<20x288xf32>
    %c0_4 = arith.constant 0 : index
    %c0_5 = arith.constant 0 : index
    %11 = vector.load %arg3[%c0_4, %c0_5] : memref<20x1xf32, #tpu.memory_space<vmem>>, vector<20x1xf32>
    %12 = vector.broadcast %11 : vector<20x1xf32> to vector<20x288xf32>
    %13 = arith.addf %10, %12 : vector<20x288xf32>
    %cst_6 = arith.constant 0.000000e+00 : f32
    %14 = vector.broadcast %cst_6 : f32 to vector<20x288xf32>
    %15 = arith.maximumf %13, %14 : vector<20x288xf32>
    %c0_7 = arith.constant 0 : index
    %c0_8 = arith.constant 0 : index
    %16 = vector.load %arg10[%c0_7, %c0_8] : memref<288x8xf32, #tpu.memory_space<vmem>>, vector<288x8xf32>
    %cst_9 = arith.constant dense<0.000000e+00> : vector<20x8xf32>
    %17 = tpu.matmul %15, %16, %cst_9 {dimension_numbers = #tpu.dot_dimension_numbers<[1], [0], [0], [1], [0, 0, 1, 1], [], []>} : vector<20x288xf32>, vector<288x8xf32>, vector<20x8xf32> -> vector<20x8xf32>
    %c0_10 = arith.constant 0 : index
    %c0_11 = arith.constant 0 : index
    %18 = vector.load %arg4[%c0_10, %c0_11] : memref<10x20xf32, #tpu.memory_space<vmem>>, vector<10x20xf32>
    %cst_12 = arith.constant dense<0.000000e+00> : vector<10x8xf32>
    %19 = tpu.matmul %18, %17, %cst_12 {dimension_numbers = #tpu.dot_dimension_numbers<[1], [0], [0], [1], [0, 0, 1, 1], [], []>} : vector<10x20xf32>, vector<20x8xf32>, vector<10x8xf32> -> vector<10x8xf32>
    %c0_13 = arith.constant 0 : index
    %c0_14 = arith.constant 0 : index
    %20 = vector.load %arg5[%c0_13, %c0_14] : memref<10x1xf32, #tpu.memory_space<vmem>>, vector<10x1xf32>
    %21 = vector.broadcast %20 : vector<10x1xf32> to vector<10x8xf32>
    %22 = arith.addf %19, %21 : vector<10x8xf32>
    %cst_15 = arith.constant 0.000000e+00 : f32
    %23 = vector.broadcast %cst_15 : f32 to vector<10x8xf32>
    %24 = arith.maximumf %22, %23 : vector<10x8xf32>
    %c0_16 = arith.constant 0 : index
    %c0_17 = arith.constant 0 : index
    %25 = vector.load %arg6[%c0_16, %c0_17] : memref<20x10xf32, #tpu.memory_space<vmem>>, vector<20x10xf32>
    %cst_18 = arith.constant dense<0.000000e+00> : vector<20x8xf32>
    %26 = tpu.matmul %25, %24, %cst_18 {dimension_numbers = #tpu.dot_dimension_numbers<[1], [0], [0], [1], [0, 0, 1, 1], [], []>} : vector<20x10xf32>, vector<10x8xf32>, vector<20x8xf32> -> vector<20x8xf32>
    %c0_19 = arith.constant 0 : index
    %c0_20 = arith.constant 0 : index
    %27 = vector.load %arg7[%c0_19, %c0_20] : memref<20x1xf32, #tpu.memory_space<vmem>>, vector<20x1xf32>
    %28 = vector.broadcast %27 : vector<20x1xf32> to vector<20x8xf32>
    %29 = arith.addf %26, %28 : vector<20x8xf32>
    %cst_21 = arith.constant 0.000000e+00 : f32
    %30 = vector.broadcast %cst_21 : f32 to vector<20x8xf32>
    %31 = arith.subf %30, %29 : vector<20x8xf32>
    %32 = math.exp %31 : vector<20x8xf32>
    %cst_22 = arith.constant 1.000000e+00 : f32
    %33 = vector.broadcast %cst_22 : f32 to vector<20x8xf32>
    %34 = arith.addf %33, %32 : vector<20x8xf32>
    %cst_23 = arith.constant 1.000000e+00 : f32
    %35 = vector.broadcast %cst_23 : f32 to vector<20x8xf32>
    %36 = arith.divf %35, %34 : vector<20x8xf32>
    %c0_24 = arith.constant 0 : index
    %c0_25 = arith.constant 0 : index
    %37 = vector.load %arg11[%c0_24, %c0_25] : memref<8x288xf32, #tpu.memory_space<vmem>>, vector<8x288xf32>
    %cst_26 = arith.constant dense<0.000000e+00> : vector<20x288xf32>
    %38 = tpu.matmul %36, %37, %cst_26 {dimension_numbers = #tpu.dot_dimension_numbers<[1], [0], [0], [1], [0, 0, 1, 1], [], []>} : vector<20x8xf32>, vector<8x288xf32>, vector<20x288xf32> -> vector<20x288xf32>
    %c0_27 = arith.constant 0 : index
    %c0_28 = arith.constant 0 : index
    %39 = vector.load %arg8[%c0_27, %c0_28] : memref<1x20xf32, #tpu.memory_space<vmem>>, vector<1x20xf32>
    %cst_29 = arith.constant dense<0.000000e+00> : vector<1x288xf32>
    %40 = tpu.matmul %39, %15, %cst_29 {dimension_numbers = #tpu.dot_dimension_numbers<[1], [0], [0], [1], [0, 0, 1, 1], [], []>} : vector<1x20xf32>, vector<20x288xf32>, vector<1x288xf32> -> vector<1x288xf32>
    %c0_30 = arith.constant 0 : index
    %c0_31 = arith.constant 0 : index
    %41 = vector.load %arg9[%c0_30, %c0_31] : memref<1x1xf32, #tpu.memory_space<vmem>>, vector<1x1xf32>
    %42 = vector.broadcast %41 : vector<1x1xf32> to vector<1x288xf32>
    %43 = arith.addf %40, %42 : vector<1x288xf32>
    %cst_32 = arith.constant 0.000000e+00 : f32
    %44 = vector.broadcast %cst_32 : f32 to vector<1x288xf32>
    %45 = arith.subf %44, %43 : vector<1x288xf32>
    %46 = math.exp %45 : vector<1x288xf32>
    %cst_33 = arith.constant 1.000000e+00 : f32
    %47 = vector.broadcast %cst_33 : f32 to vector<1x288xf32>
    %48 = arith.addf %47, %46 : vector<1x288xf32>
    %cst_34 = arith.constant 1.000000e+00 : f32
    %49 = vector.broadcast %cst_34 : f32 to vector<1x288xf32>
    %50 = arith.divf %49, %48 : vector<1x288xf32>
    %51 = vector.broadcast %50 : vector<1x288xf32> to vector<20x288xf32>
    %52 = arith.addf %38, %51 : vector<20x288xf32>
    %53 = arith.mulf %15, %52 : vector<20x288xf32>
    %54 = arith.truncf %53 : vector<20x288xf32> to vector<20x288xbf16>
    %cst_35 = arith.constant 0.000000e+00 : f32
    %55 = vector.broadcast %cst_35 : f32 to vector<50x8xf32>
    %c0_36 = arith.constant 0 : index
    %c0_37 = arith.constant 0 : index
    %c0_38 = arith.constant 0 : index
    %56 = vector.load %arg12[%c0_36, %c0_37, %c0_38] : memref<36x50x20xbf16, #tpu.memory_space<vmem>>, vector<1x50x20xbf16>
    %57 = vector.shape_cast %56 : vector<1x50x20xbf16> to vector<50x20xbf16>
    %58 = vector.extract_strided_slice %54 {offsets = [0, 0], sizes = [20, 8], strides = [1, 1]} : vector<20x288xbf16> to vector<20x8xbf16>
    %cst_39 = arith.constant dense<0.000000e+00> : vector<50x8xf32>
    %59 = tpu.matmul %57, %58, %cst_39 {dimension_numbers = #tpu.dot_dimension_numbers<[1], [0], [0], [1], [0, 0, 1, 1], [], []>} : vector<50x20xbf16>, vector<20x8xbf16>, vector<50x8xf32> -> vector<50x8xf32>
    %60 = arith.addf %55, %59 : vector<50x8xf32>
    %c1 = arith.constant 1 : index
    %c0_40 = arith.constant 0 : index
    %c0_41 = arith.constant 0 : index
    %61 = vector.load %arg12[%c1, %c0_40, %c0_41] : memref<36x50x20xbf16, #tpu.memory_space<vmem>>, vector<1x50x20xbf16>
    %62 = vector.shape_cast %61 : vector<1x50x20xbf16> to vector<50x20xbf16>
    %63 = vector.extract_strided_slice %54 {offsets = [0, 8], sizes = [20, 8], strides = [1, 1]} : vector<20x288xbf16> to vector<20x8xbf16>
    %cst_42 = arith.constant dense<0.000000e+00> : vector<50x8xf32>
    %64 = tpu.matmul %62, %63, %cst_42 {dimension_numbers = #tpu.dot_dimension_numbers<[1], [0], [0], [1], [0, 0, 1, 1], [], []>} : vector<50x20xbf16>, vector<20x8xbf16>, vector<50x8xf32> -> vector<50x8xf32>
    %65 = arith.addf %60, %64 : vector<50x8xf32>
    %c2 = arith.constant 2 : index
    %c0_43 = arith.constant 0 : index
    %c0_44 = arith.constant 0 : index
    %66 = vector.load %arg12[%c2, %c0_43, %c0_44] : memref<36x50x20xbf16, #tpu.memory_space<vmem>>, vector<1x50x20xbf16>
    %67 = vector.shape_cast %66 : vector<1x50x20xbf16> to vector<50x20xbf16>
    %68 = vector.extract_strided_slice %54 {offsets = [0, 16], sizes = [20, 8], strides = [1, 1]} : vector<20x288xbf16> to vector<20x8xbf16>
    %cst_45 = arith.constant dense<0.000000e+00> : vector<50x8xf32>
    %69 = tpu.matmul %67, %68, %cst_45 {dimension_numbers = #tpu.dot_dimension_numbers<[1], [0], [0], [1], [0, 0, 1, 1], [], []>} : vector<50x20xbf16>, vector<20x8xbf16>, vector<50x8xf32> -> vector<50x8xf32>
    %70 = arith.addf %65, %69 : vector<50x8xf32>
    %c3 = arith.constant 3 : index
    %c0_46 = arith.constant 0 : index
    %c0_47 = arith.constant 0 : index
    %71 = vector.load %arg12[%c3, %c0_46, %c0_47] : memref<36x50x20xbf16, #tpu.memory_space<vmem>>, vector<1x50x20xbf16>
    %72 = vector.shape_cast %71 : vector<1x50x20xbf16> to vector<50x20xbf16>
    %73 = vector.extract_strided_slice %54 {offsets = [0, 24], sizes = [20, 8], strides = [1, 1]} : vector<20x288xbf16> to vector<20x8xbf16>
    %cst_48 = arith.constant dense<0.000000e+00> : vector<50x8xf32>
    %74 = tpu.matmul %72, %73, %cst_48 {dimension_numbers = #tpu.dot_dimension_numbers<[1], [0], [0], [1], [0, 0, 1, 1], [], []>} : vector<50x20xbf16>, vector<20x8xbf16>, vector<50x8xf32> -> vector<50x8xf32>
    %75 = arith.addf %70, %74 : vector<50x8xf32>
    %c4 = arith.constant 4 : index
    %c0_49 = arith.constant 0 : index
    %c0_50 = arith.constant 0 : index
    %76 = vector.load %arg12[%c4, %c0_49, %c0_50] : memref<36x50x20xbf16, #tpu.memory_space<vmem>>, vector<1x50x20xbf16>
    %77 = vector.shape_cast %76 : vector<1x50x20xbf16> to vector<50x20xbf16>
    %78 = vector.extract_strided_slice %54 {offsets = [0, 32], sizes = [20, 8], strides = [1, 1]} : vector<20x288xbf16> to vector<20x8xbf16>
    %cst_51 = arith.constant dense<0.000000e+00> : vector<50x8xf32>
    %79 = tpu.matmul %77, %78, %cst_51 {dimension_numbers = #tpu.dot_dimension_numbers<[1], [0], [0], [1], [0, 0, 1, 1], [], []>} : vector<50x20xbf16>, vector<20x8xbf16>, vector<50x8xf32> -> vector<50x8xf32>
    %80 = arith.addf %75, %79 : vector<50x8xf32>
    %c5 = arith.constant 5 : index
    %c0_52 = arith.constant 0 : index
    %c0_53 = arith.constant 0 : index
    %81 = vector.load %arg12[%c5, %c0_52, %c0_53] : memref<36x50x20xbf16, #tpu.memory_space<vmem>>, vector<1x50x20xbf16>
    %82 = vector.shape_cast %81 : vector<1x50x20xbf16> to vector<50x20xbf16>
    %83 = vector.extract_strided_slice %54 {offsets = [0, 40], sizes = [20, 8], strides = [1, 1]} : vector<20x288xbf16> to vector<20x8xbf16>
    %cst_54 = arith.constant dense<0.000000e+00> : vector<50x8xf32>
    %84 = tpu.matmul %82, %83, %cst_54 {dimension_numbers = #tpu.dot_dimension_numbers<[1], [0], [0], [1], [0, 0, 1, 1], [], []>} : vector<50x20xbf16>, vector<20x8xbf16>, vector<50x8xf32> -> vector<50x8xf32>
    %85 = arith.addf %80, %84 : vector<50x8xf32>
    %c6 = arith.constant 6 : index
    %c0_55 = arith.constant 0 : index
    %c0_56 = arith.constant 0 : index
    %86 = vector.load %arg12[%c6, %c0_55, %c0_56] : memref<36x50x20xbf16, #tpu.memory_space<vmem>>, vector<1x50x20xbf16>
    %87 = vector.shape_cast %86 : vector<1x50x20xbf16> to vector<50x20xbf16>
    %88 = vector.extract_strided_slice %54 {offsets = [0, 48], sizes = [20, 8], strides = [1, 1]} : vector<20x288xbf16> to vector<20x8xbf16>
    %cst_57 = arith.constant dense<0.000000e+00> : vector<50x8xf32>
    %89 = tpu.matmul %87, %88, %cst_57 {dimension_numbers = #tpu.dot_dimension_numbers<[1], [0], [0], [1], [0, 0, 1, 1], [], []>} : vector<50x20xbf16>, vector<20x8xbf16>, vector<50x8xf32> -> vector<50x8xf32>
    %90 = arith.addf %85, %89 : vector<50x8xf32>
    %c7 = arith.constant 7 : index
    %c0_58 = arith.constant 0 : index
    %c0_59 = arith.constant 0 : index
    %91 = vector.load %arg12[%c7, %c0_58, %c0_59] : memref<36x50x20xbf16, #tpu.memory_space<vmem>>, vector<1x50x20xbf16>
    %92 = vector.shape_cast %91 : vector<1x50x20xbf16> to vector<50x20xbf16>
    %93 = vector.extract_strided_slice %54 {offsets = [0, 56], sizes = [20, 8], strides = [1, 1]} : vector<20x288xbf16> to vector<20x8xbf16>
    %cst_60 = arith.constant dense<0.000000e+00> : vector<50x8xf32>
    %94 = tpu.matmul %92, %93, %cst_60 {dimension_numbers = #tpu.dot_dimension_numbers<[1], [0], [0], [1], [0, 0, 1, 1], [], []>} : vector<50x20xbf16>, vector<20x8xbf16>, vector<50x8xf32> -> vector<50x8xf32>
    %95 = arith.addf %90, %94 : vector<50x8xf32>
    %c8 = arith.constant 8 : index
    %c0_61 = arith.constant 0 : index
    %c0_62 = arith.constant 0 : index
    %96 = vector.load %arg12[%c8, %c0_61, %c0_62] : memref<36x50x20xbf16, #tpu.memory_space<vmem>>, vector<1x50x20xbf16>
    %97 = vector.shape_cast %96 : vector<1x50x20xbf16> to vector<50x20xbf16>
    %98 = vector.extract_strided_slice %54 {offsets = [0, 64], sizes = [20, 8], strides = [1, 1]} : vector<20x288xbf16> to vector<20x8xbf16>
    %cst_63 = arith.constant dense<0.000000e+00> : vector<50x8xf32>
    %99 = tpu.matmul %97, %98, %cst_63 {dimension_numbers = #tpu.dot_dimension_numbers<[1], [0], [0], [1], [0, 0, 1, 1], [], []>} : vector<50x20xbf16>, vector<20x8xbf16>, vector<50x8xf32> -> vector<50x8xf32>
    %100 = arith.addf %95, %99 : vector<50x8xf32>
    %c9 = arith.constant 9 : index
    %c0_64 = arith.constant 0 : index
    %c0_65 = arith.constant 0 : index
    %101 = vector.load %arg12[%c9, %c0_64, %c0_65] : memref<36x50x20xbf16, #tpu.memory_space<vmem>>, vector<1x50x20xbf16>
    %102 = vector.shape_cast %101 : vector<1x50x20xbf16> to vector<50x20xbf16>
    %103 = vector.extract_strided_slice %54 {offsets = [0, 72], sizes = [20, 8], strides = [1, 1]} : vector<20x288xbf16> to vector<20x8xbf16>
    %cst_66 = arith.constant dense<0.000000e+00> : vector<50x8xf32>
    %104 = tpu.matmul %102, %103, %cst_66 {dimension_numbers = #tpu.dot_dimension_numbers<[1], [0], [0], [1], [0, 0, 1, 1], [], []>} : vector<50x20xbf16>, vector<20x8xbf16>, vector<50x8xf32> -> vector<50x8xf32>
    %105 = arith.addf %100, %104 : vector<50x8xf32>
    %c10 = arith.constant 10 : index
    %c0_67 = arith.constant 0 : index
    %c0_68 = arith.constant 0 : index
    %106 = vector.load %arg12[%c10, %c0_67, %c0_68] : memref<36x50x20xbf16, #tpu.memory_space<vmem>>, vector<1x50x20xbf16>
    %107 = vector.shape_cast %106 : vector<1x50x20xbf16> to vector<50x20xbf16>
    %108 = vector.extract_strided_slice %54 {offsets = [0, 80], sizes = [20, 8], strides = [1, 1]} : vector<20x288xbf16> to vector<20x8xbf16>
    %cst_69 = arith.constant dense<0.000000e+00> : vector<50x8xf32>
    %109 = tpu.matmul %107, %108, %cst_69 {dimension_numbers = #tpu.dot_dimension_numbers<[1], [0], [0], [1], [0, 0, 1, 1], [], []>} : vector<50x20xbf16>, vector<20x8xbf16>, vector<50x8xf32> -> vector<50x8xf32>
    %110 = arith.addf %105, %109 : vector<50x8xf32>
    %c11 = arith.constant 11 : index
    %c0_70 = arith.constant 0 : index
    %c0_71 = arith.constant 0 : index
    %111 = vector.load %arg12[%c11, %c0_70, %c0_71] : memref<36x50x20xbf16, #tpu.memory_space<vmem>>, vector<1x50x20xbf16>
    %112 = vector.shape_cast %111 : vector<1x50x20xbf16> to vector<50x20xbf16>
    %113 = vector.extract_strided_slice %54 {offsets = [0, 88], sizes = [20, 8], strides = [1, 1]} : vector<20x288xbf16> to vector<20x8xbf16>
    %cst_72 = arith.constant dense<0.000000e+00> : vector<50x8xf32>
    %114 = tpu.matmul %112, %113, %cst_72 {dimension_numbers = #tpu.dot_dimension_numbers<[1], [0], [0], [1], [0, 0, 1, 1], [], []>} : vector<50x20xbf16>, vector<20x8xbf16>, vector<50x8xf32> -> vector<50x8xf32>
    %115 = arith.addf %110, %114 : vector<50x8xf32>
    %c12 = arith.constant 12 : index
    %c0_73 = arith.constant 0 : index
    %c0_74 = arith.constant 0 : index
    %116 = vector.load %arg12[%c12, %c0_73, %c0_74] : memref<36x50x20xbf16, #tpu.memory_space<vmem>>, vector<1x50x20xbf16>
    %117 = vector.shape_cast %116 : vector<1x50x20xbf16> to vector<50x20xbf16>
    %118 = vector.extract_strided_slice %54 {offsets = [0, 96], sizes = [20, 8], strides = [1, 1]} : vector<20x288xbf16> to vector<20x8xbf16>
    %cst_75 = arith.constant dense<0.000000e+00> : vector<50x8xf32>
    %119 = tpu.matmul %117, %118, %cst_75 {dimension_numbers = #tpu.dot_dimension_numbers<[1], [0], [0], [1], [0, 0, 1, 1], [], []>} : vector<50x20xbf16>, vector<20x8xbf16>, vector<50x8xf32> -> vector<50x8xf32>
    %120 = arith.addf %115, %119 : vector<50x8xf32>
    %c13 = arith.constant 13 : index
    %c0_76 = arith.constant 0 : index
    %c0_77 = arith.constant 0 : index
    %121 = vector.load %arg12[%c13, %c0_76, %c0_77] : memref<36x50x20xbf16, #tpu.memory_space<vmem>>, vector<1x50x20xbf16>
    %122 = vector.shape_cast %121 : vector<1x50x20xbf16> to vector<50x20xbf16>
    %123 = vector.extract_strided_slice %54 {offsets = [0, 104], sizes = [20, 8], strides = [1, 1]} : vector<20x288xbf16> to vector<20x8xbf16>
    %cst_78 = arith.constant dense<0.000000e+00> : vector<50x8xf32>
    %124 = tpu.matmul %122, %123, %cst_78 {dimension_numbers = #tpu.dot_dimension_numbers<[1], [0], [0], [1], [0, 0, 1, 1], [], []>} : vector<50x20xbf16>, vector<20x8xbf16>, vector<50x8xf32> -> vector<50x8xf32>
    %125 = arith.addf %120, %124 : vector<50x8xf32>
    %c14 = arith.constant 14 : index
    %c0_79 = arith.constant 0 : index
    %c0_80 = arith.constant 0 : index
    %126 = vector.load %arg12[%c14, %c0_79, %c0_80] : memref<36x50x20xbf16, #tpu.memory_space<vmem>>, vector<1x50x20xbf16>
    %127 = vector.shape_cast %126 : vector<1x50x20xbf16> to vector<50x20xbf16>
    %128 = vector.extract_strided_slice %54 {offsets = [0, 112], sizes = [20, 8], strides = [1, 1]} : vector<20x288xbf16> to vector<20x8xbf16>
    %cst_81 = arith.constant dense<0.000000e+00> : vector<50x8xf32>
    %129 = tpu.matmul %127, %128, %cst_81 {dimension_numbers = #tpu.dot_dimension_numbers<[1], [0], [0], [1], [0, 0, 1, 1], [], []>} : vector<50x20xbf16>, vector<20x8xbf16>, vector<50x8xf32> -> vector<50x8xf32>
    %130 = arith.addf %125, %129 : vector<50x8xf32>
    %c15 = arith.constant 15 : index
    %c0_82 = arith.constant 0 : index
    %c0_83 = arith.constant 0 : index
    %131 = vector.load %arg12[%c15, %c0_82, %c0_83] : memref<36x50x20xbf16, #tpu.memory_space<vmem>>, vector<1x50x20xbf16>
    %132 = vector.shape_cast %131 : vector<1x50x20xbf16> to vector<50x20xbf16>
    %133 = vector.extract_strided_slice %54 {offsets = [0, 120], sizes = [20, 8], strides = [1, 1]} : vector<20x288xbf16> to vector<20x8xbf16>
    %cst_84 = arith.constant dense<0.000000e+00> : vector<50x8xf32>
    %134 = tpu.matmul %132, %133, %cst_84 {dimension_numbers = #tpu.dot_dimension_numbers<[1], [0], [0], [1], [0, 0, 1, 1], [], []>} : vector<50x20xbf16>, vector<20x8xbf16>, vector<50x8xf32> -> vector<50x8xf32>
    %135 = arith.addf %130, %134 : vector<50x8xf32>
    %c16 = arith.constant 16 : index
    %c0_85 = arith.constant 0 : index
    %c0_86 = arith.constant 0 : index
    %136 = vector.load %arg12[%c16, %c0_85, %c0_86] : memref<36x50x20xbf16, #tpu.memory_space<vmem>>, vector<1x50x20xbf16>
    %137 = vector.shape_cast %136 : vector<1x50x20xbf16> to vector<50x20xbf16>
    %138 = vector.extract_strided_slice %54 {offsets = [0, 128], sizes = [20, 8], strides = [1, 1]} : vector<20x288xbf16> to vector<20x8xbf16>
    %cst_87 = arith.constant dense<0.000000e+00> : vector<50x8xf32>
    %139 = tpu.matmul %137, %138, %cst_87 {dimension_numbers = #tpu.dot_dimension_numbers<[1], [0], [0], [1], [0, 0, 1, 1], [], []>} : vector<50x20xbf16>, vector<20x8xbf16>, vector<50x8xf32> -> vector<50x8xf32>
    %140 = arith.addf %135, %139 : vector<50x8xf32>
    %c17 = arith.constant 17 : index
    %c0_88 = arith.constant 0 : index
    %c0_89 = arith.constant 0 : index
    %141 = vector.load %arg12[%c17, %c0_88, %c0_89] : memref<36x50x20xbf16, #tpu.memory_space<vmem>>, vector<1x50x20xbf16>
    %142 = vector.shape_cast %141 : vector<1x50x20xbf16> to vector<50x20xbf16>
    %143 = vector.extract_strided_slice %54 {offsets = [0, 136], sizes = [20, 8], strides = [1, 1]} : vector<20x288xbf16> to vector<20x8xbf16>
    %cst_90 = arith.constant dense<0.000000e+00> : vector<50x8xf32>
    %144 = tpu.matmul %142, %143, %cst_90 {dimension_numbers = #tpu.dot_dimension_numbers<[1], [0], [0], [1], [0, 0, 1, 1], [], []>} : vector<50x20xbf16>, vector<20x8xbf16>, vector<50x8xf32> -> vector<50x8xf32>
    %145 = arith.addf %140, %144 : vector<50x8xf32>
    %c18 = arith.constant 18 : index
    %c0_91 = arith.constant 0 : index
    %c0_92 = arith.constant 0 : index
    %146 = vector.load %arg12[%c18, %c0_91, %c0_92] : memref<36x50x20xbf16, #tpu.memory_space<vmem>>, vector<1x50x20xbf16>
    %147 = vector.shape_cast %146 : vector<1x50x20xbf16> to vector<50x20xbf16>
    %148 = vector.extract_strided_slice %54 {offsets = [0, 144], sizes = [20, 8], strides = [1, 1]} : vector<20x288xbf16> to vector<20x8xbf16>
    %cst_93 = arith.constant dense<0.000000e+00> : vector<50x8xf32>
    %149 = tpu.matmul %147, %148, %cst_93 {dimension_numbers = #tpu.dot_dimension_numbers<[1], [0], [0], [1], [0, 0, 1, 1], [], []>} : vector<50x20xbf16>, vector<20x8xbf16>, vector<50x8xf32> -> vector<50x8xf32>
    %150 = arith.addf %145, %149 : vector<50x8xf32>
    %c19 = arith.constant 19 : index
    %c0_94 = arith.constant 0 : index
    %c0_95 = arith.constant 0 : index
    %151 = vector.load %arg12[%c19, %c0_94, %c0_95] : memref<36x50x20xbf16, #tpu.memory_space<vmem>>, vector<1x50x20xbf16>
    %152 = vector.shape_cast %151 : vector<1x50x20xbf16> to vector<50x20xbf16>
    %153 = vector.extract_strided_slice %54 {offsets = [0, 152], sizes = [20, 8], strides = [1, 1]} : vector<20x288xbf16> to vector<20x8xbf16>
    %cst_96 = arith.constant dense<0.000000e+00> : vector<50x8xf32>
    %154 = tpu.matmul %152, %153, %cst_96 {dimension_numbers = #tpu.dot_dimension_numbers<[1], [0], [0], [1], [0, 0, 1, 1], [], []>} : vector<50x20xbf16>, vector<20x8xbf16>, vector<50x8xf32> -> vector<50x8xf32>
    %155 = arith.addf %150, %154 : vector<50x8xf32>
    %c20 = arith.constant 20 : index
    %c0_97 = arith.constant 0 : index
    %c0_98 = arith.constant 0 : index
    %156 = vector.load %arg12[%c20, %c0_97, %c0_98] : memref<36x50x20xbf16, #tpu.memory_space<vmem>>, vector<1x50x20xbf16>
    %157 = vector.shape_cast %156 : vector<1x50x20xbf16> to vector<50x20xbf16>
    %158 = vector.extract_strided_slice %54 {offsets = [0, 160], sizes = [20, 8], strides = [1, 1]} : vector<20x288xbf16> to vector<20x8xbf16>
    %cst_99 = arith.constant dense<0.000000e+00> : vector<50x8xf32>
    %159 = tpu.matmul %157, %158, %cst_99 {dimension_numbers = #tpu.dot_dimension_numbers<[1], [0], [0], [1], [0, 0, 1, 1], [], []>} : vector<50x20xbf16>, vector<20x8xbf16>, vector<50x8xf32> -> vector<50x8xf32>
    %160 = arith.addf %155, %159 : vector<50x8xf32>
    %c21 = arith.constant 21 : index
    %c0_100 = arith.constant 0 : index
    %c0_101 = arith.constant 0 : index
    %161 = vector.load %arg12[%c21, %c0_100, %c0_101] : memref<36x50x20xbf16, #tpu.memory_space<vmem>>, vector<1x50x20xbf16>
    %162 = vector.shape_cast %161 : vector<1x50x20xbf16> to vector<50x20xbf16>
    %163 = vector.extract_strided_slice %54 {offsets = [0, 168], sizes = [20, 8], strides = [1, 1]} : vector<20x288xbf16> to vector<20x8xbf16>
    %cst_102 = arith.constant dense<0.000000e+00> : vector<50x8xf32>
    %164 = tpu.matmul %162, %163, %cst_102 {dimension_numbers = #tpu.dot_dimension_numbers<[1], [0], [0], [1], [0, 0, 1, 1], [], []>} : vector<50x20xbf16>, vector<20x8xbf16>, vector<50x8xf32> -> vector<50x8xf32>
    %165 = arith.addf %160, %164 : vector<50x8xf32>
    %c22 = arith.constant 22 : index
    %c0_103 = arith.constant 0 : index
    %c0_104 = arith.constant 0 : index
    %166 = vector.load %arg12[%c22, %c0_103, %c0_104] : memref<36x50x20xbf16, #tpu.memory_space<vmem>>, vector<1x50x20xbf16>
    %167 = vector.shape_cast %166 : vector<1x50x20xbf16> to vector<50x20xbf16>
    %168 = vector.extract_strided_slice %54 {offsets = [0, 176], sizes = [20, 8], strides = [1, 1]} : vector<20x288xbf16> to vector<20x8xbf16>
    %cst_105 = arith.constant dense<0.000000e+00> : vector<50x8xf32>
    %169 = tpu.matmul %167, %168, %cst_105 {dimension_numbers = #tpu.dot_dimension_numbers<[1], [0], [0], [1], [0, 0, 1, 1], [], []>} : vector<50x20xbf16>, vector<20x8xbf16>, vector<50x8xf32> -> vector<50x8xf32>
    %170 = arith.addf %165, %169 : vector<50x8xf32>
    %c23 = arith.constant 23 : index
    %c0_106 = arith.constant 0 : index
    %c0_107 = arith.constant 0 : index
    %171 = vector.load %arg12[%c23, %c0_106, %c0_107] : memref<36x50x20xbf16, #tpu.memory_space<vmem>>, vector<1x50x20xbf16>
    %172 = vector.shape_cast %171 : vector<1x50x20xbf16> to vector<50x20xbf16>
    %173 = vector.extract_strided_slice %54 {offsets = [0, 184], sizes = [20, 8], strides = [1, 1]} : vector<20x288xbf16> to vector<20x8xbf16>
    %cst_108 = arith.constant dense<0.000000e+00> : vector<50x8xf32>
    %174 = tpu.matmul %172, %173, %cst_108 {dimension_numbers = #tpu.dot_dimension_numbers<[1], [0], [0], [1], [0, 0, 1, 1], [], []>} : vector<50x20xbf16>, vector<20x8xbf16>, vector<50x8xf32> -> vector<50x8xf32>
    %175 = arith.addf %170, %174 : vector<50x8xf32>
    %c24 = arith.constant 24 : index
    %c0_109 = arith.constant 0 : index
    %c0_110 = arith.constant 0 : index
    %176 = vector.load %arg12[%c24, %c0_109, %c0_110] : memref<36x50x20xbf16, #tpu.memory_space<vmem>>, vector<1x50x20xbf16>
    %177 = vector.shape_cast %176 : vector<1x50x20xbf16> to vector<50x20xbf16>
    %178 = vector.extract_strided_slice %54 {offsets = [0, 192], sizes = [20, 8], strides = [1, 1]} : vector<20x288xbf16> to vector<20x8xbf16>
    %cst_111 = arith.constant dense<0.000000e+00> : vector<50x8xf32>
    %179 = tpu.matmul %177, %178, %cst_111 {dimension_numbers = #tpu.dot_dimension_numbers<[1], [0], [0], [1], [0, 0, 1, 1], [], []>} : vector<50x20xbf16>, vector<20x8xbf16>, vector<50x8xf32> -> vector<50x8xf32>
    %180 = arith.addf %175, %179 : vector<50x8xf32>
    %c25 = arith.constant 25 : index
    %c0_112 = arith.constant 0 : index
    %c0_113 = arith.constant 0 : index
    %181 = vector.load %arg12[%c25, %c0_112, %c0_113] : memref<36x50x20xbf16, #tpu.memory_space<vmem>>, vector<1x50x20xbf16>
    %182 = vector.shape_cast %181 : vector<1x50x20xbf16> to vector<50x20xbf16>
    %183 = vector.extract_strided_slice %54 {offsets = [0, 200], sizes = [20, 8], strides = [1, 1]} : vector<20x288xbf16> to vector<20x8xbf16>
    %cst_114 = arith.constant dense<0.000000e+00> : vector<50x8xf32>
    %184 = tpu.matmul %182, %183, %cst_114 {dimension_numbers = #tpu.dot_dimension_numbers<[1], [0], [0], [1], [0, 0, 1, 1], [], []>} : vector<50x20xbf16>, vector<20x8xbf16>, vector<50x8xf32> -> vector<50x8xf32>
    %185 = arith.addf %180, %184 : vector<50x8xf32>
    %c26 = arith.constant 26 : index
    %c0_115 = arith.constant 0 : index
    %c0_116 = arith.constant 0 : index
    %186 = vector.load %arg12[%c26, %c0_115, %c0_116] : memref<36x50x20xbf16, #tpu.memory_space<vmem>>, vector<1x50x20xbf16>
    %187 = vector.shape_cast %186 : vector<1x50x20xbf16> to vector<50x20xbf16>
    %188 = vector.extract_strided_slice %54 {offsets = [0, 208], sizes = [20, 8], strides = [1, 1]} : vector<20x288xbf16> to vector<20x8xbf16>
    %cst_117 = arith.constant dense<0.000000e+00> : vector<50x8xf32>
    %189 = tpu.matmul %187, %188, %cst_117 {dimension_numbers = #tpu.dot_dimension_numbers<[1], [0], [0], [1], [0, 0, 1, 1], [], []>} : vector<50x20xbf16>, vector<20x8xbf16>, vector<50x8xf32> -> vector<50x8xf32>
    %190 = arith.addf %185, %189 : vector<50x8xf32>
    %c27 = arith.constant 27 : index
    %c0_118 = arith.constant 0 : index
    %c0_119 = arith.constant 0 : index
    %191 = vector.load %arg12[%c27, %c0_118, %c0_119] : memref<36x50x20xbf16, #tpu.memory_space<vmem>>, vector<1x50x20xbf16>
    %192 = vector.shape_cast %191 : vector<1x50x20xbf16> to vector<50x20xbf16>
    %193 = vector.extract_strided_slice %54 {offsets = [0, 216], sizes = [20, 8], strides = [1, 1]} : vector<20x288xbf16> to vector<20x8xbf16>
    %cst_120 = arith.constant dense<0.000000e+00> : vector<50x8xf32>
    %194 = tpu.matmul %192, %193, %cst_120 {dimension_numbers = #tpu.dot_dimension_numbers<[1], [0], [0], [1], [0, 0, 1, 1], [], []>} : vector<50x20xbf16>, vector<20x8xbf16>, vector<50x8xf32> -> vector<50x8xf32>
    %195 = arith.addf %190, %194 : vector<50x8xf32>
    %c28 = arith.constant 28 : index
    %c0_121 = arith.constant 0 : index
    %c0_122 = arith.constant 0 : index
    %196 = vector.load %arg12[%c28, %c0_121, %c0_122] : memref<36x50x20xbf16, #tpu.memory_space<vmem>>, vector<1x50x20xbf16>
    %197 = vector.shape_cast %196 : vector<1x50x20xbf16> to vector<50x20xbf16>
    %198 = vector.extract_strided_slice %54 {offsets = [0, 224], sizes = [20, 8], strides = [1, 1]} : vector<20x288xbf16> to vector<20x8xbf16>
    %cst_123 = arith.constant dense<0.000000e+00> : vector<50x8xf32>
    %199 = tpu.matmul %197, %198, %cst_123 {dimension_numbers = #tpu.dot_dimension_numbers<[1], [0], [0], [1], [0, 0, 1, 1], [], []>} : vector<50x20xbf16>, vector<20x8xbf16>, vector<50x8xf32> -> vector<50x8xf32>
    %200 = arith.addf %195, %199 : vector<50x8xf32>
    %c29 = arith.constant 29 : index
    %c0_124 = arith.constant 0 : index
    %c0_125 = arith.constant 0 : index
    %201 = vector.load %arg12[%c29, %c0_124, %c0_125] : memref<36x50x20xbf16, #tpu.memory_space<vmem>>, vector<1x50x20xbf16>
    %202 = vector.shape_cast %201 : vector<1x50x20xbf16> to vector<50x20xbf16>
    %203 = vector.extract_strided_slice %54 {offsets = [0, 232], sizes = [20, 8], strides = [1, 1]} : vector<20x288xbf16> to vector<20x8xbf16>
    %cst_126 = arith.constant dense<0.000000e+00> : vector<50x8xf32>
    %204 = tpu.matmul %202, %203, %cst_126 {dimension_numbers = #tpu.dot_dimension_numbers<[1], [0], [0], [1], [0, 0, 1, 1], [], []>} : vector<50x20xbf16>, vector<20x8xbf16>, vector<50x8xf32> -> vector<50x8xf32>
    %205 = arith.addf %200, %204 : vector<50x8xf32>
    %c30 = arith.constant 30 : index
    %c0_127 = arith.constant 0 : index
    %c0_128 = arith.constant 0 : index
    %206 = vector.load %arg12[%c30, %c0_127, %c0_128] : memref<36x50x20xbf16, #tpu.memory_space<vmem>>, vector<1x50x20xbf16>
    %207 = vector.shape_cast %206 : vector<1x50x20xbf16> to vector<50x20xbf16>
    %208 = vector.extract_strided_slice %54 {offsets = [0, 240], sizes = [20, 8], strides = [1, 1]} : vector<20x288xbf16> to vector<20x8xbf16>
    %cst_129 = arith.constant dense<0.000000e+00> : vector<50x8xf32>
    %209 = tpu.matmul %207, %208, %cst_129 {dimension_numbers = #tpu.dot_dimension_numbers<[1], [0], [0], [1], [0, 0, 1, 1], [], []>} : vector<50x20xbf16>, vector<20x8xbf16>, vector<50x8xf32> -> vector<50x8xf32>
    %210 = arith.addf %205, %209 : vector<50x8xf32>
    %c31 = arith.constant 31 : index
    %c0_130 = arith.constant 0 : index
    %c0_131 = arith.constant 0 : index
    %211 = vector.load %arg12[%c31, %c0_130, %c0_131] : memref<36x50x20xbf16, #tpu.memory_space<vmem>>, vector<1x50x20xbf16>
    %212 = vector.shape_cast %211 : vector<1x50x20xbf16> to vector<50x20xbf16>
    %213 = vector.extract_strided_slice %54 {offsets = [0, 248], sizes = [20, 8], strides = [1, 1]} : vector<20x288xbf16> to vector<20x8xbf16>
    %cst_132 = arith.constant dense<0.000000e+00> : vector<50x8xf32>
    %214 = tpu.matmul %212, %213, %cst_132 {dimension_numbers = #tpu.dot_dimension_numbers<[1], [0], [0], [1], [0, 0, 1, 1], [], []>} : vector<50x20xbf16>, vector<20x8xbf16>, vector<50x8xf32> -> vector<50x8xf32>
    %215 = arith.addf %210, %214 : vector<50x8xf32>
    %c32 = arith.constant 32 : index
    %c0_133 = arith.constant 0 : index
    %c0_134 = arith.constant 0 : index
    %216 = vector.load %arg12[%c32, %c0_133, %c0_134] : memref<36x50x20xbf16, #tpu.memory_space<vmem>>, vector<1x50x20xbf16>
    %217 = vector.shape_cast %216 : vector<1x50x20xbf16> to vector<50x20xbf16>
    %218 = vector.extract_strided_slice %54 {offsets = [0, 256], sizes = [20, 8], strides = [1, 1]} : vector<20x288xbf16> to vector<20x8xbf16>
    %cst_135 = arith.constant dense<0.000000e+00> : vector<50x8xf32>
    %219 = tpu.matmul %217, %218, %cst_135 {dimension_numbers = #tpu.dot_dimension_numbers<[1], [0], [0], [1], [0, 0, 1, 1], [], []>} : vector<50x20xbf16>, vector<20x8xbf16>, vector<50x8xf32> -> vector<50x8xf32>
    %220 = arith.addf %215, %219 : vector<50x8xf32>
    %c33 = arith.constant 33 : index
    %c0_136 = arith.constant 0 : index
    %c0_137 = arith.constant 0 : index
    %221 = vector.load %arg12[%c33, %c0_136, %c0_137] : memref<36x50x20xbf16, #tpu.memory_space<vmem>>, vector<1x50x20xbf16>
    %222 = vector.shape_cast %221 : vector<1x50x20xbf16> to vector<50x20xbf16>
    %223 = vector.extract_strided_slice %54 {offsets = [0, 264], sizes = [20, 8], strides = [1, 1]} : vector<20x288xbf16> to vector<20x8xbf16>
    %cst_138 = arith.constant dense<0.000000e+00> : vector<50x8xf32>
    %224 = tpu.matmul %222, %223, %cst_138 {dimension_numbers = #tpu.dot_dimension_numbers<[1], [0], [0], [1], [0, 0, 1, 1], [], []>} : vector<50x20xbf16>, vector<20x8xbf16>, vector<50x8xf32> -> vector<50x8xf32>
    %225 = arith.addf %220, %224 : vector<50x8xf32>
    %c34 = arith.constant 34 : index
    %c0_139 = arith.constant 0 : index
    %c0_140 = arith.constant 0 : index
    %226 = vector.load %arg12[%c34, %c0_139, %c0_140] : memref<36x50x20xbf16, #tpu.memory_space<vmem>>, vector<1x50x20xbf16>
    %227 = vector.shape_cast %226 : vector<1x50x20xbf16> to vector<50x20xbf16>
    %228 = vector.extract_strided_slice %54 {offsets = [0, 272], sizes = [20, 8], strides = [1, 1]} : vector<20x288xbf16> to vector<20x8xbf16>
    %cst_141 = arith.constant dense<0.000000e+00> : vector<50x8xf32>
    %229 = tpu.matmul %227, %228, %cst_141 {dimension_numbers = #tpu.dot_dimension_numbers<[1], [0], [0], [1], [0, 0, 1, 1], [], []>} : vector<50x20xbf16>, vector<20x8xbf16>, vector<50x8xf32> -> vector<50x8xf32>
    %230 = arith.addf %225, %229 : vector<50x8xf32>
    %c35 = arith.constant 35 : index
    %c0_142 = arith.constant 0 : index
    %c0_143 = arith.constant 0 : index
    %231 = vector.load %arg12[%c35, %c0_142, %c0_143] : memref<36x50x20xbf16, #tpu.memory_space<vmem>>, vector<1x50x20xbf16>
    %232 = vector.shape_cast %231 : vector<1x50x20xbf16> to vector<50x20xbf16>
    %233 = vector.extract_strided_slice %54 {offsets = [0, 280], sizes = [20, 8], strides = [1, 1]} : vector<20x288xbf16> to vector<20x8xbf16>
    %cst_144 = arith.constant dense<0.000000e+00> : vector<50x8xf32>
    %234 = tpu.matmul %232, %233, %cst_144 {dimension_numbers = #tpu.dot_dimension_numbers<[1], [0], [0], [1], [0, 0, 1, 1], [], []>} : vector<50x20xbf16>, vector<20x8xbf16>, vector<50x8xf32> -> vector<50x8xf32>
    %235 = arith.addf %230, %234 : vector<50x8xf32>
    %c0_145 = arith.constant 0 : index
    %c0_146 = arith.constant 0 : index
    %236 = vector.load %arg13[%c0_145, %c0_146] : memref<50x1xf32, #tpu.memory_space<vmem>>, vector<50x1xf32>
    %237 = vector.broadcast %236 : vector<50x1xf32> to vector<50x8xf32>
    %238 = arith.addf %235, %237 : vector<50x8xf32>
    %cst_147 = arith.constant 0.000000e+00 : f32
    %239 = vector.broadcast %cst_147 : f32 to vector<50x8xf32>
    %240 = arith.maximumf %238, %239 : vector<50x8xf32>
    %241 = arith.truncf %240 : vector<50x8xf32> to vector<50x8xbf16>
    %c0_148 = arith.constant 0 : index
    %c0_149 = arith.constant 0 : index
    %242 = vector.load %arg14[%c0_148, %c0_149] : memref<20x50xbf16, #tpu.memory_space<vmem>>, vector<20x50xbf16>
    %cst_150 = arith.constant dense<0.000000e+00> : vector<20x8xf32>
    %243 = tpu.matmul %242, %241, %cst_150 {dimension_numbers = #tpu.dot_dimension_numbers<[1], [0], [0], [1], [0, 0, 1, 1], [], []>} : vector<20x50xbf16>, vector<50x8xbf16>, vector<20x8xf32> -> vector<20x8xf32>
    %c0_151 = arith.constant 0 : index
    %c0_152 = arith.constant 0 : index
    %244 = vector.load %arg15[%c0_151, %c0_152] : memref<20x1xf32, #tpu.memory_space<vmem>>, vector<20x1xf32>
    %245 = vector.broadcast %244 : vector<20x1xf32> to vector<20x8xf32>
    %246 = arith.addf %243, %245 : vector<20x8xf32>
    %c0_153 = arith.constant 0 : index
    %c0_154 = arith.constant 0 : index
    %c0_155 = arith.constant 0 : index
    %247 = vector.load %arg16[%c0_153, %c0_154, %c0_155] : memref<1x20x8xf32, #tpu.memory_space<vmem>>, vector<1x20x8xf32>
    %248 = vector.shape_cast %247 : vector<1x20x8xf32> to vector<20x8xf32>
    %249 = vector.shape_cast %246 : vector<20x8xf32> to vector<1x20x8xf32>
    tpu.vector_store %arg16[%c0_153, %c0_154, %c0_155], %249 {strides = array<i32>} : memref<1x20x8xf32, #tpu.memory_space<vmem>>, vector<1x20x8xf32>,
    return
  }
  func.func @transform_0(%arg0: i32) -> (i32, i32, i32) {
    %c0_i32 = arith.constant 0 : i32
    %c0_i32_0 = arith.constant 0 : i32
    %c0_i32_1 = arith.constant 0 : i32
    return %arg0, %c0_i32, %c0_i32_0 : i32, i32, i32
  }
  func.func @transform_1(%arg0: i32) -> (i32, i32) {
    %c0_i32 = arith.constant 0 : i32
    %c0_i32_0 = arith.constant 0 : i32
    %c0_i32_1 = arith.constant 0 : i32
    return %c0_i32, %c0_i32_0 : i32, i32
  }
  func.func @transform_2(%arg0: i32) -> (i32, i32) {
    %c0_i32 = arith.constant 0 : i32
    %c0_i32_0 = arith.constant 0 : i32
    %c0_i32_1 = arith.constant 0 : i32
    return %c0_i32, %c0_i32_0 : i32, i32
  }
  func.func @transform_3(%arg0: i32) -> (i32, i32) {
    %c0_i32 = arith.constant 0 : i32
    %c0_i32_0 = arith.constant 0 : i32
    %c0_i32_1 = arith.constant 0 : i32
    return %c0_i32, %c0_i32_0 : i32, i32
  }
  func.func @transform_4(%arg0: i32) -> (i32, i32) {
    %c0_i32 = arith.constant 0 : i32
    %c0_i32_0 = arith.constant 0 : i32
    %c0_i32_1 = arith.constant 0 : i32
    return %c0_i32, %c0_i32_0 : i32, i32
  }
  func.func @transform_5(%arg0: i32) -> (i32, i32) {
    %c0_i32 = arith.constant 0 : i32
    %c0_i32_0 = arith.constant 0 : i32
    %c0_i32_1 = arith.constant 0 : i32
    return %c0_i32, %c0_i32_0 : i32, i32
  }
  func.func @transform_6(%arg0: i32) -> (i32, i32) {
    %c0_i32 = arith.constant 0 : i32
    %c0_i32_0 = arith.constant 0 : i32
    %c0_i32_1 = arith.constant 0 : i32
    return %c0_i32, %c0_i32_0 : i32, i32
  }
  func.func @transform_7(%arg0: i32) -> (i32, i32) {
    %c0_i32 = arith.constant 0 : i32
    %c0_i32_0 = arith.constant 0 : i32
    %c0_i32_1 = arith.constant 0 : i32
    return %c0_i32, %c0_i32_0 : i32, i32
  }
  func.func @transform_8(%arg0: i32) -> (i32, i32) {
    %c0_i32 = arith.constant 0 : i32
    %c0_i32_0 = arith.constant 0 : i32
    %c0_i32_1 = arith.constant 0 : i32
    return %c0_i32, %c0_i32_0 : i32, i32
  }
  func.func @transform_9(%arg0: i32) -> (i32, i32) {
    %c0_i32 = arith.constant 0 : i32
    %c0_i32_0 = arith.constant 0 : i32
    %c0_i32_1 = arith.constant 0 : i32
    return %c0_i32, %c0_i32_0 : i32, i32
  }
  func.func @transform_10(%arg0: i32) -> (i32, i32) {
    %c0_i32 = arith.constant 0 : i32
    %c0_i32_0 = arith.constant 0 : i32
    %c0_i32_1 = arith.constant 0 : i32
    return %c0_i32, %c0_i32_0 : i32, i32
  }
  func.func @transform_11(%arg0: i32) -> (i32, i32, i32) {
    %c0_i32 = arith.constant 0 : i32
    %c0_i32_0 = arith.constant 0 : i32
    %c0_i32_1 = arith.constant 0 : i32
    %c0_i32_2 = arith.constant 0 : i32
    return %c0_i32, %c0_i32_0, %c0_i32_1 : i32, i32, i32
  }
  func.func @transform_12(%arg0: i32) -> (i32, i32) {
    %c0_i32 = arith.constant 0 : i32
    %c0_i32_0 = arith.constant 0 : i32
    %c0_i32_1 = arith.constant 0 : i32
    return %c0_i32, %c0_i32_0 : i32, i32
  }
  func.func @transform_13(%arg0: i32) -> (i32, i32) {
    %c0_i32 = arith.constant 0 : i32
    %c0_i32_0 = arith.constant 0 : i32
    %c0_i32_1 = arith.constant 0 : i32
    return %c0_i32, %c0_i32_0 : i32, i32
  }
  func.func @transform_14(%arg0: i32) -> (i32, i32) {
    %c0_i32 = arith.constant 0 : i32
    %c0_i32_0 = arith.constant 0 : i32
    %c0_i32_1 = arith.constant 0 : i32
    return %c0_i32, %c0_i32_0 : i32, i32
  }
  func.func @transform_15(%arg0: i32) -> (i32, i32, i32) {
    %c0_i32 = arith.constant 0 : i32
    %c0_i32_0 = arith.constant 0 : i32
    %c0_i32_1 = arith.constant 0 : i32
    return %arg0, %c0_i32, %c0_i32_0 : i32, i32, i32
  }
}

</mosaic_0001>

<llo_original>
// kernel: _lambda_.2
$region0: #{_lambda_.2}
  #allocation0 [shape = 'u32[]', space=smem, size = 0x4, offset = 0x4, fixed_abs, tag = 'smem constant byte address 0x4 - core index']
  #allocation1 [shape = 'u32[144,128]{1,0:T(1,128)}', space=vmem, size = 0x12000, scoped, tag = 'internal scratch']
  #allocation2 [shape = 'f32[1,1]{1,0:T(1,128)S(1)}', space=vmem, size = 0x200, scoped, tag = 'scoped memory for _lambda_.2']
  %s0 = inlined_call_operand.vmem [shape: bf16[1,25,8192], index: 0, kind: input, shape index: {}]
  %s1 = inlined_call_operand.vmem [shape: bf16[10,25], index: 1, kind: input, shape index: {}]
  %s2 = inlined_call_operand.vmem [shape: f32[10,1], index: 2, kind: input, shape index: {}]
  %s3 = inlined_call_operand.vmem [shape: f32[5,10], index: 3, kind: input, shape index: {}]
  %s4 = inlined_call_operand.vmem [shape: f32[5,1], index: 4, kind: input, shape index: {}]
  %s5 = inlined_call_operand.vmem [shape: f32[10,5], index: 5, kind: input, shape index: {}]
  %s6 = inlined_call_operand.vmem [shape: f32[10,1], index: 6, kind: input, shape index: {}]
  %s7 = inlined_call_operand.vmem [shape: f32[1,10], index: 7, kind: input, shape index: {}]
  %s8 = inlined_call_operand.<no memory space> [shape: f32[1,1], index: 8, kind: input, shape index: {}]
  %s9 = inlined_call_operand.vmem [shape: f32[2048,8], index: 9, kind: input, shape index: {}]
  %s10 = inlined_call_operand.vmem [shape: f32[8,2048], index: 10, kind: input, shape index: {}]
  %s11 = inlined_call_operand.vmem [shape: bf16[1,10,2048], index: 11, kind: output, shape index: {}]
  %s12 = sld [smem:[#allocation0]]
  $region54: #{_lambda_.2} parent=0
    _
  %s14 = ssub.s32 1, %s12
  %s15 = scalar_select 0, %s14, %s12
  %v16 = vstv %s8
  %17 = vst [vmem:[#allocation2] sm:$0x1] %v16
  // Predicated region
  $region2: #{_lambda_.2} parent=0 // pred_check
    _
  $region3: #{_lambda_.2} parent=0 // pred_check_branch
    %19 = sbr.rel (0) target = $region5
  $region4: #{_lambda_.2} parent=0 // pred_region
    _
  $region5: #{_lambda_.2} parent=0 // pred_fallthru
    _
  // Predicated region
  $region6: #{_lambda_.2} parent=0 // pred_check
    _
  $region7: #{_lambda_.2} parent=0 // pred_check_branch
    %21 = sbr.rel (0) target = $region9
  $region8: #{_lambda_.2} parent=0 // pred_region
    _
  $region9: #{_lambda_.2} parent=0 // pred_fallthru
    _
  // Predicated region
  $region10: #{_lambda_.2} parent=0 // pred_check
    _
  $region11: #{_lambda_.2} parent=0 // pred_check_branch
    %23 = sbr.rel (0) target = $region13
  $region12: #{_lambda_.2} parent=0 // pred_region
    _
  $region13: #{_lambda_.2} parent=0 // pred_fallthru
    _
  // Predicated region
  $region14: #{_lambda_.2} parent=0 // pred_check
    _
  $region15: #{_lambda_.2} parent=0 // pred_check_branch
    %25 = sbr.rel (0) target = $region17
  $region16: #{_lambda_.2} parent=0 // pred_region
    _
  $region17: #{_lambda_.2} parent=0 // pred_fallthru
    _
  // Predicated region
  $region18: #{_lambda_.2} parent=0 // pred_check
    _
  $region19: #{_lambda_.2} parent=0 // pred_check_branch
    %27 = sbr.rel (0) target = $region21
  $region20: #{_lambda_.2} parent=0 // pred_region
    _
  $region21: #{_lambda_.2} parent=0 // pred_fallthru
    _
  // Predicated region
  $region22: #{_lambda_.2} parent=0 // pred_check
    _
  $region23: #{_lambda_.2} parent=0 // pred_check_branch
    %29 = sbr.rel (0) target = $region25
  $region24: #{_lambda_.2} parent=0 // pred_region
    _
  $region25: #{_lambda_.2} parent=0 // pred_fallthru
    _
  // Predicated region
  $region26: #{_lambda_.2} parent=0 // pred_check
    _
  $region27: #{_lambda_.2} parent=0 // pred_check_branch
    %31 = sbr.rel (0) target = $region29
  $region28: #{_lambda_.2} parent=0 // pred_region
    _
  $region29: #{_lambda_.2} parent=0 // pred_fallthru
    _
  // Predicated region
  $region30: #{_lambda_.2} parent=0 // pred_check
    _
  $region31: #{_lambda_.2} parent=0 // pred_check_branch
    %33 = sbr.rel (0) target = $region33
  $region32: #{_lambda_.2} parent=0 // pred_region
    _
  $region33: #{_lambda_.2} parent=0 // pred_fallthru
    _
  // Predicated region
  $region34: #{_lambda_.2} parent=0 // pred_check
    _
  $region35: #{_lambda_.2} parent=0 // pred_check_branch
    %35 = sbr.rel (0) target = $region37
  $region36: #{_lambda_.2} parent=0 // pred_region
    _
  $region37: #{_lambda_.2} parent=0 // pred_fallthru
    _
  // Predicated region
  $region38: #{_lambda_.2} parent=0 // pred_check
    _
  $region39: #{_lambda_.2} parent=0 // pred_check_branch
    %37 = sbr.rel (0) target = $region41
  $region40: #{_lambda_.2} parent=0 // pred_region
    _
  $region41: #{_lambda_.2} parent=0 // pred_fallthru
    _
  // Predicated region
  $region42: #{_lambda_.2} parent=0 // pred_check
    _
  $region43: #{_lambda_.2} parent=0 // pred_check_branch
    %39 = sbr.rel (0) target = $region45
  $region44: #{_lambda_.2} parent=0 // pred_region
    _
  $region45: #{_lambda_.2} parent=0 // pred_fallthru
    _
  %v41 = vld [vmem:[%s1] sm:$0xf]
  %v42 = vld [vmem:[%s1 + $0x4] sm:$0x1]
  %v43 = vld [vmem:[%s0] sm:$0xff]
  %v44 = vld [vmem:[%s0 + $0x8] sm:$0xff]
  %v45 = vld [vmem:[%s0 + $0x10] sm:$0xff]
  %v46 = vld [vmem:[%s0 + $0x18] sm:$0xff]
  %v47 = vld [vmem:[%s0 + $0x20] sm:$0xff]
  %v48 = vld [vmem:[%s0 + $0x28] sm:$0xff]
  %v49 = vld [vmem:[%s0 + $0x30] sm:$0xff]
  %v50 = vld [vmem:[%s0 + $0x38] sm:$0xff]
  %v51 = vld [vmem:[%s0 + $0x40] sm:$0xff]
  %v52 = vld [vmem:[%s0 + $0x48] sm:$0xff]
  %v53 = vld [vmem:[%s0 + $0x50] sm:$0xff]
  %v54 = vld [vmem:[%s0 + $0x58] sm:$0xff]
  %v55 = vld [vmem:[%s0 + $0x60] sm:$0xff]
  %v56 = vld [vmem:[%s0 + $0x68] sm:$0xff]
  %v57 = vld [vmem:[%s0 + $0x70] sm:$0xff]
  %v58 = vld [vmem:[%s0 + $0x78] sm:$0xff]
  %v59 = vld [vmem:[%s0 + $0x80] sm:$0xff]
  %v60 = vld [vmem:[%s0 + $0x88] sm:$0xff]
  %v61 = vld [vmem:[%s0 + $0x90] sm:$0xff]
  %v62 = vld [vmem:[%s0 + $0x98] sm:$0xff]
  %v63 = vld [vmem:[%s0 + $0xa0] sm:$0xff]
  %v64 = vld [vmem:[%s0 + $0xa8] sm:$0xff]
  %v65 = vld [vmem:[%s0 + $0xb0] sm:$0xff]
  %v66 = vld [vmem:[%s0 + $0xb8] sm:$0xff]
  %v67 = vld [vmem:[%s0 + $0xc0] sm:$0xff]
  %v68 = vld [vmem:[%s0 + $0xc8] sm:$0xff]
  %v69 = vld [vmem:[%s0 + $0xd0] sm:$0xff]
  %v70 = vld [vmem:[%s0 + $0xd8] sm:$0xff]
  %v71 = vld [vmem:[%s0 + $0xe0] sm:$0xff]
  %v72 = vld [vmem:[%s0 + $0xe8] sm:$0xff]
  %v73 = vld [vmem:[%s0 + $0xf0] sm:$0xff]
  %v74 = vld [vmem:[%s0 + $0xf8] sm:$0xff]
  %v75 = vld [vmem:[%s0 + $0x100] sm:$0xff]
  %v76 = vld [vmem:[%s0 + $0x108] sm:$0xff]
  %v77 = vld [vmem:[%s0 + $0x110] sm:$0xff]
  %v78 = vld [vmem:[%s0 + $0x118] sm:$0xff]
  %v79 = vld [vmem:[%s0 + $0x120] sm:$0xff]
  %v80 = vld [vmem:[%s0 + $0x128] sm:$0xff]
  %v81 = vld [vmem:[%s0 + $0x130] sm:$0xff]
  %v82 = vld [vmem:[%s0 + $0x138] sm:$0xff]
  %v83 = vld [vmem:[%s0 + $0x140] sm:$0xff]
  %v84 = vld [vmem:[%s0 + $0x148] sm:$0xff]
  %v85 = vld [vmem:[%s0 + $0x150] sm:$0xff]
  %v86 = vld [vmem:[%s0 + $0x158] sm:$0xff]
  %v87 = vld [vmem:[%s0 + $0x160] sm:$0xff]
  %v88 = vld [vmem:[%s0 + $0x168] sm:$0xff]
  %v89 = vld [vmem:[%s0 + $0x170] sm:$0xff]
  %v90 = vld [vmem:[%s0 + $0x178] sm:$0xff]
  %v91 = vld [vmem:[%s0 + $0x180] sm:$0xff]
  %v92 = vld [vmem:[%s0 + $0x188] sm:$0xff]
  %v93 = vld [vmem:[%s0 + $0x190] sm:$0xff]
  %v94 = vld [vmem:[%s0 + $0x198] sm:$0xff]
  %v95 = vld [vmem:[%s0 + $0x1a0] sm:$0xff]
  %v96 = vld [vmem:[%s0 + $0x1a8] sm:$0xff]
  %v97 = vld [vmem:[%s0 + $0x1b0] sm:$0xff]
  %v98 = vld [vmem:[%s0 + $0x1b8] sm:$0xff]
  %v99 = vld [vmem:[%s0 + $0x1c0] sm:$0xff]
  %v100 = vld [vmem:[%s0 + $0x1c8] sm:$0xff]
  %v101 = vld [vmem:[%s0 + $0x1d0] sm:$0xff]
  %v102 = vld [vmem:[%s0 + $0x1d8] sm:$0xff]
  %v103 = vld [vmem:[%s0 + $0x1e0] sm:$0xff]
  %v104 = vld [vmem:[%s0 + $0x1e8] sm:$0xff]
  %v105 = vld [vmem:[%s0 + $0x1f0] sm:$0xff]
  %v106 = vld [vmem:[%s0 + $0x1f8] sm:$0xff]
  %v107 = vld [vmem:[%s0 + $0x200] sm:$0xff]
  %v108 = vld [vmem:[%s0 + $0x208] sm:$0xff]
  %v109 = vld [vmem:[%s0 + $0x210] sm:$0xff]
  %v110 = vld [vmem:[%s0 + $0x218] sm:$0xff]
  %v111 = vld [vmem:[%s0 + $0x220] sm:$0xff]
  %v112 = vld [vmem:[%s0 + $0x228] sm:$0xff]
  %v113 = vld [vmem:[%s0 + $0x230] sm:$0xff]
  %v114 = vld [vmem:[%s0 + $0x238] sm:$0xff]
  %v115 = vld [vmem:[%s0 + $0x240] sm:$0xff]
  %v116 = vld [vmem:[%s0 + $0x248] sm:$0xff]
  %v117 = vld [vmem:[%s0 + $0x250] sm:$0xff]
  %v118 = vld [vmem:[%s0 + $0x258] sm:$0xff]
  %v119 = vld [vmem:[%s0 + $0x260] sm:$0xff]
  %v120 = vld [vmem:[%s0 + $0x268] sm:$0xff]
  %v121 = vld [vmem:[%s0 + $0x270] sm:$0xff]
  %v122 = vld [vmem:[%s0 + $0x278] sm:$0xff]
  %v123 = vld [vmem:[%s0 + $0x280] sm:$0xff]
  %v124 = vld [vmem:[%s0 + $0x288] sm:$0xff]
  %v125 = vld [vmem:[%s0 + $0x290] sm:$0xff]
  %v126 = vld [vmem:[%s0 + $0x298] sm:$0xff]
  %v127 = vld [vmem:[%s0 + $0x2a0] sm:$0xff]
  %v128 = vld [vmem:[%s0 + $0x2a8] sm:$0xff]
  %v129 = vld [vmem:[%s0 + $0x2b0] sm:$0xff]
  %v130 = vld [vmem:[%s0 + $0x2b8] sm:$0xff]
  %v131 = vld [vmem:[%s0 + $0x2c0] sm:$0xff]
  %v132 = vld [vmem:[%s0 + $0x2c8] sm:$0xff]
  %v133 = vld [vmem:[%s0 + $0x2d0] sm:$0xff]
  %v134 = vld [vmem:[%s0 + $0x2d8] sm:$0xff]
  %v135 = vld [vmem:[%s0 + $0x2e0] sm:$0xff]
  %v136 = vld [vmem:[%s0 + $0x2e8] sm:$0xff]
  %v137 = vld [vmem:[%s0 + $0x2f0] sm:$0xff]
  %v138 = vld [vmem:[%s0 + $0x2f8] sm:$0xff]
  %v139 = vld [vmem:[%s0 + $0x300] sm:$0x11]
  %v140 = vld [vmem:[%s0 + $0x308] sm:$0x11]
  %v141 = vld [vmem:[%s0 + $0x310] sm:$0x11]
  %v142 = vld [vmem:[%s0 + $0x318] sm:$0x11]
  %v143 = vld [vmem:[%s0 + $0x320] sm:$0x11]
  %v144 = vld [vmem:[%s0 + $0x328] sm:$0x11]
  %v145 = vld [vmem:[%s0 + $0x330] sm:$0x11]
  %v146 = vld [vmem:[%s0 + $0x338] sm:$0x11]
  %v147 = vld [vmem:[%s0 + $0x340] sm:$0x11]
  %v148 = vld [vmem:[%s0 + $0x348] sm:$0x11]
  %v149 = vld [vmem:[%s0 + $0x350] sm:$0x11]
  %v150 = vld [vmem:[%s0 + $0x358] sm:$0x11]
  %v151 = vld [vmem:[%s0 + $0x360] sm:$0x11]
  %v152 = vld [vmem:[%s0 + $0x368] sm:$0x11]
  %v153 = vld [vmem:[%s0 + $0x370] sm:$0x11]
  %v154 = vld [vmem:[%s0 + $0x378] sm:$0x11]
  %v155 = vld [vmem:[%s0 + $0x380] sm:$0x11]
  %v156 = vld [vmem:[%s0 + $0x388] sm:$0x11]
  %v157 = vld [vmem:[%s0 + $0x390] sm:$0x11]
  %v158 = vld [vmem:[%s0 + $0x398] sm:$0x11]
  %v159 = vld [vmem:[%s0 + $0x3a0] sm:$0x11]
  %v160 = vld [vmem:[%s0 + $0x3a8] sm:$0x11]
  %v161 = vld [vmem:[%s0 + $0x3b0] sm:$0x11]
  %v162 = vld [vmem:[%s0 + $0x3b8] sm:$0x11]
  %v163 = vld [vmem:[%s0 + $0x3c0] sm:$0x11]
  %v164 = vld [vmem:[%s0 + $0x3c8] sm:$0x11]
  %v165 = vld [vmem:[%s0 + $0x3d0] sm:$0x11]
  %v166 = vld [vmem:[%s0 + $0x3d8] sm:$0x11]
  %v167 = vld [vmem:[%s0 + $0x3e0] sm:$0x11]
  %v168 = vld [vmem:[%s0 + $0x3e8] sm:$0x11]
  %v169 = vld [vmem:[%s0 + $0x3f0] sm:$0x11]
  %v170 = vld [vmem:[%s0 + $0x3f8] sm:$0x11]
  %v173 = vunpack.c.l.b16 %v41
  %v174 = vunpack.c.l.b16 %v42
  %v175 = vpack.c.b16 %v174, %v173
  %v304 = vunpack.c.l.b16 %v43
  %v305 = vunpack.c.h.b16 %v43
  %v306 = vunpack.c.l.b16 %v44
  %v307 = vunpack.c.h.b16 %v44
  %v308 = vunpack.c.l.b16 %v45
  %v309 = vunpack.c.h.b16 %v45
  %v310 = vunpack.c.l.b16 %v46
  %v311 = vunpack.c.h.b16 %v46
  %v312 = vunpack.c.l.b16 %v47
  %v313 = vunpack.c.h.b16 %v47
  %v314 = vunpack.c.l.b16 %v48
  %v315 = vunpack.c.h.b16 %v48
  %v316 = vunpack.c.l.b16 %v49
  %v317 = vunpack.c.h.b16 %v49
  %v318 = vunpack.c.l.b16 %v50
  %v319 = vunpack.c.h.b16 %v50
  %v320 = vunpack.c.l.b16 %v51
  %v321 = vunpack.c.h.b16 %v51
  %v322 = vunpack.c.l.b16 %v52
  %v323 = vunpack.c.h.b16 %v52
  %v324 = vunpack.c.l.b16 %v53
  %v325 = vunpack.c.h.b16 %v53
  %v326 = vunpack.c.l.b16 %v54
  %v327 = vunpack.c.h.b16 %v54
  %v328 = vunpack.c.l.b16 %v55
  %v329 = vunpack.c.h.b16 %v55
  %v330 = vunpack.c.l.b16 %v56
  %v331 = vunpack.c.h.b16 %v56
  %v332 = vunpack.c.l.b16 %v57
  %v333 = vunpack.c.h.b16 %v57
  %v334 = vunpack.c.l.b16 %v58
  %v335 = vunpack.c.h.b16 %v58
  %v336 = vunpack.c.l.b16 %v59
  %v337 = vunpack.c.h.b16 %v59
  %v338 = vunpack.c.l.b16 %v60
  %v339 = vunpack.c.h.b16 %v60
  %v340 = vunpack.c.l.b16 %v61
  %v341 = vunpack.c.h.b16 %v61
  %v342 = vunpack.c.l.b16 %v62
  %v343 = vunpack.c.h.b16 %v62
  %v344 = vunpack.c.l.b16 %v63
  %v345 = vunpack.c.h.b16 %v63
  %v346 = vunpack.c.l.b16 %v64
  %v347 = vunpack.c.h.b16 %v64
  %v348 = vunpack.c.l.b16 %v65
  %v349 = vunpack.c.h.b16 %v65
  %v350 = vunpack.c.l.b16 %v66
  %v351 = vunpack.c.h.b16 %v66
  %v352 = vunpack.c.l.b16 %v67
  %v353 = vunpack.c.h.b16 %v67
  %v354 = vunpack.c.l.b16 %v68
  %v355 = vunpack.c.h.b16 %v68
  %v356 = vunpack.c.l.b16 %v69
  %v357 = vunpack.c.h.b16 %v69
  %v358 = vunpack.c.l.b16 %v70
  %v359 = vunpack.c.h.b16 %v70
  %v360 = vunpack.c.l.b16 %v71
  %v361 = vunpack.c.h.b16 %v71
  %v362 = vunpack.c.l.b16 %v72
  %v363 = vunpack.c.h.b16 %v72
  %v364 = vunpack.c.l.b16 %v73
  %v365 = vunpack.c.h.b16 %v73
  %v366 = vunpack.c.l.b16 %v74
  %v367 = vunpack.c.h.b16 %v74
  %v368 = vunpack.c.l.b16 %v75
  %v369 = vunpack.c.h.b16 %v75
  %v370 = vunpack.c.l.b16 %v76
  %v371 = vunpack.c.h.b16 %v76
  %v372 = vunpack.c.l.b16 %v77
  %v373 = vunpack.c.h.b16 %v77
  %v374 = vunpack.c.l.b16 %v78
  %v375 = vunpack.c.h.b16 %v78
  %v376 = vunpack.c.l.b16 %v79
  %v377 = vunpack.c.h.b16 %v79
  %v378 = vunpack.c.l.b16 %v80
  %v379 = vunpack.c.h.b16 %v80
  %v380 = vunpack.c.l.b16 %v81
  %v381 = vunpack.c.h.b16 %v81
  %v382 = vunpack.c.l.b16 %v82
  %v383 = vunpack.c.h.b16 %v82
  %v384 = vunpack.c.l.b16 %v83
  %v385 = vunpack.c.h.b16 %v83
  %v386 = vunpack.c.l.b16 %v84
  %v387 = vunpack.c.h.b16 %v84
  %v388 = vunpack.c.l.b16 %v85
  %v389 = vunpack.c.h.b16 %v85
  %v390 = vunpack.c.l.b16 %v86
  %v391 = vunpack.c.h.b16 %v86
  %v392 = vunpack.c.l.b16 %v87
  %v393 = vunpack.c.h.b16 %v87
  %v394 = vunpack.c.l.b16 %v88
  %v395 = vunpack.c.h.b16 %v88
  %v396 = vunpack.c.l.b16 %v89
  %v397 = vunpack.c.h.b16 %v89
  %v398 = vunpack.c.l.b16 %v90
  %v399 = vunpack.c.h.b16 %v90
  %v400 = vunpack.c.l.b16 %v91
  %v401 = vunpack.c.h.b16 %v91
  %v402 = vunpack.c.l.b16 %v92
  %v403 = vunpack.c.h.b16 %v92
  %v404 = vunpack.c.l.b16 %v93
  %v405 = vunpack.c.h.b16 %v93
  %v406 = vunpack.c.l.b16 %v94
  %v407 = vunpack.c.h.b16 %v94
  %v408 = vunpack.c.l.b16 %v95
  %v409 = vunpack.c.h.b16 %v95
  %v410 = vunpack.c.l.b16 %v96
  %v411 = vunpack.c.h.b16 %v96
  %v412 = vunpack.c.l.b16 %v97
  %v413 = vunpack.c.h.b16 %v97
  %v414 = vunpack.c.l.b16 %v98
  %v415 = vunpack.c.h.b16 %v98
  %v416 = vunpack.c.l.b16 %v99
  %v417 = vunpack.c.h.b16 %v99
  %v418 = vunpack.c.l.b16 %v100
  %v419 = vunpack.c.h.b16 %v100
  %v420 = vunpack.c.l.b16 %v101
  %v421 = vunpack.c.h.b16 %v101
  %v422 = vunpack.c.l.b16 %v102
  %v423 = vunpack.c.h.b16 %v102
  %v424 = vunpack.c.l.b16 %v103
  %v425 = vunpack.c.h.b16 %v103
  %v426 = vunpack.c.l.b16 %v104
  %v427 = vunpack.c.h.b16 %v104
  %v428 = vunpack.c.l.b16 %v105
  %v429 = vunpack.c.h.b16 %v105
  %v430 = vunpack.c.l.b16 %v106
  %v431 = vunpack.c.h.b16 %v106
  %v432 = vunpack.c.l.b16 %v107
  %v433 = vunpack.c.h.b16 %v107
  %v434 = vunpack.c.l.b16 %v108
  %v435 = vunpack.c.h.b16 %v108
  %v436 = vunpack.c.l.b16 %v109
  %v437 = vunpack.c.h.b16 %v109
  %v438 = vunpack.c.l.b16 %v110
  %v439 = vunpack.c.h.b16 %v110
  %v440 = vunpack.c.l.b16 %v111
  %v441 = vunpack.c.h.b16 %v111
  %v442 = vunpack.c.l.b16 %v112
  %v443 = vunpack.c.h.b16 %v112
  %v444 = vunpack.c.l.b16 %v113
  %v445 = vunpack.c.h.b16 %v113
  %v446 = vunpack.c.l.b16 %v114
  %v447 = vunpack.c.h.b16 %v114
  %v448 = vunpack.c.l.b16 %v115
  %v449 = vunpack.c.h.b16 %v115
  %v450 = vunpack.c.l.b16 %v116
  %v451 = vunpack.c.h.b16 %v116
  %v452 = vunpack.c.l.b16 %v117
  %v453 = vunpack.c.h.b16 %v117
  %v454 = vunpack.c.l.b16 %v118
  %v455 = vunpack.c.h.b16 %v118
  %v456 = vunpack.c.l.b16 %v119
  %v457 = vunpack.c.h.b16 %v119
  %v458 = vunpack.c.l.b16 %v120
  %v459 = vunpack.c.h.b16 %v120
  %v460 = vunpack.c.l.b16 %v121
  %v461 = vunpack.c.h.b16 %v121
  %v462 = vunpack.c.l.b16 %v122
  %v463 = vunpack.c.h.b16 %v122
  %v464 = vunpack.c.l.b16 %v123
  %v465 = vunpack.c.h.b16 %v123
  %v466 = vunpack.c.l.b16 %v124
  %v467 = vunpack.c.h.b16 %v124
  %v468 = vunpack.c.l.b16 %v125
  %v469 = vunpack.c.h.b16 %v125
  %v470 = vunpack.c.l.b16 %v126
  %v471 = vunpack.c.h.b16 %v126
  %v472 = vunpack.c.l.b16 %v127
  %v473 = vunpack.c.h.b16 %v127
  %v474 = vunpack.c.l.b16 %v128
  %v475 = vunpack.c.h.b16 %v128
  %v476 = vunpack.c.l.b16 %v129
  %v477 = vunpack.c.h.b16 %v129
  %v478 = vunpack.c.l.b16 %v130
  %v479 = vunpack.c.h.b16 %v130
  %v480 = vunpack.c.l.b16 %v131
  %v481 = vunpack.c.h.b16 %v131
  %v482 = vunpack.c.l.b16 %v132
  %v483 = vunpack.c.h.b16 %v132
  %v484 = vunpack.c.l.b16 %v133
  %v485 = vunpack.c.h.b16 %v133
  %v486 = vunpack.c.l.b16 %v134
  %v487 = vunpack.c.h.b16 %v134
  %v488 = vunpack.c.l.b16 %v135
  %v489 = vunpack.c.h.b16 %v135
  %v490 = vunpack.c.l.b16 %v136
  %v491 = vunpack.c.h.b16 %v136
  %v492 = vunpack.c.l.b16 %v137
  %v493 = vunpack.c.h.b16 %v137
  %v494 = vunpack.c.l.b16 %v138
  %v495 = vunpack.c.h.b16 %v138
  %v496 = vunpack.c.l.b16 %v139
  %v497 = vunpack.c.h.b16 %v139
  %v498 = vunpack.c.l.b16 %v140
  %v499 = vunpack.c.h.b16 %v140
  %v500 = vunpack.c.l.b16 %v141
  %v501 = vunpack.c.h.b16 %v141
  %v502 = vunpack.c.l.b16 %v142
  %v503 = vunpack.c.h.b16 %v142
  %v504 = vunpack.c.l.b16 %v143
  %v505 = vunpack.c.h.b16 %v143
  %v506 = vunpack.c.l.b16 %v144
  %v507 = vunpack.c.h.b16 %v144
  %v508 = vunpack.c.l.b16 %v145
  %v509 = vunpack.c.h.b16 %v145
  %v510 = vunpack.c.l.b16 %v146
  %v511 = vunpack.c.h.b16 %v146
  %v512 = vunpack.c.l.b16 %v147
  %v513 = vunpack.c.h.b16 %v147
  %v514 = vunpack.c.l.b16 %v148
  %v515 = vunpack.c.h.b16 %v148
  %v516 = vunpack.c.l.b16 %v149
  %v517 = vunpack.c.h.b16 %v149
  %v518 = vunpack.c.l.b16 %v150
  %v519 = vunpack.c.h.b16 %v150
  %v520 = vunpack.c.l.b16 %v151
  %v521 = vunpack.c.h.b16 %v151
  %v522 = vunpack.c.l.b16 %v152
  %v523 = vunpack.c.h.b16 %v152
  %v524 = vunpack.c.l.b16 %v153
  %v525 = vunpack.c.h.b16 %v153
  %v526 = vunpack.c.l.b16 %v154
  %v527 = vunpack.c.h.b16 %v154
  %v528 = vunpack.c.l.b16 %v155
  %v529 = vunpack.c.h.b16 %v155
  %v530 = vunpack.c.l.b16 %v156
  %v531 = vunpack.c.h.b16 %v156
  %v532 = vunpack.c.l.b16 %v157
  %v533 = vunpack.c.h.b16 %v157
  %v534 = vunpack.c.l.b16 %v158
  %v535 = vunpack.c.h.b16 %v158
  %v536 = vunpack.c.l.b16 %v159
  %v537 = vunpack.c.h.b16 %v159
  %v538 = vunpack.c.l.b16 %v160
  %v539 = vunpack.c.h.b16 %v160
  %v540 = vunpack.c.l.b16 %v161
  %v541 = vunpack.c.h.b16 %v161
  %v542 = vunpack.c.l.b16 %v162
  %v543 = vunpack.c.h.b16 %v162
  %v544 = vunpack.c.l.b16 %v163
  %v545 = vunpack.c.h.b16 %v163
  %v546 = vunpack.c.l.b16 %v164
  %v547 = vunpack.c.h.b16 %v164
  %v548 = vunpack.c.l.b16 %v165
  %v549 = vunpack.c.h.b16 %v165
  %v550 = vunpack.c.l.b16 %v166
  %v551 = vunpack.c.h.b16 %v166
  %v552 = vunpack.c.l.b16 %v167
  %v553 = vunpack.c.h.b16 %v167
  %v554 = vunpack.c.l.b16 %v168
  %v555 = vunpack.c.h.b16 %v168
  %v556 = vunpack.c.l.b16 %v169
  %v557 = vunpack.c.h.b16 %v169
  %v558 = vunpack.c.l.b16 %v170
  %v559 = vunpack.c.h.b16 %v170
  %v560 = vpack.c.b16 %v368, %v304
  %v561 = vpack.c.b16 %v369, %v305
  %v562 = vpack.c.b16 %v370, %v306
  %v563 = vpack.c.b16 %v371, %v307
  %v564 = vpack.c.b16 %v372, %v308
  %v565 = vpack.c.b16 %v373, %v309
  %v566 = vpack.c.b16 %v374, %v310
  %v567 = vpack.c.b16 %v375, %v311
  %v568 = vpack.c.b16 %v376, %v312
  %v569 = vpack.c.b16 %v377, %v313
  %v570 = vpack.c.b16 %v378, %v314
  %v571 = vpack.c.b16 %v379, %v315
  %v572 = vpack.c.b16 %v380, %v316
  %v573 = vpack.c.b16 %v381, %v317
  %v574 = vpack.c.b16 %v382, %v318
  %v575 = vpack.c.b16 %v383, %v319
  %v576 = vpack.c.b16 %v384, %v320
  %v577 = vpack.c.b16 %v385, %v321
  %v578 = vpack.c.b16 %v386, %v322
  %v579 = vpack.c.b16 %v387, %v323
  %v580 = vpack.c.b16 %v388, %v324
  %v581 = vpack.c.b16 %v389, %v325
  %v582 = vpack.c.b16 %v390, %v326
  %v583 = vpack.c.b16 %v391, %v327
  %v584 = vpack.c.b16 %v392, %v328
  %v585 = vpack.c.b16 %v393, %v329
  %v586 = vpack.c.b16 %v394, %v330
  %v587 = vpack.c.b16 %v395, %v331
  %v588 = vpack.c.b16 %v396, %v332
  %v589 = vpack.c.b16 %v397, %v333
  %v590 = vpack.c.b16 %v398, %v334
  %v591 = vpack.c.b16 %v399, %v335
  %v592 = vpack.c.b16 %v400, %v336
  %v593 = vpack.c.b16 %v401, %v337
  %v594 = vpack.c.b16 %v402, %v338
  %v595 = vpack.c.b16 %v403, %v339
  %v596 = vpack.c.b16 %v404, %v340
  %v597 = vpack.c.b16 %v405, %v341
  %v598 = vpack.c.b16 %v406, %v342
  %v599 = vpack.c.b16 %v407, %v343
  %v600 = vpack.c.b16 %v408, %v344
  %v601 = vpack.c.b16 %v409, %v345
  %v602 = vpack.c.b16 %v410, %v346
  %v603 = vpack.c.b16 %v411, %v347
  %v604 = vpack.c.b16 %v412, %v348
  %v605 = vpack.c.b16 %v413, %v349
  %v606 = vpack.c.b16 %v414, %v350
  %v607 = vpack.c.b16 %v415, %v351
  %v608 = vpack.c.b16 %v416, %v352
  %v609 = vpack.c.b16 %v417, %v353
  %v610 = vpack.c.b16 %v418, %v354
  %v611 = vpack.c.b16 %v419, %v355
  %v612 = vpack.c.b16 %v420, %v356
  %v613 = vpack.c.b16 %v421, %v357
  %v614 = vpack.c.b16 %v422, %v358
  %v615 = vpack.c.b16 %v423, %v359
  %v616 = vpack.c.b16 %v424, %v360
  %v617 = vpack.c.b16 %v425, %v361
  %v618 = vpack.c.b16 %v426, %v362
  %v619 = vpack.c.b16 %v427, %v363
  %v620 = vpack.c.b16 %v428, %v364
  %v621 = vpack.c.b16 %v429, %v365
  %v622 = vpack.c.b16 %v430, %v366
  %v623 = vpack.c.b16 %v431, %v367
  %v624 = vpack.c.b16 %v496, %v432
  %v625 = vpack.c.b16 %v497, %v433
  %v626 = vpack.c.b16 %v498, %v434
  %v627 = vpack.c.b16 %v499, %v435
  %v628 = vpack.c.b16 %v500, %v436
  %v629 = vpack.c.b16 %v501, %v437
  %v630 = vpack.c.b16 %v502, %v438
  %v631 = vpack.c.b16 %v503, %v439
  %v632 = vpack.c.b16 %v504, %v440
  %v633 = vpack.c.b16 %v505, %v441
  %v634 = vpack.c.b16 %v506, %v442
  %v635 = vpack.c.b16 %v507, %v443
  %v636 = vpack.c.b16 %v508, %v444
  %v637 = vpack.c.b16 %v509, %v445
  %v638 = vpack.c.b16 %v510, %v446
  %v639 = vpack.c.b16 %v511, %v447
  %v640 = vpack.c.b16 %v512, %v448
  %v641 = vpack.c.b16 %v513, %v449
  %v642 = vpack.c.b16 %v514, %v450
  %v643 = vpack.c.b16 %v515, %v451
  %v644 = vpack.c.b16 %v516, %v452
  %v645 = vpack.c.b16 %v517, %v453
  %v646 = vpack.c.b16 %v518, %v454
  %v647 = vpack.c.b16 %v519, %v455
  %v648 = vpack.c.b16 %v520, %v456
  %v649 = vpack.c.b16 %v521, %v457
  %v650 = vpack.c.b16 %v522, %v458
  %v651 = vpack.c.b16 %v523, %v459
  %v652 = vpack.c.b16 %v524, %v460
  %v653 = vpack.c.b16 %v525, %v461
  %v654 = vpack.c.b16 %v526, %v462
  %v655 = vpack.c.b16 %v527, %v463
  %v656 = vpack.c.b16 %v528, %v464
  %v657 = vpack.c.b16 %v529, %v465
  %v658 = vpack.c.b16 %v530, %v466
  %v659 = vpack.c.b16 %v531, %v467
  %v660 = vpack.c.b16 %v532, %v468
  %v661 = vpack.c.b16 %v533, %v469
  %v662 = vpack.c.b16 %v534, %v470
  %v663 = vpack.c.b16 %v535, %v471
  %v664 = vpack.c.b16 %v536, %v472
  %v665 = vpack.c.b16 %v537, %v473
  %v666 = vpack.c.b16 %v538, %v474
  %v667 = vpack.c.b16 %v539, %v475
  %v668 = vpack.c.b16 %v540, %v476
  %v669 = vpack.c.b16 %v541, %v477
  %v670 = vpack.c.b16 %v542, %v478
  %v671 = vpack.c.b16 %v543, %v479
  %v672 = vpack.c.b16 %v544, %v480
  %v673 = vpack.c.b16 %v545, %v481
  %v674 = vpack.c.b16 %v546, %v482
  %v675 = vpack.c.b16 %v547, %v483
  %v676 = vpack.c.b16 %v548, %v484
  %v677 = vpack.c.b16 %v549, %v485
  %v678 = vpack.c.b16 %v550, %v486
  %v679 = vpack.c.b16 %v551, %v487
  %v680 = vpack.c.b16 %v552, %v488
  %v681 = vpack.c.b16 %v553, %v489
  %v682 = vpack.c.b16 %v554, %v490
  %v683 = vpack.c.b16 %v555, %v491
  %v684 = vpack.c.b16 %v556, %v492
  %v685 = vpack.c.b16 %v557, %v493
  %v686 = vpack.c.b16 %v558, %v494
  %v687 = vpack.c.b16 %v559, %v495
  %vm752 = vcmask 203776
  %v754 = vsel %vm752, %v175, 0
  %vm756 = vcmask 1043456
  %vm757 = vcmask 1044480
  %v758 = vsel %vm756, 4294967295, 65535
  %v759 = vsel %vm757, %v758, 0
  %v761 = vand.u32 %v624, %v759
  %v764 = vand.u32 %v625, %v759
  %v767 = vand.u32 %v626, %v759
  %v770 = vand.u32 %v627, %v759
  %v773 = vand.u32 %v628, %v759
  %v776 = vand.u32 %v629, %v759
  %v779 = vand.u32 %v630, %v759
  %v782 = vand.u32 %v631, %v759
  %v785 = vand.u32 %v632, %v759
  %v788 = vand.u32 %v633, %v759
  %v791 = vand.u32 %v634, %v759
  %v794 = vand.u32 %v635, %v759
  %v797 = vand.u32 %v636, %v759
  %v800 = vand.u32 %v637, %v759
  %v803 = vand.u32 %v638, %v759
  %v806 = vand.u32 %v639, %v759
  %v809 = vand.u32 %v640, %v759
  %v812 = vand.u32 %v641, %v759
  %v815 = vand.u32 %v642, %v759
  %v818 = vand.u32 %v643, %v759
  %v821 = vand.u32 %v644, %v759
  %v824 = vand.u32 %v645, %v759
  %v827 = vand.u32 %v646, %v759
  %v830 = vand.u32 %v647, %v759
  %v833 = vand.u32 %v648, %v759
  %v836 = vand.u32 %v649, %v759
  %v839 = vand.u32 %v650, %v759
  %v842 = vand.u32 %v651, %v759
  %v845 = vand.u32 %v652, %v759
  %v848 = vand.u32 %v653, %v759
  %v851 = vand.u32 %v654, %v759
  %v854 = vand.u32 %v655, %v759
  %v857 = vand.u32 %v656, %v759
  %v860 = vand.u32 %v657, %v759
  %v863 = vand.u32 %v658, %v759
  %v866 = vand.u32 %v659, %v759
  %v869 = vand.u32 %v660, %v759
  %v872 = vand.u32 %v661, %v759
  %v875 = vand.u32 %v662, %v759
  %v878 = vand.u32 %v663, %v759
  %v881 = vand.u32 %v664, %v759
  %v884 = vand.u32 %v665, %v759
  %v887 = vand.u32 %v666, %v759
  %v890 = vand.u32 %v667, %v759
  %v893 = vand.u32 %v668, %v759
  %v896 = vand.u32 %v669, %v759
  %v899 = vand.u32 %v670, %v759
  %v902 = vand.u32 %v671, %v759
  %v905 = vand.u32 %v672, %v759
  %v908 = vand.u32 %v673, %v759
  %v911 = vand.u32 %v674, %v759
  %v914 = vand.u32 %v675, %v759
  %v917 = vand.u32 %v676, %v759
  %v920 = vand.u32 %v677, %v759
  %v923 = vand.u32 %v678, %v759
  %v926 = vand.u32 %v679, %v759
  %v929 = vand.u32 %v680, %v759
  %v932 = vand.u32 %v681, %v759
  %v935 = vand.u32 %v682, %v759
  %v938 = vand.u32 %v683, %v759
  %v941 = vand.u32 %v684, %v759
  %v944 = vand.u32 %v685, %v759
  %v947 = vand.u32 %v686, %v759
  %v950 = vand.u32 %v687, %v759
  %952 = vmatprep.subr.bf16.mxu0 %v561
  %953 = vmatpush1.bf16.msra.mxu0 %v560
  %954 = vmatprep.subr.bf16.mxu0 %v764
  %955 = vmatpush1.bf16.msra.mxu0 %v761
  %956 = vmatprep.subr.bf16.mxu0 0
  %957 = vmatpush1.bf16.msra.mxu0 0
  %958 = vmatprep.subr.bf16.mxu0 0
  %959 = vmatpush1.bf16.msra.mxu0 0
  %960 = vmatprep.subr.bf16.mxu0 0
  %961 = vmatpush1.bf16.msra.mxu0 0
  %962 = vmatprep.subr.bf16.mxu0 0
  %963 = vmatpush1.bf16.msra.mxu0 0
  %964 = vmatprep.subr.bf16.mxu0 0
  %965 = vmatpush1.bf16.msra.mxu0 0
  %966 = vmatprep.subr.bf16.mxu0 0
  %967 = vmatpush1.bf16.msra.mxu0 0
  %968 = vmatprep.subr.bf16.mxu0 0
  %969 = vmatpush1.bf16.msra.mxu0 0
  %970 = vmatprep.subr.bf16.mxu0 0
  %971 = vmatpush1.bf16.msra.mxu0 0
  %972 = vmatprep.subr.bf16.mxu0 0
  %973 = vmatpush1.bf16.msra.mxu0 0
  %974 = vmatprep.subr.bf16.mxu0 0
  %975 = vmatpush1.bf16.msra.mxu0 0
  %976 = vmatprep.subr.bf16.mxu0 0
  %977 = vmatpush1.bf16.msra.mxu0 0
  %978 = vmatprep.subr.bf16.mxu0 0
  %979 = vmatpush1.bf16.msra.mxu0 0
  %980 = vmatprep.subr.bf16.mxu0 0
  %981 = vmatpush1.bf16.msra.mxu0 0
  %982 = vmatprep.subr.bf16.mxu0 0
  %983 = vmatpush1.bf16.msra.mxu0 0
  %984 = vmatprep.mubr.bf16.mxu0 0
  %985 = vmatmul.mubr.bf16.gmra.mrb[0].mxu0 %v754
  %v986 = vpop.f32.mrb[0].mxu0
  %v987 = vadd.f32 0.0, %v986
  %v988 = vpop.f32.mrb[0].mxu0
  %v989 = vadd.f32 0.0, %v988
  %v990 = vpop.f32.mrb[0].mxu0
  %v991 = vadd.f32 0.0, %v990
  %v992 = vpop.f32.mrb[0].mxu0
  %v993 = vadd.f32 0.0, %v992
  %994 = vdwg.mxu0
  %995 = vmatprep.subr.bf16.mxu0 %v563
  %996 = vmatpush1.bf16.msra.mxu0 %v562
  %997 = vmatprep.subr.bf16.mxu0 %v770
  %998 = vmatpush1.bf16.msra.mxu0 %v767
  %999 = vmatprep.subr.bf16.mxu0 0
  %1000 = vmatpush1.bf16.msra.mxu0 0
  %1001 = vmatprep.subr.bf16.mxu0 0
  %1002 = vmatpush1.bf16.msra.mxu0 0
  %1003 = vmatprep.subr.bf16.mxu0 0
  %1004 = vmatpush1.bf16.msra.mxu0 0
  %1005 = vmatprep.subr.bf16.mxu0 0
  %1006 = vmatpush1.bf16.msra.mxu0 0
  %1007 = vmatprep.subr.bf16.mxu0 0
  %1008 = vmatpush1.bf16.msra.mxu0 0
  %1009 = vmatprep.subr.bf16.mxu0 0
  %1010 = vmatpush1.bf16.msra.mxu0 0
  %1011 = vmatprep.subr.bf16.mxu0 0
  %1012 = vmatpush1.bf16.msra.mxu0 0
  %1013 = vmatprep.subr.bf16.mxu0 0
  %1014 = vmatpush1.bf16.msra.mxu0 0
  %1015 = vmatprep.subr.bf16.mxu0 0
  %1016 = vmatpush1.bf16.msra.mxu0 0
  %1017 = vmatprep.subr.bf16.mxu0 0
  %1018 = vmatpush1.bf16.msra.mxu0 0
  %1019 = vmatprep.subr.bf16.mxu0 0
  %1020 = vmatpush1.bf16.msra.mxu0 0
  %1021 = vmatprep.subr.bf16.mxu0 0
  %1022 = vmatpush1.bf16.msra.mxu0 0
  %1023 = vmatprep.subr.bf16.mxu0 0
  %1024 = vmatpush1.bf16.msra.mxu0 0
  %1025 = vmatprep.subr.bf16.mxu0 0
  %1026 = vmatpush1.bf16.msra.mxu0 0
  %1027 = vmatprep.mubr.bf16.mxu0 0
  %1028 = vmatmul.mubr.bf16.gmra.mrb[0].mxu0 %v754
  %v1029 = vpop.f32.mrb[0].mxu0
  %v1030 = vadd.f32 0.0, %v1029
  %v1031 = vpop.f32.mrb[0].mxu0
  %v1032 = vadd.f32 0.0, %v1031
  %v1033 = vpop.f32.mrb[0].mxu0
  %v1034 = vadd.f32 0.0, %v1033
  %v1035 = vpop.f32.mrb[0].mxu0
  %v1036 = vadd.f32 0.0, %v1035
  %1037 = vdwg.mxu0
  %1038 = vmatprep.subr.bf16.mxu0 %v565
  %1039 = vmatpush1.bf16.msra.mxu0 %v564
  %1040 = vmatprep.subr.bf16.mxu0 %v776
  %1041 = vmatpush1.bf16.msra.mxu0 %v773
  %1042 = vmatprep.subr.bf16.mxu0 0
  %1043 = vmatpush1.bf16.msra.mxu0 0
  %1044 = vmatprep.subr.bf16.mxu0 0
  %1045 = vmatpush1.bf16.msra.mxu0 0
  %1046 = vmatprep.subr.bf16.mxu0 0
  %1047 = vmatpush1.bf16.msra.mxu0 0
  %1048 = vmatprep.subr.bf16.mxu0 0
  %1049 = vmatpush1.bf16.msra.mxu0 0
  %1050 = vmatprep.subr.bf16.mxu0 0
  %1051 = vmatpush1.bf16.msra.mxu0 0
  %1052 = vmatprep.subr.bf16.mxu0 0
  %1053 = vmatpush1.bf16.msra.mxu0 0
  %1054 = vmatprep.subr.bf16.mxu0 0
  %1055 = vmatpush1.bf16.msra.mxu0 0
  %1056 = vmatprep.subr.bf16.mxu0 0
  %1057 = vmatpush1.bf16.msra.mxu0 0
  %1058 = vmatprep.subr.bf16.mxu0 0
  %1059 = vmatpush1.bf16.msra.mxu0 0
  %1060 = vmatprep.subr.bf16.mxu0 0
  %1061 = vmatpush1.bf16.msra.mxu0 0
  %1062 = vmatprep.subr.bf16.mxu0 0
  %1063 = vmatpush1.bf16.msra.mxu0 0
  %1064 = vmatprep.subr.bf16.mxu0 0
  %1065 = vmatpush1.bf16.msra.mxu0 0
  %1066 = vmatprep.subr.bf16.mxu0 0
  %1067 = vmatpush1.bf16.msra.mxu0 0
  %1068 = vmatprep.subr.bf16.mxu0 0
  %1069 = vmatpush1.bf16.msra.mxu0 0
  %1070 = vmatprep.mubr.bf16.mxu0 0
  %1071 = vmatmul.mubr.bf16.gmra.mrb[0].mxu0 %v754
  %v1072 = vpop.f32.mrb[0].mxu0
  %v1073 = vadd.f32 0.0, %v1072
  %v1074 = vpop.f32.mrb[0].mxu0
  %v1075 = vadd.f32 0.0, %v1074
  %v1076 = vpop.f32.mrb[0].mxu0
  %v1077 = vadd.f32 0.0, %v1076
  %v1078 = vpop.f32.mrb[0].mxu0
  %v1079 = vadd.f32 0.0, %v1078
  %1080 = vdwg.mxu0
  %1081 = vmatprep.subr.bf16.mxu0 %v567
  %1082 = vmatpush1.bf16.msra.mxu0 %v566
  %1083 = vmatprep.subr.bf16.mxu0 %v782
  %1084 = vmatpush1.bf16.msra.mxu0 %v779
  %1085 = vmatprep.subr.bf16.mxu0 0
  %1086 = vmatpush1.bf16.msra.mxu0 0
  %1087 = vmatprep.subr.bf16.mxu0 0
  %1088 = vmatpush1.bf16.msra.mxu0 0
  %1089 = vmatprep.subr.bf16.mxu0 0
  %1090 = vmatpush1.bf16.msra.mxu0 0
  %1091 = vmatprep.subr.bf16.mxu0 0
  %1092 = vmatpush1.bf16.msra.mxu0 0
  %1093 = vmatprep.subr.bf16.mxu0 0
  %1094 = vmatpush1.bf16.msra.mxu0 0
  %1095 = vmatprep.subr.bf16.mxu0 0
  %1096 = vmatpush1.bf16.msra.mxu0 0
  %1097 = vmatprep.subr.bf16.mxu0 0
  %1098 = vmatpush1.bf16.msra.mxu0 0
  %1099 = vmatprep.subr.bf16.mxu0 0
  %1100 = vmatpush1.bf16.msra.mxu0 0
  %1101 = vmatprep.subr.bf16.mxu0 0
  %1102 = vmatpush1.bf16.msra.mxu0 0
  %1103 = vmatprep.subr.bf16.mxu0 0
  %1104 = vmatpush1.bf16.msra.mxu0 0
  %1105 = vmatprep.subr.bf16.mxu0 0
  %1106 = vmatpush1.bf16.msra.mxu0 0
  %1107 = vmatprep.subr.bf16.mxu0 0
  %1108 = vmatpush1.bf16.msra.mxu0 0
  %1109 = vmatprep.subr.bf16.mxu0 0
  %1110 = vmatpush1.bf16.msra.mxu0 0
  %1111 = vmatprep.subr.bf16.mxu0 0
  %1112 = vmatpush1.bf16.msra.mxu0 0
  %1113 = vmatprep.mubr.bf16.mxu0 0
  %1114 = vmatmul.mubr.bf16.gmra.mrb[0].mxu0 %v754
  %v1115 = vpop.f32.mrb[0].mxu0
  %v1116 = vadd.f32 0.0, %v1115
  %v1117 = vpop.f32.mrb[0].mxu0
  %v1118 = vadd.f32 0.0, %v1117
  %v1119 = vpop.f32.mrb[0].mxu0
  %v1120 = vadd.f32 0.0, %v1119
  %v1121 = vpop.f32.mrb[0].mxu0
  %v1122 = vadd.f32 0.0, %v1121
  %1123 = vdwg.mxu0
  %1124 = vmatprep.subr.bf16.mxu0 %v569
  %1125 = vmatpush1.bf16.msra.mxu0 %v568
  %1126 = vmatprep.subr.bf16.mxu0 %v788
  %1127 = vmatpush1.bf16.msra.mxu0 %v785
  %1128 = vmatprep.subr.bf16.mxu0 0
  %1129 = vmatpush1.bf16.msra.mxu0 0
  %1130 = vmatprep.subr.bf16.mxu0 0
  %1131 = vmatpush1.bf16.msra.mxu0 0
  %1132 = vmatprep.subr.bf16.mxu0 0
  %1133 = vmatpush1.bf16.msra.mxu0 0
  %1134 = vmatprep.subr.bf16.mxu0 0
  %1135 = vmatpush1.bf16.msra.mxu0 0
  %1136 = vmatprep.subr.bf16.mxu0 0
  %1137 = vmatpush1.bf16.msra.mxu0 0
  %1138 = vmatprep.subr.bf16.mxu0 0
  %1139 = vmatpush1.bf16.msra.mxu0 0
  %1140 = vmatprep.subr.bf16.mxu0 0
  %1141 = vmatpush1.bf16.msra.mxu0 0
  %1142 = vmatprep.subr.bf16.mxu0 0
  %1143 = vmatpush1.bf16.msra.mxu0 0
  %1144 = vmatprep.subr.bf16.mxu0 0
  %1145 = vmatpush1.bf16.msra.mxu0 0
  %1146 = vmatprep.subr.bf16.mxu0 0
  %1147 = vmatpush1.bf16.msra.mxu0 0
  %1148 = vmatprep.subr.bf16.mxu0 0
  %1149 = vmatpush1.bf16.msra.mxu0 0
  %1150 = vmatprep.subr.bf16.mxu0 0
  %1151 = vmatpush1.bf16.msra.mxu0 0
  %1152 = vmatprep.subr.bf16.mxu0 0
  %1153 = vmatpush1.bf16.msra.mxu0 0
  %1154 = vmatprep.subr.bf16.mxu0 0
  %1155 = vmatpush1.bf16.msra.mxu0 0
  %1156 = vmatprep.mubr.bf16.mxu0 0
  %1157 = vmatmul.mubr.bf16.gmra.mrb[0].mxu0 %v754
  %v1158 = vpop.f32.mrb[0].mxu0
  %v1159 = vadd.f32 0.0, %v1158
  %v1160 = vpop.f32.mrb[0].mxu0
  %v1161 = vadd.f32 0.0, %v1160
  %v1162 = vpop.f32.mrb[0].mxu0
  %v1163 = vadd.f32 0.0, %v1162
  %v1164 = vpop.f32.mrb[0].mxu0
  %v1165 = vadd.f32 0.0, %v1164
  %1166 = vdwg.mxu0
  %1167 = vmatprep.subr.bf16.mxu0 %v571
  %1168 = vmatpush1.bf16.msra.mxu0 %v570
  %1169 = vmatprep.subr.bf16.mxu0 %v794
  %1170 = vmatpush1.bf16.msra.mxu0 %v791
  %1171 = vmatprep.subr.bf16.mxu0 0
  %1172 = vmatpush1.bf16.msra.mxu0 0
  %1173 = vmatprep.subr.bf16.mxu0 0
  %1174 = vmatpush1.bf16.msra.mxu0 0
  %1175 = vmatprep.subr.bf16.mxu0 0
  %1176 = vmatpush1.bf16.msra.mxu0 0
  %1177 = vmatprep.subr.bf16.mxu0 0
  %1178 = vmatpush1.bf16.msra.mxu0 0
  %1179 = vmatprep.subr.bf16.mxu0 0
  %1180 = vmatpush1.bf16.msra.mxu0 0
  %1181 = vmatprep.subr.bf16.mxu0 0
  %1182 = vmatpush1.bf16.msra.mxu0 0
  %1183 = vmatprep.subr.bf16.mxu0 0
  %1184 = vmatpush1.bf16.msra.mxu0 0
  %1185 = vmatprep.subr.bf16.mxu0 0
  %1186 = vmatpush1.bf16.msra.mxu0 0
  %1187 = vmatprep.subr.bf16.mxu0 0
  %1188 = vmatpush1.bf16.msra.mxu0 0
  %1189 = vmatprep.subr.bf16.mxu0 0
  %1190 = vmatpush1.bf16.msra.mxu0 0
  %1191 = vmatprep.subr.bf16.mxu0 0
  %1192 = vmatpush1.bf16.msra.mxu0 0
  %1193 = vmatprep.subr.bf16.mxu0 0
  %1194 = vmatpush1.bf16.msra.mxu0 0
  %1195 = vmatprep.subr.bf16.mxu0 0
  %1196 = vmatpush1.bf16.msra.mxu0 0
  %1197 = vmatprep.subr.bf16.mxu0 0
  %1198 = vmatpush1.bf16.msra.mxu0 0
  %1199 = vmatprep.mubr.bf16.mxu0 0
  %1200 = vmatmul.mubr.bf16.gmra.mrb[0].mxu0 %v754
  %v1201 = vpop.f32.mrb[0].mxu0
  %v1202 = vadd.f32 0.0, %v1201
  %v1203 = vpop.f32.mrb[0].mxu0
  %v1204 = vadd.f32 0.0, %v1203
  %v1205 = vpop.f32.mrb[0].mxu0
  %v1206 = vadd.f32 0.0, %v1205
  %v1207 = vpop.f32.mrb[0].mxu0
  %v1208 = vadd.f32 0.0, %v1207
  %1209 = vdwg.mxu0
  %1210 = vmatprep.subr.bf16.mxu0 %v573
  %1211 = vmatpush1.bf16.msra.mxu0 %v572
  %1212 = vmatprep.subr.bf16.mxu0 %v800
  %1213 = vmatpush1.bf16.msra.mxu0 %v797
  %1214 = vmatprep.subr.bf16.mxu0 0
  %1215 = vmatpush1.bf16.msra.mxu0 0
  %1216 = vmatprep.subr.bf16.mxu0 0
  %1217 = vmatpush1.bf16.msra.mxu0 0
  %1218 = vmatprep.subr.bf16.mxu0 0
  %1219 = vmatpush1.bf16.msra.mxu0 0
  %1220 = vmatprep.subr.bf16.mxu0 0
  %1221 = vmatpush1.bf16.msra.mxu0 0
  %1222 = vmatprep.subr.bf16.mxu0 0
  %1223 = vmatpush1.bf16.msra.mxu0 0
  %1224 = vmatprep.subr.bf16.mxu0 0
  %1225 = vmatpush1.bf16.msra.mxu0 0
  %1226 = vmatprep.subr.bf16.mxu0 0
  %1227 = vmatpush1.bf16.msra.mxu0 0
  %1228 = vmatprep.subr.bf16.mxu0 0
  %1229 = vmatpush1.bf16.msra.mxu0 0
  %1230 = vmatprep.subr.bf16.mxu0 0
  %1231 = vmatpush1.bf16.msra.mxu0 0
  %1232 = vmatprep.subr.bf16.mxu0 0
  %1233 = vmatpush1.bf16.msra.mxu0 0
  %1234 = vmatprep.subr.bf16.mxu0 0
  %1235 = vmatpush1.bf16.msra.mxu0 0
  %1236 = vmatprep.subr.bf16.mxu0 0
  %1237 = vmatpush1.bf16.msra.mxu0 0
  %1238 = vmatprep.subr.bf16.mxu0 0
  %1239 = vmatpush1.bf16.msra.mxu0 0
  %1240 = vmatprep.subr.bf16.mxu0 0
  %1241 = vmatpush1.bf16.msra.mxu0 0
  %1242 = vmatprep.mubr.bf16.mxu0 0
  %1243 = vmatmul.mubr.bf16.gmra.mrb[0].mxu0 %v754
  %v1244 = vpop.f32.mrb[0].mxu0
  %v1245 = vadd.f32 0.0, %v1244
  %v1246 = vpop.f32.mrb[0].mxu0
  %v1247 = vadd.f32 0.0, %v1246
  %v1248 = vpop.f32.mrb[0].mxu0
  %v1249 = vadd.f32 0.0, %v1248
  %v1250 = vpop.f32.mrb[0].mxu0
  %v1251 = vadd.f32 0.0, %v1250
  %1252 = vdwg.mxu0
  %1253 = vmatprep.subr.bf16.mxu0 %v575
  %1254 = vmatpush1.bf16.msra.mxu0 %v574
  %1255 = vmatprep.subr.bf16.mxu0 %v806
  %1256 = vmatpush1.bf16.msra.mxu0 %v803
  %1257 = vmatprep.subr.bf16.mxu0 0
  %1258 = vmatpush1.bf16.msra.mxu0 0
  %1259 = vmatprep.subr.bf16.mxu0 0
  %1260 = vmatpush1.bf16.msra.mxu0 0
  %1261 = vmatprep.subr.bf16.mxu0 0
  %1262 = vmatpush1.bf16.msra.mxu0 0
  %1263 = vmatprep.subr.bf16.mxu0 0
  %1264 = vmatpush1.bf16.msra.mxu0 0
  %1265 = vmatprep.subr.bf16.mxu0 0
  %1266 = vmatpush1.bf16.msra.mxu0 0
  %1267 = vmatprep.subr.bf16.mxu0 0
  %1268 = vmatpush1.bf16.msra.mxu0 0
  %1269 = vmatprep.subr.bf16.mxu0 0
  %1270 = vmatpush1.bf16.msra.mxu0 0
  %1271 = vmatprep.subr.bf16.mxu0 0
  %1272 = vmatpush1.bf16.msra.mxu0 0
  %1273 = vmatprep.subr.bf16.mxu0 0
  %1274 = vmatpush1.bf16.msra.mxu0 0
  %1275 = vmatprep.subr.bf16.mxu0 0
  %1276 = vmatpush1.bf16.msra.mxu0 0
  %1277 = vmatprep.subr.bf16.mxu0 0
  %1278 = vmatpush1.bf16.msra.mxu0 0
  %1279 = vmatprep.subr.bf16.mxu0 0
  %1280 = vmatpush1.bf16.msra.mxu0 0
  %1281 = vmatprep.subr.bf16.mxu0 0
  %1282 = vmatpush1.bf16.msra.mxu0 0
  %1283 = vmatprep.subr.bf16.mxu0 0
  %1284 = vmatpush1.bf16.msra.mxu0 0
  %1285 = vmatprep.mubr.bf16.mxu0 0
  %1286 = vmatmul.mubr.bf16.gmra.mrb[0].mxu0 %v754
  %v1287 = vpop.f32.mrb[0].mxu0
  %v1288 = vadd.f32 0.0, %v1287
  %v1289 = vpop.f32.mrb[0].mxu0
  %v1290 = vadd.f32 0.0, %v1289
  %v1291 = vpop.f32.mrb[0].mxu0
  %v1292 = vadd.f32 0.0, %v1291
  %v1293 = vpop.f32.mrb[0].mxu0
  %v1294 = vadd.f32 0.0, %v1293
  %1295 = vdwg.mxu0
  %1296 = vmatprep.subr.bf16.mxu0 %v577
  %1297 = vmatpush1.bf16.msra.mxu0 %v576
  %1298 = vmatprep.subr.bf16.mxu0 %v812
  %1299 = vmatpush1.bf16.msra.mxu0 %v809
  %1300 = vmatprep.subr.bf16.mxu0 0
  %1301 = vmatpush1.bf16.msra.mxu0 0
  %1302 = vmatprep.subr.bf16.mxu0 0
  %1303 = vmatpush1.bf16.msra.mxu0 0
  %1304 = vmatprep.subr.bf16.mxu0 0
  %1305 = vmatpush1.bf16.msra.mxu0 0
  %1306 = vmatprep.subr.bf16.mxu0 0
  %1307 = vmatpush1.bf16.msra.mxu0 0
  %1308 = vmatprep.subr.bf16.mxu0 0
  %1309 = vmatpush1.bf16.msra.mxu0 0
  %1310 = vmatprep.subr.bf16.mxu0 0
  %1311 = vmatpush1.bf16.msra.mxu0 0
  %1312 = vmatprep.subr.bf16.mxu0 0
  %1313 = vmatpush1.bf16.msra.mxu0 0
  %1314 = vmatprep.subr.bf16.mxu0 0
  %1315 = vmatpush1.bf16.msra.mxu0 0
  %1316 = vmatprep.subr.bf16.mxu0 0
  %1317 = vmatpush1.bf16.msra.mxu0 0
  %1318 = vmatprep.subr.bf16.mxu0 0
  %1319 = vmatpush1.bf16.msra.mxu0 0
  %1320 = vmatprep.subr.bf16.mxu0 0
  %1321 = vmatpush1.bf16.msra.mxu0 0
  %1322 = vmatprep.subr.bf16.mxu0 0
  %1323 = vmatpush1.bf16.msra.mxu0 0
  %1324 = vmatprep.subr.bf16.mxu0 0
  %1325 = vmatpush1.bf16.msra.mxu0 0
  %1326 = vmatprep.subr.bf16.mxu0 0
  %1327 = vmatpush1.bf16.msra.mxu0 0
  %1328 = vmatprep.mubr.bf16.mxu0 0
  %1329 = vmatmul.mubr.bf16.gmra.mrb[0].mxu0 %v754
  %v1330 = vpop.f32.mrb[0].mxu0
  %v1331 = vadd.f32 0.0, %v1330
  %v1332 = vpop.f32.mrb[0].mxu0
  %v1333 = vadd.f32 0.0, %v1332
  %v1334 = vpop.f32.mrb[0].mxu0
  %v1335 = vadd.f32 0.0, %v1334
  %v1336 = vpop.f32.mrb[0].mxu0
  %v1337 = vadd.f32 0.0, %v1336
  %1338 = vdwg.mxu0
  %1339 = vmatprep.subr.bf16.mxu0 %v579
  %1340 = vmatpush1.bf16.msra.mxu0 %v578
  %1341 = vmatprep.subr.bf16.mxu0 %v818
  %1342 = vmatpush1.bf16.msra.mxu0 %v815
  %1343 = vmatprep.subr.bf16.mxu0 0
  %1344 = vmatpush1.bf16.msra.mxu0 0
  %1345 = vmatprep.subr.bf16.mxu0 0
  %1346 = vmatpush1.bf16.msra.mxu0 0
  %1347 = vmatprep.subr.bf16.mxu0 0
  %1348 = vmatpush1.bf16.msra.mxu0 0
  %1349 = vmatprep.subr.bf16.mxu0 0
  %1350 = vmatpush1.bf16.msra.mxu0 0
  %1351 = vmatprep.subr.bf16.mxu0 0
  %1352 = vmatpush1.bf16.msra.mxu0 0
  %1353 = vmatprep.subr.bf16.mxu0 0
  %1354 = vmatpush1.bf16.msra.mxu0 0
  %1355 = vmatprep.subr.bf16.mxu0 0
  %1356 = vmatpush1.bf16.msra.mxu0 0
  %1357 = vmatprep.subr.bf16.mxu0 0
  %1358 = vmatpush1.bf16.msra.mxu0 0
  %1359 = vmatprep.subr.bf16.mxu0 0
  %1360 = vmatpush1.bf16.msra.mxu0 0
  %1361 = vmatprep.subr.bf16.mxu0 0
  %1362 = vmatpush1.bf16.msra.mxu0 0
  %1363 = vmatprep.subr.bf16.mxu0 0
  %1364 = vmatpush1.bf16.msra.mxu0 0
  %1365 = vmatprep.subr.bf16.mxu0 0
  %1366 = vmatpush1.bf16.msra.mxu0 0
  %1367 = vmatprep.subr.bf16.mxu0 0
  %1368 = vmatpush1.bf16.msra.mxu0 0
  %1369 = vmatprep.subr.bf16.mxu0 0
  %1370 = vmatpush1.bf16.msra.mxu0 0
  %1371 = vmatprep.mubr.bf16.mxu0 0
  %1372 = vmatmul.mubr.bf16.gmra.mrb[0].mxu0 %v754
  %v1373 = vpop.f32.mrb[0].mxu0
  %v1374 = vadd.f32 0.0, %v1373
  %v1375 = vpop.f32.mrb[0].mxu0
  %v1376 = vadd.f32 0.0, %v1375
  %v1377 = vpop.f32.mrb[0].mxu0
  %v1378 = vadd.f32 0.0, %v1377
  %v1379 = vpop.f32.mrb[0].mxu0
  %v1380 = vadd.f32 0.0, %v1379
  %1381 = vdwg.mxu0
  %1382 = vmatprep.subr.bf16.mxu0 %v581
  %1383 = vmatpush1.bf16.msra.mxu0 %v580
  %1384 = vmatprep.subr.bf16.mxu0 %v824
  %1385 = vmatpush1.bf16.msra.mxu0 %v821
  %1386 = vmatprep.subr.bf16.mxu0 0
  %1387 = vmatpush1.bf16.msra.mxu0 0
  %1388 = vmatprep.subr.bf16.mxu0 0
  %1389 = vmatpush1.bf16.msra.mxu0 0
  %1390 = vmatprep.subr.bf16.mxu0 0
  %1391 = vmatpush1.bf16.msra.mxu0 0
  %1392 = vmatprep.subr.bf16.mxu0 0
  %1393 = vmatpush1.bf16.msra.mxu0 0
  %1394 = vmatprep.subr.bf16.mxu0 0
  %1395 = vmatpush1.bf16.msra.mxu0 0
  %1396 = vmatprep.subr.bf16.mxu0 0
  %1397 = vmatpush1.bf16.msra.mxu0 0
  %1398 = vmatprep.subr.bf16.mxu0 0
  %1399 = vmatpush1.bf16.msra.mxu0 0
  %1400 = vmatprep.subr.bf16.mxu0 0
  %1401 = vmatpush1.bf16.msra.mxu0 0
  %1402 = vmatprep.subr.bf16.mxu0 0
  %1403 = vmatpush1.bf16.msra.mxu0 0
  %1404 = vmatprep.subr.bf16.mxu0 0
  %1405 = vmatpush1.bf16.msra.mxu0 0
  %1406 = vmatprep.subr.bf16.mxu0 0
  %1407 = vmatpush1.bf16.msra.mxu0 0
  %1408 = vmatprep.subr.bf16.mxu0 0
  %1409 = vmatpush1.bf16.msra.mxu0 0
  %1410 = vmatprep.subr.bf16.mxu0 0
  %1411 = vmatpush1.bf16.msra.mxu0 0
  %1412 = vmatprep.subr.bf16.mxu0 0
  %1413 = vmatpush1.bf16.msra.mxu0 0
  %1414 = vmatprep.mubr.bf16.mxu0 0
  %1415 = vmatmul.mubr.bf16.gmra.mrb[0].mxu0 %v754
  %v1416 = vpop.f32.mrb[0].mxu0
  %v1417 = vadd.f32 0.0, %v1416
  %v1418 = vpop.f32.mrb[0].mxu0
  %v1419 = vadd.f32 0.0, %v1418
  %v1420 = vpop.f32.mrb[0].mxu0
  %v1421 = vadd.f32 0.0, %v1420
  %v1422 = vpop.f32.mrb[0].mxu0
  %v1423 = vadd.f32 0.0, %v1422
  %1424 = vdwg.mxu0
  %1425 = vmatprep.subr.bf16.mxu0 %v583
  %1426 = vmatpush1.bf16.msra.mxu0 %v582
  %1427 = vmatprep.subr.bf16.mxu0 %v830
  %1428 = vmatpush1.bf16.msra.mxu0 %v827
  %1429 = vmatprep.subr.bf16.mxu0 0
  %1430 = vmatpush1.bf16.msra.mxu0 0
  %1431 = vmatprep.subr.bf16.mxu0 0
  %1432 = vmatpush1.bf16.msra.mxu0 0
  %1433 = vmatprep.subr.bf16.mxu0 0
  %1434 = vmatpush1.bf16.msra.mxu0 0
  %1435 = vmatprep.subr.bf16.mxu0 0
  %1436 = vmatpush1.bf16.msra.mxu0 0
  %1437 = vmatprep.subr.bf16.mxu0 0
  %1438 = vmatpush1.bf16.msra.mxu0 0
  %1439 = vmatprep.subr.bf16.mxu0 0
  %1440 = vmatpush1.bf16.msra.mxu0 0
  %1441 = vmatprep.subr.bf16.mxu0 0
  %1442 = vmatpush1.bf16.msra.mxu0 0
  %1443 = vmatprep.subr.bf16.mxu0 0
  %1444 = vmatpush1.bf16.msra.mxu0 0
  %1445 = vmatprep.subr.bf16.mxu0 0
  %1446 = vmatpush1.bf16.msra.mxu0 0
  %1447 = vmatprep.subr.bf16.mxu0 0
  %1448 = vmatpush1.bf16.msra.mxu0 0
  %1449 = vmatprep.subr.bf16.mxu0 0
  %1450 = vmatpush1.bf16.msra.mxu0 0
  %1451 = vmatprep.subr.bf16.mxu0 0
  %1452 = vmatpush1.bf16.msra.mxu0 0
  %1453 = vmatprep.subr.bf16.mxu0 0
  %1454 = vmatpush1.bf16.msra.mxu0 0
  %1455 = vmatprep.subr.bf16.mxu0 0
  %1456 = vmatpush1.bf16.msra.mxu0 0
  %1457 = vmatprep.mubr.bf16.mxu0 0
  %1458 = vmatmul.mubr.bf16.gmra.mrb[0].mxu0 %v754
  %v1459 = vpop.f32.mrb[0].mxu0
  %v1460 = vadd.f32 0.0, %v1459
  %v1461 = vpop.f32.mrb[0].mxu0
  %v1462 = vadd.f32 0.0, %v1461
  %v1463 = vpop.f32.mrb[0].mxu0
  %v1464 = vadd.f32 0.0, %v1463
  %v1465 = vpop.f32.mrb[0].mxu0
  %v1466 = vadd.f32 0.0, %v1465
  %1467 = vdwg.mxu0
  %1468 = vmatprep.subr.bf16.mxu0 %v585
  %1469 = vmatpush1.bf16.msra.mxu0 %v584
  %1470 = vmatprep.subr.bf16.mxu0 %v836
  %1471 = vmatpush1.bf16.msra.mxu0 %v833
  %1472 = vmatprep.subr.bf16.mxu0 0
  %1473 = vmatpush1.bf16.msra.mxu0 0
  %1474 = vmatprep.subr.bf16.mxu0 0
  %1475 = vmatpush1.bf16.msra.mxu0 0
  %1476 = vmatprep.subr.bf16.mxu0 0
  %1477 = vmatpush1.bf16.msra.mxu0 0
  %1478 = vmatprep.subr.bf16.mxu0 0
  %1479 = vmatpush1.bf16.msra.mxu0 0
  %1480 = vmatprep.subr.bf16.mxu0 0
  %1481 = vmatpush1.bf16.msra.mxu0 0
  %1482 = vmatprep.subr.bf16.mxu0 0
  %1483 = vmatpush1.bf16.msra.mxu0 0
  %1484 = vmatprep.subr.bf16.mxu0 0
  %1485 = vmatpush1.bf16.msra.mxu0 0
  %1486 = vmatprep.subr.bf16.mxu0 0
  %1487 = vmatpush1.bf16.msra.mxu0 0
  %1488 = vmatprep.subr.bf16.mxu0 0
  %1489 = vmatpush1.bf16.msra.mxu0 0
  %1490 = vmatprep.subr.bf16.mxu0 0
  %1491 = vmatpush1.bf16.msra.mxu0 0
  %1492 = vmatprep.subr.bf16.mxu0 0
  %1493 = vmatpush1.bf16.msra.mxu0 0
  %1494 = vmatprep.subr.bf16.mxu0 0
  %1495 = vmatpush1.bf16.msra.mxu0 0
  %1496 = vmatprep.subr.bf16.mxu0 0
  %1497 = vmatpush1.bf16.msra.mxu0 0
  %1498 = vmatprep.subr.bf16.mxu0 0
  %1499 = vmatpush1.bf16.msra.mxu0 0
  %1500 = vmatprep.mubr.bf16.mxu0 0
  %1501 = vmatmul.mubr.bf16.gmra.mrb[0].mxu0 %v754
  %v1502 = vpop.f32.mrb[0].mxu0
  %v1503 = vadd.f32 0.0, %v1502
  %v1504 = vpop.f32.mrb[0].mxu0
  %v1505 = vadd.f32 0.0, %v1504
  %v1506 = vpop.f32.mrb[0].mxu0
  %v1507 = vadd.f32 0.0, %v1506
  %v1508 = vpop.f32.mrb[0].mxu0
  %v1509 = vadd.f32 0.0, %v1508
  %1510 = vdwg.mxu0
  %1511 = vmatprep.subr.bf16.mxu0 %v587
  %1512 = vmatpush1.bf16.msra.mxu0 %v586
  %1513 = vmatprep.subr.bf16.mxu0 %v842
  %1514 = vmatpush1.bf16.msra.mxu0 %v839
  %1515 = vmatprep.subr.bf16.mxu0 0
  %1516 = vmatpush1.bf16.msra.mxu0 0
  %1517 = vmatprep.subr.bf16.mxu0 0
  %1518 = vmatpush1.bf16.msra.mxu0 0
  %1519 = vmatprep.subr.bf16.mxu0 0
  %1520 = vmatpush1.bf16.msra.mxu0 0
  %1521 = vmatprep.subr.bf16.mxu0 0
  %1522 = vmatpush1.bf16.msra.mxu0 0
  %1523 = vmatprep.subr.bf16.mxu0 0
  %1524 = vmatpush1.bf16.msra.mxu0 0
  %1525 = vmatprep.subr.bf16.mxu0 0
  %1526 = vmatpush1.bf16.msra.mxu0 0
  %1527 = vmatprep.subr.bf16.mxu0 0
  %1528 = vmatpush1.bf16.msra.mxu0 0
  %1529 = vmatprep.subr.bf16.mxu0 0
  %1530 = vmatpush1.bf16.msra.mxu0 0
  %1531 = vmatprep.subr.bf16.mxu0 0
  %1532 = vmatpush1.bf16.msra.mxu0 0
  %1533 = vmatprep.subr.bf16.mxu0 0
  %1534 = vmatpush1.bf16.msra.mxu0 0
  %1535 = vmatprep.subr.bf16.mxu0 0
  %1536 = vmatpush1.bf16.msra.mxu0 0
  %1537 = vmatprep.subr.bf16.mxu0 0
  %1538 = vmatpush1.bf16.msra.mxu0 0
  %1539 = vmatprep.subr.bf16.mxu0 0
  %1540 = vmatpush1.bf16.msra.mxu0 0
  %1541 = vmatprep.subr.bf16.mxu0 0
  %1542 = vmatpush1.bf16.msra.mxu0 0
  %1543 = vmatprep.mubr.bf16.mxu0 0
  %1544 = vmatmul.mubr.bf16.gmra.mrb[0].mxu0 %v754
  %v1545 = vpop.f32.mrb[0].mxu0
  %v1546 = vadd.f32 0.0, %v1545
  %v1547 = vpop.f32.mrb[0].mxu0
  %v1548 = vadd.f32 0.0, %v1547
  %v1549 = vpop.f32.mrb[0].mxu0
  %v1550 = vadd.f32 0.0, %v1549
  %v1551 = vpop.f32.mrb[0].mxu0
  %v1552 = vadd.f32 0.0, %v1551
  %1553 = vdwg.mxu0
  %1554 = vmatprep.subr.bf16.mxu0 %v589
  %1555 = vmatpush1.bf16.msra.mxu0 %v588
  %1556 = vmatprep.subr.bf16.mxu0 %v848
  %1557 = vmatpush1.bf16.msra.mxu0 %v845
  %1558 = vmatprep.subr.bf16.mxu0 0
  %1559 = vmatpush1.bf16.msra.mxu0 0
  %1560 = vmatprep.subr.bf16.mxu0 0
  %1561 = vmatpush1.bf16.msra.mxu0 0
  %1562 = vmatprep.subr.bf16.mxu0 0
  %1563 = vmatpush1.bf16.msra.mxu0 0
  %1564 = vmatprep.subr.bf16.mxu0 0
  %1565 = vmatpush1.bf16.msra.mxu0 0
  %1566 = vmatprep.subr.bf16.mxu0 0
  %1567 = vmatpush1.bf16.msra.mxu0 0
  %1568 = vmatprep.subr.bf16.mxu0 0
  %1569 = vmatpush1.bf16.msra.mxu0 0
  %1570 = vmatprep.subr.bf16.mxu0 0
  %1571 = vmatpush1.bf16.msra.mxu0 0
  %1572 = vmatprep.subr.bf16.mxu0 0
  %1573 = vmatpush1.bf16.msra.mxu0 0
  %1574 = vmatprep.subr.bf16.mxu0 0
  %1575 = vmatpush1.bf16.msra.mxu0 0
  %1576 = vmatprep.subr.bf16.mxu0 0
  %1577 = vmatpush1.bf16.msra.mxu0 0
  %1578 = vmatprep.subr.bf16.mxu0 0
  %1579 = vmatpush1.bf16.msra.mxu0 0
  %1580 = vmatprep.subr.bf16.mxu0 0
  %1581 = vmatpush1.bf16.msra.mxu0 0
  %1582 = vmatprep.subr.bf16.mxu0 0
  %1583 = vmatpush1.bf16.msra.mxu0 0
  %1584 = vmatprep.subr.bf16.mxu0 0
  %1585 = vmatpush1.bf16.msra.mxu0 0
  %1586 = vmatprep.mubr.bf16.mxu0 0
  %1587 = vmatmul.mubr.bf16.gmra.mrb[0].mxu0 %v754
  %v1588 = vpop.f32.mrb[0].mxu0
  %v1589 = vadd.f32 0.0, %v1588
  %v1590 = vpop.f32.mrb[0].mxu0
  %v1591 = vadd.f32 0.0, %v1590
  %v1592 = vpop.f32.mrb[0].mxu0
  %v1593 = vadd.f32 0.0, %v1592
  %v1594 = vpop.f32.mrb[0].mxu0
  %v1595 = vadd.f32 0.0, %v1594
  %1596 = vdwg.mxu0
  %1597 = vmatprep.subr.bf16.mxu0 %v591
  %1598 = vmatpush1.bf16.msra.mxu0 %v590
  %1599 = vmatprep.subr.bf16.mxu0 %v854
  %1600 = vmatpush1.bf16.msra.mxu0 %v851
  %1601 = vmatprep.subr.bf16.mxu0 0
  %1602 = vmatpush1.bf16.msra.mxu0 0
  %1603 = vmatprep.subr.bf16.mxu0 0
  %1604 = vmatpush1.bf16.msra.mxu0 0
  %1605 = vmatprep.subr.bf16.mxu0 0
  %1606 = vmatpush1.bf16.msra.mxu0 0
  %1607 = vmatprep.subr.bf16.mxu0 0
  %1608 = vmatpush1.bf16.msra.mxu0 0
  %1609 = vmatprep.subr.bf16.mxu0 0
  %1610 = vmatpush1.bf16.msra.mxu0 0
  %1611 = vmatprep.subr.bf16.mxu0 0
  %1612 = vmatpush1.bf16.msra.mxu0 0
  %1613 = vmatprep.subr.bf16.mxu0 0
  %1614 = vmatpush1.bf16.msra.mxu0 0
  %1615 = vmatprep.subr.bf16.mxu0 0
  %1616 = vmatpush1.bf16.msra.mxu0 0
  %1617 = vmatprep.subr.bf16.mxu0 0
  %1618 = vmatpush1.bf16.msra.mxu0 0
  %1619 = vmatprep.subr.bf16.mxu0 0
  %1620 = vmatpush1.bf16.msra.mxu0 0
  %1621 = vmatprep.subr.bf16.mxu0 0
  %1622 = vmatpush1.bf16.msra.mxu0 0
  %1623 = vmatprep.subr.bf16.mxu0 0
  %1624 = vmatpush1.bf16.msra.mxu0 0
  %1625 = vmatprep.subr.bf16.mxu0 0
  %1626 = vmatpush1.bf16.msra.mxu0 0
  %1627 = vmatprep.subr.bf16.mxu0 0
  %1628 = vmatpush1.bf16.msra.mxu0 0
  %1629 = vmatprep.mubr.bf16.mxu0 0
  %1630 = vmatmul.mubr.bf16.gmra.mrb[0].mxu0 %v754
  %v1631 = vpop.f32.mrb[0].mxu0
  %v1632 = vadd.f32 0.0, %v1631
  %v1633 = vpop.f32.mrb[0].mxu0
  %v1634 = vadd.f32 0.0, %v1633
  %v1635 = vpop.f32.mrb[0].mxu0
  %v1636 = vadd.f32 0.0, %v1635
  %v1637 = vpop.f32.mrb[0].mxu0
  %v1638 = vadd.f32 0.0, %v1637
  %1639 = vdwg.mxu0
  %1640 = vmatprep.subr.bf16.mxu0 %v593
  %1641 = vmatpush1.bf16.msra.mxu0 %v592
  %1642 = vmatprep.subr.bf16.mxu0 %v860
  %1643 = vmatpush1.bf16.msra.mxu0 %v857
  %1644 = vmatprep.subr.bf16.mxu0 0
  %1645 = vmatpush1.bf16.msra.mxu0 0
  %1646 = vmatprep.subr.bf16.mxu0 0
  %1647 = vmatpush1.bf16.msra.mxu0 0
  %1648 = vmatprep.subr.bf16.mxu0 0
  %1649 = vmatpush1.bf16.msra.mxu0 0
  %1650 = vmatprep.subr.bf16.mxu0 0
  %1651 = vmatpush1.bf16.msra.mxu0 0
  %1652 = vmatprep.subr.bf16.mxu0 0
  %1653 = vmatpush1.bf16.msra.mxu0 0
  %1654 = vmatprep.subr.bf16.mxu0 0
  %1655 = vmatpush1.bf16.msra.mxu0 0
  %1656 = vmatprep.subr.bf16.mxu0 0
  %1657 = vmatpush1.bf16.msra.mxu0 0
  %1658 = vmatprep.subr.bf16.mxu0 0
  %1659 = vmatpush1.bf16.msra.mxu0 0
  %1660 = vmatprep.subr.bf16.mxu0 0
  %1661 = vmatpush1.bf16.msra.mxu0 0
  %1662 = vmatprep.subr.bf16.mxu0 0
  %1663 = vmatpush1.bf16.msra.mxu0 0
  %1664 = vmatprep.subr.bf16.mxu0 0
  %1665 = vmatpush1.bf16.msra.mxu0 0
  %1666 = vmatprep.subr.bf16.mxu0 0
  %1667 = vmatpush1.bf16.msra.mxu0 0
  %1668 = vmatprep.subr.bf16.mxu0 0
  %1669 = vmatpush1.bf16.msra.mxu0 0
  %1670 = vmatprep.subr.bf16.mxu0 0
  %1671 = vmatpush1.bf16.msra.mxu0 0
  %1672 = vmatprep.mubr.bf16.mxu0 0
  %1673 = vmatmul.mubr.bf16.gmra.mrb[0].mxu0 %v754
  %v1674 = vpop.f32.mrb[0].mxu0
  %v1675 = vadd.f32 0.0, %v1674
  %v1676 = vpop.f32.mrb[0].mxu0
  %v1677 = vadd.f32 0.0, %v1676
  %v1678 = vpop.f32.mrb[0].mxu0
  %v1679 = vadd.f32 0.0, %v1678
  %v1680 = vpop.f32.mrb[0].mxu0
  %v1681 = vadd.f32 0.0, %v1680
  %1682 = vdwg.mxu0
  %1683 = vmatprep.subr.bf16.mxu0 %v595
  %1684 = vmatpush1.bf16.msra.mxu0 %v594
  %1685 = vmatprep.subr.bf16.mxu0 %v866
  %1686 = vmatpush1.bf16.msra.mxu0 %v863
  %1687 = vmatprep.subr.bf16.mxu0 0
  %1688 = vmatpush1.bf16.msra.mxu0 0
  %1689 = vmatprep.subr.bf16.mxu0 0
  %1690 = vmatpush1.bf16.msra.mxu0 0
  %1691 = vmatprep.subr.bf16.mxu0 0
  %1692 = vmatpush1.bf16.msra.mxu0 0
  %1693 = vmatprep.subr.bf16.mxu0 0
  %1694 = vmatpush1.bf16.msra.mxu0 0
  %1695 = vmatprep.subr.bf16.mxu0 0
  %1696 = vmatpush1.bf16.msra.mxu0 0
  %1697 = vmatprep.subr.bf16.mxu0 0
  %1698 = vmatpush1.bf16.msra.mxu0 0
  %1699 = vmatprep.subr.bf16.mxu0 0
  %1700 = vmatpush1.bf16.msra.mxu0 0
  %1701 = vmatprep.subr.bf16.mxu0 0
  %1702 = vmatpush1.bf16.msra.mxu0 0
  %1703 = vmatprep.subr.bf16.mxu0 0
  %1704 = vmatpush1.bf16.msra.mxu0 0
  %1705 = vmatprep.subr.bf16.mxu0 0
  %1706 = vmatpush1.bf16.msra.mxu0 0
  %1707 = vmatprep.subr.bf16.mxu0 0
  %1708 = vmatpush1.bf16.msra.mxu0 0
  %1709 = vmatprep.subr.bf16.mxu0 0
  %1710 = vmatpush1.bf16.msra.mxu0 0
  %1711 = vmatprep.subr.bf16.mxu0 0
  %1712 = vmatpush1.bf16.msra.mxu0 0
  %1713 = vmatprep.subr.bf16.mxu0 0
  %1714 = vmatpush1.bf16.msra.mxu0 0
  %1715 = vmatprep.mubr.bf16.mxu0 0
  %1716 = vmatmul.mubr.bf16.gmra.mrb[0].mxu0 %v754
  %v1717 = vpop.f32.mrb[0].mxu0
  %v1718 = vadd.f32 0.0, %v1717
  %v1719 = vpop.f32.mrb[0].mxu0
  %v1720 = vadd.f32 0.0, %v1719
  %v1721 = vpop.f32.mrb[0].mxu0
  %v1722 = vadd.f32 0.0, %v1721
  %v1723 = vpop.f32.mrb[0].mxu0
  %v1724 = vadd.f32 0.0, %v1723
  %1725 = vdwg.mxu0
  %1726 = vmatprep.subr.bf16.mxu0 %v597
  %1727 = vmatpush1.bf16.msra.mxu0 %v596
  %1728 = vmatprep.subr.bf16.mxu0 %v872
  %1729 = vmatpush1.bf16.msra.mxu0 %v869
  %1730 = vmatprep.subr.bf16.mxu0 0
  %1731 = vmatpush1.bf16.msra.mxu0 0
  %1732 = vmatprep.subr.bf16.mxu0 0
  %1733 = vmatpush1.bf16.msra.mxu0 0
  %1734 = vmatprep.subr.bf16.mxu0 0
  %1735 = vmatpush1.bf16.msra.mxu0 0
  %1736 = vmatprep.subr.bf16.mxu0 0
  %1737 = vmatpush1.bf16.msra.mxu0 0
  %1738 = vmatprep.subr.bf16.mxu0 0
  %1739 = vmatpush1.bf16.msra.mxu0 0
  %1740 = vmatprep.subr.bf16.mxu0 0
  %1741 = vmatpush1.bf16.msra.mxu0 0
  %1742 = vmatprep.subr.bf16.mxu0 0
  %1743 = vmatpush1.bf16.msra.mxu0 0
  %1744 = vmatprep.subr.bf16.mxu0 0
  %1745 = vmatpush1.bf16.msra.mxu0 0
  %1746 = vmatprep.subr.bf16.mxu0 0
  %1747 = vmatpush1.bf16.msra.mxu0 0
  %1748 = vmatprep.subr.bf16.mxu0 0
  %1749 = vmatpush1.bf16.msra.mxu0 0
  %1750 = vmatprep.subr.bf16.mxu0 0
  %1751 = vmatpush1.bf16.msra.mxu0 0
  %1752 = vmatprep.subr.bf16.mxu0 0
  %1753 = vmatpush1.bf16.msra.mxu0 0
  %1754 = vmatprep.subr.bf16.mxu0 0
  %1755 = vmatpush1.bf16.msra.mxu0 0
  %1756 = vmatprep.subr.bf16.mxu0 0
  %1757 = vmatpush1.bf16.msra.mxu0 0
  %1758 = vmatprep.mubr.bf16.mxu0 0
  %1759 = vmatmul.mubr.bf16.gmra.mrb[0].mxu0 %v754
  %v1760 = vpop.f32.mrb[0].mxu0
  %v1761 = vadd.f32 0.0, %v1760
  %v1762 = vpop.f32.mrb[0].mxu0
  %v1763 = vadd.f32 0.0, %v1762
  %v1764 = vpop.f32.mrb[0].mxu0
  %v1765 = vadd.f32 0.0, %v1764
  %v1766 = vpop.f32.mrb[0].mxu0
  %v1767 = vadd.f32 0.0, %v1766
  %1768 = vdwg.mxu0
  %1769 = vmatprep.subr.bf16.mxu0 %v599
  %1770 = vmatpush1.bf16.msra.mxu0 %v598
  %1771 = vmatprep.subr.bf16.mxu0 %v878
  %1772 = vmatpush1.bf16.msra.mxu0 %v875
  %1773 = vmatprep.subr.bf16.mxu0 0
  %1774 = vmatpush1.bf16.msra.mxu0 0
  %1775 = vmatprep.subr.bf16.mxu0 0
  %1776 = vmatpush1.bf16.msra.mxu0 0
  %1777 = vmatprep.subr.bf16.mxu0 0
  %1778 = vmatpush1.bf16.msra.mxu0 0
  %1779 = vmatprep.subr.bf16.mxu0 0
  %1780 = vmatpush1.bf16.msra.mxu0 0
  %1781 = vmatprep.subr.bf16.mxu0 0
  %1782 = vmatpush1.bf16.msra.mxu0 0
  %1783 = vmatprep.subr.bf16.mxu0 0
  %1784 = vmatpush1.bf16.msra.mxu0 0
  %1785 = vmatprep.subr.bf16.mxu0 0
  %1786 = vmatpush1.bf16.msra.mxu0 0
  %1787 = vmatprep.subr.bf16.mxu0 0
  %1788 = vmatpush1.bf16.msra.mxu0 0
  %1789 = vmatprep.subr.bf16.mxu0 0
  %1790 = vmatpush1.bf16.msra.mxu0 0
  %1791 = vmatprep.subr.bf16.mxu0 0
  %1792 = vmatpush1.bf16.msra.mxu0 0
  %1793 = vmatprep.subr.bf16.mxu0 0
  %1794 = vmatpush1.bf16.msra.mxu0 0
  %1795 = vmatprep.subr.bf16.mxu0 0
  %1796 = vmatpush1.bf16.msra.mxu0 0
  %1797 = vmatprep.subr.bf16.mxu0 0
  %1798 = vmatpush1.bf16.msra.mxu0 0
  %1799 = vmatprep.subr.bf16.mxu0 0
  %1800 = vmatpush1.bf16.msra.mxu0 0
  %1801 = vmatprep.mubr.bf16.mxu0 0
  %1802 = vmatmul.mubr.bf16.gmra.mrb[0].mxu0 %v754
  %v1803 = vpop.f32.mrb[0].mxu0
  %v1804 = vadd.f32 0.0, %v1803
  %v1805 = vpop.f32.mrb[0].mxu0
  %v1806 = vadd.f32 0.0, %v1805
  %v1807 = vpop.f32.mrb[0].mxu0
  %v1808 = vadd.f32 0.0, %v1807
  %v1809 = vpop.f32.mrb[0].mxu0
  %v1810 = vadd.f32 0.0, %v1809
  %1811 = vdwg.mxu0
  %1812 = vmatprep.subr.bf16.mxu0 %v601
  %1813 = vmatpush1.bf16.msra.mxu0 %v600
  %1814 = vmatprep.subr.bf16.mxu0 %v884
  %1815 = vmatpush1.bf16.msra.mxu0 %v881
  %1816 = vmatprep.subr.bf16.mxu0 0
  %1817 = vmatpush1.bf16.msra.mxu0 0
  %1818 = vmatprep.subr.bf16.mxu0 0
  %1819 = vmatpush1.bf16.msra.mxu0 0
  %1820 = vmatprep.subr.bf16.mxu0 0
  %1821 = vmatpush1.bf16.msra.mxu0 0
  %1822 = vmatprep.subr.bf16.mxu0 0
  %1823 = vmatpush1.bf16.msra.mxu0 0
  %1824 = vmatprep.subr.bf16.mxu0 0
  %1825 = vmatpush1.bf16.msra.mxu0 0
  %1826 = vmatprep.subr.bf16.mxu0 0
  %1827 = vmatpush1.bf16.msra.mxu0 0
  %1828 = vmatprep.subr.bf16.mxu0 0
  %1829 = vmatpush1.bf16.msra.mxu0 0
  %1830 = vmatprep.subr.bf16.mxu0 0
  %1831 = vmatpush1.bf16.msra.mxu0 0
  %1832 = vmatprep.subr.bf16.mxu0 0
  %1833 = vmatpush1.bf16.msra.mxu0 0
  %1834 = vmatprep.subr.bf16.mxu0 0
  %1835 = vmatpush1.bf16.msra.mxu0 0
  %1836 = vmatprep.subr.bf16.mxu0 0
  %1837 = vmatpush1.bf16.msra.mxu0 0
  %1838 = vmatprep.subr.bf16.mxu0 0
  %1839 = vmatpush1.bf16.msra.mxu0 0
  %1840 = vmatprep.subr.bf16.mxu0 0
  %1841 = vmatpush1.bf16.msra.mxu0 0
  %1842 = vmatprep.subr.bf16.mxu0 0
  %1843 = vmatpush1.bf16.msra.mxu0 0
  %1844 = vmatprep.mubr.bf16.mxu0 0
  %1845 = vmatmul.mubr.bf16.gmra.mrb[0].mxu0 %v754
  %v1846 = vpop.f32.mrb[0].mxu0
  %v1847 = vadd.f32 0.0, %v1846
  %v1848 = vpop.f32.mrb[0].mxu0
  %v1849 = vadd.f32 0.0, %v1848
  %v1850 = vpop.f32.mrb[0].mxu0
  %v1851 = vadd.f32 0.0, %v1850
  %v1852 = vpop.f32.mrb[0].mxu0
  %v1853 = vadd.f32 0.0, %v1852
  %1854 = vdwg.mxu0
  %1855 = vmatprep.subr.bf16.mxu0 %v603
  %1856 = vmatpush1.bf16.msra.mxu0 %v602
  %1857 = vmatprep.subr.bf16.mxu0 %v890
  %1858 = vmatpush1.bf16.msra.mxu0 %v887
  %1859 = vmatprep.subr.bf16.mxu0 0
  %1860 = vmatpush1.bf16.msra.mxu0 0
  %1861 = vmatprep.subr.bf16.mxu0 0
  %1862 = vmatpush1.bf16.msra.mxu0 0
  %1863 = vmatprep.subr.bf16.mxu0 0
  %1864 = vmatpush1.bf16.msra.mxu0 0
  %1865 = vmatprep.subr.bf16.mxu0 0
  %1866 = vmatpush1.bf16.msra.mxu0 0
  %1867 = vmatprep.subr.bf16.mxu0 0
  %1868 = vmatpush1.bf16.msra.mxu0 0
  %1869 = vmatprep.subr.bf16.mxu0 0
  %1870 = vmatpush1.bf16.msra.mxu0 0
  %1871 = vmatprep.subr.bf16.mxu0 0
  %1872 = vmatpush1.bf16.msra.mxu0 0
  %1873 = vmatprep.subr.bf16.mxu0 0
  %1874 = vmatpush1.bf16.msra.mxu0 0
  %1875 = vmatprep.subr.bf16.mxu0 0
  %1876 = vmatpush1.bf16.msra.mxu0 0
  %1877 = vmatprep.subr.bf16.mxu0 0
  %1878 = vmatpush1.bf16.msra.mxu0 0
  %1879 = vmatprep.subr.bf16.mxu0 0
  %1880 = vmatpush1.bf16.msra.mxu0 0
  %1881 = vmatprep.subr.bf16.mxu0 0
  %1882 = vmatpush1.bf16.msra.mxu0 0
  %1883 = vmatprep.subr.bf16.mxu0 0
  %1884 = vmatpush1.bf16.msra.mxu0 0
  %1885 = vmatprep.subr.bf16.mxu0 0
  %1886 = vmatpush1.bf16.msra.mxu0 0
  %1887 = vmatprep.mubr.bf16.mxu0 0
  %1888 = vmatmul.mubr.bf16.gmra.mrb[0].mxu0 %v754
  %v1889 = vpop.f32.mrb[0].mxu0
  %v1890 = vadd.f32 0.0, %v1889
  %v1891 = vpop.f32.mrb[0].mxu0
  %v1892 = vadd.f32 0.0, %v1891
  %v1893 = vpop.f32.mrb[0].mxu0
  %v1894 = vadd.f32 0.0, %v1893
  %v1895 = vpop.f32.mrb[0].mxu0
  %v1896 = vadd.f32 0.0, %v1895
  %1897 = vdwg.mxu0
  %1898 = vmatprep.subr.bf16.mxu0 %v605
  %1899 = vmatpush1.bf16.msra.mxu0 %v604
  %1900 = vmatprep.subr.bf16.mxu0 %v896
  %1901 = vmatpush1.bf16.msra.mxu0 %v893
  %1902 = vmatprep.subr.bf16.mxu0 0
  %1903 = vmatpush1.bf16.msra.mxu0 0
  %1904 = vmatprep.subr.bf16.mxu0 0
  %1905 = vmatpush1.bf16.msra.mxu0 0
  %1906 = vmatprep.subr.bf16.mxu0 0
  %1907 = vmatpush1.bf16.msra.mxu0 0
  %1908 = vmatprep.subr.bf16.mxu0 0
  %1909 = vmatpush1.bf16.msra.mxu0 0
  %1910 = vmatprep.subr.bf16.mxu0 0
  %1911 = vmatpush1.bf16.msra.mxu0 0
  %1912 = vmatprep.subr.bf16.mxu0 0
  %1913 = vmatpush1.bf16.msra.mxu0 0
  %1914 = vmatprep.subr.bf16.mxu0 0
  %1915 = vmatpush1.bf16.msra.mxu0 0
  %1916 = vmatprep.subr.bf16.mxu0 0
  %1917 = vmatpush1.bf16.msra.mxu0 0
  %1918 = vmatprep.subr.bf16.mxu0 0
  %1919 = vmatpush1.bf16.msra.mxu0 0
  %1920 = vmatprep.subr.bf16.mxu0 0
  %1921 = vmatpush1.bf16.msra.mxu0 0
  %1922 = vmatprep.subr.bf16.mxu0 0
  %1923 = vmatpush1.bf16.msra.mxu0 0
  %1924 = vmatprep.subr.bf16.mxu0 0
  %1925 = vmatpush1.bf16.msra.mxu0 0
  %1926 = vmatprep.subr.bf16.mxu0 0
  %1927 = vmatpush1.bf16.msra.mxu0 0
  %1928 = vmatprep.subr.bf16.mxu0 0
  %1929 = vmatpush1.bf16.msra.mxu0 0
  %1930 = vmatprep.mubr.bf16.mxu0 0
  %1931 = vmatmul.mubr.bf16.gmra.mrb[0].mxu0 %v754
  %v1932 = vpop.f32.mrb[0].mxu0
  %v1933 = vadd.f32 0.0, %v1932
  %v1934 = vpop.f32.mrb[0].mxu0
  %v1935 = vadd.f32 0.0, %v1934
  %v1936 = vpop.f32.mrb[0].mxu0
  %v1937 = vadd.f32 0.0, %v1936
  %v1938 = vpop.f32.mrb[0].mxu0
  %v1939 = vadd.f32 0.0, %v1938
  %1940 = vdwg.mxu0
  %1941 = vmatprep.subr.bf16.mxu0 %v607
  %1942 = vmatpush1.bf16.msra.mxu0 %v606
  %1943 = vmatprep.subr.bf16.mxu0 %v902
  %1944 = vmatpush1.bf16.msra.mxu0 %v899
  %1945 = vmatprep.subr.bf16.mxu0 0
  %1946 = vmatpush1.bf16.msra.mxu0 0
  %1947 = vmatprep.subr.bf16.mxu0 0
  %1948 = vmatpush1.bf16.msra.mxu0 0
  %1949 = vmatprep.subr.bf16.mxu0 0
  %1950 = vmatpush1.bf16.msra.mxu0 0
  %1951 = vmatprep.subr.bf16.mxu0 0
  %1952 = vmatpush1.bf16.msra.mxu0 0
  %1953 = vmatprep.subr.bf16.mxu0 0
  %1954 = vmatpush1.bf16.msra.mxu0 0
  %1955 = vmatprep.subr.bf16.mxu0 0
  %1956 = vmatpush1.bf16.msra.mxu0 0
  %1957 = vmatprep.subr.bf16.mxu0 0
  %1958 = vmatpush1.bf16.msra.mxu0 0
  %1959 = vmatprep.subr.bf16.mxu0 0
  %1960 = vmatpush1.bf16.msra.mxu0 0
  %1961 = vmatprep.subr.bf16.mxu0 0
  %1962 = vmatpush1.bf16.msra.mxu0 0
  %1963 = vmatprep.subr.bf16.mxu0 0
  %1964 = vmatpush1.bf16.msra.mxu0 0
  %1965 = vmatprep.subr.bf16.mxu0 0
  %1966 = vmatpush1.bf16.msra.mxu0 0
  %1967 = vmatprep.subr.bf16.mxu0 0
  %1968 = vmatpush1.bf16.msra.mxu0 0
  %1969 = vmatprep.subr.bf16.mxu0 0
  %1970 = vmatpush1.bf16.msra.mxu0 0
  %1971 = vmatprep.subr.bf16.mxu0 0
  %1972 = vmatpush1.bf16.msra.mxu0 0
  %1973 = vmatprep.mubr.bf16.mxu0 0
  %1974 = vmatmul.mubr.bf16.gmra.mrb[0].mxu0 %v754
  %v1975 = vpop.f32.mrb[0].mxu0
  %v1976 = vadd.f32 0.0, %v1975
  %v1977 = vpop.f32.mrb[0].mxu0
  %v1978 = vadd.f32 0.0, %v1977
  %v1979 = vpop.f32.mrb[0].mxu0
  %v1980 = vadd.f32 0.0, %v1979
  %v1981 = vpop.f32.mrb[0].mxu0
  %v1982 = vadd.f32 0.0, %v1981
  %1983 = vdwg.mxu0
  %1984 = vmatprep.subr.bf16.mxu0 %v609
  %1985 = vmatpush1.bf16.msra.mxu0 %v608
  %1986 = vmatprep.subr.bf16.mxu0 %v908
  %1987 = vmatpush1.bf16.msra.mxu0 %v905
  %1988 = vmatprep.subr.bf16.mxu0 0
  %1989 = vmatpush1.bf16.msra.mxu0 0
  %1990 = vmatprep.subr.bf16.mxu0 0
  %1991 = vmatpush1.bf16.msra.mxu0 0
  %1992 = vmatprep.subr.bf16.mxu0 0
  %1993 = vmatpush1.bf16.msra.mxu0 0
  %1994 = vmatprep.subr.bf16.mxu0 0
  %1995 = vmatpush1.bf16.msra.mxu0 0
  %1996 = vmatprep.subr.bf16.mxu0 0
  %1997 = vmatpush1.bf16.msra.mxu0 0
  %1998 = vmatprep.subr.bf16.mxu0 0
  %1999 = vmatpush1.bf16.msra.mxu0 0
  %2000 = vmatprep.subr.bf16.mxu0 0
  %2001 = vmatpush1.bf16.msra.mxu0 0
  %2002 = vmatprep.subr.bf16.mxu0 0
  %2003 = vmatpush1.bf16.msra.mxu0 0
  %2004 = vmatprep.subr.bf16.mxu0 0
  %2005 = vmatpush1.bf16.msra.mxu0 0
  %2006 = vmatprep.subr.bf16.mxu0 0
  %2007 = vmatpush1.bf16.msra.mxu0 0
  %2008 = vmatprep.subr.bf16.mxu0 0
  %2009 = vmatpush1.bf16.msra.mxu0 0
  %2010 = vmatprep.subr.bf16.mxu0 0
  %2011 = vmatpush1.bf16.msra.mxu0 0
  %2012 = vmatprep.subr.bf16.mxu0 0
  %2013 = vmatpush1.bf16.msra.mxu0 0
  %2014 = vmatprep.subr.bf16.mxu0 0
  %2015 = vmatpush1.bf16.msra.mxu0 0
  %2016 = vmatprep.mubr.bf16.mxu0 0
  %2017 = vmatmul.mubr.bf16.gmra.mrb[0].mxu0 %v754
  %v2018 = vpop.f32.mrb[0].mxu0
  %v2019 = vadd.f32 0.0, %v2018
  %v2020 = vpop.f32.mrb[0].mxu0
  %v2021 = vadd.f32 0.0, %v2020
  %v2022 = vpop.f32.mrb[0].mxu0
  %v2023 = vadd.f32 0.0, %v2022
  %v2024 = vpop.f32.mrb[0].mxu0
  %v2025 = vadd.f32 0.0, %v2024
  %2026 = vdwg.mxu0
  %2027 = vmatprep.subr.bf16.mxu0 %v611
  %2028 = vmatpush1.bf16.msra.mxu0 %v610
  %2029 = vmatprep.subr.bf16.mxu0 %v914
  %2030 = vmatpush1.bf16.msra.mxu0 %v911
  %2031 = vmatprep.subr.bf16.mxu0 0
  %2032 = vmatpush1.bf16.msra.mxu0 0
  %2033 = vmatprep.subr.bf16.mxu0 0
  %2034 = vmatpush1.bf16.msra.mxu0 0
  %2035 = vmatprep.subr.bf16.mxu0 0
  %2036 = vmatpush1.bf16.msra.mxu0 0
  %2037 = vmatprep.subr.bf16.mxu0 0
  %2038 = vmatpush1.bf16.msra.mxu0 0
  %2039 = vmatprep.subr.bf16.mxu0 0
  %2040 = vmatpush1.bf16.msra.mxu0 0
  %2041 = vmatprep.subr.bf16.mxu0 0
  %2042 = vmatpush1.bf16.msra.mxu0 0
  %2043 = vmatprep.subr.bf16.mxu0 0
  %2044 = vmatpush1.bf16.msra.mxu0 0
  %2045 = vmatprep.subr.bf16.mxu0 0
  %2046 = vmatpush1.bf16.msra.mxu0 0
  %2047 = vmatprep.subr.bf16.mxu0 0
  %2048 = vmatpush1.bf16.msra.mxu0 0
  %2049 = vmatprep.subr.bf16.mxu0 0
  %2050 = vmatpush1.bf16.msra.mxu0 0
  %2051 = vmatprep.subr.bf16.mxu0 0
  %2052 = vmatpush1.bf16.msra.mxu0 0
  %2053 = vmatprep.subr.bf16.mxu0 0
  %2054 = vmatpush1.bf16.msra.mxu0 0
  %2055 = vmatprep.subr.bf16.mxu0 0
  %2056 = vmatpush1.bf16.msra.mxu0 0
  %2057 = vmatprep.subr.bf16.mxu0 0
  %2058 = vmatpush1.bf16.msra.mxu0 0
  %2059 = vmatprep.mubr.bf16.mxu0 0
  %2060 = vmatmul.mubr.bf16.gmra.mrb[0].mxu0 %v754
  %v2061 = vpop.f32.mrb[0].mxu0
  %v2062 = vadd.f32 0.0, %v2061
  %v2063 = vpop.f32.mrb[0].mxu0
  %v2064 = vadd.f32 0.0, %v2063
  %v2065 = vpop.f32.mrb[0].mxu0
  %v2066 = vadd.f32 0.0, %v2065
  %v2067 = vpop.f32.mrb[0].mxu0
  %v2068 = vadd.f32 0.0, %v2067
  %2069 = vdwg.mxu0
  %2070 = vmatprep.subr.bf16.mxu0 %v613
  %2071 = vmatpush1.bf16.msra.mxu0 %v612
  %2072 = vmatprep.subr.bf16.mxu0 %v920
  %2073 = vmatpush1.bf16.msra.mxu0 %v917
  %2074 = vmatprep.subr.bf16.mxu0 0
  %2075 = vmatpush1.bf16.msra.mxu0 0
  %2076 = vmatprep.subr.bf16.mxu0 0
  %2077 = vmatpush1.bf16.msra.mxu0 0
  %2078 = vmatprep.subr.bf16.mxu0 0
  %2079 = vmatpush1.bf16.msra.mxu0 0
  %2080 = vmatprep.subr.bf16.mxu0 0
  %2081 = vmatpush1.bf16.msra.mxu0 0
  %2082 = vmatprep.subr.bf16.mxu0 0
  %2083 = vmatpush1.bf16.msra.mxu0 0
  %2084 = vmatprep.subr.bf16.mxu0 0
  %2085 = vmatpush1.bf16.msra.mxu0 0
  %2086 = vmatprep.subr.bf16.mxu0 0
  %2087 = vmatpush1.bf16.msra.mxu0 0
  %2088 = vmatprep.subr.bf16.mxu0 0
  %2089 = vmatpush1.bf16.msra.mxu0 0
  %2090 = vmatprep.subr.bf16.mxu0 0
  %2091 = vmatpush1.bf16.msra.mxu0 0
  %2092 = vmatprep.subr.bf16.mxu0 0
  %2093 = vmatpush1.bf16.msra.mxu0 0
  %2094 = vmatprep.subr.bf16.mxu0 0
  %2095 = vmatpush1.bf16.msra.mxu0 0
  %2096 = vmatprep.subr.bf16.mxu0 0
  %2097 = vmatpush1.bf16.msra.mxu0 0
  %2098 = vmatprep.subr.bf16.mxu0 0
  %2099 = vmatpush1.bf16.msra.mxu0 0
  %2100 = vmatprep.subr.bf16.mxu0 0
  %2101 = vmatpush1.bf16.msra.mxu0 0
  %2102 = vmatprep.mubr.bf16.mxu0 0
  %2103 = vmatmul.mubr.bf16.gmra.mrb[0].mxu0 %v754
  %v2104 = vpop.f32.mrb[0].mxu0
  %v2105 = vadd.f32 0.0, %v2104
  %v2106 = vpop.f32.mrb[0].mxu0
  %v2107 = vadd.f32 0.0, %v2106
  %v2108 = vpop.f32.mrb[0].mxu0
  %v2109 = vadd.f32 0.0, %v2108
  %v2110 = vpop.f32.mrb[0].mxu0
  %v2111 = vadd.f32 0.0, %v2110
  %2112 = vdwg.mxu0
  %2113 = vmatprep.subr.bf16.mxu0 %v615
  %2114 = vmatpush1.bf16.msra.mxu0 %v614
  %2115 = vmatprep.subr.bf16.mxu0 %v926
  %2116 = vmatpush1.bf16.msra.mxu0 %v923
  %2117 = vmatprep.subr.bf16.mxu0 0
  %2118 = vmatpush1.bf16.msra.mxu0 0
  %2119 = vmatprep.subr.bf16.mxu0 0
  %2120 = vmatpush1.bf16.msra.mxu0 0
  %2121 = vmatprep.subr.bf16.mxu0 0
  %2122 = vmatpush1.bf16.msra.mxu0 0
  %2123 = vmatprep.subr.bf16.mxu0 0
  %2124 = vmatpush1.bf16.msra.mxu0 0
  %2125 = vmatprep.subr.bf16.mxu0 0
  %2126 = vmatpush1.bf16.msra.mxu0 0
  %2127 = vmatprep.subr.bf16.mxu0 0
  %2128 = vmatpush1.bf16.msra.mxu0 0
  %2129 = vmatprep.subr.bf16.mxu0 0
  %2130 = vmatpush1.bf16.msra.mxu0 0
  %2131 = vmatprep.subr.bf16.mxu0 0
  %2132 = vmatpush1.bf16.msra.mxu0 0
  %2133 = vmatprep.subr.bf16.mxu0 0
  %2134 = vmatpush1.bf16.msra.mxu0 0
  %2135 = vmatprep.subr.bf16.mxu0 0
  %2136 = vmatpush1.bf16.msra.mxu0 0
  %2137 = vmatprep.subr.bf16.mxu0 0
  %2138 = vmatpush1.bf16.msra.mxu0 0
  %2139 = vmatprep.subr.bf16.mxu0 0
  %2140 = vmatpush1.bf16.msra.mxu0 0
  %2141 = vmatprep.subr.bf16.mxu0 0
  %2142 = vmatpush1.bf16.msra.mxu0 0
  %2143 = vmatprep.subr.bf16.mxu0 0
  %2144 = vmatpush1.bf16.msra.mxu0 0
  %2145 = vmatprep.mubr.bf16.mxu0 0
  %2146 = vmatmul.mubr.bf16.gmra.mrb[0].mxu0 %v754
  %v2147 = vpop.f32.mrb[0].mxu0
  %v2148 = vadd.f32 0.0, %v2147
  %v2149 = vpop.f32.mrb[0].mxu0
  %v2150 = vadd.f32 0.0, %v2149
  %v2151 = vpop.f32.mrb[0].mxu0
  %v2152 = vadd.f32 0.0, %v2151
  %v2153 = vpop.f32.mrb[0].mxu0
  %v2154 = vadd.f32 0.0, %v2153
  %2155 = vdwg.mxu0
  %2156 = vmatprep.subr.bf16.mxu0 %v617
  %2157 = vmatpush1.bf16.msra.mxu0 %v616
  %2158 = vmatprep.subr.bf16.mxu0 %v932
  %2159 = vmatpush1.bf16.msra.mxu0 %v929
  %2160 = vmatprep.subr.bf16.mxu0 0
  %2161 = vmatpush1.bf16.msra.mxu0 0
  %2162 = vmatprep.subr.bf16.mxu0 0
  %2163 = vmatpush1.bf16.msra.mxu0 0
  %2164 = vmatprep.subr.bf16.mxu0 0
  %2165 = vmatpush1.bf16.msra.mxu0 0
  %2166 = vmatprep.subr.bf16.mxu0 0
  %2167 = vmatpush1.bf16.msra.mxu0 0
  %2168 = vmatprep.subr.bf16.mxu0 0
  %2169 = vmatpush1.bf16.msra.mxu0 0
  %2170 = vmatprep.subr.bf16.mxu0 0
  %2171 = vmatpush1.bf16.msra.mxu0 0
  %2172 = vmatprep.subr.bf16.mxu0 0
  %2173 = vmatpush1.bf16.msra.mxu0 0
  %2174 = vmatprep.subr.bf16.mxu0 0
  %2175 = vmatpush1.bf16.msra.mxu0 0
  %2176 = vmatprep.subr.bf16.mxu0 0
  %2177 = vmatpush1.bf16.msra.mxu0 0
  %2178 = vmatprep.subr.bf16.mxu0 0
  %2179 = vmatpush1.bf16.msra.mxu0 0
  %2180 = vmatprep.subr.bf16.mxu0 0
  %2181 = vmatpush1.bf16.msra.mxu0 0
  %2182 = vmatprep.subr.bf16.mxu0 0
  %2183 = vmatpush1.bf16.msra.mxu0 0
  %2184 = vmatprep.subr.bf16.mxu0 0
  %2185 = vmatpush1.bf16.msra.mxu0 0
  %2186 = vmatprep.subr.bf16.mxu0 0
  %2187 = vmatpush1.bf16.msra.mxu0 0
  %2188 = vmatprep.mubr.bf16.mxu0 0
  %2189 = vmatmul.mubr.bf16.gmra.mrb[0].mxu0 %v754
  %v2190 = vpop.f32.mrb[0].mxu0
  %v2191 = vadd.f32 0.0, %v2190
  %v2192 = vpop.f32.mrb[0].mxu0
  %v2193 = vadd.f32 0.0, %v2192
  %v2194 = vpop.f32.mrb[0].mxu0
  %v2195 = vadd.f32 0.0, %v2194
  %v2196 = vpop.f32.mrb[0].mxu0
  %v2197 = vadd.f32 0.0, %v2196
  %2198 = vdwg.mxu0
  %2199 = vmatprep.subr.bf16.mxu0 %v619
  %2200 = vmatpush1.bf16.msra.mxu0 %v618
  %2201 = vmatprep.subr.bf16.mxu0 %v938
  %2202 = vmatpush1.bf16.msra.mxu0 %v935
  %2203 = vmatprep.subr.bf16.mxu0 0
  %2204 = vmatpush1.bf16.msra.mxu0 0
  %2205 = vmatprep.subr.bf16.mxu0 0
  %2206 = vmatpush1.bf16.msra.mxu0 0
  %2207 = vmatprep.subr.bf16.mxu0 0
  %2208 = vmatpush1.bf16.msra.mxu0 0
  %2209 = vmatprep.subr.bf16.mxu0 0
  %2210 = vmatpush1.bf16.msra.mxu0 0
  %2211 = vmatprep.subr.bf16.mxu0 0
  %2212 = vmatpush1.bf16.msra.mxu0 0
  %2213 = vmatprep.subr.bf16.mxu0 0
  %2214 = vmatpush1.bf16.msra.mxu0 0
  %2215 = vmatprep.subr.bf16.mxu0 0
  %2216 = vmatpush1.bf16.msra.mxu0 0
  %2217 = vmatprep.subr.bf16.mxu0 0
  %2218 = vmatpush1.bf16.msra.mxu0 0
  %2219 = vmatprep.subr.bf16.mxu0 0
  %2220 = vmatpush1.bf16.msra.mxu0 0
  %2221 = vmatprep.subr.bf16.mxu0 0
  %2222 = vmatpush1.bf16.msra.mxu0 0
  %2223 = vmatprep.subr.bf16.mxu0 0
  %2224 = vmatpush1.bf16.msra.mxu0 0
  %2225 = vmatprep.subr.bf16.mxu0 0
  %2226 = vmatpush1.bf16.msra.mxu0 0
  %2227 = vmatprep.subr.bf16.mxu0 0
  %2228 = vmatpush1.bf16.msra.mxu0 0
  %2229 = vmatprep.subr.bf16.mxu0 0
  %2230 = vmatpush1.bf16.msra.mxu0 0
  %2231 = vmatprep.mubr.bf16.mxu0 0
  %2232 = vmatmul.mubr.bf16.gmra.mrb[0].mxu0 %v754
  %v2233 = vpop.f32.mrb[0].mxu0
  %v2234 = vadd.f32 0.0, %v2233
  %v2235 = vpop.f32.mrb[0].mxu0
  %v2236 = vadd.f32 0.0, %v2235
  %v2237 = vpop.f32.mrb[0].mxu0
  %v2238 = vadd.f32 0.0, %v2237
  %v2239 = vpop.f32.mrb[0].mxu0
  %v2240 = vadd.f32 0.0, %v2239
  %2241 = vdwg.mxu0
  %2242 = vmatprep.subr.bf16.mxu0 %v621
  %2243 = vmatpush1.bf16.msra.mxu0 %v620
  %2244 = vmatprep.subr.bf16.mxu0 %v944
  %2245 = vmatpush1.bf16.msra.mxu0 %v941
  %2246 = vmatprep.subr.bf16.mxu0 0
  %2247 = vmatpush1.bf16.msra.mxu0 0
  %2248 = vmatprep.subr.bf16.mxu0 0
  %2249 = vmatpush1.bf16.msra.mxu0 0
  %2250 = vmatprep.subr.bf16.mxu0 0
  %2251 = vmatpush1.bf16.msra.mxu0 0
  %2252 = vmatprep.subr.bf16.mxu0 0
  %2253 = vmatpush1.bf16.msra.mxu0 0
  %2254 = vmatprep.subr.bf16.mxu0 0
  %2255 = vmatpush1.bf16.msra.mxu0 0
  %2256 = vmatprep.subr.bf16.mxu0 0
  %2257 = vmatpush1.bf16.msra.mxu0 0
  %2258 = vmatprep.subr.bf16.mxu0 0
  %2259 = vmatpush1.bf16.msra.mxu0 0
  %2260 = vmatprep.subr.bf16.mxu0 0
  %2261 = vmatpush1.bf16.msra.mxu0 0
  %2262 = vmatprep.subr.bf16.mxu0 0
  %2263 = vmatpush1.bf16.msra.mxu0 0
  %2264 = vmatprep.subr.bf16.mxu0 0
  %2265 = vmatpush1.bf16.msra.mxu0 0
  %2266 = vmatprep.subr.bf16.mxu0 0
  %2267 = vmatpush1.bf16.msra.mxu0 0
  %2268 = vmatprep.subr.bf16.mxu0 0
  %2269 = vmatpush1.bf16.msra.mxu0 0
  %2270 = vmatprep.subr.bf16.mxu0 0
  %2271 = vmatpush1.bf16.msra.mxu0 0
  %2272 = vmatprep.subr.bf16.mxu0 0
  %2273 = vmatpush1.bf16.msra.mxu0 0
  %2274 = vmatprep.mubr.bf16.mxu0 0
  %2275 = vmatmul.mubr.bf16.gmra.mrb[0].mxu0 %v754
  %v2276 = vpop.f32.mrb[0].mxu0
  %v2277 = vadd.f32 0.0, %v2276
  %v2278 = vpop.f32.mrb[0].mxu0
  %v2279 = vadd.f32 0.0, %v2278
  %v2280 = vpop.f32.mrb[0].mxu0
  %v2281 = vadd.f32 0.0, %v2280
  %v2282 = vpop.f32.mrb[0].mxu0
  %v2283 = vadd.f32 0.0, %v2282
  %2284 = vdwg.mxu0
  %2285 = vmatprep.subr.bf16.mxu0 %v623
  %2286 = vmatpush1.bf16.msra.mxu0 %v622
  %2287 = vmatprep.subr.bf16.mxu0 %v950
  %2288 = vmatpush1.bf16.msra.mxu0 %v947
  %2289 = vmatprep.subr.bf16.mxu0 0
  %2290 = vmatpush1.bf16.msra.mxu0 0
  %2291 = vmatprep.subr.bf16.mxu0 0
  %2292 = vmatpush1.bf16.msra.mxu0 0
  %2293 = vmatprep.subr.bf16.mxu0 0
  %2294 = vmatpush1.bf16.msra.mxu0 0
  %2295 = vmatprep.subr.bf16.mxu0 0
  %2296 = vmatpush1.bf16.msra.mxu0 0
  %2297 = vmatprep.subr.bf16.mxu0 0
  %2298 = vmatpush1.bf16.msra.mxu0 0
  %2299 = vmatprep.subr.bf16.mxu0 0
  %2300 = vmatpush1.bf16.msra.mxu0 0
  %2301 = vmatprep.subr.bf16.mxu0 0
  %2302 = vmatpush1.bf16.msra.mxu0 0
  %2303 = vmatprep.subr.bf16.mxu0 0
  %2304 = vmatpush1.bf16.msra.mxu0 0
  %2305 = vmatprep.subr.bf16.mxu0 0
  %2306 = vmatpush1.bf16.msra.mxu0 0
  %2307 = vmatprep.subr.bf16.mxu0 0
  %2308 = vmatpush1.bf16.msra.mxu0 0
  %2309 = vmatprep.subr.bf16.mxu0 0
  %2310 = vmatpush1.bf16.msra.mxu0 0
  %2311 = vmatprep.subr.bf16.mxu0 0
  %2312 = vmatpush1.bf16.msra.mxu0 0
  %2313 = vmatprep.subr.bf16.mxu0 0
  %2314 = vmatpush1.bf16.msra.mxu0 0
  %2315 = vmatprep.subr.bf16.mxu0 0
  %2316 = vmatpush1.bf16.msra.mxu0 0
  %2317 = vmatprep.mubr.bf16.mxu0 0
  %2318 = vmatmul.mubr.bf16.gmra.mrb[0].mxu0 %v754
  %v2319 = vpop.f32.mrb[0].mxu0
  %v2320 = vadd.f32 0.0, %v2319
  %v2321 = vpop.f32.mrb[0].mxu0
  %v2322 = vadd.f32 0.0, %v2321
  %v2323 = vpop.f32.mrb[0].mxu0
  %v2324 = vadd.f32 0.0, %v2323
  %v2325 = vpop.f32.mrb[0].mxu0
  %v2326 = vadd.f32 0.0, %v2325
  %2327 = vdwg.mxu0
  %v2328 = vmax.f32 %v987, %v1331
  %v2329 = vmax.f32 %v989, %v1333
  %v2330 = vmax.f32 %v1030, %v1374
  %v2331 = vmax.f32 %v1032, %v1376
  %v2332 = vmax.f32 %v1073, %v1417
  %v2333 = vmax.f32 %v1075, %v1419
  %v2334 = vmax.f32 %v1116, %v1460
  %v2335 = vmax.f32 %v1118, %v1462
  %v2336 = vmax.f32 %v1159, %v1503
  %v2337 = vmax.f32 %v1161, %v1505
  %v2338 = vmax.f32 %v1202, %v1546
  %v2339 = vmax.f32 %v1204, %v1548
  %v2340 = vmax.f32 %v1245, %v1589
  %v2341 = vmax.f32 %v1247, %v1591
  %v2342 = vmax.f32 %v1288, %v1632
  %v2343 = vmax.f32 %v1290, %v1634
  %v2344 = vmax.f32 %v991, %v1335
  %v2345 = vmax.f32 %v993, %v1337
  %v2346 = vmax.f32 %v1034, %v1378
  %v2347 = vmax.f32 %v1036, %v1380
  %v2348 = vmax.f32 %v1077, %v1421
  %v2349 = vmax.f32 %v1079, %v1423
  %v2350 = vmax.f32 %v1120, %v1464
  %v2351 = vmax.f32 %v1122, %v1466
  %v2352 = vmax.f32 %v1163, %v1507
  %v2353 = vmax.f32 %v1165, %v1509
  %v2354 = vmax.f32 %v1206, %v1550
  %v2355 = vmax.f32 %v1208, %v1552
  %v2356 = vmax.f32 %v1249, %v1593
  %v2357 = vmax.f32 %v1251, %v1595
  %v2358 = vmax.f32 %v1292, %v1636
  %v2359 = vmax.f32 %v1294, %v1638
  %v2360 = vmax.f32 %v1675, %v2019
  %v2361 = vmax.f32 %v1677, %v2021
  %v2362 = vmax.f32 %v1718, %v2062
  %v2363 = vmax.f32 %v1720, %v2064
  %v2364 = vmax.f32 %v1761, %v2105
  %v2365 = vmax.f32 %v1763, %v2107
  %v2366 = vmax.f32 %v1804, %v2148
  %v2367 = vmax.f32 %v1806, %v2150
  %v2368 = vmax.f32 %v1847, %v2191
  %v2369 = vmax.f32 %v1849, %v2193
  %v2370 = vmax.f32 %v1890, %v2234
  %v2371 = vmax.f32 %v1892, %v2236
  %v2372 = vmax.f32 %v1933, %v2277
  %v2373 = vmax.f32 %v1935, %v2279
  %v2374 = vmax.f32 %v1976, %v2320
  %v2375 = vmax.f32 %v1978, %v2322
  %v2376 = vmax.f32 %v1679, %v2023
  %v2377 = vmax.f32 %v1681, %v2025
  %v2378 = vmax.f32 %v1722, %v2066
  %v2379 = vmax.f32 %v1724, %v2068
  %v2380 = vmax.f32 %v1765, %v2109
  %v2381 = vmax.f32 %v1767, %v2111
  %v2382 = vmax.f32 %v1808, %v2152
  %v2383 = vmax.f32 %v1810, %v2154
  %v2384 = vmax.f32 %v1851, %v2195
  %v2385 = vmax.f32 %v1853, %v2197
  %v2386 = vmax.f32 %v1894, %v2238
  %v2387 = vmax.f32 %v1896, %v2240
  %v2388 = vmax.f32 %v1937, %v2281
  %v2389 = vmax.f32 %v1939, %v2283
  %v2390 = vmax.f32 %v1980, %v2324
  %v2391 = vmax.f32 %v1982, %v2326
  %v2392 = vmax.f32 %v2328, %v2360
  %v2393 = vmax.f32 %v2329, %v2361
  %v2394 = vmax.f32 %v2330, %v2362
  %v2395 = vmax.f32 %v2331, %v2363
  %v2396 = vmax.f32 %v2332, %v2364
  %v2397 = vmax.f32 %v2333, %v2365
  %v2398 = vmax.f32 %v2334, %v2366
  %v2399 = vmax.f32 %v2335, %v2367
  %v2400 = vmax.f32 %v2336, %v2368
  %v2401 = vmax.f32 %v2337, %v2369
  %v2402 = vmax.f32 %v2338, %v2370
  %v2403 = vmax.f32 %v2339, %v2371
  %v2404 = vmax.f32 %v2340, %v2372
  %v2405 = vmax.f32 %v2341, %v2373
  %v2406 = vmax.f32 %v2342, %v2374
  %v2407 = vmax.f32 %v2343, %v2375
  %v2408 = vmax.f32 %v2344, %v2376
  %v2409 = vmax.f32 %v2345, %v2377
  %v2410 = vmax.f32 %v2346, %v2378
  %v2411 = vmax.f32 %v2347, %v2379
  %v2412 = vmax.f32 %v2348, %v2380
  %v2413 = vmax.f32 %v2349, %v2381
  %v2414 = vmax.f32 %v2350, %v2382
  %v2415 = vmax.f32 %v2351, %v2383
  %v2416 = vmax.f32 %v2352, %v2384
  %v2417 = vmax.f32 %v2353, %v2385
  %v2418 = vmax.f32 %v2354, %v2386
  %v2419 = vmax.f32 %v2355, %v2387
  %v2420 = vmax.f32 %v2356, %v2388
  %v2421 = vmax.f32 %v2357, %v2389
  %v2422 = vmax.f32 %v2358, %v2390
  %v2423 = vmax.f32 %v2359, %v2391
  %v2424 = vld [vmem:[%s2] sm:$0xff]
  %v2425 = vld [vmem:[%s2 + $0x8] sm:$0x3]
  %2427 = vset.pattern.permute.xlu0 0
  %2428 = vperm.xlu0 %2427, %v2424
  %v2429 = vpop.permute.xlu0 %2428
  %2432 = vset.pattern.permute.xlu0 0
  %2433 = vperm.xlu0 %2432, %v2425
  %v2434 = vpop.permute.xlu0 %2433
  %v2436 = vadd.f32 %v2392, %v2429
  %v2437 = vadd.f32 %v2393, %v2429
  %v2438 = vadd.f32 %v2394, %v2429
  %v2439 = vadd.f32 %v2395, %v2429
  %v2440 = vadd.f32 %v2396, %v2429
  %v2441 = vadd.f32 %v2397, %v2429
  %v2442 = vadd.f32 %v2398, %v2429
  %v2443 = vadd.f32 %v2399, %v2429
  %v2444 = vadd.f32 %v2400, %v2429
  %v2445 = vadd.f32 %v2401, %v2429
  %v2446 = vadd.f32 %v2402, %v2429
  %v2447 = vadd.f32 %v2403, %v2429
  %v2448 = vadd.f32 %v2404, %v2429
  %v2449 = vadd.f32 %v2405, %v2429
  %v2450 = vadd.f32 %v2406, %v2429
  %v2451 = vadd.f32 %v2407, %v2429
  %v2452 = vadd.f32 %v2408, %v2434
  %v2453 = vadd.f32 %v2409, %v2434
  %v2454 = vadd.f32 %v2410, %v2434
  %v2455 = vadd.f32 %v2411, %v2434
  %v2456 = vadd.f32 %v2412, %v2434
  %v2457 = vadd.f32 %v2413, %v2434
  %v2458 = vadd.f32 %v2414, %v2434
  %v2459 = vadd.f32 %v2415, %v2434
  %v2460 = vadd.f32 %v2416, %v2434
  %v2461 = vadd.f32 %v2417, %v2434
  %v2462 = vadd.f32 %v2418, %v2434
  %v2463 = vadd.f32 %v2419, %v2434
  %v2464 = vadd.f32 %v2420, %v2434
  %v2465 = vadd.f32 %v2421, %v2434
  %v2466 = vadd.f32 %v2422, %v2434
  %v2467 = vadd.f32 %v2423, %v2434
  %v2468 = vmax.f32 %v2436, 0.0
  %v2469 = vmax.f32 %v2437, 0.0
  %v2470 = vmax.f32 %v2438, 0.0
  %v2471 = vmax.f32 %v2439, 0.0
  %v2472 = vmax.f32 %v2440, 0.0
  %v2473 = vmax.f32 %v2441, 0.0
  %v2474 = vmax.f32 %v2442, 0.0
  %v2475 = vmax.f32 %v2443, 0.0
  %v2476 = vmax.f32 %v2444, 0.0
  %v2477 = vmax.f32 %v2445, 0.0
  %v2478 = vmax.f32 %v2446, 0.0
  %v2479 = vmax.f32 %v2447, 0.0
  %v2480 = vmax.f32 %v2448, 0.0
  %v2481 = vmax.f32 %v2449, 0.0
  %v2482 = vmax.f32 %v2450, 0.0
  %v2483 = vmax.f32 %v2451, 0.0
  %v2484 = vmax.f32 %v2452, 0.0
  %v2485 = vmax.f32 %v2453, 0.0
  %v2486 = vmax.f32 %v2454, 0.0
  %v2487 = vmax.f32 %v2455, 0.0
  %v2488 = vmax.f32 %v2456, 0.0
  %v2489 = vmax.f32 %v2457, 0.0
  %v2490 = vmax.f32 %v2458, 0.0
  %v2491 = vmax.f32 %v2459, 0.0
  %v2492 = vmax.f32 %v2460, 0.0
  %v2493 = vmax.f32 %v2461, 0.0
  %v2494 = vmax.f32 %v2462, 0.0
  %v2495 = vmax.f32 %v2463, 0.0
  %v2496 = vmax.f32 %v2464, 0.0
  %v2497 = vmax.f32 %v2465, 0.0
  %v2498 = vmax.f32 %v2466, 0.0
  %v2499 = vmax.f32 %v2467, 0.0
  %v2500 = vld [vmem:[%s9] sm:$0xff]
  %v2501 = vld [vmem:[%s9 + $0x8] sm:$0xff]
  %v2502 = vld [vmem:[%s9 + $0x10] sm:$0xff]
  %v2503 = vld [vmem:[%s9 + $0x18] sm:$0xff]
  %v2504 = vld [vmem:[%s9 + $0x20] sm:$0xff]
  %v2505 = vld [vmem:[%s9 + $0x28] sm:$0xff]
  %v2506 = vld [vmem:[%s9 + $0x30] sm:$0xff]
  %v2507 = vld [vmem:[%s9 + $0x38] sm:$0xff]
  %v2508 = vld [vmem:[%s9 + $0x40] sm:$0xff]
  %v2509 = vld [vmem:[%s9 + $0x48] sm:$0xff]
  %v2510 = vld [vmem:[%s9 + $0x50] sm:$0xff]
  %v2511 = vld [vmem:[%s9 + $0x58] sm:$0xff]
  %v2512 = vld [vmem:[%s9 + $0x60] sm:$0xff]
  %v2513 = vld [vmem:[%s9 + $0x68] sm:$0xff]
  %v2514 = vld [vmem:[%s9 + $0x70] sm:$0xff]
  %v2515 = vld [vmem:[%s9 + $0x78] sm:$0xff]
  %v2516 = vld [vmem:[%s9 + $0x80] sm:$0xff]
  %v2517 = vld [vmem:[%s9 + $0x88] sm:$0xff]
  %v2518 = vld [vmem:[%s9 + $0x90] sm:$0xff]
  %v2519 = vld [vmem:[%s9 + $0x98] sm:$0xff]
  %v2520 = vld [vmem:[%s9 + $0xa0] sm:$0xff]
  %v2521 = vld [vmem:[%s9 + $0xa8] sm:$0xff]
  %v2522 = vld [vmem:[%s9 + $0xb0] sm:$0xff]
  %v2523 = vld [vmem:[%s9 + $0xb8] sm:$0xff]
  %v2524 = vld [vmem:[%s9 + $0xc0] sm:$0xff]
  %v2525 = vld [vmem:[%s9 + $0xc8] sm:$0xff]
  %v2526 = vld [vmem:[%s9 + $0xd0] sm:$0xff]
  %v2527 = vld [vmem:[%s9 + $0xd8] sm:$0xff]
  %v2528 = vld [vmem:[%s9 + $0xe0] sm:$0xff]
  %v2529 = vld [vmem:[%s9 + $0xe8] sm:$0xff]
  %v2530 = vld [vmem:[%s9 + $0xf0] sm:$0xff]
  %v2531 = vld [vmem:[%s9 + $0xf8] sm:$0xff]
  %v2532 = vld [vmem:[%s9 + $0x100] sm:$0xff]
  %v2533 = vld [vmem:[%s9 + $0x108] sm:$0xff]
  %v2534 = vld [vmem:[%s9 + $0x110] sm:$0xff]
  %v2535 = vld [vmem:[%s9 + $0x118] sm:$0xff]
  %v2536 = vld [vmem:[%s9 + $0x120] sm:$0xff]
  %v2537 = vld [vmem:[%s9 + $0x128] sm:$0xff]
  %v2538 = vld [vmem:[%s9 + $0x130] sm:$0xff]
  %v2539 = vld [vmem:[%s9 + $0x138] sm:$0xff]
  %v2540 = vld [vmem:[%s9 + $0x140] sm:$0xff]
  %v2541 = vld [vmem:[%s9 + $0x148] sm:$0xff]
  %v2542 = vld [vmem:[%s9 + $0x150] sm:$0xff]
  %v2543 = vld [vmem:[%s9 + $0x158] sm:$0xff]
  %v2544 = vld [vmem:[%s9 + $0x160] sm:$0xff]
  %v2545 = vld [vmem:[%s9 + $0x168] sm:$0xff]
  %v2546 = vld [vmem:[%s9 + $0x170] sm:$0xff]
  %v2547 = vld [vmem:[%s9 + $0x178] sm:$0xff]
  %v2548 = vld [vmem:[%s9 + $0x180] sm:$0xff]
  %v2549 = vld [vmem:[%s9 + $0x188] sm:$0xff]
  %v2550 = vld [vmem:[%s9 + $0x190] sm:$0xff]
  %v2551 = vld [vmem:[%s9 + $0x198] sm:$0xff]
  %v2552 = vld [vmem:[%s9 + $0x1a0] sm:$0xff]
  %v2553 = vld [vmem:[%s9 + $0x1a8] sm:$0xff]
  %v2554 = vld [vmem:[%s9 + $0x1b0] sm:$0xff]
  %v2555 = vld [vmem:[%s9 + $0x1b8] sm:$0xff]
  %v2556 = vld [vmem:[%s9 + $0x1c0] sm:$0xff]
  %v2557 = vld [vmem:[%s9 + $0x1c8] sm:$0xff]
  %v2558 = vld [vmem:[%s9 + $0x1d0] sm:$0xff]
  %v2559 = vld [vmem:[%s9 + $0x1d8] sm:$0xff]
  %v2560 = vld [vmem:[%s9 + $0x1e0] sm:$0xff]
  %v2561 = vld [vmem:[%s9 + $0x1e8] sm:$0xff]
  %v2562 = vld [vmem:[%s9 + $0x1f0] sm:$0xff]
  %v2563 = vld [vmem:[%s9 + $0x1f8] sm:$0xff]
  %v2564 = vld [vmem:[%s9 + $0x200] sm:$0xff]
  %v2565 = vld [vmem:[%s9 + $0x208] sm:$0xff]
  %v2566 = vld [vmem:[%s9 + $0x210] sm:$0xff]
  %v2567 = vld [vmem:[%s9 + $0x218] sm:$0xff]
  %v2568 = vld [vmem:[%s9 + $0x220] sm:$0xff]
  %v2569 = vld [vmem:[%s9 + $0x228] sm:$0xff]
  %v2570 = vld [vmem:[%s9 + $0x230] sm:$0xff]
  %v2571 = vld [vmem:[%s9 + $0x238] sm:$0xff]
  %v2572 = vld [vmem:[%s9 + $0x240] sm:$0xff]
  %v2573 = vld [vmem:[%s9 + $0x248] sm:$0xff]
  %v2574 = vld [vmem:[%s9 + $0x250] sm:$0xff]
  %v2575 = vld [vmem:[%s9 + $0x258] sm:$0xff]
  %v2576 = vld [vmem:[%s9 + $0x260] sm:$0xff]
  %v2577 = vld [vmem:[%s9 + $0x268] sm:$0xff]
  %v2578 = vld [vmem:[%s9 + $0x270] sm:$0xff]
  %v2579 = vld [vmem:[%s9 + $0x278] sm:$0xff]
  %v2580 = vld [vmem:[%s9 + $0x280] sm:$0xff]
  %v2581 = vld [vmem:[%s9 + $0x288] sm:$0xff]
  %v2582 = vld [vmem:[%s9 + $0x290] sm:$0xff]
  %v2583 = vld [vmem:[%s9 + $0x298] sm:$0xff]
  %v2584 = vld [vmem:[%s9 + $0x2a0] sm:$0xff]
  %v2585 = vld [vmem:[%s9 + $0x2a8] sm:$0xff]
  %v2586 = vld [vmem:[%s9 + $0x2b0] sm:$0xff]
  %v2587 = vld [vmem:[%s9 + $0x2b8] sm:$0xff]
  %v2588 = vld [vmem:[%s9 + $0x2c0] sm:$0xff]
  %v2589 = vld [vmem:[%s9 + $0x2c8] sm:$0xff]
  %v2590 = vld [vmem:[%s9 + $0x2d0] sm:$0xff]
  %v2591 = vld [vmem:[%s9 + $0x2d8] sm:$0xff]
  %v2592 = vld [vmem:[%s9 + $0x2e0] sm:$0xff]
  %v2593 = vld [vmem:[%s9 + $0x2e8] sm:$0xff]
  %v2594 = vld [vmem:[%s9 + $0x2f0] sm:$0xff]
  %v2595 = vld [vmem:[%s9 + $0x2f8] sm:$0xff]
  %v2596 = vld [vmem:[%s9 + $0x300] sm:$0xff]
  %v2597 = vld [vmem:[%s9 + $0x308] sm:$0xff]
  %v2598 = vld [vmem:[%s9 + $0x310] sm:$0xff]
  %v2599 = vld [vmem:[%s9 + $0x318] sm:$0xff]
  %v2600 = vld [vmem:[%s9 + $0x320] sm:$0xff]
  %v2601 = vld [vmem:[%s9 + $0x328] sm:$0xff]
  %v2602 = vld [vmem:[%s9 + $0x330] sm:$0xff]
  %v2603 = vld [vmem:[%s9 + $0x338] sm:$0xff]
  %v2604 = vld [vmem:[%s9 + $0x340] sm:$0xff]
  %v2605 = vld [vmem:[%s9 + $0x348] sm:$0xff]
  %v2606 = vld [vmem:[%s9 + $0x350] sm:$0xff]
  %v2607 = vld [vmem:[%s9 + $0x358] sm:$0xff]
  %v2608 = vld [vmem:[%s9 + $0x360] sm:$0xff]
  %v2609 = vld [vmem:[%s9 + $0x368] sm:$0xff]
  %v2610 = vld [vmem:[%s9 + $0x370] sm:$0xff]
  %v2611 = vld [vmem:[%s9 + $0x378] sm:$0xff]
  %v2612 = vld [vmem:[%s9 + $0x380] sm:$0xff]
  %v2613 = vld [vmem:[%s9 + $0x388] sm:$0xff]
  %v2614 = vld [vmem:[%s9 + $0x390] sm:$0xff]
  %v2615 = vld [vmem:[%s9 + $0x398] sm:$0xff]
  %v2616 = vld [vmem:[%s9 + $0x3a0] sm:$0xff]
  %v2617 = vld [vmem:[%s9 + $0x3a8] sm:$0xff]
  %v2618 = vld [vmem:[%s9 + $0x3b0] sm:$0xff]
  %v2619 = vld [vmem:[%s9 + $0x3b8] sm:$0xff]
  %v2620 = vld [vmem:[%s9 + $0x3c0] sm:$0xff]
  %v2621 = vld [vmem:[%s9 + $0x3c8] sm:$0xff]
  %v2622 = vld [vmem:[%s9 + $0x3d0] sm:$0xff]
  %v2623 = vld [vmem:[%s9 + $0x3d8] sm:$0xff]
  %v2624 = vld [vmem:[%s9 + $0x3e0] sm:$0xff]
  %v2625 = vld [vmem:[%s9 + $0x3e8] sm:$0xff]
  %v2626 = vld [vmem:[%s9 + $0x3f0] sm:$0xff]
  %v2627 = vld [vmem:[%s9 + $0x3f8] sm:$0xff]
  %v2628 = vld [vmem:[%s9 + $0x400] sm:$0xff]
  %v2629 = vld [vmem:[%s9 + $0x408] sm:$0xff]
  %v2630 = vld [vmem:[%s9 + $0x410] sm:$0xff]
  %v2631 = vld [vmem:[%s9 + $0x418] sm:$0xff]
  %v2632 = vld [vmem:[%s9 + $0x420] sm:$0xff]
  %v2633 = vld [vmem:[%s9 + $0x428] sm:$0xff]
  %v2634 = vld [vmem:[%s9 + $0x430] sm:$0xff]
  %v2635 = vld [vmem:[%s9 + $0x438] sm:$0xff]
  %v2636 = vld [vmem:[%s9 + $0x440] sm:$0xff]
  %v2637 = vld [vmem:[%s9 + $0x448] sm:$0xff]
  %v2638 = vld [vmem:[%s9 + $0x450] sm:$0xff]
  %v2639 = vld [vmem:[%s9 + $0x458] sm:$0xff]
  %v2640 = vld [vmem:[%s9 + $0x460] sm:$0xff]
  %v2641 = vld [vmem:[%s9 + $0x468] sm:$0xff]
  %v2642 = vld [vmem:[%s9 + $0x470] sm:$0xff]
  %v2643 = vld [vmem:[%s9 + $0x478] sm:$0xff]
  %v2644 = vld [vmem:[%s9 + $0x480] sm:$0xff]
  %v2645 = vld [vmem:[%s9 + $0x488] sm:$0xff]
  %v2646 = vld [vmem:[%s9 + $0x490] sm:$0xff]
  %v2647 = vld [vmem:[%s9 + $0x498] sm:$0xff]
  %v2648 = vld [vmem:[%s9 + $0x4a0] sm:$0xff]
  %v2649 = vld [vmem:[%s9 + $0x4a8] sm:$0xff]
  %v2650 = vld [vmem:[%s9 + $0x4b0] sm:$0xff]
  %v2651 = vld [vmem:[%s9 + $0x4b8] sm:$0xff]
  %v2652 = vld [vmem:[%s9 + $0x4c0] sm:$0xff]
  %v2653 = vld [vmem:[%s9 + $0x4c8] sm:$0xff]
  %v2654 = vld [vmem:[%s9 + $0x4d0] sm:$0xff]
  %v2655 = vld [vmem:[%s9 + $0x4d8] sm:$0xff]
  %v2656 = vld [vmem:[%s9 + $0x4e0] sm:$0xff]
  %v2657 = vld [vmem:[%s9 + $0x4e8] sm:$0xff]
  %v2658 = vld [vmem:[%s9 + $0x4f0] sm:$0xff]
  %v2659 = vld [vmem:[%s9 + $0x4f8] sm:$0xff]
  %v2660 = vld [vmem:[%s9 + $0x500] sm:$0xff]
  %v2661 = vld [vmem:[%s9 + $0x508] sm:$0xff]
  %v2662 = vld [vmem:[%s9 + $0x510] sm:$0xff]
  %v2663 = vld [vmem:[%s9 + $0x518] sm:$0xff]
  %v2664 = vld [vmem:[%s9 + $0x520] sm:$0xff]
  %v2665 = vld [vmem:[%s9 + $0x528] sm:$0xff]
  %v2666 = vld [vmem:[%s9 + $0x530] sm:$0xff]
  %v2667 = vld [vmem:[%s9 + $0x538] sm:$0xff]
  %v2668 = vld [vmem:[%s9 + $0x540] sm:$0xff]
  %v2669 = vld [vmem:[%s9 + $0x548] sm:$0xff]
  %v2670 = vld [vmem:[%s9 + $0x550] sm:$0xff]
  %v2671 = vld [vmem:[%s9 + $0x558] sm:$0xff]
  %v2672 = vld [vmem:[%s9 + $0x560] sm:$0xff]
  %v2673 = vld [vmem:[%s9 + $0x568] sm:$0xff]
  %v2674 = vld [vmem:[%s9 + $0x570] sm:$0xff]
  %v2675 = vld [vmem:[%s9 + $0x578] sm:$0xff]
  %v2676 = vld [vmem:[%s9 + $0x580] sm:$0xff]
  %v2677 = vld [vmem:[%s9 + $0x588] sm:$0xff]
  %v2678 = vld [vmem:[%s9 + $0x590] sm:$0xff]
  %v2679 = vld [vmem:[%s9 + $0x598] sm:$0xff]
  %v2680 = vld [vmem:[%s9 + $0x5a0] sm:$0xff]
  %v2681 = vld [vmem:[%s9 + $0x5a8] sm:$0xff]
  %v2682 = vld [vmem:[%s9 + $0x5b0] sm:$0xff]
  %v2683 = vld [vmem:[%s9 + $0x5b8] sm:$0xff]
  %v2684 = vld [vmem:[%s9 + $0x5c0] sm:$0xff]
  %v2685 = vld [vmem:[%s9 + $0x5c8] sm:$0xff]
  %v2686 = vld [vmem:[%s9 + $0x5d0] sm:$0xff]
  %v2687 = vld [vmem:[%s9 + $0x5d8] sm:$0xff]
  %v2688 = vld [vmem:[%s9 + $0x5e0] sm:$0xff]
  %v2689 = vld [vmem:[%s9 + $0x5e8] sm:$0xff]
  %v2690 = vld [vmem:[%s9 + $0x5f0] sm:$0xff]
  %v2691 = vld [vmem:[%s9 + $0x5f8] sm:$0xff]
  %v2692 = vld [vmem:[%s9 + $0x600] sm:$0xff]
  %v2693 = vld [vmem:[%s9 + $0x608] sm:$0xff]
  %v2694 = vld [vmem:[%s9 + $0x610] sm:$0xff]
  %v2695 = vld [vmem:[%s9 + $0x618] sm:$0xff]
  %v2696 = vld [vmem:[%s9 + $0x620] sm:$0xff]
  %v2697 = vld [vmem:[%s9 + $0x628] sm:$0xff]
  %v2698 = vld [vmem:[%s9 + $0x630] sm:$0xff]
  %v2699 = vld [vmem:[%s9 + $0x638] sm:$0xff]
  %v2700 = vld [vmem:[%s9 + $0x640] sm:$0xff]
  %v2701 = vld [vmem:[%s9 + $0x648] sm:$0xff]
  %v2702 = vld [vmem:[%s9 + $0x650] sm:$0xff]
  %v2703 = vld [vmem:[%s9 + $0x658] sm:$0xff]
  %v2704 = vld [vmem:[%s9 + $0x660] sm:$0xff]
  %v2705 = vld [vmem:[%s9 + $0x668] sm:$0xff]
  %v2706 = vld [vmem:[%s9 + $0x670] sm:$0xff]
  %v2707 = vld [vmem:[%s9 + $0x678] sm:$0xff]
  %v2708 = vld [vmem:[%s9 + $0x680] sm:$0xff]
  %v2709 = vld [vmem:[%s9 + $0x688] sm:$0xff]
  %v2710 = vld [vmem:[%s9 + $0x690] sm:$0xff]
  %v2711 = vld [vmem:[%s9 + $0x698] sm:$0xff]
  %v2712 = vld [vmem:[%s9 + $0x6a0] sm:$0xff]
  %v2713 = vld [vmem:[%s9 + $0x6a8] sm:$0xff]
  %v2714 = vld [vmem:[%s9 + $0x6b0] sm:$0xff]
  %v2715 = vld [vmem:[%s9 + $0x6b8] sm:$0xff]
  %v2716 = vld [vmem:[%s9 + $0x6c0] sm:$0xff]
  %v2717 = vld [vmem:[%s9 + $0x6c8] sm:$0xff]
  %v2718 = vld [vmem:[%s9 + $0x6d0] sm:$0xff]
  %v2719 = vld [vmem:[%s9 + $0x6d8] sm:$0xff]
  %v2720 = vld [vmem:[%s9 + $0x6e0] sm:$0xff]
  %v2721 = vld [vmem:[%s9 + $0x6e8] sm:$0xff]
  %v2722 = vld [vmem:[%s9 + $0x6f0] sm:$0xff]
  %v2723 = vld [vmem:[%s9 + $0x6f8] sm:$0xff]
  %v2724 = vld [vmem:[%s9 + $0x700] sm:$0xff]
  %v2725 = vld [vmem:[%s9 + $0x708] sm:$0xff]
  %v2726 = vld [vmem:[%s9 + $0x710] sm:$0xff]
  %v2727 = vld [vmem:[%s9 + $0x718] sm:$0xff]
  %v2728 = vld [vmem:[%s9 + $0x720] sm:$0xff]
  %v2729 = vld [vmem:[%s9 + $0x728] sm:$0xff]
  %v2730 = vld [vmem:[%s9 + $0x730] sm:$0xff]
  %v2731 = vld [vmem:[%s9 + $0x738] sm:$0xff]
  %v2732 = vld [vmem:[%s9 + $0x740] sm:$0xff]
  %v2733 = vld [vmem:[%s9 + $0x748] sm:$0xff]
  %v2734 = vld [vmem:[%s9 + $0x750] sm:$0xff]
  %v2735 = vld [vmem:[%s9 + $0x758] sm:$0xff]
  %v2736 = vld [vmem:[%s9 + $0x760] sm:$0xff]
  %v2737 = vld [vmem:[%s9 + $0x768] sm:$0xff]
  %v2738 = vld [vmem:[%s9 + $0x770] sm:$0xff]
  %v2739 = vld [vmem:[%s9 + $0x778] sm:$0xff]
  %v2740 = vld [vmem:[%s9 + $0x780] sm:$0xff]
  %v2741 = vld [vmem:[%s9 + $0x788] sm:$0xff]
  %v2742 = vld [vmem:[%s9 + $0x790] sm:$0xff]
  %v2743 = vld [vmem:[%s9 + $0x798] sm:$0xff]
  %v2744 = vld [vmem:[%s9 + $0x7a0] sm:$0xff]
  %v2745 = vld [vmem:[%s9 + $0x7a8] sm:$0xff]
  %v2746 = vld [vmem:[%s9 + $0x7b0] sm:$0xff]
  %v2747 = vld [vmem:[%s9 + $0x7b8] sm:$0xff]
  %v2748 = vld [vmem:[%s9 + $0x7c0] sm:$0xff]
  %v2749 = vld [vmem:[%s9 + $0x7c8] sm:$0xff]
  %v2750 = vld [vmem:[%s9 + $0x7d0] sm:$0xff]
  %v2751 = vld [vmem:[%s9 + $0x7d8] sm:$0xff]
  %v2752 = vld [vmem:[%s9 + $0x7e0] sm:$0xff]
  %v2753 = vld [vmem:[%s9 + $0x7e8] sm:$0xff]
  %v2754 = vld [vmem:[%s9 + $0x7f0] sm:$0xff]
  %v2755 = vld [vmem:[%s9 + $0x7f8] sm:$0xff]
  %2756 = vmatprep.subr.mxu0 0.0
  %2757 = vmatpush1.msra.mxu0 %v2500
  %2758 = vmatprep.subr.mxu0 0.0
  %2759 = vmatpush1.msra.mxu0 %v2501
  %2760 = vmatprep.subr.mxu0 0.0
  %2761 = vmatpush1.msra.mxu0 %v2502
  %2762 = vmatprep.subr.mxu0 0.0
  %2763 = vmatpush1.msra.mxu0 %v2503
  %2764 = vmatprep.subr.mxu0 0.0
  %2765 = vmatpush1.msra.mxu0 %v2504
  %2766 = vmatprep.subr.mxu0 0.0
  %2767 = vmatpush1.msra.mxu0 %v2505
  %2768 = vmatprep.subr.mxu0 0.0
  %2769 = vmatpush1.msra.mxu0 %v2506
  %2770 = vmatprep.subr.mxu0 0.0
  %2771 = vmatpush1.msra.mxu0 %v2507
  %2772 = vmatprep.subr.mxu0 0.0
  %2773 = vmatpush1.msra.mxu0 %v2508
  %2774 = vmatprep.subr.mxu0 0.0
  %2775 = vmatpush1.msra.mxu0 %v2509
  %2776 = vmatprep.subr.mxu0 0.0
  %2777 = vmatpush1.msra.mxu0 %v2510
  %2778 = vmatprep.subr.mxu0 0.0
  %2779 = vmatpush1.msra.mxu0 %v2511
  %2780 = vmatprep.subr.mxu0 0.0
  %2781 = vmatpush1.msra.mxu0 %v2512
  %2782 = vmatprep.subr.mxu0 0.0
  %2783 = vmatpush1.msra.mxu0 %v2513
  %2784 = vmatprep.subr.mxu0 0.0
  %2785 = vmatpush1.msra.mxu0 %v2514
  %2786 = vmatprep.subr.mxu0 0.0
  %2787 = vmatpush1.msra.mxu0 %v2515
  %2788 = vmatprep.subr.mxu0 0.0
  %2789 = vmatpush1.msra.mxu0 %v2516
  %2790 = vmatprep.subr.mxu0 0.0
  %2791 = vmatpush1.msra.mxu0 %v2517
  %2792 = vmatprep.subr.mxu0 0.0
  %2793 = vmatpush1.msra.mxu0 %v2518
  %2794 = vmatprep.subr.mxu0 0.0
  %2795 = vmatpush1.msra.mxu0 %v2519
  %2796 = vmatprep.subr.mxu0 0.0
  %2797 = vmatpush1.msra.mxu0 %v2520
  %2798 = vmatprep.subr.mxu0 0.0
  %2799 = vmatpush1.msra.mxu0 %v2521
  %2800 = vmatprep.subr.mxu0 0.0
  %2801 = vmatpush1.msra.mxu0 %v2522
  %2802 = vmatprep.subr.mxu0 0.0
  %2803 = vmatpush1.msra.mxu0 %v2523
  %2804 = vmatprep.subr.mxu0 0.0
  %2805 = vmatpush1.msra.mxu0 %v2524
  %2806 = vmatprep.subr.mxu0 0.0
  %2807 = vmatpush1.msra.mxu0 %v2525
  %2808 = vmatprep.subr.mxu0 0.0
  %2809 = vmatpush1.msra.mxu0 %v2526
  %2810 = vmatprep.subr.mxu0 0.0
  %2811 = vmatpush1.msra.mxu0 %v2527
  %2812 = vmatprep.subr.mxu0 0.0
  %2813 = vmatpush1.msra.mxu0 %v2528
  %2814 = vmatprep.subr.mxu0 0.0
  %2815 = vmatpush1.msra.mxu0 %v2529
  %2816 = vmatprep.subr.mxu0 0.0
  %2817 = vmatpush1.msra.mxu0 %v2530
  %2818 = vmatprep.subr.mxu0 0.0
  %2819 = vmatpush1.msra.mxu0 %v2531
  %2820 = vmatprep.mubr.f32.mxu0 %v2469
  %2821 = vmatmul.mubr.f32.gmra.mrb[0].mxu0 %v2468
  %v2822 = vpop.f32.mrb[0].mxu0
  %v2823 = vadd.f32 0.0, %v2822
  %v2824 = vpop.f32.mrb[0].mxu0
  %2825 = vmatprep.mubr.f32.mxu0 %v2485
  %2826 = vmatmul.mubr.f32.gmra.mrb[0].mxu0 %v2484
  %v2827 = vpop.f32.mrb[0].mxu0
  %v2828 = vadd.f32 0.0, %v2827
  %v2829 = vpop.f32.mrb[0].mxu0
  %2830 = vdwg.mxu0
  %2831 = vmatprep.subr.mxu0 0.0
  %2832 = vmatpush1.msra.mxu0 %v2532
  %2833 = vmatprep.subr.mxu0 0.0
  %2834 = vmatpush1.msra.mxu0 %v2533
  %2835 = vmatprep.subr.mxu0 0.0
  %2836 = vmatpush1.msra.mxu0 %v2534
  %2837 = vmatprep.subr.mxu0 0.0
  %2838 = vmatpush1.msra.mxu0 %v2535
  %2839 = vmatprep.subr.mxu0 0.0
  %2840 = vmatpush1.msra.mxu0 %v2536
  %2841 = vmatprep.subr.mxu0 0.0
  %2842 = vmatpush1.msra.mxu0 %v2537
  %2843 = vmatprep.subr.mxu0 0.0
  %2844 = vmatpush1.msra.mxu0 %v2538
  %2845 = vmatprep.subr.mxu0 0.0
  %2846 = vmatpush1.msra.mxu0 %v2539
  %2847 = vmatprep.subr.mxu0 0.0
  %2848 = vmatpush1.msra.mxu0 %v2540
  %2849 = vmatprep.subr.mxu0 0.0
  %2850 = vmatpush1.msra.mxu0 %v2541
  %2851 = vmatprep.subr.mxu0 0.0
  %2852 = vmatpush1.msra.mxu0 %v2542
  %2853 = vmatprep.subr.mxu0 0.0
  %2854 = vmatpush1.msra.mxu0 %v2543
  %2855 = vmatprep.subr.mxu0 0.0
  %2856 = vmatpush1.msra.mxu0 %v2544
  %2857 = vmatprep.subr.mxu0 0.0
  %2858 = vmatpush1.msra.mxu0 %v2545
  %2859 = vmatprep.subr.mxu0 0.0
  %2860 = vmatpush1.msra.mxu0 %v2546
  %2861 = vmatprep.subr.mxu0 0.0
  %2862 = vmatpush1.msra.mxu0 %v2547
  %2863 = vmatprep.subr.mxu0 0.0
  %2864 = vmatpush1.msra.mxu0 %v2548
  %2865 = vmatprep.subr.mxu0 0.0
  %2866 = vmatpush1.msra.mxu0 %v2549
  %2867 = vmatprep.subr.mxu0 0.0
  %2868 = vmatpush1.msra.mxu0 %v2550
  %2869 = vmatprep.subr.mxu0 0.0
  %2870 = vmatpush1.msra.mxu0 %v2551
  %2871 = vmatprep.subr.mxu0 0.0
  %2872 = vmatpush1.msra.mxu0 %v2552
  %2873 = vmatprep.subr.mxu0 0.0
  %2874 = vmatpush1.msra.mxu0 %v2553
  %2875 = vmatprep.subr.mxu0 0.0
  %2876 = vmatpush1.msra.mxu0 %v2554
  %2877 = vmatprep.subr.mxu0 0.0
  %2878 = vmatpush1.msra.mxu0 %v2555
  %2879 = vmatprep.subr.mxu0 0.0
  %2880 = vmatpush1.msra.mxu0 %v2556
  %2881 = vmatprep.subr.mxu0 0.0
  %2882 = vmatpush1.msra.mxu0 %v2557
  %2883 = vmatprep.subr.mxu0 0.0
  %2884 = vmatpush1.msra.mxu0 %v2558
  %2885 = vmatprep.subr.mxu0 0.0
  %2886 = vmatpush1.msra.mxu0 %v2559
  %2887 = vmatprep.subr.mxu0 0.0
  %2888 = vmatpush1.msra.mxu0 %v2560
  %2889 = vmatprep.subr.mxu0 0.0
  %2890 = vmatpush1.msra.mxu0 %v2561
  %2891 = vmatprep.subr.mxu0 0.0
  %2892 = vmatpush1.msra.mxu0 %v2562
  %2893 = vmatprep.subr.mxu0 0.0
  %2894 = vmatpush1.msra.mxu0 %v2563
  %2895 = vmatprep.mubr.f32.mxu0 %v2471
  %2896 = vmatmul.mubr.f32.gmra.mrb[0].mxu0 %v2470
  %v2897 = vpop.f32.mrb[0].mxu0
  %v2898 = vadd.f32 %v2823, %v2897
  %v2899 = vpop.f32.mrb[0].mxu0
  %2900 = vmatprep.mubr.f32.mxu0 %v2487
  %2901 = vmatmul.mubr.f32.gmra.mrb[0].mxu0 %v2486
  %v2902 = vpop.f32.mrb[0].mxu0
  %v2903 = vadd.f32 %v2828, %v2902
  %v2904 = vpop.f32.mrb[0].mxu0
  %2905 = vdwg.mxu0
  %2906 = vmatprep.subr.mxu0 0.0
  %2907 = vmatpush1.msra.mxu0 %v2564
  %2908 = vmatprep.subr.mxu0 0.0
  %2909 = vmatpush1.msra.mxu0 %v2565
  %2910 = vmatprep.subr.mxu0 0.0
  %2911 = vmatpush1.msra.mxu0 %v2566
  %2912 = vmatprep.subr.mxu0 0.0
  %2913 = vmatpush1.msra.mxu0 %v2567
  %2914 = vmatprep.subr.mxu0 0.0
  %2915 = vmatpush1.msra.mxu0 %v2568
  %2916 = vmatprep.subr.mxu0 0.0
  %2917 = vmatpush1.msra.mxu0 %v2569
  %2918 = vmatprep.subr.mxu0 0.0
  %2919 = vmatpush1.msra.mxu0 %v2570
  %2920 = vmatprep.subr.mxu0 0.0
  %2921 = vmatpush1.msra.mxu0 %v2571
  %2922 = vmatprep.subr.mxu0 0.0
  %2923 = vmatpush1.msra.mxu0 %v2572
  %2924 = vmatprep.subr.mxu0 0.0
  %2925 = vmatpush1.msra.mxu0 %v2573
  %2926 = vmatprep.subr.mxu0 0.0
  %2927 = vmatpush1.msra.mxu0 %v2574
  %2928 = vmatprep.subr.mxu0 0.0
  %2929 = vmatpush1.msra.mxu0 %v2575
  %2930 = vmatprep.subr.mxu0 0.0
  %2931 = vmatpush1.msra.mxu0 %v2576
  %2932 = vmatprep.subr.mxu0 0.0
  %2933 = vmatpush1.msra.mxu0 %v2577
  %2934 = vmatprep.subr.mxu0 0.0
  %2935 = vmatpush1.msra.mxu0 %v2578
  %2936 = vmatprep.subr.mxu0 0.0
  %2937 = vmatpush1.msra.mxu0 %v2579
  %2938 = vmatprep.subr.mxu0 0.0
  %2939 = vmatpush1.msra.mxu0 %v2580
  %2940 = vmatprep.subr.mxu0 0.0
  %2941 = vmatpush1.msra.mxu0 %v2581
  %2942 = vmatprep.subr.mxu0 0.0
  %2943 = vmatpush1.msra.mxu0 %v2582
  %2944 = vmatprep.subr.mxu0 0.0
  %2945 = vmatpush1.msra.mxu0 %v2583
  %2946 = vmatprep.subr.mxu0 0.0
  %2947 = vmatpush1.msra.mxu0 %v2584
  %2948 = vmatprep.subr.mxu0 0.0
  %2949 = vmatpush1.msra.mxu0 %v2585
  %2950 = vmatprep.subr.mxu0 0.0
  %2951 = vmatpush1.msra.mxu0 %v2586
  %2952 = vmatprep.subr.mxu0 0.0
  %2953 = vmatpush1.msra.mxu0 %v2587
  %2954 = vmatprep.subr.mxu0 0.0
  %2955 = vmatpush1.msra.mxu0 %v2588
  %2956 = vmatprep.subr.mxu0 0.0
  %2957 = vmatpush1.msra.mxu0 %v2589
  %2958 = vmatprep.subr.mxu0 0.0
  %2959 = vmatpush1.msra.mxu0 %v2590
  %2960 = vmatprep.subr.mxu0 0.0
  %2961 = vmatpush1.msra.mxu0 %v2591
  %2962 = vmatprep.subr.mxu0 0.0
  %2963 = vmatpush1.msra.mxu0 %v2592
  %2964 = vmatprep.subr.mxu0 0.0
  %2965 = vmatpush1.msra.mxu0 %v2593
  %2966 = vmatprep.subr.mxu0 0.0
  %2967 = vmatpush1.msra.mxu0 %v2594
  %2968 = vmatprep.subr.mxu0 0.0
  %2969 = vmatpush1.msra.mxu0 %v2595
  %2970 = vmatprep.mubr.f32.mxu0 %v2473
  %2971 = vmatmul.mubr.f32.gmra.mrb[0].mxu0 %v2472
  %v2972 = vpop.f32.mrb[0].mxu0
  %v2973 = vadd.f32 %v2898, %v2972
  %v2974 = vpop.f32.mrb[0].mxu0
  %2975 = vmatprep.mubr.f32.mxu0 %v2489
  %2976 = vmatmul.mubr.f32.gmra.mrb[0].mxu0 %v2488
  %v2977 = vpop.f32.mrb[0].mxu0
  %v2978 = vadd.f32 %v2903, %v2977
  %v2979 = vpop.f32.mrb[0].mxu0
  %2980 = vdwg.mxu0
  %2981 = vmatprep.subr.mxu0 0.0
  %2982 = vmatpush1.msra.mxu0 %v2596
  %2983 = vmatprep.subr.mxu0 0.0
  %2984 = vmatpush1.msra.mxu0 %v2597
  %2985 = vmatprep.subr.mxu0 0.0
  %2986 = vmatpush1.msra.mxu0 %v2598
  %2987 = vmatprep.subr.mxu0 0.0
  %2988 = vmatpush1.msra.mxu0 %v2599
  %2989 = vmatprep.subr.mxu0 0.0
  %2990 = vmatpush1.msra.mxu0 %v2600
  %2991 = vmatprep.subr.mxu0 0.0
  %2992 = vmatpush1.msra.mxu0 %v2601
  %2993 = vmatprep.subr.mxu0 0.0
  %2994 = vmatpush1.msra.mxu0 %v2602
  %2995 = vmatprep.subr.mxu0 0.0
  %2996 = vmatpush1.msra.mxu0 %v2603
  %2997 = vmatprep.subr.mxu0 0.0
  %2998 = vmatpush1.msra.mxu0 %v2604
  %2999 = vmatprep.subr.mxu0 0.0
  %3000 = vmatpush1.msra.mxu0 %v2605
  %3001 = vmatprep.subr.mxu0 0.0
  %3002 = vmatpush1.msra.mxu0 %v2606
  %3003 = vmatprep.subr.mxu0 0.0
  %3004 = vmatpush1.msra.mxu0 %v2607
  %3005 = vmatprep.subr.mxu0 0.0
  %3006 = vmatpush1.msra.mxu0 %v2608
  %3007 = vmatprep.subr.mxu0 0.0
  %3008 = vmatpush1.msra.mxu0 %v2609
  %3009 = vmatprep.subr.mxu0 0.0
  %3010 = vmatpush1.msra.mxu0 %v2610
  %3011 = vmatprep.subr.mxu0 0.0
  %3012 = vmatpush1.msra.mxu0 %v2611
  %3013 = vmatprep.subr.mxu0 0.0
  %3014 = vmatpush1.msra.mxu0 %v2612
  %3015 = vmatprep.subr.mxu0 0.0
  %3016 = vmatpush1.msra.mxu0 %v2613
  %3017 = vmatprep.subr.mxu0 0.0
  %3018 = vmatpush1.msra.mxu0 %v2614
  %3019 = vmatprep.subr.mxu0 0.0
  %3020 = vmatpush1.msra.mxu0 %v2615
  %3021 = vmatprep.subr.mxu0 0.0
  %3022 = vmatpush1.msra.mxu0 %v2616
  %3023 = vmatprep.subr.mxu0 0.0
  %3024 = vmatpush1.msra.mxu0 %v2617
  %3025 = vmatprep.subr.mxu0 0.0
  %3026 = vmatpush1.msra.mxu0 %v2618
  %3027 = vmatprep.subr.mxu0 0.0
  %3028 = vmatpush1.msra.mxu0 %v2619
  %3029 = vmatprep.subr.mxu0 0.0
  %3030 = vmatpush1.msra.mxu0 %v2620
  %3031 = vmatprep.subr.mxu0 0.0
  %3032 = vmatpush1.msra.mxu0 %v2621
  %3033 = vmatprep.subr.mxu0 0.0
  %3034 = vmatpush1.msra.mxu0 %v2622
  %3035 = vmatprep.subr.mxu0 0.0
  %3036 = vmatpush1.msra.mxu0 %v2623
  %3037 = vmatprep.subr.mxu0 0.0
  %3038 = vmatpush1.msra.mxu0 %v2624
  %3039 = vmatprep.subr.mxu0 0.0
  %3040 = vmatpush1.msra.mxu0 %v2625
  %3041 = vmatprep.subr.mxu0 0.0
  %3042 = vmatpush1.msra.mxu0 %v2626
  %3043 = vmatprep.subr.mxu0 0.0
  %3044 = vmatpush1.msra.mxu0 %v2627
  %3045 = vmatprep.mubr.f32.mxu0 %v2475
  %3046 = vmatmul.mubr.f32.gmra.mrb[0].mxu0 %v2474
  %v3047 = vpop.f32.mrb[0].mxu0
  %v3048 = vadd.f32 %v2973, %v3047
  %v3049 = vpop.f32.mrb[0].mxu0
  %3050 = vmatprep.mubr.f32.mxu0 %v2491
  %3051 = vmatmul.mubr.f32.gmra.mrb[0].mxu0 %v2490
  %v3052 = vpop.f32.mrb[0].mxu0
  %v3053 = vadd.f32 %v2978, %v3052
  %v3054 = vpop.f32.mrb[0].mxu0
  %3055 = vdwg.mxu0
  %3056 = vmatprep.subr.mxu0 0.0
  %3057 = vmatpush1.msra.mxu0 %v2628
  %3058 = vmatprep.subr.mxu0 0.0
  %3059 = vmatpush1.msra.mxu0 %v2629
  %3060 = vmatprep.subr.mxu0 0.0
  %3061 = vmatpush1.msra.mxu0 %v2630
  %3062 = vmatprep.subr.mxu0 0.0
  %3063 = vmatpush1.msra.mxu0 %v2631
  %3064 = vmatprep.subr.mxu0 0.0
  %3065 = vmatpush1.msra.mxu0 %v2632
  %3066 = vmatprep.subr.mxu0 0.0
  %3067 = vmatpush1.msra.mxu0 %v2633
  %3068 = vmatprep.subr.mxu0 0.0
  %3069 = vmatpush1.msra.mxu0 %v2634
  %3070 = vmatprep.subr.mxu0 0.0
  %3071 = vmatpush1.msra.mxu0 %v2635
  %3072 = vmatprep.subr.mxu0 0.0
  %3073 = vmatpush1.msra.mxu0 %v2636
  %3074 = vmatprep.subr.mxu0 0.0
  %3075 = vmatpush1.msra.mxu0 %v2637
  %3076 = vmatprep.subr.mxu0 0.0
  %3077 = vmatpush1.msra.mxu0 %v2638
  %3078 = vmatprep.subr.mxu0 0.0
  %3079 = vmatpush1.msra.mxu0 %v2639
  %3080 = vmatprep.subr.mxu0 0.0
  %3081 = vmatpush1.msra.mxu0 %v2640
  %3082 = vmatprep.subr.mxu0 0.0
  %3083 = vmatpush1.msra.mxu0 %v2641
  %3084 = vmatprep.subr.mxu0 0.0
  %3085 = vmatpush1.msra.mxu0 %v2642
  %3086 = vmatprep.subr.mxu0 0.0
  %3087 = vmatpush1.msra.mxu0 %v2643
  %3088 = vmatprep.subr.mxu0 0.0
  %3089 = vmatpush1.msra.mxu0 %v2644
  %3090 = vmatprep.subr.mxu0 0.0
  %3091 = vmatpush1.msra.mxu0 %v2645
  %3092 = vmatprep.subr.mxu0 0.0
  %3093 = vmatpush1.msra.mxu0 %v2646
  %3094 = vmatprep.subr.mxu0 0.0
  %3095 = vmatpush1.msra.mxu0 %v2647
  %3096 = vmatprep.subr.mxu0 0.0
  %3097 = vmatpush1.msra.mxu0 %v2648
  %3098 = vmatprep.subr.mxu0 0.0
  %3099 = vmatpush1.msra.mxu0 %v2649
  %3100 = vmatprep.subr.mxu0 0.0
  %3101 = vmatpush1.msra.mxu0 %v2650
  %3102 = vmatprep.subr.mxu0 0.0
  %3103 = vmatpush1.msra.mxu0 %v2651
  %3104 = vmatprep.subr.mxu0 0.0
  %3105 = vmatpush1.msra.mxu0 %v2652
  %3106 = vmatprep.subr.mxu0 0.0
  %3107 = vmatpush1.msra.mxu0 %v2653
  %3108 = vmatprep.subr.mxu0 0.0
  %3109 = vmatpush1.msra.mxu0 %v2654
  %3110 = vmatprep.subr.mxu0 0.0
  %3111 = vmatpush1.msra.mxu0 %v2655
  %3112 = vmatprep.subr.mxu0 0.0
  %3113 = vmatpush1.msra.mxu0 %v2656
  %3114 = vmatprep.subr.mxu0 0.0
  %3115 = vmatpush1.msra.mxu0 %v2657
  %3116 = vmatprep.subr.mxu0 0.0
  %3117 = vmatpush1.msra.mxu0 %v2658
  %3118 = vmatprep.subr.mxu0 0.0
  %3119 = vmatpush1.msra.mxu0 %v2659
  %3120 = vmatprep.mubr.f32.mxu0 %v2477
  %3121 = vmatmul.mubr.f32.gmra.mrb[0].mxu0 %v2476
  %v3122 = vpop.f32.mrb[0].mxu0
  %v3123 = vadd.f32 %v3048, %v3122
  %v3124 = vpop.f32.mrb[0].mxu0
  %3125 = vmatprep.mubr.f32.mxu0 %v2493
  %3126 = vmatmul.mubr.f32.gmra.mrb[0].mxu0 %v2492
  %v3127 = vpop.f32.mrb[0].mxu0
  %v3128 = vadd.f32 %v3053, %v3127
  %v3129 = vpop.f32.mrb[0].mxu0
  %3130 = vdwg.mxu0
  %3131 = vmatprep.subr.mxu0 0.0
  %3132 = vmatpush1.msra.mxu0 %v2660
  %3133 = vmatprep.subr.mxu0 0.0
  %3134 = vmatpush1.msra.mxu0 %v2661
  %3135 = vmatprep.subr.mxu0 0.0
  %3136 = vmatpush1.msra.mxu0 %v2662
  %3137 = vmatprep.subr.mxu0 0.0
  %3138 = vmatpush1.msra.mxu0 %v2663
  %3139 = vmatprep.subr.mxu0 0.0
  %3140 = vmatpush1.msra.mxu0 %v2664
  %3141 = vmatprep.subr.mxu0 0.0
  %3142 = vmatpush1.msra.mxu0 %v2665
  %3143 = vmatprep.subr.mxu0 0.0
  %3144 = vmatpush1.msra.mxu0 %v2666
  %3145 = vmatprep.subr.mxu0 0.0
  %3146 = vmatpush1.msra.mxu0 %v2667
  %3147 = vmatprep.subr.mxu0 0.0
  %3148 = vmatpush1.msra.mxu0 %v2668
  %3149 = vmatprep.subr.mxu0 0.0
  %3150 = vmatpush1.msra.mxu0 %v2669
  %3151 = vmatprep.subr.mxu0 0.0
  %3152 = vmatpush1.msra.mxu0 %v2670
  %3153 = vmatprep.subr.mxu0 0.0
  %3154 = vmatpush1.msra.mxu0 %v2671
  %3155 = vmatprep.subr.mxu0 0.0
  %3156 = vmatpush1.msra.mxu0 %v2672
  %3157 = vmatprep.subr.mxu0 0.0
  %3158 = vmatpush1.msra.mxu0 %v2673
  %3159 = vmatprep.subr.mxu0 0.0
  %3160 = vmatpush1.msra.mxu0 %v2674
  %3161 = vmatprep.subr.mxu0 0.0
  %3162 = vmatpush1.msra.mxu0 %v2675
  %3163 = vmatprep.subr.mxu0 0.0
  %3164 = vmatpush1.msra.mxu0 %v2676
  %3165 = vmatprep.subr.mxu0 0.0
  %3166 = vmatpush1.msra.mxu0 %v2677
  %3167 = vmatprep.subr.mxu0 0.0
  %3168 = vmatpush1.msra.mxu0 %v2678
  %3169 = vmatprep.subr.mxu0 0.0
  %3170 = vmatpush1.msra.mxu0 %v2679
  %3171 = vmatprep.subr.mxu0 0.0
  %3172 = vmatpush1.msra.mxu0 %v2680
  %3173 = vmatprep.subr.mxu0 0.0
  %3174 = vmatpush1.msra.mxu0 %v2681
  %3175 = vmatprep.subr.mxu0 0.0
  %3176 = vmatpush1.msra.mxu0 %v2682
  %3177 = vmatprep.subr.mxu0 0.0
  %3178 = vmatpush1.msra.mxu0 %v2683
  %3179 = vmatprep.subr.mxu0 0.0
  %3180 = vmatpush1.msra.mxu0 %v2684
  %3181 = vmatprep.subr.mxu0 0.0
  %3182 = vmatpush1.msra.mxu0 %v2685
  %3183 = vmatprep.subr.mxu0 0.0
  %3184 = vmatpush1.msra.mxu0 %v2686
  %3185 = vmatprep.subr.mxu0 0.0
  %3186 = vmatpush1.msra.mxu0 %v2687
  %3187 = vmatprep.subr.mxu0 0.0
  %3188 = vmatpush1.msra.mxu0 %v2688
  %3189 = vmatprep.subr.mxu0 0.0
  %3190 = vmatpush1.msra.mxu0 %v2689
  %3191 = vmatprep.subr.mxu0 0.0
  %3192 = vmatpush1.msra.mxu0 %v2690
  %3193 = vmatprep.subr.mxu0 0.0
  %3194 = vmatpush1.msra.mxu0 %v2691
  %3195 = vmatprep.mubr.f32.mxu0 %v2479
  %3196 = vmatmul.mubr.f32.gmra.mrb[0].mxu0 %v2478
  %v3197 = vpop.f32.mrb[0].mxu0
  %v3198 = vadd.f32 %v3123, %v3197
  %v3199 = vpop.f32.mrb[0].mxu0
  %3200 = vmatprep.mubr.f32.mxu0 %v2495
  %3201 = vmatmul.mubr.f32.gmra.mrb[0].mxu0 %v2494
  %v3202 = vpop.f32.mrb[0].mxu0
  %v3203 = vadd.f32 %v3128, %v3202
  %v3204 = vpop.f32.mrb[0].mxu0
  %3205 = vdwg.mxu0
  %3206 = vmatprep.subr.mxu0 0.0
  %3207 = vmatpush1.msra.mxu0 %v2692
  %3208 = vmatprep.subr.mxu0 0.0
  %3209 = vmatpush1.msra.mxu0 %v2693
  %3210 = vmatprep.subr.mxu0 0.0
  %3211 = vmatpush1.msra.mxu0 %v2694
  %3212 = vmatprep.subr.mxu0 0.0
  %3213 = vmatpush1.msra.mxu0 %v2695
  %3214 = vmatprep.subr.mxu0 0.0
  %3215 = vmatpush1.msra.mxu0 %v2696
  %3216 = vmatprep.subr.mxu0 0.0
  %3217 = vmatpush1.msra.mxu0 %v2697
  %3218 = vmatprep.subr.mxu0 0.0
  %3219 = vmatpush1.msra.mxu0 %v2698
  %3220 = vmatprep.subr.mxu0 0.0
  %3221 = vmatpush1.msra.mxu0 %v2699
  %3222 = vmatprep.subr.mxu0 0.0
  %3223 = vmatpush1.msra.mxu0 %v2700
  %3224 = vmatprep.subr.mxu0 0.0
  %3225 = vmatpush1.msra.mxu0 %v2701
  %3226 = vmatprep.subr.mxu0 0.0
  %3227 = vmatpush1.msra.mxu0 %v2702
  %3228 = vmatprep.subr.mxu0 0.0
  %3229 = vmatpush1.msra.mxu0 %v2703
  %3230 = vmatprep.subr.mxu0 0.0
  %3231 = vmatpush1.msra.mxu0 %v2704
  %3232 = vmatprep.subr.mxu0 0.0
  %3233 = vmatpush1.msra.mxu0 %v2705
  %3234 = vmatprep.subr.mxu0 0.0
  %3235 = vmatpush1.msra.mxu0 %v2706
  %3236 = vmatprep.subr.mxu0 0.0
  %3237 = vmatpush1.msra.mxu0 %v2707
  %3238 = vmatprep.subr.mxu0 0.0
  %3239 = vmatpush1.msra.mxu0 %v2708
  %3240 = vmatprep.subr.mxu0 0.0
  %3241 = vmatpush1.msra.mxu0 %v2709
  %3242 = vmatprep.subr.mxu0 0.0
  %3243 = vmatpush1.msra.mxu0 %v2710
  %3244 = vmatprep.subr.mxu0 0.0
  %3245 = vmatpush1.msra.mxu0 %v2711
  %3246 = vmatprep.subr.mxu0 0.0
  %3247 = vmatpush1.msra.mxu0 %v2712
  %3248 = vmatprep.subr.mxu0 0.0
  %3249 = vmatpush1.msra.mxu0 %v2713
  %3250 = vmatprep.subr.mxu0 0.0
  %3251 = vmatpush1.msra.mxu0 %v2714
  %3252 = vmatprep.subr.mxu0 0.0
  %3253 = vmatpush1.msra.mxu0 %v2715
  %3254 = vmatprep.subr.mxu0 0.0
  %3255 = vmatpush1.msra.mxu0 %v2716
  %3256 = vmatprep.subr.mxu0 0.0
  %3257 = vmatpush1.msra.mxu0 %v2717
  %3258 = vmatprep.subr.mxu0 0.0
  %3259 = vmatpush1.msra.mxu0 %v2718
  %3260 = vmatprep.subr.mxu0 0.0
  %3261 = vmatpush1.msra.mxu0 %v2719
  %3262 = vmatprep.subr.mxu0 0.0
  %3263 = vmatpush1.msra.mxu0 %v2720
  %3264 = vmatprep.subr.mxu0 0.0
  %3265 = vmatpush1.msra.mxu0 %v2721
  %3266 = vmatprep.subr.mxu0 0.0
  %3267 = vmatpush1.msra.mxu0 %v2722
  %3268 = vmatprep.subr.mxu0 0.0
  %3269 = vmatpush1.msra.mxu0 %v2723
  %3270 = vmatprep.mubr.f32.mxu0 %v2481
  %3271 = vmatmul.mubr.f32.gmra.mrb[0].mxu0 %v2480
  %v3272 = vpop.f32.mrb[0].mxu0
  %v3273 = vadd.f32 %v3198, %v3272
  %v3274 = vpop.f32.mrb[0].mxu0
  %3275 = vmatprep.mubr.f32.mxu0 %v2497
  %3276 = vmatmul.mubr.f32.gmra.mrb[0].mxu0 %v2496
  %v3277 = vpop.f32.mrb[0].mxu0
  %v3278 = vadd.f32 %v3203, %v3277
  %v3279 = vpop.f32.mrb[0].mxu0
  %3280 = vdwg.mxu0
  %3281 = vmatprep.subr.mxu0 0.0
  %3282 = vmatpush1.msra.mxu0 %v2724
  %3283 = vmatprep.subr.mxu0 0.0
  %3284 = vmatpush1.msra.mxu0 %v2725
  %3285 = vmatprep.subr.mxu0 0.0
  %3286 = vmatpush1.msra.mxu0 %v2726
  %3287 = vmatprep.subr.mxu0 0.0
  %3288 = vmatpush1.msra.mxu0 %v2727
  %3289 = vmatprep.subr.mxu0 0.0
  %3290 = vmatpush1.msra.mxu0 %v2728
  %3291 = vmatprep.subr.mxu0 0.0
  %3292 = vmatpush1.msra.mxu0 %v2729
  %3293 = vmatprep.subr.mxu0 0.0
  %3294 = vmatpush1.msra.mxu0 %v2730
  %3295 = vmatprep.subr.mxu0 0.0
  %3296 = vmatpush1.msra.mxu0 %v2731
  %3297 = vmatprep.subr.mxu0 0.0
  %3298 = vmatpush1.msra.mxu0 %v2732
  %3299 = vmatprep.subr.mxu0 0.0
  %3300 = vmatpush1.msra.mxu0 %v2733
  %3301 = vmatprep.subr.mxu0 0.0
  %3302 = vmatpush1.msra.mxu0 %v2734
  %3303 = vmatprep.subr.mxu0 0.0
  %3304 = vmatpush1.msra.mxu0 %v2735
  %3305 = vmatprep.subr.mxu0 0.0
  %3306 = vmatpush1.msra.mxu0 %v2736
  %3307 = vmatprep.subr.mxu0 0.0
  %3308 = vmatpush1.msra.mxu0 %v2737
  %3309 = vmatprep.subr.mxu0 0.0
  %3310 = vmatpush1.msra.mxu0 %v2738
  %3311 = vmatprep.subr.mxu0 0.0
  %3312 = vmatpush1.msra.mxu0 %v2739
  %3313 = vmatprep.subr.mxu0 0.0
  %3314 = vmatpush1.msra.mxu0 %v2740
  %3315 = vmatprep.subr.mxu0 0.0
  %3316 = vmatpush1.msra.mxu0 %v2741
  %3317 = vmatprep.subr.mxu0 0.0
  %3318 = vmatpush1.msra.mxu0 %v2742
  %3319 = vmatprep.subr.mxu0 0.0
  %3320 = vmatpush1.msra.mxu0 %v2743
  %3321 = vmatprep.subr.mxu0 0.0
  %3322 = vmatpush1.msra.mxu0 %v2744
  %3323 = vmatprep.subr.mxu0 0.0
  %3324 = vmatpush1.msra.mxu0 %v2745
  %3325 = vmatprep.subr.mxu0 0.0
  %3326 = vmatpush1.msra.mxu0 %v2746
  %3327 = vmatprep.subr.mxu0 0.0
  %3328 = vmatpush1.msra.mxu0 %v2747
  %3329 = vmatprep.subr.mxu0 0.0
  %3330 = vmatpush1.msra.mxu0 %v2748
  %3331 = vmatprep.subr.mxu0 0.0
  %3332 = vmatpush1.msra.mxu0 %v2749
  %3333 = vmatprep.subr.mxu0 0.0
  %3334 = vmatpush1.msra.mxu0 %v2750
  %3335 = vmatprep.subr.mxu0 0.0
  %3336 = vmatpush1.msra.mxu0 %v2751
  %3337 = vmatprep.subr.mxu0 0.0
  %3338 = vmatpush1.msra.mxu0 %v2752
  %3339 = vmatprep.subr.mxu0 0.0
  %3340 = vmatpush1.msra.mxu0 %v2753
  %3341 = vmatprep.subr.mxu0 0.0
  %3342 = vmatpush1.msra.mxu0 %v2754
  %3343 = vmatprep.subr.mxu0 0.0
  %3344 = vmatpush1.msra.mxu0 %v2755
  %3345 = vmatprep.mubr.f32.mxu0 %v2483
  %3346 = vmatmul.mubr.f32.gmra.mrb[0].mxu0 %v2482
  %v3347 = vpop.f32.mrb[0].mxu0
  %v3348 = vadd.f32 %v3273, %v3347
  %v3349 = vpop.f32.mrb[0].mxu0
  %3350 = vmatprep.mubr.f32.mxu0 %v2499
  %3351 = vmatmul.mubr.f32.gmra.mrb[0].mxu0 %v2498
  %v3352 = vpop.f32.mrb[0].mxu0
  %v3353 = vadd.f32 %v3278, %v3352
  %v3354 = vpop.f32.mrb[0].mxu0
  %3355 = vdwg.mxu0
  %v3356 = vld [vmem:[%s3] sm:$0x1f]
  %v3357 = vld [vmem:[%s4] sm:$0x1f]
  %3359 = vset.pattern.permute.xlu0 0
  %3360 = vperm.xlu0 %3359, %v3357
  %v3361 = vpop.permute.xlu0 %3360
  %vm3363 = vcmask 80896
  %v3365 = vsel %vm3363, %v3356, 0
  %vm3367 = vcmask 1041408
  %v3369 = vsel %vm3367, %v3353, 0
  %3371 = vmatprep.subr.mxu0 0.0
  %3372 = vmatpush1.msra.mxu0 %v3348
  %3373 = vmatprep.subr.mxu0 0.0
  %3374 = vmatpush1.msra.mxu0 %v3369
  %3375 = vmatprep.subr.mxu0 0.0
  %3376 = vmatpush1.msra.mxu0 0.0
  %3377 = vmatprep.subr.mxu0 0.0
  %3378 = vmatpush1.msra.mxu0 0.0
  %3379 = vmatprep.subr.mxu0 0.0
  %3380 = vmatpush1.msra.mxu0 0.0
  %3381 = vmatprep.subr.mxu0 0.0
  %3382 = vmatpush1.msra.mxu0 0.0
  %3383 = vmatprep.subr.mxu0 0.0
  %3384 = vmatpush1.msra.mxu0 0.0
  %3385 = vmatprep.subr.mxu0 0.0
  %3386 = vmatpush1.msra.mxu0 0.0
  %3387 = vmatprep.subr.mxu0 0.0
  %3388 = vmatpush1.msra.mxu0 0.0
  %3389 = vmatprep.subr.mxu0 0.0
  %3390 = vmatpush1.msra.mxu0 0.0
  %3391 = vmatprep.subr.mxu0 0.0
  %3392 = vmatpush1.msra.mxu0 0.0
  %3393 = vmatprep.subr.mxu0 0.0
  %3394 = vmatpush1.msra.mxu0 0.0
  %3395 = vmatprep.subr.mxu0 0.0
  %3396 = vmatpush1.msra.mxu0 0.0
  %3397 = vmatprep.subr.mxu0 0.0
  %3398 = vmatpush1.msra.mxu0 0.0
  %3399 = vmatprep.subr.mxu0 0.0
  %3400 = vmatpush1.msra.mxu0 0.0
  %3401 = vmatprep.subr.mxu0 0.0
  %3402 = vmatpush1.msra.mxu0 0.0
  %3403 = vmatprep.subr.mxu0 0.0
  %3404 = vmatpush1.msra.mxu0 0.0
  %3405 = vmatprep.subr.mxu0 0.0
  %3406 = vmatpush1.msra.mxu0 0.0
  %3407 = vmatprep.subr.mxu0 0.0
  %3408 = vmatpush1.msra.mxu0 0.0
  %3409 = vmatprep.subr.mxu0 0.0
  %3410 = vmatpush1.msra.mxu0 0.0
  %3411 = vmatprep.subr.mxu0 0.0
  %3412 = vmatpush1.msra.mxu0 0.0
  %3413 = vmatprep.subr.mxu0 0.0
  %3414 = vmatpush1.msra.mxu0 0.0
  %3415 = vmatprep.subr.mxu0 0.0
  %3416 = vmatpush1.msra.mxu0 0.0
  %3417 = vmatprep.subr.mxu0 0.0
  %3418 = vmatpush1.msra.mxu0 0.0
  %3419 = vmatprep.subr.mxu0 0.0
  %3420 = vmatpush1.msra.mxu0 0.0
  %3421 = vmatprep.subr.mxu0 0.0
  %3422 = vmatpush1.msra.mxu0 0.0
  %3423 = vmatprep.subr.mxu0 0.0
  %3424 = vmatpush1.msra.mxu0 0.0
  %3425 = vmatprep.subr.mxu0 0.0
  %3426 = vmatpush1.msra.mxu0 0.0
  %3427 = vmatprep.subr.mxu0 0.0
  %3428 = vmatpush1.msra.mxu0 0.0
  %3429 = vmatprep.subr.mxu0 0.0
  %3430 = vmatpush1.msra.mxu0 0.0
  %3431 = vmatprep.subr.mxu0 0.0
  %3432 = vmatpush1.msra.mxu0 0.0
  %3433 = vmatprep.subr.mxu0 0.0
  %3434 = vmatpush1.msra.mxu0 0.0
  %3435 = vmatprep.mubr.f32.mxu0 0.0
  %3436 = vmatmul.mubr.f32.gmra.mrb[0].mxu0 %v3365
  %v3437 = vpop.f32.mrb[0].mxu0
  %v3438 = vadd.f32 %v3361, %v3437
  %v3439 = vpop.f32.mrb[0].mxu0
  %3440 = vdwg.mxu0
  %v3441 = vmax.f32 %v3438, 0.0
  %v3442 = vld [vmem:[%s5] sm:$0xff]
  %v3443 = vld [vmem:[%s5 + $0x8] sm:$0x3]
  %v3444 = vld [vmem:[%s6] sm:$0xff]
  %v3445 = vld [vmem:[%s6 + $0x8] sm:$0x3]
  %3447 = vset.pattern.permute.xlu0 0
  %3448 = vperm.xlu0 %3447, %v3444
  %v3449 = vpop.permute.xlu0 %3448
  %3452 = vset.pattern.permute.xlu0 0
  %3453 = vperm.xlu0 %3452, %v3445
  %v3454 = vpop.permute.xlu0 %3453
  %vm3456 = vcmask 39936
  %v3458 = vsel %vm3456, %v3442, 0
  %v3461 = vsel %vm3456, %v3443, 0
  %v3464 = vsel %vm757, %v3441, 0
  %3466 = vmatprep.subr.mxu0 0.0
  %3467 = vmatpush1.msra.mxu0 %v3464
  %3468 = vmatprep.subr.mxu0 0.0
  %3469 = vmatpush1.msra.mxu0 0.0
  %3470 = vmatprep.subr.mxu0 0.0
  %3471 = vmatpush1.msra.mxu0 0.0
  %3472 = vmatprep.subr.mxu0 0.0
  %3473 = vmatpush1.msra.mxu0 0.0
  %3474 = vmatprep.subr.mxu0 0.0
  %3475 = vmatpush1.msra.mxu0 0.0
  %3476 = vmatprep.subr.mxu0 0.0
  %3477 = vmatpush1.msra.mxu0 0.0
  %3478 = vmatprep.subr.mxu0 0.0
  %3479 = vmatpush1.msra.mxu0 0.0
  %3480 = vmatprep.subr.mxu0 0.0
  %3481 = vmatpush1.msra.mxu0 0.0
  %3482 = vmatprep.subr.mxu0 0.0
  %3483 = vmatpush1.msra.mxu0 0.0
  %3484 = vmatprep.subr.mxu0 0.0
  %3485 = vmatpush1.msra.mxu0 0.0
  %3486 = vmatprep.subr.mxu0 0.0
  %3487 = vmatpush1.msra.mxu0 0.0
  %3488 = vmatprep.subr.mxu0 0.0
  %3489 = vmatpush1.msra.mxu0 0.0
  %3490 = vmatprep.subr.mxu0 0.0
  %3491 = vmatpush1.msra.mxu0 0.0
  %3492 = vmatprep.subr.mxu0 0.0
  %3493 = vmatpush1.msra.mxu0 0.0
  %3494 = vmatprep.subr.mxu0 0.0
  %3495 = vmatpush1.msra.mxu0 0.0
  %3496 = vmatprep.subr.mxu0 0.0
  %3497 = vmatpush1.msra.mxu0 0.0
  %3498 = vmatprep.subr.mxu0 0.0
  %3499 = vmatpush1.msra.mxu0 0.0
  %3500 = vmatprep.subr.mxu0 0.0
  %3501 = vmatpush1.msra.mxu0 0.0
  %3502 = vmatprep.subr.mxu0 0.0
  %3503 = vmatpush1.msra.mxu0 0.0
  %3504 = vmatprep.subr.mxu0 0.0
  %3505 = vmatpush1.msra.mxu0 0.0
  %3506 = vmatprep.subr.mxu0 0.0
  %3507 = vmatpush1.msra.mxu0 0.0
  %3508 = vmatprep.subr.mxu0 0.0
  %3509 = vmatpush1.msra.mxu0 0.0
  %3510 = vmatprep.subr.mxu0 0.0
  %3511 = vmatpush1.msra.mxu0 0.0
  %3512 = vmatprep.subr.mxu0 0.0
  %3513 = vmatpush1.msra.mxu0 0.0
  %3514 = vmatprep.subr.mxu0 0.0
  %3515 = vmatpush1.msra.mxu0 0.0
  %3516 = vmatprep.subr.mxu0 0.0
  %3517 = vmatpush1.msra.mxu0 0.0
  %3518 = vmatprep.subr.mxu0 0.0
  %3519 = vmatpush1.msra.mxu0 0.0
  %3520 = vmatprep.subr.mxu0 0.0
  %3521 = vmatpush1.msra.mxu0 0.0
  %3522 = vmatprep.subr.mxu0 0.0
  %3523 = vmatpush1.msra.mxu0 0.0
  %3524 = vmatprep.subr.mxu0 0.0
  %3525 = vmatpush1.msra.mxu0 0.0
  %3526 = vmatprep.subr.mxu0 0.0
  %3527 = vmatpush1.msra.mxu0 0.0
  %3528 = vmatprep.subr.mxu0 0.0
  %3529 = vmatpush1.msra.mxu0 0.0
  %3530 = vmatprep.mubr.f32.mxu0 0.0
  %3531 = vmatmul.mubr.f32.gmra.mrb[0].mxu0 %v3458
  %v3532 = vpop.f32.mrb[0].mxu0
  %v3533 = vadd.f32 %v3449, %v3532
  %v3534 = vpop.f32.mrb[0].mxu0
  %3535 = vmatprep.mubr.f32.mxu0 0.0
  %3536 = vmatmul.mubr.f32.gmra.mrb[0].mxu0 %v3461
  %v3537 = vpop.f32.mrb[0].mxu0
  %v3538 = vadd.f32 %v3454, %v3537
  %v3539 = vpop.f32.mrb[0].mxu0
  %3540 = vdwg.mxu0
  %v3541 = vsub.f32 0.0, %v3533
  %v3542 = vsub.f32 0.0, %v3538
  %v3543 = vmul.f32 %v3541, 1.442695
  %v3544 = vpow.pop %v3543
  %v3545 = vmul.f32 %v3542, 1.442695
  %v3546 = vpow.pop %v3545
  %v3547 = vadd.f32 %v3544, 1.0
  %v3548 = vadd.f32 %v3546, 1.0
  %v3549 = vrcp.pop %v3547
  %v3550 = vmul.f32 1.0, %v3549
  %v3551 = vrcp.pop %v3548
  %v3552 = vmul.f32 1.0, %v3551
  %v3553 = vld [vmem:[%s10] sm:$0xff]
  %v3554 = vld [vmem:[%s10 + $0x8] sm:$0xff]
  %v3555 = vld [vmem:[%s10 + $0x10] sm:$0xff]
  %v3556 = vld [vmem:[%s10 + $0x18] sm:$0xff]
  %v3557 = vld [vmem:[%s10 + $0x20] sm:$0xff]
  %v3558 = vld [vmem:[%s10 + $0x28] sm:$0xff]
  %v3559 = vld [vmem:[%s10 + $0x30] sm:$0xff]
  %v3560 = vld [vmem:[%s10 + $0x38] sm:$0xff]
  %v3561 = vld [vmem:[%s10 + $0x40] sm:$0xff]
  %v3562 = vld [vmem:[%s10 + $0x48] sm:$0xff]
  %v3563 = vld [vmem:[%s10 + $0x50] sm:$0xff]
  %v3564 = vld [vmem:[%s10 + $0x58] sm:$0xff]
  %v3565 = vld [vmem:[%s10 + $0x60] sm:$0xff]
  %v3566 = vld [vmem:[%s10 + $0x68] sm:$0xff]
  %v3567 = vld [vmem:[%s10 + $0x70] sm:$0xff]
  %v3568 = vld [vmem:[%s10 + $0x78] sm:$0xff]
  %v3569 = vld [vmem:[%s7] sm:$0x1]
  %v3570 = vld [vmem:[#allocation2] sm:$0x1]
  %3572 = vset.pattern.permute.xlu0 0
  %3573 = vperm.xlu0 %3572, %v3570
  %v3574 = vpop.permute.xlu0 %3573
  %v3576 = vlaneseq
  %v3577 = vshrl.u32 %v3576, 7
  %v3578 = vsub.s32 0, %v3577
  %v3579 = vrot.slane %v3574, %v3578
  %v3581 = vsel %vm3363, %v3569, 0
  %v3584 = vsel %vm3367, %v2484, 0
  %v3587 = vsel %vm3367, %v2485, 0
  %v3590 = vsel %vm3367, %v2486, 0
  %v3593 = vsel %vm3367, %v2487, 0
  %v3596 = vsel %vm3367, %v2488, 0
  %v3599 = vsel %vm3367, %v2489, 0
  %v3602 = vsel %vm3367, %v2490, 0
  %v3605 = vsel %vm3367, %v2491, 0
  %v3608 = vsel %vm3367, %v2492, 0
  %v3611 = vsel %vm3367, %v2493, 0
  %v3614 = vsel %vm3367, %v2494, 0
  %v3617 = vsel %vm3367, %v2495, 0
  %v3620 = vsel %vm3367, %v2496, 0
  %v3623 = vsel %vm3367, %v2497, 0
  %v3626 = vsel %vm3367, %v2498, 0
  %v3629 = vsel %vm3367, %v2499, 0
  %3631 = vmatprep.subr.mxu0 %v2469
  %3632 = vmatpush1.msra.mxu0 %v2468
  %3633 = vmatprep.subr.mxu0 %v3587
  %3634 = vmatpush1.msra.mxu0 %v3584
  %3635 = vmatprep.subr.mxu0 0.0
  %3636 = vmatpush1.msra.mxu0 0.0
  %3637 = vmatprep.subr.mxu0 0.0
  %3638 = vmatpush1.msra.mxu0 0.0
  %3639 = vmatprep.subr.mxu0 0.0
  %3640 = vmatpush1.msra.mxu0 0.0
  %3641 = vmatprep.subr.mxu0 0.0
  %3642 = vmatpush1.msra.mxu0 0.0
  %3643 = vmatprep.subr.mxu0 0.0
  %3644 = vmatpush1.msra.mxu0 0.0
  %3645 = vmatprep.subr.mxu0 0.0
  %3646 = vmatpush1.msra.mxu0 0.0
  %3647 = vmatprep.subr.mxu0 0.0
  %3648 = vmatpush1.msra.mxu0 0.0
  %3649 = vmatprep.subr.mxu0 0.0
  %3650 = vmatpush1.msra.mxu0 0.0
  %3651 = vmatprep.subr.mxu0 0.0
  %3652 = vmatpush1.msra.mxu0 0.0
  %3653 = vmatprep.subr.mxu0 0.0
  %3654 = vmatpush1.msra.mxu0 0.0
  %3655 = vmatprep.subr.mxu0 0.0
  %3656 = vmatpush1.msra.mxu0 0.0
  %3657 = vmatprep.subr.mxu0 0.0
  %3658 = vmatpush1.msra.mxu0 0.0
  %3659 = vmatprep.subr.mxu0 0.0
  %3660 = vmatpush1.msra.mxu0 0.0
  %3661 = vmatprep.subr.mxu0 0.0
  %3662 = vmatpush1.msra.mxu0 0.0
  %3663 = vmatprep.subr.mxu0 0.0
  %3664 = vmatpush1.msra.mxu0 0.0
  %3665 = vmatprep.subr.mxu0 0.0
  %3666 = vmatpush1.msra.mxu0 0.0
  %3667 = vmatprep.subr.mxu0 0.0
  %3668 = vmatpush1.msra.mxu0 0.0
  %3669 = vmatprep.subr.mxu0 0.0
  %3670 = vmatpush1.msra.mxu0 0.0
  %3671 = vmatprep.subr.mxu0 0.0
  %3672 = vmatpush1.msra.mxu0 0.0
  %3673 = vmatprep.subr.mxu0 0.0
  %3674 = vmatpush1.msra.mxu0 0.0
  %3675 = vmatprep.subr.mxu0 0.0
  %3676 = vmatpush1.msra.mxu0 0.0
  %3677 = vmatprep.subr.mxu0 0.0
  %3678 = vmatpush1.msra.mxu0 0.0
  %3679 = vmatprep.subr.mxu0 0.0
  %3680 = vmatpush1.msra.mxu0 0.0
  %3681 = vmatprep.subr.mxu0 0.0
  %3682 = vmatpush1.msra.mxu0 0.0
  %3683 = vmatprep.subr.mxu0 0.0
  %3684 = vmatpush1.msra.mxu0 0.0
  %3685 = vmatprep.subr.mxu0 0.0
  %3686 = vmatpush1.msra.mxu0 0.0
  %3687 = vmatprep.subr.mxu0 0.0
  %3688 = vmatpush1.msra.mxu0 0.0
  %3689 = vmatprep.subr.mxu0 0.0
  %3690 = vmatpush1.msra.mxu0 0.0
  %3691 = vmatprep.subr.mxu0 0.0
  %3692 = vmatpush1.msra.mxu0 0.0
  %3693 = vmatprep.subr.mxu0 0.0
  %3694 = vmatpush1.msra.mxu0 0.0
  %3695 = vmatprep.mubr.f32.mxu0 0.0
  %3696 = vmatmul.mubr.f32.gmra.mrb[0].mxu0 %v3581
  %v3697 = vpop.f32.mrb[0].mxu0
  %v3698 = vadd.f32 %v3579, %v3697
  %v3699 = vpop.f32.mrb[0].mxu0
  %v3700 = vadd.f32 %v3579, %v3699
  %3701 = vdwg.mxu0
  %3702 = vmatprep.subr.mxu0 %v2471
  %3703 = vmatpush1.msra.mxu0 %v2470
  %3704 = vmatprep.subr.mxu0 %v3593
  %3705 = vmatpush1.msra.mxu0 %v3590
  %3706 = vmatprep.subr.mxu0 0.0
  %3707 = vmatpush1.msra.mxu0 0.0
  %3708 = vmatprep.subr.mxu0 0.0
  %3709 = vmatpush1.msra.mxu0 0.0
  %3710 = vmatprep.subr.mxu0 0.0
  %3711 = vmatpush1.msra.mxu0 0.0
  %3712 = vmatprep.subr.mxu0 0.0
  %3713 = vmatpush1.msra.mxu0 0.0
  %3714 = vmatprep.subr.mxu0 0.0
  %3715 = vmatpush1.msra.mxu0 0.0
  %3716 = vmatprep.subr.mxu0 0.0
  %3717 = vmatpush1.msra.mxu0 0.0
  %3718 = vmatprep.subr.mxu0 0.0
  %3719 = vmatpush1.msra.mxu0 0.0
  %3720 = vmatprep.subr.mxu0 0.0
  %3721 = vmatpush1.msra.mxu0 0.0
  %3722 = vmatprep.subr.mxu0 0.0
  %3723 = vmatpush1.msra.mxu0 0.0
  %3724 = vmatprep.subr.mxu0 0.0
  %3725 = vmatpush1.msra.mxu0 0.0
  %3726 = vmatprep.subr.mxu0 0.0
  %3727 = vmatpush1.msra.mxu0 0.0
  %3728 = vmatprep.subr.mxu0 0.0
  %3729 = vmatpush1.msra.mxu0 0.0
  %3730 = vmatprep.subr.mxu0 0.0
  %3731 = vmatpush1.msra.mxu0 0.0
  %3732 = vmatprep.subr.mxu0 0.0
  %3733 = vmatpush1.msra.mxu0 0.0
  %3734 = vmatprep.subr.mxu0 0.0
  %3735 = vmatpush1.msra.mxu0 0.0
  %3736 = vmatprep.subr.mxu0 0.0
  %3737 = vmatpush1.msra.mxu0 0.0
  %3738 = vmatprep.subr.mxu0 0.0
  %3739 = vmatpush1.msra.mxu0 0.0
  %3740 = vmatprep.subr.mxu0 0.0
  %3741 = vmatpush1.msra.mxu0 0.0
  %3742 = vmatprep.subr.mxu0 0.0
  %3743 = vmatpush1.msra.mxu0 0.0
  %3744 = vmatprep.subr.mxu0 0.0
  %3745 = vmatpush1.msra.mxu0 0.0
  %3746 = vmatprep.subr.mxu0 0.0
  %3747 = vmatpush1.msra.mxu0 0.0
  %3748 = vmatprep.subr.mxu0 0.0
  %3749 = vmatpush1.msra.mxu0 0.0
  %3750 = vmatprep.subr.mxu0 0.0
  %3751 = vmatpush1.msra.mxu0 0.0
  %3752 = vmatprep.subr.mxu0 0.0
  %3753 = vmatpush1.msra.mxu0 0.0
  %3754 = vmatprep.subr.mxu0 0.0
  %3755 = vmatpush1.msra.mxu0 0.0
  %3756 = vmatprep.subr.mxu0 0.0
  %3757 = vmatpush1.msra.mxu0 0.0
  %3758 = vmatprep.subr.mxu0 0.0
  %3759 = vmatpush1.msra.mxu0 0.0
  %3760 = vmatprep.subr.mxu0 0.0
  %3761 = vmatpush1.msra.mxu0 0.0
  %3762 = vmatprep.subr.mxu0 0.0
  %3763 = vmatpush1.msra.mxu0 0.0
  %3764 = vmatprep.subr.mxu0 0.0
  %3765 = vmatpush1.msra.mxu0 0.0
  %3766 = vmatprep.mubr.f32.mxu0 0.0
  %3767 = vmatmul.mubr.f32.gmra.mrb[0].mxu0 %v3581
  %v3768 = vpop.f32.mrb[0].mxu0
  %v3769 = vadd.f32 %v3579, %v3768
  %v3770 = vpop.f32.mrb[0].mxu0
  %v3771 = vadd.f32 %v3579, %v3770
  %3772 = vdwg.mxu0
  %3773 = vmatprep.subr.mxu0 %v2473
  %3774 = vmatpush1.msra.mxu0 %v2472
  %3775 = vmatprep.subr.mxu0 %v3599
  %3776 = vmatpush1.msra.mxu0 %v3596
  %3777 = vmatprep.subr.mxu0 0.0
  %3778 = vmatpush1.msra.mxu0 0.0
  %3779 = vmatprep.subr.mxu0 0.0
  %3780 = vmatpush1.msra.mxu0 0.0
  %3781 = vmatprep.subr.mxu0 0.0
  %3782 = vmatpush1.msra.mxu0 0.0
  %3783 = vmatprep.subr.mxu0 0.0
  %3784 = vmatpush1.msra.mxu0 0.0
  %3785 = vmatprep.subr.mxu0 0.0
  %3786 = vmatpush1.msra.mxu0 0.0
  %3787 = vmatprep.subr.mxu0 0.0
  %3788 = vmatpush1.msra.mxu0 0.0
  %3789 = vmatprep.subr.mxu0 0.0
  %3790 = vmatpush1.msra.mxu0 0.0
  %3791 = vmatprep.subr.mxu0 0.0
  %3792 = vmatpush1.msra.mxu0 0.0
  %3793 = vmatprep.subr.mxu0 0.0
  %3794 = vmatpush1.msra.mxu0 0.0
  %3795 = vmatprep.subr.mxu0 0.0
  %3796 = vmatpush1.msra.mxu0 0.0
  %3797 = vmatprep.subr.mxu0 0.0
  %3798 = vmatpush1.msra.mxu0 0.0
  %3799 = vmatprep.subr.mxu0 0.0
  %3800 = vmatpush1.msra.mxu0 0.0
  %3801 = vmatprep.subr.mxu0 0.0
  %3802 = vmatpush1.msra.mxu0 0.0
  %3803 = vmatprep.subr.mxu0 0.0
  %3804 = vmatpush1.msra.mxu0 0.0
  %3805 = vmatprep.subr.mxu0 0.0
  %3806 = vmatpush1.msra.mxu0 0.0
  %3807 = vmatprep.subr.mxu0 0.0
  %3808 = vmatpush1.msra.mxu0 0.0
  %3809 = vmatprep.subr.mxu0 0.0
  %3810 = vmatpush1.msra.mxu0 0.0
  %3811 = vmatprep.subr.mxu0 0.0
  %3812 = vmatpush1.msra.mxu0 0.0
  %3813 = vmatprep.subr.mxu0 0.0
  %3814 = vmatpush1.msra.mxu0 0.0
  %3815 = vmatprep.subr.mxu0 0.0
  %3816 = vmatpush1.msra.mxu0 0.0
  %3817 = vmatprep.subr.mxu0 0.0
  %3818 = vmatpush1.msra.mxu0 0.0
  %3819 = vmatprep.subr.mxu0 0.0
  %3820 = vmatpush1.msra.mxu0 0.0
  %3821 = vmatprep.subr.mxu0 0.0
  %3822 = vmatpush1.msra.mxu0 0.0
  %3823 = vmatprep.subr.mxu0 0.0
  %3824 = vmatpush1.msra.mxu0 0.0
  %3825 = vmatprep.subr.mxu0 0.0
  %3826 = vmatpush1.msra.mxu0 0.0
  %3827 = vmatprep.subr.mxu0 0.0
  %3828 = vmatpush1.msra.mxu0 0.0
  %3829 = vmatprep.subr.mxu0 0.0
  %3830 = vmatpush1.msra.mxu0 0.0
  %3831 = vmatprep.subr.mxu0 0.0
  %3832 = vmatpush1.msra.mxu0 0.0
  %3833 = vmatprep.subr.mxu0 0.0
  %3834 = vmatpush1.msra.mxu0 0.0
  %3835 = vmatprep.subr.mxu0 0.0
  %3836 = vmatpush1.msra.mxu0 0.0
  %3837 = vmatprep.mubr.f32.mxu0 0.0
  %3838 = vmatmul.mubr.f32.gmra.mrb[0].mxu0 %v3581
  %v3839 = vpop.f32.mrb[0].mxu0
  %v3840 = vadd.f32 %v3579, %v3839
  %v3841 = vpop.f32.mrb[0].mxu0
  %v3842 = vadd.f32 %v3579, %v3841
  %3843 = vdwg.mxu0
  %3844 = vmatprep.subr.mxu0 %v2475
  %3845 = vmatpush1.msra.mxu0 %v2474
  %3846 = vmatprep.subr.mxu0 %v3605
  %3847 = vmatpush1.msra.mxu0 %v3602
  %3848 = vmatprep.subr.mxu0 0.0
  %3849 = vmatpush1.msra.mxu0 0.0
  %3850 = vmatprep.subr.mxu0 0.0
  %3851 = vmatpush1.msra.mxu0 0.0
  %3852 = vmatprep.subr.mxu0 0.0
  %3853 = vmatpush1.msra.mxu0 0.0
  %3854 = vmatprep.subr.mxu0 0.0
  %3855 = vmatpush1.msra.mxu0 0.0
  %3856 = vmatprep.subr.mxu0 0.0
  %3857 = vmatpush1.msra.mxu0 0.0
  %3858 = vmatprep.subr.mxu0 0.0
  %3859 = vmatpush1.msra.mxu0 0.0
  %3860 = vmatprep.subr.mxu0 0.0
  %3861 = vmatpush1.msra.mxu0 0.0
  %3862 = vmatprep.subr.mxu0 0.0
  %3863 = vmatpush1.msra.mxu0 0.0
  %3864 = vmatprep.subr.mxu0 0.0
  %3865 = vmatpush1.msra.mxu0 0.0
  %3866 = vmatprep.subr.mxu0 0.0
  %3867 = vmatpush1.msra.mxu0 0.0
  %3868 = vmatprep.subr.mxu0 0.0
  %3869 = vmatpush1.msra.mxu0 0.0
  %3870 = vmatprep.subr.mxu0 0.0
  %3871 = vmatpush1.msra.mxu0 0.0
  %3872 = vmatprep.subr.mxu0 0.0
  %3873 = vmatpush1.msra.mxu0 0.0
  %3874 = vmatprep.subr.mxu0 0.0
  %3875 = vmatpush1.msra.mxu0 0.0
  %3876 = vmatprep.subr.mxu0 0.0
  %3877 = vmatpush1.msra.mxu0 0.0
  %3878 = vmatprep.subr.mxu0 0.0
  %3879 = vmatpush1.msra.mxu0 0.0
  %3880 = vmatprep.subr.mxu0 0.0
  %3881 = vmatpush1.msra.mxu0 0.0
  %3882 = vmatprep.subr.mxu0 0.0
  %3883 = vmatpush1.msra.mxu0 0.0
  %3884 = vmatprep.subr.mxu0 0.0
  %3885 = vmatpush1.msra.mxu0 0.0
  %3886 = vmatprep.subr.mxu0 0.0
  %3887 = vmatpush1.msra.mxu0 0.0
  %3888 = vmatprep.subr.mxu0 0.0
  %3889 = vmatpush1.msra.mxu0 0.0
  %3890 = vmatprep.subr.mxu0 0.0
  %3891 = vmatpush1.msra.mxu0 0.0
  %3892 = vmatprep.subr.mxu0 0.0
  %3893 = vmatpush1.msra.mxu0 0.0
  %3894 = vmatprep.subr.mxu0 0.0
  %3895 = vmatpush1.msra.mxu0 0.0
  %3896 = vmatprep.subr.mxu0 0.0
  %3897 = vmatpush1.msra.mxu0 0.0
  %3898 = vmatprep.subr.mxu0 0.0
  %3899 = vmatpush1.msra.mxu0 0.0
  %3900 = vmatprep.subr.mxu0 0.0
  %3901 = vmatpush1.msra.mxu0 0.0
  %3902 = vmatprep.subr.mxu0 0.0
  %3903 = vmatpush1.msra.mxu0 0.0
  %3904 = vmatprep.subr.mxu0 0.0
  %3905 = vmatpush1.msra.mxu0 0.0
  %3906 = vmatprep.subr.mxu0 0.0
  %3907 = vmatpush1.msra.mxu0 0.0
  %3908 = vmatprep.mubr.f32.mxu0 0.0
  %3909 = vmatmul.mubr.f32.gmra.mrb[0].mxu0 %v3581
  %v3910 = vpop.f32.mrb[0].mxu0
  %v3911 = vadd.f32 %v3579, %v3910
  %v3912 = vpop.f32.mrb[0].mxu0
  %v3913 = vadd.f32 %v3579, %v3912
  %3914 = vdwg.mxu0
  %3915 = vmatprep.subr.mxu0 %v2477
  %3916 = vmatpush1.msra.mxu0 %v2476
  %3917 = vmatprep.subr.mxu0 %v3611
  %3918 = vmatpush1.msra.mxu0 %v3608
  %3919 = vmatprep.subr.mxu0 0.0
  %3920 = vmatpush1.msra.mxu0 0.0
  %3921 = vmatprep.subr.mxu0 0.0
  %3922 = vmatpush1.msra.mxu0 0.0
  %3923 = vmatprep.subr.mxu0 0.0
  %3924 = vmatpush1.msra.mxu0 0.0
  %3925 = vmatprep.subr.mxu0 0.0
  %3926 = vmatpush1.msra.mxu0 0.0
  %3927 = vmatprep.subr.mxu0 0.0
  %3928 = vmatpush1.msra.mxu0 0.0
  %3929 = vmatprep.subr.mxu0 0.0
  %3930 = vmatpush1.msra.mxu0 0.0
  %3931 = vmatprep.subr.mxu0 0.0
  %3932 = vmatpush1.msra.mxu0 0.0
  %3933 = vmatprep.subr.mxu0 0.0
  %3934 = vmatpush1.msra.mxu0 0.0
  %3935 = vmatprep.subr.mxu0 0.0
  %3936 = vmatpush1.msra.mxu0 0.0
  %3937 = vmatprep.subr.mxu0 0.0
  %3938 = vmatpush1.msra.mxu0 0.0
  %3939 = vmatprep.subr.mxu0 0.0
  %3940 = vmatpush1.msra.mxu0 0.0
  %3941 = vmatprep.subr.mxu0 0.0
  %3942 = vmatpush1.msra.mxu0 0.0
  %3943 = vmatprep.subr.mxu0 0.0
  %3944 = vmatpush1.msra.mxu0 0.0
  %3945 = vmatprep.subr.mxu0 0.0
  %3946 = vmatpush1.msra.mxu0 0.0
  %3947 = vmatprep.subr.mxu0 0.0
  %3948 = vmatpush1.msra.mxu0 0.0
  %3949 = vmatprep.subr.mxu0 0.0
  %3950 = vmatpush1.msra.mxu0 0.0
  %3951 = vmatprep.subr.mxu0 0.0
  %3952 = vmatpush1.msra.mxu0 0.0
  %3953 = vmatprep.subr.mxu0 0.0
  %3954 = vmatpush1.msra.mxu0 0.0
  %3955 = vmatprep.subr.mxu0 0.0
  %3956 = vmatpush1.msra.mxu0 0.0
  %3957 = vmatprep.subr.mxu0 0.0
  %3958 = vmatpush1.msra.mxu0 0.0
  %3959 = vmatprep.subr.mxu0 0.0
  %3960 = vmatpush1.msra.mxu0 0.0
  %3961 = vmatprep.subr.mxu0 0.0
  %3962 = vmatpush1.msra.mxu0 0.0
  %3963 = vmatprep.subr.mxu0 0.0
  %3964 = vmatpush1.msra.mxu0 0.0
  %3965 = vmatprep.subr.mxu0 0.0
  %3966 = vmatpush1.msra.mxu0 0.0
  %3967 = vmatprep.subr.mxu0 0.0
  %3968 = vmatpush1.msra.mxu0 0.0
  %3969 = vmatprep.subr.mxu0 0.0
  %3970 = vmatpush1.msra.mxu0 0.0
  %3971 = vmatprep.subr.mxu0 0.0
  %3972 = vmatpush1.msra.mxu0 0.0
  %3973 = vmatprep.subr.mxu0 0.0
  %3974 = vmatpush1.msra.mxu0 0.0
  %3975 = vmatprep.subr.mxu0 0.0
  %3976 = vmatpush1.msra.mxu0 0.0
  %3977 = vmatprep.subr.mxu0 0.0
  %3978 = vmatpush1.msra.mxu0 0.0
  %3979 = vmatprep.mubr.f32.mxu0 0.0
  %3980 = vmatmul.mubr.f32.gmra.mrb[0].mxu0 %v3581
  %v3981 = vpop.f32.mrb[0].mxu0
  %v3982 = vadd.f32 %v3579, %v3981
  %v3983 = vpop.f32.mrb[0].mxu0
  %v3984 = vadd.f32 %v3579, %v3983
  %3985 = vdwg.mxu0
  %3986 = vmatprep.subr.mxu0 %v2479
  %3987 = vmatpush1.msra.mxu0 %v2478
  %3988 = vmatprep.subr.mxu0 %v3617
  %3989 = vmatpush1.msra.mxu0 %v3614
  %3990 = vmatprep.subr.mxu0 0.0
  %3991 = vmatpush1.msra.mxu0 0.0
  %3992 = vmatprep.subr.mxu0 0.0
  %3993 = vmatpush1.msra.mxu0 0.0
  %3994 = vmatprep.subr.mxu0 0.0
  %3995 = vmatpush1.msra.mxu0 0.0
  %3996 = vmatprep.subr.mxu0 0.0
  %3997 = vmatpush1.msra.mxu0 0.0
  %3998 = vmatprep.subr.mxu0 0.0
  %3999 = vmatpush1.msra.mxu0 0.0
  %4000 = vmatprep.subr.mxu0 0.0
  %4001 = vmatpush1.msra.mxu0 0.0
  %4002 = vmatprep.subr.mxu0 0.0
  %4003 = vmatpush1.msra.mxu0 0.0
  %4004 = vmatprep.subr.mxu0 0.0
  %4005 = vmatpush1.msra.mxu0 0.0
  %4006 = vmatprep.subr.mxu0 0.0
  %4007 = vmatpush1.msra.mxu0 0.0
  %4008 = vmatprep.subr.mxu0 0.0
  %4009 = vmatpush1.msra.mxu0 0.0
  %4010 = vmatprep.subr.mxu0 0.0
  %4011 = vmatpush1.msra.mxu0 0.0
  %4012 = vmatprep.subr.mxu0 0.0
  %4013 = vmatpush1.msra.mxu0 0.0
  %4014 = vmatprep.subr.mxu0 0.0
  %4015 = vmatpush1.msra.mxu0 0.0
  %4016 = vmatprep.subr.mxu0 0.0
  %4017 = vmatpush1.msra.mxu0 0.0
  %4018 = vmatprep.subr.mxu0 0.0
  %4019 = vmatpush1.msra.mxu0 0.0
  %4020 = vmatprep.subr.mxu0 0.0
  %4021 = vmatpush1.msra.mxu0 0.0
  %4022 = vmatprep.subr.mxu0 0.0
  %4023 = vmatpush1.msra.mxu0 0.0
  %4024 = vmatprep.subr.mxu0 0.0
  %4025 = vmatpush1.msra.mxu0 0.0
  %4026 = vmatprep.subr.mxu0 0.0
  %4027 = vmatpush1.msra.mxu0 0.0
  %4028 = vmatprep.subr.mxu0 0.0
  %4029 = vmatpush1.msra.mxu0 0.0
  %4030 = vmatprep.subr.mxu0 0.0
  %4031 = vmatpush1.msra.mxu0 0.0
  %4032 = vmatprep.subr.mxu0 0.0
  %4033 = vmatpush1.msra.mxu0 0.0
  %4034 = vmatprep.subr.mxu0 0.0
  %4035 = vmatpush1.msra.mxu0 0.0
  %4036 = vmatprep.subr.mxu0 0.0
  %4037 = vmatpush1.msra.mxu0 0.0
  %4038 = vmatprep.subr.mxu0 0.0
  %4039 = vmatpush1.msra.mxu0 0.0
  %4040 = vmatprep.subr.mxu0 0.0
  %4041 = vmatpush1.msra.mxu0 0.0
  %4042 = vmatprep.subr.mxu0 0.0
  %4043 = vmatpush1.msra.mxu0 0.0
  %4044 = vmatprep.subr.mxu0 0.0
  %4045 = vmatpush1.msra.mxu0 0.0
  %4046 = vmatprep.subr.mxu0 0.0
  %4047 = vmatpush1.msra.mxu0 0.0
  %4048 = vmatprep.subr.mxu0 0.0
  %4049 = vmatpush1.msra.mxu0 0.0
  %4050 = vmatprep.mubr.f32.mxu0 0.0
  %4051 = vmatmul.mubr.f32.gmra.mrb[0].mxu0 %v3581
  %v4052 = vpop.f32.mrb[0].mxu0
  %v4053 = vadd.f32 %v3579, %v4052
  %v4054 = vpop.f32.mrb[0].mxu0
  %v4055 = vadd.f32 %v3579, %v4054
  %4056 = vdwg.mxu0
  %4057 = vmatprep.subr.mxu0 %v2481
  %4058 = vmatpush1.msra.mxu0 %v2480
  %4059 = vmatprep.subr.mxu0 %v3623
  %4060 = vmatpush1.msra.mxu0 %v3620
  %4061 = vmatprep.subr.mxu0 0.0
  %4062 = vmatpush1.msra.mxu0 0.0
  %4063 = vmatprep.subr.mxu0 0.0
  %4064 = vmatpush1.msra.mxu0 0.0
  %4065 = vmatprep.subr.mxu0 0.0
  %4066 = vmatpush1.msra.mxu0 0.0
  %4067 = vmatprep.subr.mxu0 0.0
  %4068 = vmatpush1.msra.mxu0 0.0
  %4069 = vmatprep.subr.mxu0 0.0
  %4070 = vmatpush1.msra.mxu0 0.0
  %4071 = vmatprep.subr.mxu0 0.0
  %4072 = vmatpush1.msra.mxu0 0.0
  %4073 = vmatprep.subr.mxu0 0.0
  %4074 = vmatpush1.msra.mxu0 0.0
  %4075 = vmatprep.subr.mxu0 0.0
  %4076 = vmatpush1.msra.mxu0 0.0
  %4077 = vmatprep.subr.mxu0 0.0
  %4078 = vmatpush1.msra.mxu0 0.0
  %4079 = vmatprep.subr.mxu0 0.0
  %4080 = vmatpush1.msra.mxu0 0.0
  %4081 = vmatprep.subr.mxu0 0.0
  %4082 = vmatpush1.msra.mxu0 0.0
  %4083 = vmatprep.subr.mxu0 0.0
  %4084 = vmatpush1.msra.mxu0 0.0
  %4085 = vmatprep.subr.mxu0 0.0
  %4086 = vmatpush1.msra.mxu0 0.0
  %4087 = vmatprep.subr.mxu0 0.0
  %4088 = vmatpush1.msra.mxu0 0.0
  %4089 = vmatprep.subr.mxu0 0.0
  %4090 = vmatpush1.msra.mxu0 0.0
  %4091 = vmatprep.subr.mxu0 0.0
  %4092 = vmatpush1.msra.mxu0 0.0
  %4093 = vmatprep.subr.mxu0 0.0
  %4094 = vmatpush1.msra.mxu0 0.0
  %4095 = vmatprep.subr.mxu0 0.0
  %4096 = vmatpush1.msra.mxu0 0.0
  %4097 = vmatprep.subr.mxu0 0.0
  %4098 = vmatpush1.msra.mxu0 0.0
  %4099 = vmatprep.subr.mxu0 0.0
  %4100 = vmatpush1.msra.mxu0 0.0
  %4101 = vmatprep.subr.mxu0 0.0
  %4102 = vmatpush1.msra.mxu0 0.0
  %4103 = vmatprep.subr.mxu0 0.0
  %4104 = vmatpush1.msra.mxu0 0.0
  %4105 = vmatprep.subr.mxu0 0.0
  %4106 = vmatpush1.msra.mxu0 0.0
  %4107 = vmatprep.subr.mxu0 0.0
  %4108 = vmatpush1.msra.mxu0 0.0
  %4109 = vmatprep.subr.mxu0 0.0
  %4110 = vmatpush1.msra.mxu0 0.0
  %4111 = vmatprep.subr.mxu0 0.0
  %4112 = vmatpush1.msra.mxu0 0.0
  %4113 = vmatprep.subr.mxu0 0.0
  %4114 = vmatpush1.msra.mxu0 0.0
  %4115 = vmatprep.subr.mxu0 0.0
  %4116 = vmatpush1.msra.mxu0 0.0
  %4117 = vmatprep.subr.mxu0 0.0
  %4118 = vmatpush1.msra.mxu0 0.0
  %4119 = vmatprep.subr.mxu0 0.0
  %4120 = vmatpush1.msra.mxu0 0.0
  %4121 = vmatprep.mubr.f32.mxu0 0.0
  %4122 = vmatmul.mubr.f32.gmra.mrb[0].mxu0 %v3581
  %v4123 = vpop.f32.mrb[0].mxu0
  %v4124 = vadd.f32 %v3579, %v4123
  %v4125 = vpop.f32.mrb[0].mxu0
  %v4126 = vadd.f32 %v3579, %v4125
  %4127 = vdwg.mxu0
  %4128 = vmatprep.subr.mxu0 %v2483
  %4129 = vmatpush1.msra.mxu0 %v2482
  %4130 = vmatprep.subr.mxu0 %v3629
  %4131 = vmatpush1.msra.mxu0 %v3626
  %4132 = vmatprep.subr.mxu0 0.0
  %4133 = vmatpush1.msra.mxu0 0.0
  %4134 = vmatprep.subr.mxu0 0.0
  %4135 = vmatpush1.msra.mxu0 0.0
  %4136 = vmatprep.subr.mxu0 0.0
  %4137 = vmatpush1.msra.mxu0 0.0
  %4138 = vmatprep.subr.mxu0 0.0
  %4139 = vmatpush1.msra.mxu0 0.0
  %4140 = vmatprep.subr.mxu0 0.0
  %4141 = vmatpush1.msra.mxu0 0.0
  %4142 = vmatprep.subr.mxu0 0.0
  %4143 = vmatpush1.msra.mxu0 0.0
  %4144 = vmatprep.subr.mxu0 0.0
  %4145 = vmatpush1.msra.mxu0 0.0
  %4146 = vmatprep.subr.mxu0 0.0
  %4147 = vmatpush1.msra.mxu0 0.0
  %4148 = vmatprep.subr.mxu0 0.0
  %4149 = vmatpush1.msra.mxu0 0.0
  %4150 = vmatprep.subr.mxu0 0.0
  %4151 = vmatpush1.msra.mxu0 0.0
  %4152 = vmatprep.subr.mxu0 0.0
  %4153 = vmatpush1.msra.mxu0 0.0
  %4154 = vmatprep.subr.mxu0 0.0
  %4155 = vmatpush1.msra.mxu0 0.0
  %4156 = vmatprep.subr.mxu0 0.0
  %4157 = vmatpush1.msra.mxu0 0.0
  %4158 = vmatprep.subr.mxu0 0.0
  %4159 = vmatpush1.msra.mxu0 0.0
  %4160 = vmatprep.subr.mxu0 0.0
  %4161 = vmatpush1.msra.mxu0 0.0
  %4162 = vmatprep.subr.mxu0 0.0
  %4163 = vmatpush1.msra.mxu0 0.0
  %4164 = vmatprep.subr.mxu0 0.0
  %4165 = vmatpush1.msra.mxu0 0.0
  %4166 = vmatprep.subr.mxu0 0.0
  %4167 = vmatpush1.msra.mxu0 0.0
  %4168 = vmatprep.subr.mxu0 0.0
  %4169 = vmatpush1.msra.mxu0 0.0
  %4170 = vmatprep.subr.mxu0 0.0
  %4171 = vmatpush1.msra.mxu0 0.0
  %4172 = vmatprep.subr.mxu0 0.0
  %4173 = vmatpush1.msra.mxu0 0.0
  %4174 = vmatprep.subr.mxu0 0.0
  %4175 = vmatpush1.msra.mxu0 0.0
  %4176 = vmatprep.subr.mxu0 0.0
  %4177 = vmatpush1.msra.mxu0 0.0
  %4178 = vmatprep.subr.mxu0 0.0
  %4179 = vmatpush1.msra.mxu0 0.0
  %4180 = vmatprep.subr.mxu0 0.0
  %4181 = vmatpush1.msra.mxu0 0.0
  %4182 = vmatprep.subr.mxu0 0.0
  %4183 = vmatpush1.msra.mxu0 0.0
  %4184 = vmatprep.subr.mxu0 0.0
  %4185 = vmatpush1.msra.mxu0 0.0
  %4186 = vmatprep.subr.mxu0 0.0
  %4187 = vmatpush1.msra.mxu0 0.0
  %4188 = vmatprep.subr.mxu0 0.0
  %4189 = vmatpush1.msra.mxu0 0.0
  %4190 = vmatprep.subr.mxu0 0.0
  %4191 = vmatpush1.msra.mxu0 0.0
  %4192 = vmatprep.mubr.f32.mxu0 0.0
  %4193 = vmatmul.mubr.f32.gmra.mrb[0].mxu0 %v3581
  %v4194 = vpop.f32.mrb[0].mxu0
  %v4195 = vadd.f32 %v3579, %v4194
  %v4196 = vpop.f32.mrb[0].mxu0
  %v4197 = vadd.f32 %v3579, %v4196
  %4198 = vdwg.mxu0
  %v4199 = vsub.f32 0.0, %v3698
  %v4200 = vsub.f32 0.0, %v3700
  %v4201 = vsub.f32 0.0, %v3769
  %v4202 = vsub.f32 0.0, %v3771
  %v4203 = vsub.f32 0.0, %v3840
  %v4204 = vsub.f32 0.0, %v3842
  %v4205 = vsub.f32 0.0, %v3911
  %v4206 = vsub.f32 0.0, %v3913
  %v4207 = vsub.f32 0.0, %v3982
  %v4208 = vsub.f32 0.0, %v3984
  %v4209 = vsub.f32 0.0, %v4053
  %v4210 = vsub.f32 0.0, %v4055
  %v4211 = vsub.f32 0.0, %v4124
  %v4212 = vsub.f32 0.0, %v4126
  %v4213 = vsub.f32 0.0, %v4195
  %v4214 = vsub.f32 0.0, %v4197
  %v4215 = vmul.f32 %v4199, 1.442695
  %v4216 = vpow.pop %v4215
  %v4217 = vmul.f32 %v4200, 1.442695
  %v4218 = vpow.pop %v4217
  %v4219 = vmul.f32 %v4201, 1.442695
  %v4220 = vpow.pop %v4219
  %v4221 = vmul.f32 %v4202, 1.442695
  %v4222 = vpow.pop %v4221
  %v4223 = vmul.f32 %v4203, 1.442695
  %v4224 = vpow.pop %v4223
  %v4225 = vmul.f32 %v4204, 1.442695
  %v4226 = vpow.pop %v4225
  %v4227 = vmul.f32 %v4205, 1.442695
  %v4228 = vpow.pop %v4227
  %v4229 = vmul.f32 %v4206, 1.442695
  %v4230 = vpow.pop %v4229
  %v4231 = vmul.f32 %v4207, 1.442695
  %v4232 = vpow.pop %v4231
  %v4233 = vmul.f32 %v4208, 1.442695
  %v4234 = vpow.pop %v4233
  %v4235 = vmul.f32 %v4209, 1.442695
  %v4236 = vpow.pop %v4235
  %v4237 = vmul.f32 %v4210, 1.442695
  %v4238 = vpow.pop %v4237
  %v4239 = vmul.f32 %v4211, 1.442695
  %v4240 = vpow.pop %v4239
  %v4241 = vmul.f32 %v4212, 1.442695
  %v4242 = vpow.pop %v4241
  %v4243 = vmul.f32 %v4213, 1.442695
  %v4244 = vpow.pop %v4243
  %v4245 = vmul.f32 %v4214, 1.442695
  %v4246 = vpow.pop %v4245
  %v4247 = vadd.f32 %v4216, 1.0
  %v4248 = vadd.f32 %v4218, 1.0
  %v4249 = vadd.f32 %v4220, 1.0
  %v4250 = vadd.f32 %v4222, 1.0
  %v4251 = vadd.f32 %v4224, 1.0
  %v4252 = vadd.f32 %v4226, 1.0
  %v4253 = vadd.f32 %v4228, 1.0
  %v4254 = vadd.f32 %v4230, 1.0
  %v4255 = vadd.f32 %v4232, 1.0
  %v4256 = vadd.f32 %v4234, 1.0
  %v4257 = vadd.f32 %v4236, 1.0
  %v4258 = vadd.f32 %v4238, 1.0
  %v4259 = vadd.f32 %v4240, 1.0
  %v4260 = vadd.f32 %v4242, 1.0
  %v4261 = vadd.f32 %v4244, 1.0
  %v4262 = vadd.f32 %v4246, 1.0
  %v4263 = vrcp.pop %v4247
  %v4264 = vmul.f32 1.0, %v4263
  %v4265 = vrcp.pop %v4248
  %v4266 = vmul.f32 1.0, %v4265
  %v4267 = vrcp.pop %v4249
  %v4268 = vmul.f32 1.0, %v4267
  %v4269 = vrcp.pop %v4250
  %v4270 = vmul.f32 1.0, %v4269
  %v4271 = vrcp.pop %v4251
  %v4272 = vmul.f32 1.0, %v4271
  %v4273 = vrcp.pop %v4252
  %v4274 = vmul.f32 1.0, %v4273
  %v4275 = vrcp.pop %v4253
  %v4276 = vmul.f32 1.0, %v4275
  %v4277 = vrcp.pop %v4254
  %v4278 = vmul.f32 1.0, %v4277
  %v4279 = vrcp.pop %v4255
  %v4280 = vmul.f32 1.0, %v4279
  %v4281 = vrcp.pop %v4256
  %v4282 = vmul.f32 1.0, %v4281
  %v4283 = vrcp.pop %v4257
  %v4284 = vmul.f32 1.0, %v4283
  %v4285 = vrcp.pop %v4258
  %v4286 = vmul.f32 1.0, %v4285
  %v4287 = vrcp.pop %v4259
  %v4288 = vmul.f32 1.0, %v4287
  %v4289 = vrcp.pop %v4260
  %v4290 = vmul.f32 1.0, %v4289
  %v4291 = vrcp.pop %v4261
  %v4292 = vmul.f32 1.0, %v4291
  %v4293 = vrcp.pop %v4262
  %v4294 = vmul.f32 1.0, %v4293
  %v4295 = vlaneseq
  %v4296 = vshrl.u32 %v4295, 7
  %v4297 = vsub.s32 0, %v4296
  %v4298 = vrot.slane %v4264, %v4297
  %v4299 = vlaneseq
  %v4300 = vshrl.u32 %v4299, 7
  %v4301 = vsub.s32 0, %v4300
  %v4302 = vrot.slane %v4266, %v4301
  %v4303 = vlaneseq
  %v4304 = vshrl.u32 %v4303, 7
  %v4305 = vsub.s32 0, %v4304
  %v4306 = vrot.slane %v4268, %v4305
  %v4307 = vlaneseq
  %v4308 = vshrl.u32 %v4307, 7
  %v4309 = vsub.s32 0, %v4308
  %v4310 = vrot.slane %v4270, %v4309
  %v4311 = vlaneseq
  %v4312 = vshrl.u32 %v4311, 7
  %v4313 = vsub.s32 0, %v4312
  %v4314 = vrot.slane %v4272, %v4313
  %v4315 = vlaneseq
  %v4316 = vshrl.u32 %v4315, 7
  %v4317 = vsub.s32 0, %v4316
  %v4318 = vrot.slane %v4274, %v4317
  %v4319 = vlaneseq
  %v4320 = vshrl.u32 %v4319, 7
  %v4321 = vsub.s32 0, %v4320
  %v4322 = vrot.slane %v4276, %v4321
  %v4323 = vlaneseq
  %v4324 = vshrl.u32 %v4323, 7
  %v4325 = vsub.s32 0, %v4324
  %v4326 = vrot.slane %v4278, %v4325
  %v4327 = vlaneseq
  %v4328 = vshrl.u32 %v4327, 7
  %v4329 = vsub.s32 0, %v4328
  %v4330 = vrot.slane %v4280, %v4329
  %v4331 = vlaneseq
  %v4332 = vshrl.u32 %v4331, 7
  %v4333 = vsub.s32 0, %v4332
  %v4334 = vrot.slane %v4282, %v4333
  %v4335 = vlaneseq
  %v4336 = vshrl.u32 %v4335, 7
  %v4337 = vsub.s32 0, %v4336
  %v4338 = vrot.slane %v4284, %v4337
  %v4339 = vlaneseq
  %v4340 = vshrl.u32 %v4339, 7
  %v4341 = vsub.s32 0, %v4340
  %v4342 = vrot.slane %v4286, %v4341
  %v4343 = vlaneseq
  %v4344 = vshrl.u32 %v4343, 7
  %v4345 = vsub.s32 0, %v4344
  %v4346 = vrot.slane %v4288, %v4345
  %v4347 = vlaneseq
  %v4348 = vshrl.u32 %v4347, 7
  %v4349 = vsub.s32 0, %v4348
  %v4350 = vrot.slane %v4290, %v4349
  %v4351 = vlaneseq
  %v4352 = vshrl.u32 %v4351, 7
  %v4353 = vsub.s32 0, %v4352
  %v4354 = vrot.slane %v4292, %v4353
  %v4355 = vlaneseq
  %v4356 = vshrl.u32 %v4355, 7
  %v4357 = vsub.s32 0, %v4356
  %v4358 = vrot.slane %v4294, %v4357
  %vm4359 = vcmask 64512
  %v4361 = vsel %vm4359, %v3550, 0
  %v4364 = vsel %vm4359, %v3552, 0
  %4366 = vmatprep.subr.mxu0 %v3554
  %4367 = vmatpush1.msra.mxu0 %v3553
  %4368 = vmatprep.subr.mxu0 0.0
  %4369 = vmatpush1.msra.mxu0 0.0
  %4370 = vmatprep.subr.mxu0 0.0
  %4371 = vmatpush1.msra.mxu0 0.0
  %4372 = vmatprep.subr.mxu0 0.0
  %4373 = vmatpush1.msra.mxu0 0.0
  %4374 = vmatprep.subr.mxu0 0.0
  %4375 = vmatpush1.msra.mxu0 0.0
  %4376 = vmatprep.subr.mxu0 0.0
  %4377 = vmatpush1.msra.mxu0 0.0
  %4378 = vmatprep.subr.mxu0 0.0
  %4379 = vmatpush1.msra.mxu0 0.0
  %4380 = vmatprep.subr.mxu0 0.0
  %4381 = vmatpush1.msra.mxu0 0.0
  %4382 = vmatprep.subr.mxu0 0.0
  %4383 = vmatpush1.msra.mxu0 0.0
  %4384 = vmatprep.subr.mxu0 0.0
  %4385 = vmatpush1.msra.mxu0 0.0
  %4386 = vmatprep.subr.mxu0 0.0
  %4387 = vmatpush1.msra.mxu0 0.0
  %4388 = vmatprep.subr.mxu0 0.0
  %4389 = vmatpush1.msra.mxu0 0.0
  %4390 = vmatprep.subr.mxu0 0.0
  %4391 = vmatpush1.msra.mxu0 0.0
  %4392 = vmatprep.subr.mxu0 0.0
  %4393 = vmatpush1.msra.mxu0 0.0
  %4394 = vmatprep.subr.mxu0 0.0
  %4395 = vmatpush1.msra.mxu0 0.0
  %4396 = vmatprep.subr.mxu0 0.0
  %4397 = vmatpush1.msra.mxu0 0.0
  %4398 = vmatprep.subr.mxu0 0.0
  %4399 = vmatpush1.msra.mxu0 0.0
  %4400 = vmatprep.subr.mxu0 0.0
  %4401 = vmatpush1.msra.mxu0 0.0
  %4402 = vmatprep.subr.mxu0 0.0
  %4403 = vmatpush1.msra.mxu0 0.0
  %4404 = vmatprep.subr.mxu0 0.0
  %4405 = vmatpush1.msra.mxu0 0.0
  %4406 = vmatprep.subr.mxu0 0.0
  %4407 = vmatpush1.msra.mxu0 0.0
  %4408 = vmatprep.subr.mxu0 0.0
  %4409 = vmatpush1.msra.mxu0 0.0
  %4410 = vmatprep.subr.mxu0 0.0
  %4411 = vmatpush1.msra.mxu0 0.0
  %4412 = vmatprep.subr.mxu0 0.0
  %4413 = vmatpush1.msra.mxu0 0.0
  %4414 = vmatprep.subr.mxu0 0.0
  %4415 = vmatpush1.msra.mxu0 0.0
  %4416 = vmatprep.subr.mxu0 0.0
  %4417 = vmatpush1.msra.mxu0 0.0
  %4418 = vmatprep.subr.mxu0 0.0
  %4419 = vmatpush1.msra.mxu0 0.0
  %4420 = vmatprep.subr.mxu0 0.0
  %4421 = vmatpush1.msra.mxu0 0.0
  %4422 = vmatprep.subr.mxu0 0.0
  %4423 = vmatpush1.msra.mxu0 0.0
  %4424 = vmatprep.subr.mxu0 0.0
  %4425 = vmatpush1.msra.mxu0 0.0
  %4426 = vmatprep.subr.mxu0 0.0
  %4427 = vmatpush1.msra.mxu0 0.0
  %4428 = vmatprep.subr.mxu0 0.0
  %4429 = vmatpush1.msra.mxu0 0.0
  %4430 = vmatprep.mubr.f32.mxu0 0.0
  %4431 = vmatmul.mubr.f32.gmra.mrb[0].mxu0 %v4361
  %v4432 = vpop.f32.mrb[0].mxu0
  %v4433 = vadd.f32 %v4298, %v4432
  %v4434 = vpop.f32.mrb[0].mxu0
  %v4435 = vadd.f32 %v4302, %v4434
  %4436 = vmatprep.mubr.f32.mxu0 0.0
  %4437 = vmatmul.mubr.f32.gmra.mrb[0].mxu0 %v4364
  %v4438 = vpop.f32.mrb[0].mxu0
  %v4439 = vadd.f32 %v4298, %v4438
  %v4440 = vpop.f32.mrb[0].mxu0
  %v4441 = vadd.f32 %v4302, %v4440
  %4442 = vdwg.mxu0
  %4443 = vmatprep.subr.mxu0 %v3556
  %4444 = vmatpush1.msra.mxu0 %v3555
  %4445 = vmatprep.subr.mxu0 0.0
  %4446 = vmatpush1.msra.mxu0 0.0
  %4447 = vmatprep.subr.mxu0 0.0
  %4448 = vmatpush1.msra.mxu0 0.0
  %4449 = vmatprep.subr.mxu0 0.0
  %4450 = vmatpush1.msra.mxu0 0.0
  %4451 = vmatprep.subr.mxu0 0.0
  %4452 = vmatpush1.msra.mxu0 0.0
  %4453 = vmatprep.subr.mxu0 0.0
  %4454 = vmatpush1.msra.mxu0 0.0
  %4455 = vmatprep.subr.mxu0 0.0
  %4456 = vmatpush1.msra.mxu0 0.0
  %4457 = vmatprep.subr.mxu0 0.0
  %4458 = vmatpush1.msra.mxu0 0.0
  %4459 = vmatprep.subr.mxu0 0.0
  %4460 = vmatpush1.msra.mxu0 0.0
  %4461 = vmatprep.subr.mxu0 0.0
  %4462 = vmatpush1.msra.mxu0 0.0
  %4463 = vmatprep.subr.mxu0 0.0
  %4464 = vmatpush1.msra.mxu0 0.0
  %4465 = vmatprep.subr.mxu0 0.0
  %4466 = vmatpush1.msra.mxu0 0.0
  %4467 = vmatprep.subr.mxu0 0.0
  %4468 = vmatpush1.msra.mxu0 0.0
  %4469 = vmatprep.subr.mxu0 0.0
  %4470 = vmatpush1.msra.mxu0 0.0
  %4471 = vmatprep.subr.mxu0 0.0
  %4472 = vmatpush1.msra.mxu0 0.0
  %4473 = vmatprep.subr.mxu0 0.0
  %4474 = vmatpush1.msra.mxu0 0.0
  %4475 = vmatprep.subr.mxu0 0.0
  %4476 = vmatpush1.msra.mxu0 0.0
  %4477 = vmatprep.subr.mxu0 0.0
  %4478 = vmatpush1.msra.mxu0 0.0
  %4479 = vmatprep.subr.mxu0 0.0
  %4480 = vmatpush1.msra.mxu0 0.0
  %4481 = vmatprep.subr.mxu0 0.0
  %4482 = vmatpush1.msra.mxu0 0.0
  %4483 = vmatprep.subr.mxu0 0.0
  %4484 = vmatpush1.msra.mxu0 0.0
  %4485 = vmatprep.subr.mxu0 0.0
  %4486 = vmatpush1.msra.mxu0 0.0
  %4487 = vmatprep.subr.mxu0 0.0
  %4488 = vmatpush1.msra.mxu0 0.0
  %4489 = vmatprep.subr.mxu0 0.0
  %4490 = vmatpush1.msra.mxu0 0.0
  %4491 = vmatprep.subr.mxu0 0.0
  %4492 = vmatpush1.msra.mxu0 0.0
  %4493 = vmatprep.subr.mxu0 0.0
  %4494 = vmatpush1.msra.mxu0 0.0
  %4495 = vmatprep.subr.mxu0 0.0
  %4496 = vmatpush1.msra.mxu0 0.0
  %4497 = vmatprep.subr.mxu0 0.0
  %4498 = vmatpush1.msra.mxu0 0.0
  %4499 = vmatprep.subr.mxu0 0.0
  %4500 = vmatpush1.msra.mxu0 0.0
  %4501 = vmatprep.subr.mxu0 0.0
  %4502 = vmatpush1.msra.mxu0 0.0
  %4503 = vmatprep.subr.mxu0 0.0
  %4504 = vmatpush1.msra.mxu0 0.0
  %4505 = vmatprep.subr.mxu0 0.0
  %4506 = vmatpush1.msra.mxu0 0.0
  %4507 = vmatprep.mubr.f32.mxu0 0.0
  %4508 = vmatmul.mubr.f32.gmra.mrb[0].mxu0 %v4361
  %v4509 = vpop.f32.mrb[0].mxu0
  %v4510 = vadd.f32 %v4306, %v4509
  %v4511 = vpop.f32.mrb[0].mxu0
  %v4512 = vadd.f32 %v4310, %v4511
  %4513 = vmatprep.mubr.f32.mxu0 0.0
  %4514 = vmatmul.mubr.f32.gmra.mrb[0].mxu0 %v4364
  %v4515 = vpop.f32.mrb[0].mxu0
  %v4516 = vadd.f32 %v4306, %v4515
  %v4517 = vpop.f32.mrb[0].mxu0
  %v4518 = vadd.f32 %v4310, %v4517
  %4519 = vdwg.mxu0
  %4520 = vmatprep.subr.mxu0 %v3558
  %4521 = vmatpush1.msra.mxu0 %v3557
  %4522 = vmatprep.subr.mxu0 0.0
  %4523 = vmatpush1.msra.mxu0 0.0
  %4524 = vmatprep.subr.mxu0 0.0
  %4525 = vmatpush1.msra.mxu0 0.0
  %4526 = vmatprep.subr.mxu0 0.0
  %4527 = vmatpush1.msra.mxu0 0.0
  %4528 = vmatprep.subr.mxu0 0.0
  %4529 = vmatpush1.msra.mxu0 0.0
  %4530 = vmatprep.subr.mxu0 0.0
  %4531 = vmatpush1.msra.mxu0 0.0
  %4532 = vmatprep.subr.mxu0 0.0
  %4533 = vmatpush1.msra.mxu0 0.0
  %4534 = vmatprep.subr.mxu0 0.0
  %4535 = vmatpush1.msra.mxu0 0.0
  %4536 = vmatprep.subr.mxu0 0.0
  %4537 = vmatpush1.msra.mxu0 0.0
  %4538 = vmatprep.subr.mxu0 0.0
  %4539 = vmatpush1.msra.mxu0 0.0
  %4540 = vmatprep.subr.mxu0 0.0
  %4541 = vmatpush1.msra.mxu0 0.0
  %4542 = vmatprep.subr.mxu0 0.0
  %4543 = vmatpush1.msra.mxu0 0.0
  %4544 = vmatprep.subr.mxu0 0.0
  %4545 = vmatpush1.msra.mxu0 0.0
  %4546 = vmatprep.subr.mxu0 0.0
  %4547 = vmatpush1.msra.mxu0 0.0
  %4548 = vmatprep.subr.mxu0 0.0
  %4549 = vmatpush1.msra.mxu0 0.0
  %4550 = vmatprep.subr.mxu0 0.0
  %4551 = vmatpush1.msra.mxu0 0.0
  %4552 = vmatprep.subr.mxu0 0.0
  %4553 = vmatpush1.msra.mxu0 0.0
  %4554 = vmatprep.subr.mxu0 0.0
  %4555 = vmatpush1.msra.mxu0 0.0
  %4556 = vmatprep.subr.mxu0 0.0
  %4557 = vmatpush1.msra.mxu0 0.0
  %4558 = vmatprep.subr.mxu0 0.0
  %4559 = vmatpush1.msra.mxu0 0.0
  %4560 = vmatprep.subr.mxu0 0.0
  %4561 = vmatpush1.msra.mxu0 0.0
  %4562 = vmatprep.subr.mxu0 0.0
  %4563 = vmatpush1.msra.mxu0 0.0
  %4564 = vmatprep.subr.mxu0 0.0
  %4565 = vmatpush1.msra.mxu0 0.0
  %4566 = vmatprep.subr.mxu0 0.0
  %4567 = vmatpush1.msra.mxu0 0.0
  %4568 = vmatprep.subr.mxu0 0.0
  %4569 = vmatpush1.msra.mxu0 0.0
  %4570 = vmatprep.subr.mxu0 0.0
  %4571 = vmatpush1.msra.mxu0 0.0
  %4572 = vmatprep.subr.mxu0 0.0
  %4573 = vmatpush1.msra.mxu0 0.0
  %4574 = vmatprep.subr.mxu0 0.0
  %4575 = vmatpush1.msra.mxu0 0.0
  %4576 = vmatprep.subr.mxu0 0.0
  %4577 = vmatpush1.msra.mxu0 0.0
  %4578 = vmatprep.subr.mxu0 0.0
  %4579 = vmatpush1.msra.mxu0 0.0
  %4580 = vmatprep.subr.mxu0 0.0
  %4581 = vmatpush1.msra.mxu0 0.0
  %4582 = vmatprep.subr.mxu0 0.0
  %4583 = vmatpush1.msra.mxu0 0.0
  %4584 = vmatprep.mubr.f32.mxu0 0.0
  %4585 = vmatmul.mubr.f32.gmra.mrb[0].mxu0 %v4361
  %v4586 = vpop.f32.mrb[0].mxu0
  %v4587 = vadd.f32 %v4314, %v4586
  %v4588 = vpop.f32.mrb[0].mxu0
  %v4589 = vadd.f32 %v4318, %v4588
  %4590 = vmatprep.mubr.f32.mxu0 0.0
  %4591 = vmatmul.mubr.f32.gmra.mrb[0].mxu0 %v4364
  %v4592 = vpop.f32.mrb[0].mxu0
  %v4593 = vadd.f32 %v4314, %v4592
  %v4594 = vpop.f32.mrb[0].mxu0
  %v4595 = vadd.f32 %v4318, %v4594
  %4596 = vdwg.mxu0
  %4597 = vmatprep.subr.mxu0 %v3560
  %4598 = vmatpush1.msra.mxu0 %v3559
  %4599 = vmatprep.subr.mxu0 0.0
  %4600 = vmatpush1.msra.mxu0 0.0
  %4601 = vmatprep.subr.mxu0 0.0
  %4602 = vmatpush1.msra.mxu0 0.0
  %4603 = vmatprep.subr.mxu0 0.0
  %4604 = vmatpush1.msra.mxu0 0.0
  %4605 = vmatprep.subr.mxu0 0.0
  %4606 = vmatpush1.msra.mxu0 0.0
  %4607 = vmatprep.subr.mxu0 0.0
  %4608 = vmatpush1.msra.mxu0 0.0
  %4609 = vmatprep.subr.mxu0 0.0
  %4610 = vmatpush1.msra.mxu0 0.0
  %4611 = vmatprep.subr.mxu0 0.0
  %4612 = vmatpush1.msra.mxu0 0.0
  %4613 = vmatprep.subr.mxu0 0.0
  %4614 = vmatpush1.msra.mxu0 0.0
  %4615 = vmatprep.subr.mxu0 0.0
  %4616 = vmatpush1.msra.mxu0 0.0
  %4617 = vmatprep.subr.mxu0 0.0
  %4618 = vmatpush1.msra.mxu0 0.0
  %4619 = vmatprep.subr.mxu0 0.0
  %4620 = vmatpush1.msra.mxu0 0.0
  %4621 = vmatprep.subr.mxu0 0.0
  %4622 = vmatpush1.msra.mxu0 0.0
  %4623 = vmatprep.subr.mxu0 0.0
  %4624 = vmatpush1.msra.mxu0 0.0
  %4625 = vmatprep.subr.mxu0 0.0
  %4626 = vmatpush1.msra.mxu0 0.0
  %4627 = vmatprep.subr.mxu0 0.0
  %4628 = vmatpush1.msra.mxu0 0.0
  %4629 = vmatprep.subr.mxu0 0.0
  %4630 = vmatpush1.msra.mxu0 0.0
  %4631 = vmatprep.subr.mxu0 0.0
  %4632 = vmatpush1.msra.mxu0 0.0
  %4633 = vmatprep.subr.mxu0 0.0
  %4634 = vmatpush1.msra.mxu0 0.0
  %4635 = vmatprep.subr.mxu0 0.0
  %4636 = vmatpush1.msra.mxu0 0.0
  %4637 = vmatprep.subr.mxu0 0.0
  %4638 = vmatpush1.msra.mxu0 0.0
  %4639 = vmatprep.subr.mxu0 0.0
  %4640 = vmatpush1.msra.mxu0 0.0
  %4641 = vmatprep.subr.mxu0 0.0
  %4642 = vmatpush1.msra.mxu0 0.0
  %4643 = vmatprep.subr.mxu0 0.0
  %4644 = vmatpush1.msra.mxu0 0.0
  %4645 = vmatprep.subr.mxu0 0.0
  %4646 = vmatpush1.msra.mxu0 0.0
  %4647 = vmatprep.subr.mxu0 0.0
  %4648 = vmatpush1.msra.mxu0 0.0
  %4649 = vmatprep.subr.mxu0 0.0
  %4650 = vmatpush1.msra.mxu0 0.0
  %4651 = vmatprep.subr.mxu0 0.0
  %4652 = vmatpush1.msra.mxu0 0.0
  %4653 = vmatprep.subr.mxu0 0.0
  %4654 = vmatpush1.msra.mxu0 0.0
  %4655 = vmatprep.subr.mxu0 0.0
  %4656 = vmatpush1.msra.mxu0 0.0
  %4657 = vmatprep.subr.mxu0 0.0
  %4658 = vmatpush1.msra.mxu0 0.0
  %4659 = vmatprep.subr.mxu0 0.0
  %4660 = vmatpush1.msra.mxu0 0.0
  %4661 = vmatprep.mubr.f32.mxu0 0.0
  %4662 = vmatmul.mubr.f32.gmra.mrb[0].mxu0 %v4361
  %v4663 = vpop.f32.mrb[0].mxu0
  %v4664 = vadd.f32 %v4322, %v4663
  %v4665 = vpop.f32.mrb[0].mxu0
  %v4666 = vadd.f32 %v4326, %v4665
  %4667 = vmatprep.mubr.f32.mxu0 0.0
  %4668 = vmatmul.mubr.f32.gmra.mrb[0].mxu0 %v4364
  %v4669 = vpop.f32.mrb[0].mxu0
  %v4670 = vadd.f32 %v4322, %v4669
  %v4671 = vpop.f32.mrb[0].mxu0
  %v4672 = vadd.f32 %v4326, %v4671
  %4673 = vdwg.mxu0
  %4674 = vmatprep.subr.mxu0 %v3562
  %4675 = vmatpush1.msra.mxu0 %v3561
  %4676 = vmatprep.subr.mxu0 0.0
  %4677 = vmatpush1.msra.mxu0 0.0
  %4678 = vmatprep.subr.mxu0 0.0
  %4679 = vmatpush1.msra.mxu0 0.0
  %4680 = vmatprep.subr.mxu0 0.0
  %4681 = vmatpush1.msra.mxu0 0.0
  %4682 = vmatprep.subr.mxu0 0.0
  %4683 = vmatpush1.msra.mxu0 0.0
  %4684 = vmatprep.subr.mxu0 0.0
  %4685 = vmatpush1.msra.mxu0 0.0
  %4686 = vmatprep.subr.mxu0 0.0
  %4687 = vmatpush1.msra.mxu0 0.0
  %4688 = vmatprep.subr.mxu0 0.0
  %4689 = vmatpush1.msra.mxu0 0.0
  %4690 = vmatprep.subr.mxu0 0.0
  %4691 = vmatpush1.msra.mxu0 0.0
  %4692 = vmatprep.subr.mxu0 0.0
  %4693 = vmatpush1.msra.mxu0 0.0
  %4694 = vmatprep.subr.mxu0 0.0
  %4695 = vmatpush1.msra.mxu0 0.0
  %4696 = vmatprep.subr.mxu0 0.0
  %4697 = vmatpush1.msra.mxu0 0.0
  %4698 = vmatprep.subr.mxu0 0.0
  %4699 = vmatpush1.msra.mxu0 0.0
  %4700 = vmatprep.subr.mxu0 0.0
  %4701 = vmatpush1.msra.mxu0 0.0
  %4702 = vmatprep.subr.mxu0 0.0
  %4703 = vmatpush1.msra.mxu0 0.0
  %4704 = vmatprep.subr.mxu0 0.0
  %4705 = vmatpush1.msra.mxu0 0.0
  %4706 = vmatprep.subr.mxu0 0.0
  %4707 = vmatpush1.msra.mxu0 0.0
  %4708 = vmatprep.subr.mxu0 0.0
  %4709 = vmatpush1.msra.mxu0 0.0
  %4710 = vmatprep.subr.mxu0 0.0
  %4711 = vmatpush1.msra.mxu0 0.0
  %4712 = vmatprep.subr.mxu0 0.0
  %4713 = vmatpush1.msra.mxu0 0.0
  %4714 = vmatprep.subr.mxu0 0.0
  %4715 = vmatpush1.msra.mxu0 0.0
  %4716 = vmatprep.subr.mxu0 0.0
  %4717 = vmatpush1.msra.mxu0 0.0
  %4718 = vmatprep.subr.mxu0 0.0
  %4719 = vmatpush1.msra.mxu0 0.0
  %4720 = vmatprep.subr.mxu0 0.0
  %4721 = vmatpush1.msra.mxu0 0.0
  %4722 = vmatprep.subr.mxu0 0.0
  %4723 = vmatpush1.msra.mxu0 0.0
  %4724 = vmatprep.subr.mxu0 0.0
  %4725 = vmatpush1.msra.mxu0 0.0
  %4726 = vmatprep.subr.mxu0 0.0
  %4727 = vmatpush1.msra.mxu0 0.0
  %4728 = vmatprep.subr.mxu0 0.0
  %4729 = vmatpush1.msra.mxu0 0.0
  %4730 = vmatprep.subr.mxu0 0.0
  %4731 = vmatpush1.msra.mxu0 0.0
  %4732 = vmatprep.subr.mxu0 0.0
  %4733 = vmatpush1.msra.mxu0 0.0
  %4734 = vmatprep.subr.mxu0 0.0
  %4735 = vmatpush1.msra.mxu0 0.0
  %4736 = vmatprep.subr.mxu0 0.0
  %4737 = vmatpush1.msra.mxu0 0.0
  %4738 = vmatprep.mubr.f32.mxu0 0.0
  %4739 = vmatmul.mubr.f32.gmra.mrb[0].mxu0 %v4361
  %v4740 = vpop.f32.mrb[0].mxu0
  %v4741 = vadd.f32 %v4330, %v4740
  %v4742 = vpop.f32.mrb[0].mxu0
  %v4743 = vadd.f32 %v4334, %v4742
  %4744 = vmatprep.mubr.f32.mxu0 0.0
  %4745 = vmatmul.mubr.f32.gmra.mrb[0].mxu0 %v4364
  %v4746 = vpop.f32.mrb[0].mxu0
  %v4747 = vadd.f32 %v4330, %v4746
  %v4748 = vpop.f32.mrb[0].mxu0
  %v4749 = vadd.f32 %v4334, %v4748
  %4750 = vdwg.mxu0
  %4751 = vmatprep.subr.mxu0 %v3564
  %4752 = vmatpush1.msra.mxu0 %v3563
  %4753 = vmatprep.subr.mxu0 0.0
  %4754 = vmatpush1.msra.mxu0 0.0
  %4755 = vmatprep.subr.mxu0 0.0
  %4756 = vmatpush1.msra.mxu0 0.0
  %4757 = vmatprep.subr.mxu0 0.0
  %4758 = vmatpush1.msra.mxu0 0.0
  %4759 = vmatprep.subr.mxu0 0.0
  %4760 = vmatpush1.msra.mxu0 0.0
  %4761 = vmatprep.subr.mxu0 0.0
  %4762 = vmatpush1.msra.mxu0 0.0
  %4763 = vmatprep.subr.mxu0 0.0
  %4764 = vmatpush1.msra.mxu0 0.0
  %4765 = vmatprep.subr.mxu0 0.0
  %4766 = vmatpush1.msra.mxu0 0.0
  %4767 = vmatprep.subr.mxu0 0.0
  %4768 = vmatpush1.msra.mxu0 0.0
  %4769 = vmatprep.subr.mxu0 0.0
  %4770 = vmatpush1.msra.mxu0 0.0
  %4771 = vmatprep.subr.mxu0 0.0
  %4772 = vmatpush1.msra.mxu0 0.0
  %4773 = vmatprep.subr.mxu0 0.0
  %4774 = vmatpush1.msra.mxu0 0.0
  %4775 = vmatprep.subr.mxu0 0.0
  %4776 = vmatpush1.msra.mxu0 0.0
  %4777 = vmatprep.subr.mxu0 0.0
  %4778 = vmatpush1.msra.mxu0 0.0
  %4779 = vmatprep.subr.mxu0 0.0
  %4780 = vmatpush1.msra.mxu0 0.0
  %4781 = vmatprep.subr.mxu0 0.0
  %4782 = vmatpush1.msra.mxu0 0.0
  %4783 = vmatprep.subr.mxu0 0.0
  %4784 = vmatpush1.msra.mxu0 0.0
  %4785 = vmatprep.subr.mxu0 0.0
  %4786 = vmatpush1.msra.mxu0 0.0
  %4787 = vmatprep.subr.mxu0 0.0
  %4788 = vmatpush1.msra.mxu0 0.0
  %4789 = vmatprep.subr.mxu0 0.0
  %4790 = vmatpush1.msra.mxu0 0.0
  %4791 = vmatprep.subr.mxu0 0.0
  %4792 = vmatpush1.msra.mxu0 0.0
  %4793 = vmatprep.subr.mxu0 0.0
  %4794 = vmatpush1.msra.mxu0 0.0
  %4795 = vmatprep.subr.mxu0 0.0
  %4796 = vmatpush1.msra.mxu0 0.0
  %4797 = vmatprep.subr.mxu0 0.0
  %4798 = vmatpush1.msra.mxu0 0.0
  %4799 = vmatprep.subr.mxu0 0.0
  %4800 = vmatpush1.msra.mxu0 0.0
  %4801 = vmatprep.subr.mxu0 0.0
  %4802 = vmatpush1.msra.mxu0 0.0
  %4803 = vmatprep.subr.mxu0 0.0
  %4804 = vmatpush1.msra.mxu0 0.0
  %4805 = vmatprep.subr.mxu0 0.0
  %4806 = vmatpush1.msra.mxu0 0.0
  %4807 = vmatprep.subr.mxu0 0.0
  %4808 = vmatpush1.msra.mxu0 0.0
  %4809 = vmatprep.subr.mxu0 0.0
  %4810 = vmatpush1.msra.mxu0 0.0
  %4811 = vmatprep.subr.mxu0 0.0
  %4812 = vmatpush1.msra.mxu0 0.0
  %4813 = vmatprep.subr.mxu0 0.0
  %4814 = vmatpush1.msra.mxu0 0.0
  %4815 = vmatprep.mubr.f32.mxu0 0.0
  %4816 = vmatmul.mubr.f32.gmra.mrb[0].mxu0 %v4361
  %v4817 = vpop.f32.mrb[0].mxu0
  %v4818 = vadd.f32 %v4338, %v4817
  %v4819 = vpop.f32.mrb[0].mxu0
  %v4820 = vadd.f32 %v4342, %v4819
  %4821 = vmatprep.mubr.f32.mxu0 0.0
  %4822 = vmatmul.mubr.f32.gmra.mrb[0].mxu0 %v4364
  %v4823 = vpop.f32.mrb[0].mxu0
  %v4824 = vadd.f32 %v4338, %v4823
  %v4825 = vpop.f32.mrb[0].mxu0
  %v4826 = vadd.f32 %v4342, %v4825
  %4827 = vdwg.mxu0
  %4828 = vmatprep.subr.mxu0 %v3566
  %4829 = vmatpush1.msra.mxu0 %v3565
  %4830 = vmatprep.subr.mxu0 0.0
  %4831 = vmatpush1.msra.mxu0 0.0
  %4832 = vmatprep.subr.mxu0 0.0
  %4833 = vmatpush1.msra.mxu0 0.0
  %4834 = vmatprep.subr.mxu0 0.0
  %4835 = vmatpush1.msra.mxu0 0.0
  %4836 = vmatprep.subr.mxu0 0.0
  %4837 = vmatpush1.msra.mxu0 0.0
  %4838 = vmatprep.subr.mxu0 0.0
  %4839 = vmatpush1.msra.mxu0 0.0
  %4840 = vmatprep.subr.mxu0 0.0
  %4841 = vmatpush1.msra.mxu0 0.0
  %4842 = vmatprep.subr.mxu0 0.0
  %4843 = vmatpush1.msra.mxu0 0.0
  %4844 = vmatprep.subr.mxu0 0.0
  %4845 = vmatpush1.msra.mxu0 0.0
  %4846 = vmatprep.subr.mxu0 0.0
  %4847 = vmatpush1.msra.mxu0 0.0
  %4848 = vmatprep.subr.mxu0 0.0
  %4849 = vmatpush1.msra.mxu0 0.0
  %4850 = vmatprep.subr.mxu0 0.0
  %4851 = vmatpush1.msra.mxu0 0.0
  %4852 = vmatprep.subr.mxu0 0.0
  %4853 = vmatpush1.msra.mxu0 0.0
  %4854 = vmatprep.subr.mxu0 0.0
  %4855 = vmatpush1.msra.mxu0 0.0
  %4856 = vmatprep.subr.mxu0 0.0
  %4857 = vmatpush1.msra.mxu0 0.0
  %4858 = vmatprep.subr.mxu0 0.0
  %4859 = vmatpush1.msra.mxu0 0.0
  %4860 = vmatprep.subr.mxu0 0.0
  %4861 = vmatpush1.msra.mxu0 0.0
  %4862 = vmatprep.subr.mxu0 0.0
  %4863 = vmatpush1.msra.mxu0 0.0
  %4864 = vmatprep.subr.mxu0 0.0
  %4865 = vmatpush1.msra.mxu0 0.0
  %4866 = vmatprep.subr.mxu0 0.0
  %4867 = vmatpush1.msra.mxu0 0.0
  %4868 = vmatprep.subr.mxu0 0.0
  %4869 = vmatpush1.msra.mxu0 0.0
  %4870 = vmatprep.subr.mxu0 0.0
  %4871 = vmatpush1.msra.mxu0 0.0
  %4872 = vmatprep.subr.mxu0 0.0
  %4873 = vmatpush1.msra.mxu0 0.0
  %4874 = vmatprep.subr.mxu0 0.0
  %4875 = vmatpush1.msra.mxu0 0.0
  %4876 = vmatprep.subr.mxu0 0.0
  %4877 = vmatpush1.msra.mxu0 0.0
  %4878 = vmatprep.subr.mxu0 0.0
  %4879 = vmatpush1.msra.mxu0 0.0
  %4880 = vmatprep.subr.mxu0 0.0
  %4881 = vmatpush1.msra.mxu0 0.0
  %4882 = vmatprep.subr.mxu0 0.0
  %4883 = vmatpush1.msra.mxu0 0.0
  %4884 = vmatprep.subr.mxu0 0.0
  %4885 = vmatpush1.msra.mxu0 0.0
  %4886 = vmatprep.subr.mxu0 0.0
  %4887 = vmatpush1.msra.mxu0 0.0
  %4888 = vmatprep.subr.mxu0 0.0
  %4889 = vmatpush1.msra.mxu0 0.0
  %4890 = vmatprep.subr.mxu0 0.0
  %4891 = vmatpush1.msra.mxu0 0.0
  %4892 = vmatprep.mubr.f32.mxu0 0.0
  %4893 = vmatmul.mubr.f32.gmra.mrb[0].mxu0 %v4361
  %v4894 = vpop.f32.mrb[0].mxu0
  %v4895 = vadd.f32 %v4346, %v4894
  %v4896 = vpop.f32.mrb[0].mxu0
  %v4897 = vadd.f32 %v4350, %v4896
  %4898 = vmatprep.mubr.f32.mxu0 0.0
  %4899 = vmatmul.mubr.f32.gmra.mrb[0].mxu0 %v4364
  %v4900 = vpop.f32.mrb[0].mxu0
  %v4901 = vadd.f32 %v4346, %v4900
  %v4902 = vpop.f32.mrb[0].mxu0
  %v4903 = vadd.f32 %v4350, %v4902
  %4904 = vdwg.mxu0
  %4905 = vmatprep.subr.mxu0 %v3568
  %4906 = vmatpush1.msra.mxu0 %v3567
  %4907 = vmatprep.subr.mxu0 0.0
  %4908 = vmatpush1.msra.mxu0 0.0
  %4909 = vmatprep.subr.mxu0 0.0
  %4910 = vmatpush1.msra.mxu0 0.0
  %4911 = vmatprep.subr.mxu0 0.0
  %4912 = vmatpush1.msra.mxu0 0.0
  %4913 = vmatprep.subr.mxu0 0.0
  %4914 = vmatpush1.msra.mxu0 0.0
  %4915 = vmatprep.subr.mxu0 0.0
  %4916 = vmatpush1.msra.mxu0 0.0
  %4917 = vmatprep.subr.mxu0 0.0
  %4918 = vmatpush1.msra.mxu0 0.0
  %4919 = vmatprep.subr.mxu0 0.0
  %4920 = vmatpush1.msra.mxu0 0.0
  %4921 = vmatprep.subr.mxu0 0.0
  %4922 = vmatpush1.msra.mxu0 0.0
  %4923 = vmatprep.subr.mxu0 0.0
  %4924 = vmatpush1.msra.mxu0 0.0
  %4925 = vmatprep.subr.mxu0 0.0
  %4926 = vmatpush1.msra.mxu0 0.0
  %4927 = vmatprep.subr.mxu0 0.0
  %4928 = vmatpush1.msra.mxu0 0.0
  %4929 = vmatprep.subr.mxu0 0.0
  %4930 = vmatpush1.msra.mxu0 0.0
  %4931 = vmatprep.subr.mxu0 0.0
  %4932 = vmatpush1.msra.mxu0 0.0
  %4933 = vmatprep.subr.mxu0 0.0
  %4934 = vmatpush1.msra.mxu0 0.0
  %4935 = vmatprep.subr.mxu0 0.0
  %4936 = vmatpush1.msra.mxu0 0.0
  %4937 = vmatprep.subr.mxu0 0.0
  %4938 = vmatpush1.msra.mxu0 0.0
  %4939 = vmatprep.subr.mxu0 0.0
  %4940 = vmatpush1.msra.mxu0 0.0
  %4941 = vmatprep.subr.mxu0 0.0
  %4942 = vmatpush1.msra.mxu0 0.0
  %4943 = vmatprep.subr.mxu0 0.0
  %4944 = vmatpush1.msra.mxu0 0.0
  %4945 = vmatprep.subr.mxu0 0.0
  %4946 = vmatpush1.msra.mxu0 0.0
  %4947 = vmatprep.subr.mxu0 0.0
  %4948 = vmatpush1.msra.mxu0 0.0
  %4949 = vmatprep.subr.mxu0 0.0
  %4950 = vmatpush1.msra.mxu0 0.0
  %4951 = vmatprep.subr.mxu0 0.0
  %4952 = vmatpush1.msra.mxu0 0.0
  %4953 = vmatprep.subr.mxu0 0.0
  %4954 = vmatpush1.msra.mxu0 0.0
  %4955 = vmatprep.subr.mxu0 0.0
  %4956 = vmatpush1.msra.mxu0 0.0
  %4957 = vmatprep.subr.mxu0 0.0
  %4958 = vmatpush1.msra.mxu0 0.0
  %4959 = vmatprep.subr.mxu0 0.0
  %4960 = vmatpush1.msra.mxu0 0.0
  %4961 = vmatprep.subr.mxu0 0.0
  %4962 = vmatpush1.msra.mxu0 0.0
  %4963 = vmatprep.subr.mxu0 0.0
  %4964 = vmatpush1.msra.mxu0 0.0
  %4965 = vmatprep.subr.mxu0 0.0
  %4966 = vmatpush1.msra.mxu0 0.0
  %4967 = vmatprep.subr.mxu0 0.0
  %4968 = vmatpush1.msra.mxu0 0.0
  %4969 = vmatprep.mubr.f32.mxu0 0.0
  %4970 = vmatmul.mubr.f32.gmra.mrb[0].mxu0 %v4361
  %v4971 = vpop.f32.mrb[0].mxu0
  %v4972 = vadd.f32 %v4354, %v4971
  %v4973 = vpop.f32.mrb[0].mxu0
  %v4974 = vadd.f32 %v4358, %v4973
  %4975 = vmatprep.mubr.f32.mxu0 0.0
  %4976 = vmatmul.mubr.f32.gmra.mrb[0].mxu0 %v4364
  %v4977 = vpop.f32.mrb[0].mxu0
  %v4978 = vadd.f32 %v4354, %v4977
  %v4979 = vpop.f32.mrb[0].mxu0
  %v4980 = vadd.f32 %v4358, %v4979
  %4981 = vdwg.mxu0
  %v4982 = vmul.f32 %v2468, %v4433
  %v4983 = vmul.f32 %v2469, %v4435
  %v4984 = vmul.f32 %v2470, %v4510
  %v4985 = vmul.f32 %v2471, %v4512
  %v4986 = vmul.f32 %v2472, %v4587
  %v4987 = vmul.f32 %v2473, %v4589
  %v4988 = vmul.f32 %v2474, %v4664
  %v4989 = vmul.f32 %v2475, %v4666
  %v4990 = vmul.f32 %v2476, %v4741
  %v4991 = vmul.f32 %v2477, %v4743
  %v4992 = vmul.f32 %v2478, %v4818
  %v4993 = vmul.f32 %v2479, %v4820
  %v4994 = vmul.f32 %v2480, %v4895
  %v4995 = vmul.f32 %v2481, %v4897
  %v4996 = vmul.f32 %v2482, %v4972
  %v4997 = vmul.f32 %v2483, %v4974
  %v4998 = vmul.f32 %v2484, %v4439
  %v4999 = vmul.f32 %v2485, %v4441
  %v5000 = vmul.f32 %v2486, %v4516
  %v5001 = vmul.f32 %v2487, %v4518
  %v5002 = vmul.f32 %v2488, %v4593
  %v5003 = vmul.f32 %v2489, %v4595
  %v5004 = vmul.f32 %v2490, %v4670
  %v5005 = vmul.f32 %v2491, %v4672
  %v5006 = vmul.f32 %v2492, %v4747
  %v5007 = vmul.f32 %v2493, %v4749
  %v5008 = vmul.f32 %v2494, %v4824
  %v5009 = vmul.f32 %v2495, %v4826
  %v5010 = vmul.f32 %v2496, %v4901
  %v5011 = vmul.f32 %v2497, %v4903
  %v5012 = vmul.f32 %v2498, %v4978
  %v5013 = vmul.f32 %v2499, %v4980
  %v5014 = vpack.c.bf16 %v4998, %v4982
  %v5015 = vpack.c.bf16 %v4999, %v4983
  %v5016 = vpack.c.bf16 %v5000, %v4984
  %v5017 = vpack.c.bf16 %v5001, %v4985
  %v5018 = vpack.c.bf16 %v5002, %v4986
  %v5019 = vpack.c.bf16 %v5003, %v4987
  %v5020 = vpack.c.bf16 %v5004, %v4988
  %v5021 = vpack.c.bf16 %v5005, %v4989
  %v5022 = vpack.c.bf16 %v5006, %v4990
  %v5023 = vpack.c.bf16 %v5007, %v4991
  %v5024 = vpack.c.bf16 %v5008, %v4992
  %v5025 = vpack.c.bf16 %v5009, %v4993
  %v5026 = vpack.c.bf16 %v5010, %v4994
  %v5027 = vpack.c.bf16 %v5011, %v4995
  %v5028 = vpack.c.bf16 %v5012, %v4996
  %v5029 = vpack.c.bf16 %v5013, %v4997
  %v5046 = vunpack.c.l.b16 %v5014
  %v5047 = vunpack.c.l.b16 %v5015
  %v5048 = vunpack.c.l.b16 %v5016
  %v5049 = vunpack.c.l.b16 %v5017
  %v5050 = vunpack.c.l.b16 %v5018
  %v5051 = vunpack.c.l.b16 %v5019
  %v5052 = vunpack.c.l.b16 %v5020
  %v5053 = vunpack.c.l.b16 %v5021
  %v5054 = vunpack.c.l.b16 %v5022
  %v5055 = vunpack.c.l.b16 %v5023
  %v5056 = vunpack.c.l.b16 %v5024
  %v5057 = vunpack.c.l.b16 %v5025
  %v5058 = vunpack.c.l.b16 %v5026
  %v5059 = vunpack.c.l.b16 %v5027
  %v5060 = vunpack.c.l.b16 %v5028
  %v5061 = vunpack.c.l.b16 %v5029
  %v5062 = vunpack.c.h.b16 %v5014
  %v5063 = vunpack.c.h.b16 %v5015
  %v5064 = vunpack.c.h.b16 %v5016
  %v5065 = vunpack.c.h.b16 %v5017
  %v5066 = vunpack.c.h.b16 %v5018
  %v5067 = vunpack.c.h.b16 %v5019
  %v5068 = vunpack.c.h.b16 %v5020
  %v5069 = vunpack.c.h.b16 %v5021
  %v5070 = vunpack.c.h.b16 %v5022
  %v5071 = vunpack.c.h.b16 %v5023
  %v5072 = vunpack.c.h.b16 %v5024
  %v5073 = vunpack.c.h.b16 %v5025
  %v5074 = vunpack.c.h.b16 %v5026
  %v5075 = vunpack.c.h.b16 %v5027
  %v5076 = vunpack.c.h.b16 %v5028
  %v5077 = vunpack.c.h.b16 %v5029
  %v5078 = vpack.c.b16 %v5047, %v5046
  %v5079 = vpack.c.b16 %v5049, %v5048
  %v5080 = vpack.c.b16 %v5051, %v5050
  %v5081 = vpack.c.b16 %v5053, %v5052
  %v5082 = vpack.c.b16 %v5055, %v5054
  %v5083 = vpack.c.b16 %v5057, %v5056
  %v5084 = vpack.c.b16 %v5059, %v5058
  %v5085 = vpack.c.b16 %v5061, %v5060
  %v5086 = vpack.c.b16 %v5063, %v5062
  %v5087 = vpack.c.b16 %v5065, %v5064
  %v5088 = vpack.c.b16 %v5067, %v5066
  %v5089 = vpack.c.b16 %v5069, %v5068
  %v5090 = vpack.c.b16 %v5071, %v5070
  %v5091 = vpack.c.b16 %v5073, %v5072
  %v5092 = vpack.c.b16 %v5075, %v5074
  %v5093 = vpack.c.b16 %v5077, %v5076
  %5110 = vst [vmem:[%s11] sm:$0xff] %v5078
  %5111 = vst [vmem:[%s11 + $0x8] sm:$0xff] %v5079
  %5112 = vst [vmem:[%s11 + $0x10] sm:$0xff] %v5080
  %5113 = vst [vmem:[%s11 + $0x18] sm:$0xff] %v5081
  %5114 = vst [vmem:[%s11 + $0x20] sm:$0xff] %v5082
  %5115 = vst [vmem:[%s11 + $0x28] sm:$0xff] %v5083
  %5116 = vst [vmem:[%s11 + $0x30] sm:$0xff] %v5084
  %5117 = vst [vmem:[%s11 + $0x38] sm:$0xff] %v5085
  %5118 = vst [vmem:[%s11 + $0x40] sm:$0x11] %v5086
  %5119 = vst [vmem:[%s11 + $0x48] sm:$0x11] %v5087
  %5120 = vst [vmem:[%s11 + $0x50] sm:$0x11] %v5088
  %5121 = vst [vmem:[%s11 + $0x58] sm:$0x11] %v5089
  %5122 = vst [vmem:[%s11 + $0x60] sm:$0x11] %v5090
  %5123 = vst [vmem:[%s11 + $0x68] sm:$0x11] %v5091
  %5124 = vst [vmem:[%s11 + $0x70] sm:$0x11] %v5092
  %5125 = vst [vmem:[%s11 + $0x78] sm:$0x11] %v5093
  // Predicated region
  $region46: #{_lambda_.2} parent=0 // pred_check
    _
  $region47: #{_lambda_.2} parent=0 // pred_check_branch
    %5127 = sbr.rel (0) target = $region49
  $region48: #{_lambda_.2} parent=0 // pred_region
    _
  $region49: #{_lambda_.2} parent=0 // pred_fallthru
    _
  // Predicated region
  $region50: #{_lambda_.2} parent=0 // pred_check
    _
  $region51: #{_lambda_.2} parent=0 // pred_check_branch
    %5129 = sbr.rel (0) target = $region53
  $region52: #{_lambda_.2} parent=0 // pred_region
    _
  $region53: #{_lambda_.2} parent=0 // pred_fallthru
    _

// kernel: _lambda_.3
$region0: #{_lambda_.3}
  #allocation0 [shape = 'u32[]', space=smem, size = 0x4, offset = 0x4, fixed_abs, tag = 'smem constant byte address 0x4 - core index']
  #allocation1 [shape = 'u32[144,128]{1,0:T(1,128)}', space=vmem, size = 0x12000, scoped, tag = 'internal scratch']
  #allocation2 [shape = 'f32[1,1]{1,0:T(1,128)S(1)}', space=vmem, size = 0x200, scoped, tag = 'scoped memory for _lambda_.3']
  %s0 = inlined_call_operand.vmem [shape: bf16[1,250,1152], index: 0, kind: input, shape index: {}]
  %s1 = inlined_call_operand.vmem [shape: bf16[20,250], index: 1, kind: input, shape index: {}]
  %s2 = inlined_call_operand.vmem [shape: f32[20,1], index: 2, kind: input, shape index: {}]
  %s3 = inlined_call_operand.vmem [shape: f32[10,20], index: 3, kind: input, shape index: {}]
  %s4 = inlined_call_operand.vmem [shape: f32[10,1], index: 4, kind: input, shape index: {}]
  %s5 = inlined_call_operand.vmem [shape: f32[20,10], index: 5, kind: input, shape index: {}]
  %s6 = inlined_call_operand.vmem [shape: f32[20,1], index: 6, kind: input, shape index: {}]
  %s7 = inlined_call_operand.vmem [shape: f32[1,20], index: 7, kind: input, shape index: {}]
  %s8 = inlined_call_operand.<no memory space> [shape: f32[1,1], index: 8, kind: input, shape index: {}]
  %s9 = inlined_call_operand.vmem [shape: f32[288,8], index: 9, kind: input, shape index: {}]
  %s10 = inlined_call_operand.vmem [shape: f32[8,288], index: 10, kind: input, shape index: {}]
  %s11 = inlined_call_operand.vmem [shape: bf16[36,50,20], index: 11, kind: input, shape index: {}]
  %s12 = inlined_call_operand.vmem [shape: f32[50,1], index: 12, kind: input, shape index: {}]
  %s13 = inlined_call_operand.vmem [shape: bf16[20,50], index: 13, kind: input, shape index: {}]
  %s14 = inlined_call_operand.vmem [shape: f32[20,1], index: 14, kind: input, shape index: {}]
  %s15 = inlined_call_operand.vmem [shape: f32[1,20,8], index: 15, kind: output, shape index: {}]
  %s16 = sld [smem:[#allocation0]]
  $region70: #{_lambda_.3} parent=0
    _
  %s18 = ssub.s32 1, %s16
  %s19 = scalar_select 0, %s18, %s16
  %v20 = vstv %s8
  %21 = vst [vmem:[#allocation2] sm:$0x1] %v20
  // Predicated region
  $region2: #{_lambda_.3} parent=0 // pred_check
    _
  $region3: #{_lambda_.3} parent=0 // pred_check_branch
    %23 = sbr.rel (0) target = $region5
  $region4: #{_lambda_.3} parent=0 // pred_region
    _
  $region5: #{_lambda_.3} parent=0 // pred_fallthru
    _
  // Predicated region
  $region6: #{_lambda_.3} parent=0 // pred_check
    _
  $region7: #{_lambda_.3} parent=0 // pred_check_branch
    %25 = sbr.rel (0) target = $region9
  $region8: #{_lambda_.3} parent=0 // pred_region
    _
  $region9: #{_lambda_.3} parent=0 // pred_fallthru
    _
  // Predicated region
  $region10: #{_lambda_.3} parent=0 // pred_check
    _
  $region11: #{_lambda_.3} parent=0 // pred_check_branch
    %27 = sbr.rel (0) target = $region13
  $region12: #{_lambda_.3} parent=0 // pred_region
    _
  $region13: #{_lambda_.3} parent=0 // pred_fallthru
    _
  // Predicated region
  $region14: #{_lambda_.3} parent=0 // pred_check
    _
  $region15: #{_lambda_.3} parent=0 // pred_check_branch
    %29 = sbr.rel (0) target = $region17
  $region16: #{_lambda_.3} parent=0 // pred_region
    _
  $region17: #{_lambda_.3} parent=0 // pred_fallthru
    _
  // Predicated region
  $region18: #{_lambda_.3} parent=0 // pred_check
    _
  $region19: #{_lambda_.3} parent=0 // pred_check_branch
    %31 = sbr.rel (0) target = $region21
  $region20: #{_lambda_.3} parent=0 // pred_region
    _
  $region21: #{_lambda_.3} parent=0 // pred_fallthru
    _
  // Predicated region
  $region22: #{_lambda_.3} parent=0 // pred_check
    _
  $region23: #{_lambda_.3} parent=0 // pred_check_branch
    %33 = sbr.rel (0) target = $region25
  $region24: #{_lambda_.3} parent=0 // pred_region
    _
  $region25: #{_lambda_.3} parent=0 // pred_fallthru
    _
  // Predicated region
  $region26: #{_lambda_.3} parent=0 // pred_check
    _
  $region27: #{_lambda_.3} parent=0 // pred_check_branch
    %35 = sbr.rel (0) target = $region29
  $region28: #{_lambda_.3} parent=0 // pred_region
    _
  $region29: #{_lambda_.3} parent=0 // pred_fallthru
    _
  // Predicated region
  $region30: #{_lambda_.3} parent=0 // pred_check
    _
  $region31: #{_lambda_.3} parent=0 // pred_check_branch
    %37 = sbr.rel (0) target = $region33
  $region32: #{_lambda_.3} parent=0 // pred_region
    _
  $region33: #{_lambda_.3} parent=0 // pred_fallthru
    _
  // Predicated region
  $region34: #{_lambda_.3} parent=0 // pred_check
    _
  $region35: #{_lambda_.3} parent=0 // pred_check_branch
    %39 = sbr.rel (0) target = $region37
  $region36: #{_lambda_.3} parent=0 // pred_region
    _
  $region37: #{_lambda_.3} parent=0 // pred_fallthru
    _
  // Predicated region
  $region38: #{_lambda_.3} parent=0 // pred_check
    _
  $region39: #{_lambda_.3} parent=0 // pred_check_branch
    %41 = sbr.rel (0) target = $region41
  $region40: #{_lambda_.3} parent=0 // pred_region
    _
  $region41: #{_lambda_.3} parent=0 // pred_fallthru
    _
  // Predicated region
  $region42: #{_lambda_.3} parent=0 // pred_check
    _
  $region43: #{_lambda_.3} parent=0 // pred_check_branch
    %43 = sbr.rel (0) target = $region45
  $region44: #{_lambda_.3} parent=0 // pred_region
    _
  $region45: #{_lambda_.3} parent=0 // pred_fallthru
    _
  // Predicated region
  $region46: #{_lambda_.3} parent=0 // pred_check
    _
  $region47: #{_lambda_.3} parent=0 // pred_check_branch
    %45 = sbr.rel (0) target = $region49
  $region48: #{_lambda_.3} parent=0 // pred_region
    _
  $region49: #{_lambda_.3} parent=0 // pred_fallthru
    _
  // Predicated region
  $region50: #{_lambda_.3} parent=0 // pred_check
    _
  $region51: #{_lambda_.3} parent=0 // pred_check_branch
    %47 = sbr.rel (0) target = $region53
  $region52: #{_lambda_.3} parent=0 // pred_region
    _
  $region53: #{_lambda_.3} parent=0 // pred_fallthru
    _
  // Predicated region
  $region54: #{_lambda_.3} parent=0 // pred_check
    _
  $region55: #{_lambda_.3} parent=0 // pred_check_branch
    %49 = sbr.rel (0) target = $region57
  $region56: #{_lambda_.3} parent=0 // pred_region
    _
  $region57: #{_lambda_.3} parent=0 // pred_fallthru
    _
  // Predicated region
  $region58: #{_lambda_.3} parent=0 // pred_check
    _
  $region59: #{_lambda_.3} parent=0 // pred_check_branch
    %51 = sbr.rel (0) target = $region61
  $region60: #{_lambda_.3} parent=0 // pred_region
    _
  $region61: #{_lambda_.3} parent=0 // pred_fallthru
    _
  %v53 = vld [vmem:[%s1] sm:$0xff]
  %v54 = vld [vmem:[%s1 + $0x8] sm:$0xff]
  %v55 = vld [vmem:[%s1 + $0x10] sm:$0x33]
  %v56 = vld [vmem:[%s0] sm:$0xff]
  %v57 = vld [vmem:[%s0 + $0x8] sm:$0xff]
  %v58 = vld [vmem:[%s0 + $0x10] sm:$0xff]
  %v59 = vld [vmem:[%s0 + $0x18] sm:$0xff]
  %v60 = vld [vmem:[%s0 + $0x20] sm:$0xf]
  %v61 = vld [vmem:[%s0 + $0x24] sm:$0xff]
  %v62 = vld [vmem:[%s0 + $0x2c] sm:$0xff]
  %v63 = vld [vmem:[%s0 + $0x34] sm:$0xff]
  %v64 = vld [vmem:[%s0 + $0x3c] sm:$0xff]
  %v65 = vld [vmem:[%s0 + $0x44] sm:$0xf]
  %v66 = vld [vmem:[%s0 + $0x48] sm:$0xff]
  %v67 = vld [vmem:[%s0 + $0x50] sm:$0xff]
  %v68 = vld [vmem:[%s0 + $0x58] sm:$0xff]
  %v69 = vld [vmem:[%s0 + $0x60] sm:$0xff]
  %v70 = vld [vmem:[%s0 + $0x68] sm:$0xf]
  %v71 = vld [vmem:[%s0 + $0x6c] sm:$0xff]
  %v72 = vld [vmem:[%s0 + $0x74] sm:$0xff]
  %v73 = vld [vmem:[%s0 + $0x7c] sm:$0xff]
  %v74 = vld [vmem:[%s0 + $0x84] sm:$0xff]
  %v75 = vld [vmem:[%s0 + $0x8c] sm:$0xf]
  %v76 = vld [vmem:[%s0 + $0x90] sm:$0xff]
  %v77 = vld [vmem:[%s0 + $0x98] sm:$0xff]
  %v78 = vld [vmem:[%s0 + $0xa0] sm:$0xff]
  %v79 = vld [vmem:[%s0 + $0xa8] sm:$0xff]
  %v80 = vld [vmem:[%s0 + $0xb0] sm:$0xf]
  %v81 = vld [vmem:[%s0 + $0xb4] sm:$0xff]
  %v82 = vld [vmem:[%s0 + $0xbc] sm:$0xff]
  %v83 = vld [vmem:[%s0 + $0xc4] sm:$0xff]
  %v84 = vld [vmem:[%s0 + $0xcc] sm:$0xff]
  %v85 = vld [vmem:[%s0 + $0xd4] sm:$0xf]
  %v86 = vld [vmem:[%s0 + $0xd8] sm:$0xff]
  %v87 = vld [vmem:[%s0 + $0xe0] sm:$0xff]
  %v88 = vld [vmem:[%s0 + $0xe8] sm:$0xff]
  %v89 = vld [vmem:[%s0 + $0xf0] sm:$0xff]
  %v90 = vld [vmem:[%s0 + $0xf8] sm:$0xf]
  %v91 = vld [vmem:[%s0 + $0xfc] sm:$0xff]
  %v92 = vld [vmem:[%s0 + $0x104] sm:$0xff]
  %v93 = vld [vmem:[%s0 + $0x10c] sm:$0xff]
  %v94 = vld [vmem:[%s0 + $0x114] sm:$0xff]
  %v95 = vld [vmem:[%s0 + $0x11c] sm:$0xf]
  %v96 = vld [vmem:[%s0 + $0x120] sm:$0xff]
  %v97 = vld [vmem:[%s0 + $0x128] sm:$0xff]
  %v98 = vld [vmem:[%s0 + $0x130] sm:$0xff]
  %v99 = vld [vmem:[%s0 + $0x138] sm:$0xff]
  %v100 = vld [vmem:[%s0 + $0x140] sm:$0xf]
  %v101 = vld [vmem:[%s0 + $0x144] sm:$0xff]
  %v102 = vld [vmem:[%s0 + $0x14c] sm:$0xff]
  %v103 = vld [vmem:[%s0 + $0x154] sm:$0xff]
  %v104 = vld [vmem:[%s0 + $0x15c] sm:$0xff]
  %v105 = vld [vmem:[%s0 + $0x164] sm:$0xf]
  %v106 = vld [vmem:[%s0 + $0x168] sm:$0xff]
  %v107 = vld [vmem:[%s0 + $0x170] sm:$0xff]
  %v108 = vld [vmem:[%s0 + $0x178] sm:$0xff]
  %v109 = vld [vmem:[%s0 + $0x180] sm:$0xff]
  %v110 = vld [vmem:[%s0 + $0x188] sm:$0xf]
  %v111 = vld [vmem:[%s0 + $0x18c] sm:$0xff]
  %v112 = vld [vmem:[%s0 + $0x194] sm:$0xff]
  %v113 = vld [vmem:[%s0 + $0x19c] sm:$0xff]
  %v114 = vld [vmem:[%s0 + $0x1a4] sm:$0xff]
  %v115 = vld [vmem:[%s0 + $0x1ac] sm:$0xf]
  %v116 = vld [vmem:[%s0 + $0x1b0] sm:$0xff]
  %v117 = vld [vmem:[%s0 + $0x1b8] sm:$0xff]
  %v118 = vld [vmem:[%s0 + $0x1c0] sm:$0xff]
  %v119 = vld [vmem:[%s0 + $0x1c8] sm:$0xff]
  %v120 = vld [vmem:[%s0 + $0x1d0] sm:$0xf]
  %v121 = vld [vmem:[%s0 + $0x1d4] sm:$0xff]
  %v122 = vld [vmem:[%s0 + $0x1dc] sm:$0xff]
  %v123 = vld [vmem:[%s0 + $0x1e4] sm:$0xff]
  %v124 = vld [vmem:[%s0 + $0x1ec] sm:$0xff]
  %v125 = vld [vmem:[%s0 + $0x1f4] sm:$0xf]
  %v126 = vld [vmem:[%s0 + $0x1f8] sm:$0xff]
  %v127 = vld [vmem:[%s0 + $0x200] sm:$0xff]
  %v128 = vld [vmem:[%s0 + $0x208] sm:$0xff]
  %v129 = vld [vmem:[%s0 + $0x210] sm:$0xff]
  %v130 = vld [vmem:[%s0 + $0x218] sm:$0xf]
  %v131 = vld [vmem:[%s0 + $0x21c] sm:$0xff]
  %v132 = vld [vmem:[%s0 + $0x224] sm:$0xff]
  %v133 = vld [vmem:[%s0 + $0x22c] sm:$0xff]
  %v134 = vld [vmem:[%s0 + $0x234] sm:$0xff]
  %v135 = vld [vmem:[%s0 + $0x23c] sm:$0xf]
  %v136 = vld [vmem:[%s0 + $0x240] sm:$0xff]
  %v137 = vld [vmem:[%s0 + $0x248] sm:$0xff]
  %v138 = vld [vmem:[%s0 + $0x250] sm:$0xff]
  %v139 = vld [vmem:[%s0 + $0x258] sm:$0xff]
  %v140 = vld [vmem:[%s0 + $0x260] sm:$0xf]
  %v141 = vld [vmem:[%s0 + $0x264] sm:$0xff]
  %v142 = vld [vmem:[%s0 + $0x26c] sm:$0xff]
  %v143 = vld [vmem:[%s0 + $0x274] sm:$0xff]
  %v144 = vld [vmem:[%s0 + $0x27c] sm:$0xff]
  %v145 = vld [vmem:[%s0 + $0x284] sm:$0xf]
  %v146 = vld [vmem:[%s0 + $0x288] sm:$0xff]
  %v147 = vld [vmem:[%s0 + $0x290] sm:$0xff]
  %v148 = vld [vmem:[%s0 + $0x298] sm:$0xff]
  %v149 = vld [vmem:[%s0 + $0x2a0] sm:$0xff]
  %v150 = vld [vmem:[%s0 + $0x2a8] sm:$0xf]
  %v151 = vld [vmem:[%s0 + $0x2ac] sm:$0xff]
  %v152 = vld [vmem:[%s0 + $0x2b4] sm:$0xff]
  %v153 = vld [vmem:[%s0 + $0x2bc] sm:$0xff]
  %v154 = vld [vmem:[%s0 + $0x2c4] sm:$0xff]
  %v155 = vld [vmem:[%s0 + $0x2cc] sm:$0xf]
  %v156 = vld [vmem:[%s0 + $0x2d0] sm:$0xff]
  %v157 = vld [vmem:[%s0 + $0x2d8] sm:$0xff]
  %v158 = vld [vmem:[%s0 + $0x2e0] sm:$0xff]
  %v159 = vld [vmem:[%s0 + $0x2e8] sm:$0xff]
  %v160 = vld [vmem:[%s0 + $0x2f0] sm:$0xf]
  %v161 = vld [vmem:[%s0 + $0x2f4] sm:$0xff]
  %v162 = vld [vmem:[%s0 + $0x2fc] sm:$0xff]
  %v163 = vld [vmem:[%s0 + $0x304] sm:$0xff]
  %v164 = vld [vmem:[%s0 + $0x30c] sm:$0xff]
  %v165 = vld [vmem:[%s0 + $0x314] sm:$0xf]
  %v166 = vld [vmem:[%s0 + $0x318] sm:$0xff]
  %v167 = vld [vmem:[%s0 + $0x320] sm:$0xff]
  %v168 = vld [vmem:[%s0 + $0x328] sm:$0xff]
  %v169 = vld [vmem:[%s0 + $0x330] sm:$0xff]
  %v170 = vld [vmem:[%s0 + $0x338] sm:$0xf]
  %v171 = vld [vmem:[%s0 + $0x33c] sm:$0xff]
  %v172 = vld [vmem:[%s0 + $0x344] sm:$0xff]
  %v173 = vld [vmem:[%s0 + $0x34c] sm:$0xff]
  %v174 = vld [vmem:[%s0 + $0x354] sm:$0xff]
  %v175 = vld [vmem:[%s0 + $0x35c] sm:$0xf]
  %v176 = vld [vmem:[%s0 + $0x360] sm:$0xff]
  %v177 = vld [vmem:[%s0 + $0x368] sm:$0xff]
  %v178 = vld [vmem:[%s0 + $0x370] sm:$0xff]
  %v179 = vld [vmem:[%s0 + $0x378] sm:$0xff]
  %v180 = vld [vmem:[%s0 + $0x380] sm:$0xf]
  %v181 = vld [vmem:[%s0 + $0x384] sm:$0xff]
  %v182 = vld [vmem:[%s0 + $0x38c] sm:$0xff]
  %v183 = vld [vmem:[%s0 + $0x394] sm:$0xff]
  %v184 = vld [vmem:[%s0 + $0x39c] sm:$0xff]
  %v185 = vld [vmem:[%s0 + $0x3a4] sm:$0xf]
  %v186 = vld [vmem:[%s0 + $0x3a8] sm:$0xff]
  %v187 = vld [vmem:[%s0 + $0x3b0] sm:$0xff]
  %v188 = vld [vmem:[%s0 + $0x3b8] sm:$0xff]
  %v189 = vld [vmem:[%s0 + $0x3c0] sm:$0xff]
  %v190 = vld [vmem:[%s0 + $0x3c8] sm:$0xf]
  %v191 = vld [vmem:[%s0 + $0x3cc] sm:$0xff]
  %v192 = vld [vmem:[%s0 + $0x3d4] sm:$0xff]
  %v193 = vld [vmem:[%s0 + $0x3dc] sm:$0xff]
  %v194 = vld [vmem:[%s0 + $0x3e4] sm:$0xff]
  %v195 = vld [vmem:[%s0 + $0x3ec] sm:$0xf]
  %v196 = vld [vmem:[%s0 + $0x3f0] sm:$0xff]
  %v197 = vld [vmem:[%s0 + $0x3f8] sm:$0xff]
  %v198 = vld [vmem:[%s0 + $0x400] sm:$0xff]
  %v199 = vld [vmem:[%s0 + $0x408] sm:$0xff]
  %v200 = vld [vmem:[%s0 + $0x410] sm:$0xf]
  %v201 = vld [vmem:[%s0 + $0x414] sm:$0xff]
  %v202 = vld [vmem:[%s0 + $0x41c] sm:$0xff]
  %v203 = vld [vmem:[%s0 + $0x424] sm:$0xff]
  %v204 = vld [vmem:[%s0 + $0x42c] sm:$0xff]
  %v205 = vld [vmem:[%s0 + $0x434] sm:$0xf]
  %v206 = vld [vmem:[%s0 + $0x438] sm:$0xff]
  %v207 = vld [vmem:[%s0 + $0x440] sm:$0xff]
  %v208 = vld [vmem:[%s0 + $0x448] sm:$0xff]
  %v209 = vld [vmem:[%s0 + $0x450] sm:$0xff]
  %v210 = vld [vmem:[%s0 + $0x458] sm:$0xf]
  %v211 = vld [vmem:[%s0 + $0x45c] sm:$0x11]
  %v212 = vld [vmem:[%s0 + $0x464] sm:$0x11]
  %v213 = vld [vmem:[%s0 + $0x46c] sm:$0x11]
  %v214 = vld [vmem:[%s0 + $0x474] sm:$0x11]
  %v215 = vld [vmem:[%s0 + $0x47c] sm:$0x1]
  %v219 = vunpack.c.l.b16 %v53
  %v220 = vunpack.c.h.b16 %v53
  %v221 = vunpack.c.l.b16 %v54
  %v222 = vunpack.c.h.b16 %v54
  %v223 = vunpack.c.l.b16 %v55
  %v224 = vunpack.c.h.b16 %v55
  %v225 = vpack.c.b16 %v221, %v219
  %v226 = vpack.c.b16 %v222, %v220
  %v227 = vpack.c.b16 %v223, %v223
  %v228 = vpack.c.b16 %v224, %v224
  %v391 = vunpack.c.l.b16 %v56
  %v392 = vunpack.c.h.b16 %v56
  %v393 = vunpack.c.l.b16 %v57
  %v394 = vunpack.c.h.b16 %v57
  %v395 = vunpack.c.l.b16 %v58
  %v396 = vunpack.c.h.b16 %v58
  %v397 = vunpack.c.l.b16 %v59
  %v398 = vunpack.c.h.b16 %v59
  %v399 = vunpack.c.l.b16 %v60
  %v400 = vunpack.c.l.b16 %v61
  %v401 = vunpack.c.h.b16 %v61
  %v402 = vunpack.c.l.b16 %v62
  %v403 = vunpack.c.h.b16 %v62
  %v404 = vunpack.c.l.b16 %v63
  %v405 = vunpack.c.h.b16 %v63
  %v406 = vunpack.c.l.b16 %v64
  %v407 = vunpack.c.h.b16 %v64
  %v408 = vunpack.c.l.b16 %v65
  %v409 = vunpack.c.l.b16 %v66
  %v410 = vunpack.c.h.b16 %v66
  %v411 = vunpack.c.l.b16 %v67
  %v412 = vunpack.c.h.b16 %v67
  %v413 = vunpack.c.l.b16 %v68
  %v414 = vunpack.c.h.b16 %v68
  %v415 = vunpack.c.l.b16 %v69
  %v416 = vunpack.c.h.b16 %v69
  %v417 = vunpack.c.l.b16 %v70
  %v418 = vunpack.c.l.b16 %v71
  %v419 = vunpack.c.h.b16 %v71
  %v420 = vunpack.c.l.b16 %v72
  %v421 = vunpack.c.h.b16 %v72
  %v422 = vunpack.c.l.b16 %v73
  %v423 = vunpack.c.h.b16 %v73
  %v424 = vunpack.c.l.b16 %v74
  %v425 = vunpack.c.h.b16 %v74
  %v426 = vunpack.c.l.b16 %v75
  %v427 = vunpack.c.l.b16 %v76
  %v428 = vunpack.c.h.b16 %v76
  %v429 = vunpack.c.l.b16 %v77
  %v430 = vunpack.c.h.b16 %v77
  %v431 = vunpack.c.l.b16 %v78
  %v432 = vunpack.c.h.b16 %v78
  %v433 = vunpack.c.l.b16 %v79
  %v434 = vunpack.c.h.b16 %v79
  %v435 = vunpack.c.l.b16 %v80
  %v436 = vunpack.c.l.b16 %v81
  %v437 = vunpack.c.h.b16 %v81
  %v438 = vunpack.c.l.b16 %v82
  %v439 = vunpack.c.h.b16 %v82
  %v440 = vunpack.c.l.b16 %v83
  %v441 = vunpack.c.h.b16 %v83
  %v442 = vunpack.c.l.b16 %v84
  %v443 = vunpack.c.h.b16 %v84
  %v444 = vunpack.c.l.b16 %v85
  %v445 = vunpack.c.l.b16 %v86
  %v446 = vunpack.c.h.b16 %v86
  %v447 = vunpack.c.l.b16 %v87
  %v448 = vunpack.c.h.b16 %v87
  %v449 = vunpack.c.l.b16 %v88
  %v450 = vunpack.c.h.b16 %v88
  %v451 = vunpack.c.l.b16 %v89
  %v452 = vunpack.c.h.b16 %v89
  %v453 = vunpack.c.l.b16 %v90
  %v454 = vunpack.c.l.b16 %v91
  %v455 = vunpack.c.h.b16 %v91
  %v456 = vunpack.c.l.b16 %v92
  %v457 = vunpack.c.h.b16 %v92
  %v458 = vunpack.c.l.b16 %v93
  %v459 = vunpack.c.h.b16 %v93
  %v460 = vunpack.c.l.b16 %v94
  %v461 = vunpack.c.h.b16 %v94
  %v462 = vunpack.c.l.b16 %v95
  %v463 = vunpack.c.l.b16 %v96
  %v464 = vunpack.c.h.b16 %v96
  %v465 = vunpack.c.l.b16 %v97
  %v466 = vunpack.c.h.b16 %v97
  %v467 = vunpack.c.l.b16 %v98
  %v468 = vunpack.c.h.b16 %v98
  %v469 = vunpack.c.l.b16 %v99
  %v470 = vunpack.c.h.b16 %v99
  %v471 = vunpack.c.l.b16 %v100
  %v472 = vunpack.c.l.b16 %v101
  %v473 = vunpack.c.h.b16 %v101
  %v474 = vunpack.c.l.b16 %v102
  %v475 = vunpack.c.h.b16 %v102
  %v476 = vunpack.c.l.b16 %v103
  %v477 = vunpack.c.h.b16 %v103
  %v478 = vunpack.c.l.b16 %v104
  %v479 = vunpack.c.h.b16 %v104
  %v480 = vunpack.c.l.b16 %v105
  %v481 = vunpack.c.l.b16 %v106
  %v482 = vunpack.c.h.b16 %v106
  %v483 = vunpack.c.l.b16 %v107
  %v484 = vunpack.c.h.b16 %v107
  %v485 = vunpack.c.l.b16 %v108
  %v486 = vunpack.c.h.b16 %v108
  %v487 = vunpack.c.l.b16 %v109
  %v488 = vunpack.c.h.b16 %v109
  %v489 = vunpack.c.l.b16 %v110
  %v490 = vunpack.c.l.b16 %v111
  %v491 = vunpack.c.h.b16 %v111
  %v492 = vunpack.c.l.b16 %v112
  %v493 = vunpack.c.h.b16 %v112
  %v494 = vunpack.c.l.b16 %v113
  %v495 = vunpack.c.h.b16 %v113
  %v496 = vunpack.c.l.b16 %v114
  %v497 = vunpack.c.h.b16 %v114
  %v498 = vunpack.c.l.b16 %v115
  %v499 = vunpack.c.l.b16 %v116
  %v500 = vunpack.c.h.b16 %v116
  %v501 = vunpack.c.l.b16 %v117
  %v502 = vunpack.c.h.b16 %v117
  %v503 = vunpack.c.l.b16 %v118
  %v504 = vunpack.c.h.b16 %v118
  %v505 = vunpack.c.l.b16 %v119
  %v506 = vunpack.c.h.b16 %v119
  %v507 = vunpack.c.l.b16 %v120
  %v508 = vunpack.c.l.b16 %v121
  %v509 = vunpack.c.h.b16 %v121
  %v510 = vunpack.c.l.b16 %v122
  %v511 = vunpack.c.h.b16 %v122
  %v512 = vunpack.c.l.b16 %v123
  %v513 = vunpack.c.h.b16 %v123
  %v514 = vunpack.c.l.b16 %v124
  %v515 = vunpack.c.h.b16 %v124
  %v516 = vunpack.c.l.b16 %v125
  %v517 = vunpack.c.l.b16 %v126
  %v518 = vunpack.c.h.b16 %v126
  %v519 = vunpack.c.l.b16 %v127
  %v520 = vunpack.c.h.b16 %v127
  %v521 = vunpack.c.l.b16 %v128
  %v522 = vunpack.c.h.b16 %v128
  %v523 = vunpack.c.l.b16 %v129
  %v524 = vunpack.c.h.b16 %v129
  %v525 = vunpack.c.l.b16 %v130
  %v526 = vunpack.c.l.b16 %v131
  %v527 = vunpack.c.h.b16 %v131
  %v528 = vunpack.c.l.b16 %v132
  %v529 = vunpack.c.h.b16 %v132
  %v530 = vunpack.c.l.b16 %v133
  %v531 = vunpack.c.h.b16 %v133
  %v532 = vunpack.c.l.b16 %v134
  %v533 = vunpack.c.h.b16 %v134
  %v534 = vunpack.c.l.b16 %v135
  %v535 = vunpack.c.l.b16 %v136
  %v536 = vunpack.c.h.b16 %v136
  %v537 = vunpack.c.l.b16 %v137
  %v538 = vunpack.c.h.b16 %v137
  %v539 = vunpack.c.l.b16 %v138
  %v540 = vunpack.c.h.b16 %v138
  %v541 = vunpack.c.l.b16 %v139
  %v542 = vunpack.c.h.b16 %v139
  %v543 = vunpack.c.l.b16 %v140
  %v544 = vunpack.c.l.b16 %v141
  %v545 = vunpack.c.h.b16 %v141
  %v546 = vunpack.c.l.b16 %v142
  %v547 = vunpack.c.h.b16 %v142
  %v548 = vunpack.c.l.b16 %v143
  %v549 = vunpack.c.h.b16 %v143
  %v550 = vunpack.c.l.b16 %v144
  %v551 = vunpack.c.h.b16 %v144
  %v552 = vunpack.c.l.b16 %v145
  %v553 = vunpack.c.l.b16 %v146
  %v554 = vunpack.c.h.b16 %v146
  %v555 = vunpack.c.l.b16 %v147
  %v556 = vunpack.c.h.b16 %v147
  %v557 = vunpack.c.l.b16 %v148
  %v558 = vunpack.c.h.b16 %v148
  %v559 = vunpack.c.l.b16 %v149
  %v560 = vunpack.c.h.b16 %v149
  %v561 = vunpack.c.l.b16 %v150
  %v562 = vunpack.c.l.b16 %v151
  %v563 = vunpack.c.h.b16 %v151
  %v564 = vunpack.c.l.b16 %v152
  %v565 = vunpack.c.h.b16 %v152
  %v566 = vunpack.c.l.b16 %v153
  %v567 = vunpack.c.h.b16 %v153
  %v568 = vunpack.c.l.b16 %v154
  %v569 = vunpack.c.h.b16 %v154
  %v570 = vunpack.c.l.b16 %v155
  %v571 = vunpack.c.l.b16 %v156
  %v572 = vunpack.c.h.b16 %v156
  %v573 = vunpack.c.l.b16 %v157
  %v574 = vunpack.c.h.b16 %v157
  %v575 = vunpack.c.l.b16 %v158
  %v576 = vunpack.c.h.b16 %v158
  %v577 = vunpack.c.l.b16 %v159
  %v578 = vunpack.c.h.b16 %v159
  %v579 = vunpack.c.l.b16 %v160
  %v580 = vunpack.c.l.b16 %v161
  %v581 = vunpack.c.h.b16 %v161
  %v582 = vunpack.c.l.b16 %v162
  %v583 = vunpack.c.h.b16 %v162
  %v584 = vunpack.c.l.b16 %v163
  %v585 = vunpack.c.h.b16 %v163
  %v586 = vunpack.c.l.b16 %v164
  %v587 = vunpack.c.h.b16 %v164
  %v588 = vunpack.c.l.b16 %v165
  %v589 = vunpack.c.l.b16 %v166
  %v590 = vunpack.c.h.b16 %v166
  %v591 = vunpack.c.l.b16 %v167
  %v592 = vunpack.c.h.b16 %v167
  %v593 = vunpack.c.l.b16 %v168
  %v594 = vunpack.c.h.b16 %v168
  %v595 = vunpack.c.l.b16 %v169
  %v596 = vunpack.c.h.b16 %v169
  %v597 = vunpack.c.l.b16 %v170
  %v598 = vunpack.c.l.b16 %v171
  %v599 = vunpack.c.h.b16 %v171
  %v600 = vunpack.c.l.b16 %v172
  %v601 = vunpack.c.h.b16 %v172
  %v602 = vunpack.c.l.b16 %v173
  %v603 = vunpack.c.h.b16 %v173
  %v604 = vunpack.c.l.b16 %v174
  %v605 = vunpack.c.h.b16 %v174
  %v606 = vunpack.c.l.b16 %v175
  %v607 = vunpack.c.l.b16 %v176
  %v608 = vunpack.c.h.b16 %v176
  %v609 = vunpack.c.l.b16 %v177
  %v610 = vunpack.c.h.b16 %v177
  %v611 = vunpack.c.l.b16 %v178
  %v612 = vunpack.c.h.b16 %v178
  %v613 = vunpack.c.l.b16 %v179
  %v614 = vunpack.c.h.b16 %v179
  %v615 = vunpack.c.l.b16 %v180
  %v616 = vunpack.c.l.b16 %v181
  %v617 = vunpack.c.h.b16 %v181
  %v618 = vunpack.c.l.b16 %v182
  %v619 = vunpack.c.h.b16 %v182
  %v620 = vunpack.c.l.b16 %v183
  %v621 = vunpack.c.h.b16 %v183
  %v622 = vunpack.c.l.b16 %v184
  %v623 = vunpack.c.h.b16 %v184
  %v624 = vunpack.c.l.b16 %v185
  %v625 = vunpack.c.l.b16 %v186
  %v626 = vunpack.c.h.b16 %v186
  %v627 = vunpack.c.l.b16 %v187
  %v628 = vunpack.c.h.b16 %v187
  %v629 = vunpack.c.l.b16 %v188
  %v630 = vunpack.c.h.b16 %v188
  %v631 = vunpack.c.l.b16 %v189
  %v632 = vunpack.c.h.b16 %v189
  %v633 = vunpack.c.l.b16 %v190
  %v634 = vunpack.c.l.b16 %v191
  %v635 = vunpack.c.h.b16 %v191
  %v636 = vunpack.c.l.b16 %v192
  %v637 = vunpack.c.h.b16 %v192
  %v638 = vunpack.c.l.b16 %v193
  %v639 = vunpack.c.h.b16 %v193
  %v640 = vunpack.c.l.b16 %v194
  %v641 = vunpack.c.h.b16 %v194
  %v642 = vunpack.c.l.b16 %v195
  %v643 = vunpack.c.l.b16 %v196
  %v644 = vunpack.c.h.b16 %v196
  %v645 = vunpack.c.l.b16 %v197
  %v646 = vunpack.c.h.b16 %v197
  %v647 = vunpack.c.l.b16 %v198
  %v648 = vunpack.c.h.b16 %v198
  %v649 = vunpack.c.l.b16 %v199
  %v650 = vunpack.c.h.b16 %v199
  %v651 = vunpack.c.l.b16 %v200
  %v652 = vunpack.c.l.b16 %v201
  %v653 = vunpack.c.h.b16 %v201
  %v654 = vunpack.c.l.b16 %v202
  %v655 = vunpack.c.h.b16 %v202
  %v656 = vunpack.c.l.b16 %v203
  %v657 = vunpack.c.h.b16 %v203
  %v658 = vunpack.c.l.b16 %v204
  %v659 = vunpack.c.h.b16 %v204
  %v660 = vunpack.c.l.b16 %v205
  %v661 = vunpack.c.l.b16 %v206
  %v662 = vunpack.c.h.b16 %v206
  %v663 = vunpack.c.l.b16 %v207
  %v664 = vunpack.c.h.b16 %v207
  %v665 = vunpack.c.l.b16 %v208
  %v666 = vunpack.c.h.b16 %v208
  %v667 = vunpack.c.l.b16 %v209
  %v668 = vunpack.c.h.b16 %v209
  %v669 = vunpack.c.l.b16 %v210
  %v670 = vunpack.c.l.b16 %v211
  %v671 = vunpack.c.h.b16 %v211
  %v672 = vunpack.c.l.b16 %v212
  %v673 = vunpack.c.h.b16 %v212
  %v674 = vunpack.c.l.b16 %v213
  %v675 = vunpack.c.h.b16 %v213
  %v676 = vunpack.c.l.b16 %v214
  %v677 = vunpack.c.h.b16 %v214
  %v678 = vunpack.c.l.b16 %v215
  %v679 = vpack.c.b16 %v400, %v391
  %v680 = vpack.c.b16 %v401, %v392
  %v681 = vpack.c.b16 %v402, %v393
  %v682 = vpack.c.b16 %v403, %v394
  %v683 = vpack.c.b16 %v404, %v395
  %v684 = vpack.c.b16 %v405, %v396
  %v685 = vpack.c.b16 %v406, %v397
  %v686 = vpack.c.b16 %v407, %v398
  %v687 = vpack.c.b16 %v408, %v399
  %v688 = vpack.c.b16 %v418, %v409
  %v689 = vpack.c.b16 %v419, %v410
  %v690 = vpack.c.b16 %v420, %v411
  %v691 = vpack.c.b16 %v421, %v412
  %v692 = vpack.c.b16 %v422, %v413
  %v693 = vpack.c.b16 %v423, %v414
  %v694 = vpack.c.b16 %v424, %v415
  %v695 = vpack.c.b16 %v425, %v416
  %v696 = vpack.c.b16 %v426, %v417
  %v697 = vpack.c.b16 %v436, %v427
  %v698 = vpack.c.b16 %v437, %v428
  %v699 = vpack.c.b16 %v438, %v429
  %v700 = vpack.c.b16 %v439, %v430
  %v701 = vpack.c.b16 %v440, %v431
  %v702 = vpack.c.b16 %v441, %v432
  %v703 = vpack.c.b16 %v442, %v433
  %v704 = vpack.c.b16 %v443, %v434
  %v705 = vpack.c.b16 %v444, %v435
  %v706 = vpack.c.b16 %v454, %v445
  %v707 = vpack.c.b16 %v455, %v446
  %v708 = vpack.c.b16 %v456, %v447
  %v709 = vpack.c.b16 %v457, %v448
  %v710 = vpack.c.b16 %v458, %v449
  %v711 = vpack.c.b16 %v459, %v450
  %v712 = vpack.c.b16 %v460, %v451
  %v713 = vpack.c.b16 %v461, %v452
  %v714 = vpack.c.b16 %v462, %v453
  %v715 = vpack.c.b16 %v472, %v463
  %v716 = vpack.c.b16 %v473, %v464
  %v717 = vpack.c.b16 %v474, %v465
  %v718 = vpack.c.b16 %v475, %v466
  %v719 = vpack.c.b16 %v476, %v467
  %v720 = vpack.c.b16 %v477, %v468
  %v721 = vpack.c.b16 %v478, %v469
  %v722 = vpack.c.b16 %v479, %v470
  %v723 = vpack.c.b16 %v480, %v471
  %v724 = vpack.c.b16 %v490, %v481
  %v725 = vpack.c.b16 %v491, %v482
  %v726 = vpack.c.b16 %v492, %v483
  %v727 = vpack.c.b16 %v493, %v484
  %v728 = vpack.c.b16 %v494, %v485
  %v729 = vpack.c.b16 %v495, %v486
  %v730 = vpack.c.b16 %v496, %v487
  %v731 = vpack.c.b16 %v497, %v488
  %v732 = vpack.c.b16 %v498, %v489
  %v733 = vpack.c.b16 %v508, %v499
  %v734 = vpack.c.b16 %v509, %v500
  %v735 = vpack.c.b16 %v510, %v501
  %v736 = vpack.c.b16 %v511, %v502
  %v737 = vpack.c.b16 %v512, %v503
  %v738 = vpack.c.b16 %v513, %v504
  %v739 = vpack.c.b16 %v514, %v505
  %v740 = vpack.c.b16 %v515, %v506
  %v741 = vpack.c.b16 %v516, %v507
  %v742 = vpack.c.b16 %v526, %v517
  %v743 = vpack.c.b16 %v527, %v518
  %v744 = vpack.c.b16 %v528, %v519
  %v745 = vpack.c.b16 %v529, %v520
  %v746 = vpack.c.b16 %v530, %v521
  %v747 = vpack.c.b16 %v531, %v522
  %v748 = vpack.c.b16 %v532, %v523
  %v749 = vpack.c.b16 %v533, %v524
  %v750 = vpack.c.b16 %v534, %v525
  %v751 = vpack.c.b16 %v544, %v535
  %v752 = vpack.c.b16 %v545, %v536
  %v753 = vpack.c.b16 %v546, %v537
  %v754 = vpack.c.b16 %v547, %v538
  %v755 = vpack.c.b16 %v548, %v539
  %v756 = vpack.c.b16 %v549, %v540
  %v757 = vpack.c.b16 %v550, %v541
  %v758 = vpack.c.b16 %v551, %v542
  %v759 = vpack.c.b16 %v552, %v543
  %v760 = vpack.c.b16 %v562, %v553
  %v761 = vpack.c.b16 %v563, %v554
  %v762 = vpack.c.b16 %v564, %v555
  %v763 = vpack.c.b16 %v565, %v556
  %v764 = vpack.c.b16 %v566, %v557
  %v765 = vpack.c.b16 %v567, %v558
  %v766 = vpack.c.b16 %v568, %v559
  %v767 = vpack.c.b16 %v569, %v560
  %v768 = vpack.c.b16 %v570, %v561
  %v769 = vpack.c.b16 %v580, %v571
  %v770 = vpack.c.b16 %v581, %v572
  %v771 = vpack.c.b16 %v582, %v573
  %v772 = vpack.c.b16 %v583, %v574
  %v773 = vpack.c.b16 %v584, %v575
  %v774 = vpack.c.b16 %v585, %v576
  %v775 = vpack.c.b16 %v586, %v577
  %v776 = vpack.c.b16 %v587, %v578
  %v777 = vpack.c.b16 %v588, %v579
  %v778 = vpack.c.b16 %v598, %v589
  %v779 = vpack.c.b16 %v599, %v590
  %v780 = vpack.c.b16 %v600, %v591
  %v781 = vpack.c.b16 %v601, %v592
  %v782 = vpack.c.b16 %v602, %v593
  %v783 = vpack.c.b16 %v603, %v594
  %v784 = vpack.c.b16 %v604, %v595
  %v785 = vpack.c.b16 %v605, %v596
  %v786 = vpack.c.b16 %v606, %v597
  %v787 = vpack.c.b16 %v616, %v607
  %v788 = vpack.c.b16 %v617, %v608
  %v789 = vpack.c.b16 %v618, %v609
  %v790 = vpack.c.b16 %v619, %v610
  %v791 = vpack.c.b16 %v620, %v611
  %v792 = vpack.c.b16 %v621, %v612
  %v793 = vpack.c.b16 %v622, %v613
  %v794 = vpack.c.b16 %v623, %v614
  %v795 = vpack.c.b16 %v624, %v615
  %v796 = vpack.c.b16 %v634, %v625
  %v797 = vpack.c.b16 %v635, %v626
  %v798 = vpack.c.b16 %v636, %v627
  %v799 = vpack.c.b16 %v637, %v628
  %v800 = vpack.c.b16 %v638, %v629
  %v801 = vpack.c.b16 %v639, %v630
  %v802 = vpack.c.b16 %v640, %v631
  %v803 = vpack.c.b16 %v641, %v632
  %v804 = vpack.c.b16 %v642, %v633
  %v805 = vpack.c.b16 %v652, %v643
  %v806 = vpack.c.b16 %v653, %v644
  %v807 = vpack.c.b16 %v654, %v645
  %v808 = vpack.c.b16 %v655, %v646
  %v809 = vpack.c.b16 %v656, %v647
  %v810 = vpack.c.b16 %v657, %v648
  %v811 = vpack.c.b16 %v658, %v649
  %v812 = vpack.c.b16 %v659, %v650
  %v813 = vpack.c.b16 %v660, %v651
  %v814 = vpack.c.b16 %v670, %v661
  %v815 = vpack.c.b16 %v671, %v662
  %v816 = vpack.c.b16 %v672, %v663
  %v817 = vpack.c.b16 %v673, %v664
  %v818 = vpack.c.b16 %v674, %v665
  %v819 = vpack.c.b16 %v675, %v666
  %v820 = vpack.c.b16 %v676, %v667
  %v821 = vpack.c.b16 %v677, %v668
  %v822 = vpack.c.b16 %v678, %v669
  %vm958 = vcmask 998400
  %v960 = vsel %vm958, %v226, 0
  %v963 = vsel %vm958, %v228, 0
  %vm965 = vcmask 1044480
  %v967 = vsel %vm965, %v814, 0
  %v970 = vsel %vm965, %v815, 0
  %v973 = vsel %vm965, %v816, 0
  %v976 = vsel %vm965, %v817, 0
  %v979 = vsel %vm965, %v818, 0
  %v982 = vsel %vm965, %v819, 0
  %v985 = vsel %vm965, %v820, 0
  %v988 = vsel %vm965, %v821, 0
  %v991 = vsel %vm965, %v822, 0
  %993 = vmatprep.subr.bf16.mxu0 %v680
  %994 = vmatpush1.bf16.msra.mxu0 %v679
  %995 = vmatprep.subr.bf16.mxu0 %v689
  %996 = vmatpush1.bf16.msra.mxu0 %v688
  %997 = vmatprep.subr.bf16.mxu0 %v698
  %998 = vmatpush1.bf16.msra.mxu0 %v697
  %999 = vmatprep.subr.bf16.mxu0 %v707
  %1000 = vmatpush1.bf16.msra.mxu0 %v706
  %1001 = vmatprep.subr.bf16.mxu0 %v716
  %1002 = vmatpush1.bf16.msra.mxu0 %v715
  %1003 = vmatprep.subr.bf16.mxu0 %v725
  %1004 = vmatpush1.bf16.msra.mxu0 %v724
  %1005 = vmatprep.subr.bf16.mxu0 %v734
  %1006 = vmatpush1.bf16.msra.mxu0 %v733
  %1007 = vmatprep.subr.bf16.mxu0 %v743
  %1008 = vmatpush1.bf16.msra.mxu0 %v742
  %1009 = vmatprep.subr.bf16.mxu0 %v752
  %1010 = vmatpush1.bf16.msra.mxu0 %v751
  %1011 = vmatprep.subr.bf16.mxu0 %v761
  %1012 = vmatpush1.bf16.msra.mxu0 %v760
  %1013 = vmatprep.subr.bf16.mxu0 %v770
  %1014 = vmatpush1.bf16.msra.mxu0 %v769
  %1015 = vmatprep.subr.bf16.mxu0 %v779
  %1016 = vmatpush1.bf16.msra.mxu0 %v778
  %1017 = vmatprep.subr.bf16.mxu0 %v788
  %1018 = vmatpush1.bf16.msra.mxu0 %v787
  %1019 = vmatprep.subr.bf16.mxu0 %v797
  %1020 = vmatpush1.bf16.msra.mxu0 %v796
  %1021 = vmatprep.subr.bf16.mxu0 %v806
  %1022 = vmatpush1.bf16.msra.mxu0 %v805
  %1023 = vmatprep.subr.bf16.mxu0 %v970
  %1024 = vmatpush1.bf16.msra.mxu0 %v967
  %1025 = vmatprep.mubr.bf16.mxu0 %v960
  %1026 = vmatmul.mubr.bf16.gmra.mrb[0].mxu0 %v225
  %v1027 = vpop.f32.mrb[0].mxu0
  %v1028 = vadd.f32 0.0, %v1027
  %v1029 = vpop.f32.mrb[0].mxu0
  %v1030 = vadd.f32 0.0, %v1029
  %v1031 = vpop.f32.mrb[0].mxu0
  %v1032 = vadd.f32 0.0, %v1031
  %v1033 = vpop.f32.mrb[0].mxu0
  %v1034 = vadd.f32 0.0, %v1033
  %1035 = vmatprep.mubr.bf16.mxu0 %v963
  %1036 = vmatmul.mubr.bf16.gmra.mrb[0].mxu0 %v227
  %v1037 = vpop.f32.mrb[0].mxu0
  %v1038 = vadd.f32 0.0, %v1037
  %v1039 = vpop.f32.mrb[0].mxu0
  %v1040 = vadd.f32 0.0, %v1039
  %v1041 = vpop.f32.mrb[0].mxu0
  %v1042 = vpop.f32.mrb[0].mxu0
  %1043 = vdwg.mxu0
  %1044 = vmatprep.subr.bf16.mxu0 %v682
  %1045 = vmatpush1.bf16.msra.mxu0 %v681
  %1046 = vmatprep.subr.bf16.mxu0 %v691
  %1047 = vmatpush1.bf16.msra.mxu0 %v690
  %1048 = vmatprep.subr.bf16.mxu0 %v700
  %1049 = vmatpush1.bf16.msra.mxu0 %v699
  %1050 = vmatprep.subr.bf16.mxu0 %v709
  %1051 = vmatpush1.bf16.msra.mxu0 %v708
  %1052 = vmatprep.subr.bf16.mxu0 %v718
  %1053 = vmatpush1.bf16.msra.mxu0 %v717
  %1054 = vmatprep.subr.bf16.mxu0 %v727
  %1055 = vmatpush1.bf16.msra.mxu0 %v726
  %1056 = vmatprep.subr.bf16.mxu0 %v736
  %1057 = vmatpush1.bf16.msra.mxu0 %v735
  %1058 = vmatprep.subr.bf16.mxu0 %v745
  %1059 = vmatpush1.bf16.msra.mxu0 %v744
  %1060 = vmatprep.subr.bf16.mxu0 %v754
  %1061 = vmatpush1.bf16.msra.mxu0 %v753
  %1062 = vmatprep.subr.bf16.mxu0 %v763
  %1063 = vmatpush1.bf16.msra.mxu0 %v762
  %1064 = vmatprep.subr.bf16.mxu0 %v772
  %1065 = vmatpush1.bf16.msra.mxu0 %v771
  %1066 = vmatprep.subr.bf16.mxu0 %v781
  %1067 = vmatpush1.bf16.msra.mxu0 %v780
  %1068 = vmatprep.subr.bf16.mxu0 %v790
  %1069 = vmatpush1.bf16.msra.mxu0 %v789
  %1070 = vmatprep.subr.bf16.mxu0 %v799
  %1071 = vmatpush1.bf16.msra.mxu0 %v798
  %1072 = vmatprep.subr.bf16.mxu0 %v808
  %1073 = vmatpush1.bf16.msra.mxu0 %v807
  %1074 = vmatprep.subr.bf16.mxu0 %v976
  %1075 = vmatpush1.bf16.msra.mxu0 %v973
  %1076 = vmatprep.mubr.bf16.mxu0 %v960
  %1077 = vmatmul.mubr.bf16.gmra.mrb[0].mxu0 %v225
  %v1078 = vpop.f32.mrb[0].mxu0
  %v1079 = vadd.f32 0.0, %v1078
  %v1080 = vpop.f32.mrb[0].mxu0
  %v1081 = vadd.f32 0.0, %v1080
  %v1082 = vpop.f32.mrb[0].mxu0
  %v1083 = vadd.f32 0.0, %v1082
  %v1084 = vpop.f32.mrb[0].mxu0
  %v1085 = vadd.f32 0.0, %v1084
  %1086 = vmatprep.mubr.bf16.mxu0 %v963
  %1087 = vmatmul.mubr.bf16.gmra.mrb[0].mxu0 %v227
  %v1088 = vpop.f32.mrb[0].mxu0
  %v1089 = vadd.f32 0.0, %v1088
  %v1090 = vpop.f32.mrb[0].mxu0
  %v1091 = vadd.f32 0.0, %v1090
  %v1092 = vpop.f32.mrb[0].mxu0
  %v1093 = vpop.f32.mrb[0].mxu0
  %1094 = vdwg.mxu0
  %1095 = vmatprep.subr.bf16.mxu0 %v684
  %1096 = vmatpush1.bf16.msra.mxu0 %v683
  %1097 = vmatprep.subr.bf16.mxu0 %v693
  %1098 = vmatpush1.bf16.msra.mxu0 %v692
  %1099 = vmatprep.subr.bf16.mxu0 %v702
  %1100 = vmatpush1.bf16.msra.mxu0 %v701
  %1101 = vmatprep.subr.bf16.mxu0 %v711
  %1102 = vmatpush1.bf16.msra.mxu0 %v710
  %1103 = vmatprep.subr.bf16.mxu0 %v720
  %1104 = vmatpush1.bf16.msra.mxu0 %v719
  %1105 = vmatprep.subr.bf16.mxu0 %v729
  %1106 = vmatpush1.bf16.msra.mxu0 %v728
  %1107 = vmatprep.subr.bf16.mxu0 %v738
  %1108 = vmatpush1.bf16.msra.mxu0 %v737
  %1109 = vmatprep.subr.bf16.mxu0 %v747
  %1110 = vmatpush1.bf16.msra.mxu0 %v746
  %1111 = vmatprep.subr.bf16.mxu0 %v756
  %1112 = vmatpush1.bf16.msra.mxu0 %v755
  %1113 = vmatprep.subr.bf16.mxu0 %v765
  %1114 = vmatpush1.bf16.msra.mxu0 %v764
  %1115 = vmatprep.subr.bf16.mxu0 %v774
  %1116 = vmatpush1.bf16.msra.mxu0 %v773
  %1117 = vmatprep.subr.bf16.mxu0 %v783
  %1118 = vmatpush1.bf16.msra.mxu0 %v782
  %1119 = vmatprep.subr.bf16.mxu0 %v792
  %1120 = vmatpush1.bf16.msra.mxu0 %v791
  %1121 = vmatprep.subr.bf16.mxu0 %v801
  %1122 = vmatpush1.bf16.msra.mxu0 %v800
  %1123 = vmatprep.subr.bf16.mxu0 %v810
  %1124 = vmatpush1.bf16.msra.mxu0 %v809
  %1125 = vmatprep.subr.bf16.mxu0 %v982
  %1126 = vmatpush1.bf16.msra.mxu0 %v979
  %1127 = vmatprep.mubr.bf16.mxu0 %v960
  %1128 = vmatmul.mubr.bf16.gmra.mrb[0].mxu0 %v225
  %v1129 = vpop.f32.mrb[0].mxu0
  %v1130 = vadd.f32 0.0, %v1129
  %v1131 = vpop.f32.mrb[0].mxu0
  %v1132 = vadd.f32 0.0, %v1131
  %v1133 = vpop.f32.mrb[0].mxu0
  %v1134 = vadd.f32 0.0, %v1133
  %v1135 = vpop.f32.mrb[0].mxu0
  %v1136 = vadd.f32 0.0, %v1135
  %1137 = vmatprep.mubr.bf16.mxu0 %v963
  %1138 = vmatmul.mubr.bf16.gmra.mrb[0].mxu0 %v227
  %v1139 = vpop.f32.mrb[0].mxu0
  %v1140 = vadd.f32 0.0, %v1139
  %v1141 = vpop.f32.mrb[0].mxu0
  %v1142 = vadd.f32 0.0, %v1141
  %v1143 = vpop.f32.mrb[0].mxu0
  %v1144 = vpop.f32.mrb[0].mxu0
  %1145 = vdwg.mxu0
  %1146 = vmatprep.subr.bf16.mxu0 %v686
  %1147 = vmatpush1.bf16.msra.mxu0 %v685
  %1148 = vmatprep.subr.bf16.mxu0 %v695
  %1149 = vmatpush1.bf16.msra.mxu0 %v694
  %1150 = vmatprep.subr.bf16.mxu0 %v704
  %1151 = vmatpush1.bf16.msra.mxu0 %v703
  %1152 = vmatprep.subr.bf16.mxu0 %v713
  %1153 = vmatpush1.bf16.msra.mxu0 %v712
  %1154 = vmatprep.subr.bf16.mxu0 %v722
  %1155 = vmatpush1.bf16.msra.mxu0 %v721
  %1156 = vmatprep.subr.bf16.mxu0 %v731
  %1157 = vmatpush1.bf16.msra.mxu0 %v730
  %1158 = vmatprep.subr.bf16.mxu0 %v740
  %1159 = vmatpush1.bf16.msra.mxu0 %v739
  %1160 = vmatprep.subr.bf16.mxu0 %v749
  %1161 = vmatpush1.bf16.msra.mxu0 %v748
  %1162 = vmatprep.subr.bf16.mxu0 %v758
  %1163 = vmatpush1.bf16.msra.mxu0 %v757
  %1164 = vmatprep.subr.bf16.mxu0 %v767
  %1165 = vmatpush1.bf16.msra.mxu0 %v766
  %1166 = vmatprep.subr.bf16.mxu0 %v776
  %1167 = vmatpush1.bf16.msra.mxu0 %v775
  %1168 = vmatprep.subr.bf16.mxu0 %v785
  %1169 = vmatpush1.bf16.msra.mxu0 %v784
  %1170 = vmatprep.subr.bf16.mxu0 %v794
  %1171 = vmatpush1.bf16.msra.mxu0 %v793
  %1172 = vmatprep.subr.bf16.mxu0 %v803
  %1173 = vmatpush1.bf16.msra.mxu0 %v802
  %1174 = vmatprep.subr.bf16.mxu0 %v812
  %1175 = vmatpush1.bf16.msra.mxu0 %v811
  %1176 = vmatprep.subr.bf16.mxu0 %v988
  %1177 = vmatpush1.bf16.msra.mxu0 %v985
  %1178 = vmatprep.mubr.bf16.mxu0 %v960
  %1179 = vmatmul.mubr.bf16.gmra.mrb[0].mxu0 %v225
  %v1180 = vpop.f32.mrb[0].mxu0
  %v1181 = vadd.f32 0.0, %v1180
  %v1182 = vpop.f32.mrb[0].mxu0
  %v1183 = vadd.f32 0.0, %v1182
  %v1184 = vpop.f32.mrb[0].mxu0
  %v1185 = vadd.f32 0.0, %v1184
  %v1186 = vpop.f32.mrb[0].mxu0
  %v1187 = vadd.f32 0.0, %v1186
  %1188 = vmatprep.mubr.bf16.mxu0 %v963
  %1189 = vmatmul.mubr.bf16.gmra.mrb[0].mxu0 %v227
  %v1190 = vpop.f32.mrb[0].mxu0
  %v1191 = vadd.f32 0.0, %v1190
  %v1192 = vpop.f32.mrb[0].mxu0
  %v1193 = vadd.f32 0.0, %v1192
  %v1194 = vpop.f32.mrb[0].mxu0
  %v1195 = vpop.f32.mrb[0].mxu0
  %1196 = vdwg.mxu0
  %1197 = vmatprep.subr.bf16.mxu0 0
  %1198 = vmatpush1.bf16.msra.mxu0 %v687
  %1199 = vmatprep.subr.bf16.mxu0 0
  %1200 = vmatpush1.bf16.msra.mxu0 %v696
  %1201 = vmatprep.subr.bf16.mxu0 0
  %1202 = vmatpush1.bf16.msra.mxu0 %v705
  %1203 = vmatprep.subr.bf16.mxu0 0
  %1204 = vmatpush1.bf16.msra.mxu0 %v714
  %1205 = vmatprep.subr.bf16.mxu0 0
  %1206 = vmatpush1.bf16.msra.mxu0 %v723
  %1207 = vmatprep.subr.bf16.mxu0 0
  %1208 = vmatpush1.bf16.msra.mxu0 %v732
  %1209 = vmatprep.subr.bf16.mxu0 0
  %1210 = vmatpush1.bf16.msra.mxu0 %v741
  %1211 = vmatprep.subr.bf16.mxu0 0
  %1212 = vmatpush1.bf16.msra.mxu0 %v750
  %1213 = vmatprep.subr.bf16.mxu0 0
  %1214 = vmatpush1.bf16.msra.mxu0 %v759
  %1215 = vmatprep.subr.bf16.mxu0 0
  %1216 = vmatpush1.bf16.msra.mxu0 %v768
  %1217 = vmatprep.subr.bf16.mxu0 0
  %1218 = vmatpush1.bf16.msra.mxu0 %v777
  %1219 = vmatprep.subr.bf16.mxu0 0
  %1220 = vmatpush1.bf16.msra.mxu0 %v786
  %1221 = vmatprep.subr.bf16.mxu0 0
  %1222 = vmatpush1.bf16.msra.mxu0 %v795
  %1223 = vmatprep.subr.bf16.mxu0 0
  %1224 = vmatpush1.bf16.msra.mxu0 %v804
  %1225 = vmatprep.subr.bf16.mxu0 0
  %1226 = vmatpush1.bf16.msra.mxu0 %v813
  %1227 = vmatprep.subr.bf16.mxu0 0
  %1228 = vmatpush1.bf16.msra.mxu0 %v991
  %1229 = vmatprep.mubr.bf16.mxu0 %v960
  %1230 = vmatmul.mubr.bf16.gmra.mrb[0].mxu0 %v225
  %v1231 = vpop.f32.mrb[0].mxu0
  %v1232 = vadd.f32 0.0, %v1231
  %v1233 = vpop.f32.mrb[0].mxu0
  %v1234 = vpop.f32.mrb[0].mxu0
  %v1235 = vadd.f32 0.0, %v1234
  %v1236 = vpop.f32.mrb[0].mxu0
  %1237 = vmatprep.mubr.bf16.mxu0 %v963
  %1238 = vmatmul.mubr.bf16.gmra.mrb[0].mxu0 %v227
  %v1239 = vpop.f32.mrb[0].mxu0
  %v1240 = vadd.f32 0.0, %v1239
  %v1241 = vpop.f32.mrb[0].mxu0
  %v1242 = vpop.f32.mrb[0].mxu0
  %v1243 = vpop.f32.mrb[0].mxu0
  %1244 = vdwg.mxu0
  %1254 = vrot.lane.b32.xlu0 %v1079, 96
  %v1255 = vpop.permute.xlu0 %1254
  %1256 = vrot.lane.b32.xlu0 %v1081, 96
  %v1257 = vpop.permute.xlu0 %1256
  %1258 = vrot.lane.b32.xlu0 %v1130, 96
  %v1259 = vpop.permute.xlu0 %1258
  %1260 = vrot.lane.b32.xlu0 %v1083, 96
  %v1261 = vpop.permute.xlu0 %1260
  %1262 = vrot.lane.b32.xlu0 %v1085, 96
  %v1263 = vpop.permute.xlu0 %1262
  %1264 = vrot.lane.b32.xlu0 %v1134, 96
  %v1265 = vpop.permute.xlu0 %1264
  %1266 = vrot.lane.b32.xlu0 %v1089, 96
  %v1267 = vpop.permute.xlu0 %1266
  %1268 = vrot.lane.b32.xlu0 %v1091, 96
  %v1269 = vpop.permute.xlu0 %1268
  %1270 = vrot.lane.b32.xlu0 %v1140, 96
  %v1271 = vpop.permute.xlu0 %1270
  %vm1272 = vcmask 785408
  %v1273 = vsel %vm1272, %v1255, %v1257
  %v1274 = vsel %vm1272, %v1257, %v1259
  %v1275 = vsel %vm1272, %v1261, %v1263
  %v1276 = vsel %vm1272, %v1263, %v1265
  %v1277 = vsel %vm1272, %v1267, %v1269
  %v1278 = vsel %vm1272, %v1269, %v1271
  %v1288 = vmax.f32 %v1028, %v1273
  %v1289 = vmax.f32 %v1030, %v1274
  %v1290 = vmax.f32 %v1079, %v1259
  %v1291 = vmax.f32 %v1032, %v1275
  %v1292 = vmax.f32 %v1034, %v1276
  %v1293 = vmax.f32 %v1083, %v1265
  %v1294 = vmax.f32 %v1038, %v1277
  %v1295 = vmax.f32 %v1040, %v1278
  %v1296 = vmax.f32 %v1089, %v1271
  %1306 = vrot.lane.b32.xlu0 %v1181, 96
  %v1307 = vpop.permute.xlu0 %1306
  %1308 = vrot.lane.b32.xlu0 %v1183, 96
  %v1309 = vpop.permute.xlu0 %1308
  %1310 = vrot.lane.b32.xlu0 %v1232, 96
  %v1311 = vpop.permute.xlu0 %1310
  %1312 = vrot.lane.b32.xlu0 %v1185, 96
  %v1313 = vpop.permute.xlu0 %1312
  %1314 = vrot.lane.b32.xlu0 %v1187, 96
  %v1315 = vpop.permute.xlu0 %1314
  %1316 = vrot.lane.b32.xlu0 %v1235, 96
  %v1317 = vpop.permute.xlu0 %1316
  %1318 = vrot.lane.b32.xlu0 %v1191, 96
  %v1319 = vpop.permute.xlu0 %1318
  %1320 = vrot.lane.b32.xlu0 %v1193, 96
  %v1321 = vpop.permute.xlu0 %1320
  %1322 = vrot.lane.b32.xlu0 %v1240, 96
  %v1323 = vpop.permute.xlu0 %1322
  %v1324 = vsel %vm1272, %v1307, %v1309
  %v1325 = vsel %vm1272, %v1309, %v1311
  %v1326 = vsel %vm1272, %v1313, %v1315
  %v1327 = vsel %vm1272, %v1315, %v1317
  %v1328 = vsel %vm1272, %v1319, %v1321
  %v1329 = vsel %vm1272, %v1321, %v1323
  %v1339 = vmax.f32 %v1130, %v1324
  %v1340 = vmax.f32 %v1132, %v1325
  %v1341 = vmax.f32 %v1181, %v1311
  %v1342 = vmax.f32 %v1134, %v1326
  %v1343 = vmax.f32 %v1136, %v1327
  %v1344 = vmax.f32 %v1185, %v1317
  %v1345 = vmax.f32 %v1140, %v1328
  %v1346 = vmax.f32 %v1142, %v1329
  %v1347 = vmax.f32 %v1191, %v1323
  %1357 = vrot.lane.b32.xlu0 %v1339, 64
  %v1358 = vpop.permute.xlu0 %1357
  %1359 = vrot.lane.b32.xlu0 %v1340, 64
  %v1360 = vpop.permute.xlu0 %1359
  %1361 = vrot.lane.b32.xlu0 %v1341, 64
  %v1362 = vpop.permute.xlu0 %1361
  %1363 = vrot.lane.b32.xlu0 %v1342, 64
  %v1364 = vpop.permute.xlu0 %1363
  %1365 = vrot.lane.b32.xlu0 %v1343, 64
  %v1366 = vpop.permute.xlu0 %1365
  %1367 = vrot.lane.b32.xlu0 %v1344, 64
  %v1368 = vpop.permute.xlu0 %1367
  %1369 = vrot.lane.b32.xlu0 %v1345, 64
  %v1370 = vpop.permute.xlu0 %1369
  %1371 = vrot.lane.b32.xlu0 %v1346, 64
  %v1372 = vpop.permute.xlu0 %1371
  %1373 = vrot.lane.b32.xlu0 %v1347, 64
  %v1374 = vpop.permute.xlu0 %1373
  %vm1375 = vcmask 523264
  %v1376 = vsel %vm1375, %v1358, %v1360
  %v1377 = vsel %vm1375, %v1360, %v1362
  %v1378 = vsel %vm1375, %v1364, %v1366
  %v1379 = vsel %vm1375, %v1366, %v1368
  %v1380 = vsel %vm1375, %v1370, %v1372
  %v1381 = vsel %vm1375, %v1372, %v1374
  %v1391 = vmax.f32 %v1288, %v1376
  %v1392 = vmax.f32 %v1289, %v1377
  %v1393 = vmax.f32 %v1290, %v1362
  %v1394 = vmax.f32 %v1291, %v1378
  %v1395 = vmax.f32 %v1292, %v1379
  %v1396 = vmax.f32 %v1293, %v1368
  %v1397 = vmax.f32 %v1294, %v1380
  %v1398 = vmax.f32 %v1295, %v1381
  %v1399 = vmax.f32 %v1296, %v1374
  %v1400 = vld [vmem:[%s2] sm:$0xff]
  %v1401 = vld [vmem:[%s2 + $0x8] sm:$0xff]
  %v1402 = vld [vmem:[%s2 + $0x10] sm:$0xf]
  %1404 = vset.pattern.permute.xlu0 0
  %1405 = vperm.xlu0 %1404, %v1400
  %v1406 = vpop.permute.xlu0 %1405
  %1409 = vset.pattern.permute.xlu0 0
  %1410 = vperm.xlu0 %1409, %v1401
  %v1411 = vpop.permute.xlu0 %1410
  %1414 = vset.pattern.permute.xlu0 0
  %1415 = vperm.xlu0 %1414, %v1402
  %v1416 = vpop.permute.xlu0 %1415
  %v1418 = vadd.f32 %v1391, %v1406
  %v1419 = vadd.f32 %v1392, %v1406
  %v1420 = vadd.f32 %v1393, %v1406
  %v1421 = vadd.f32 %v1394, %v1411
  %v1422 = vadd.f32 %v1395, %v1411
  %v1423 = vadd.f32 %v1396, %v1411
  %v1424 = vadd.f32 %v1397, %v1416
  %v1425 = vadd.f32 %v1398, %v1416
  %v1426 = vadd.f32 %v1399, %v1416
  %v1427 = vmax.f32 %v1418, 0.0
  %v1428 = vmax.f32 %v1419, 0.0
  %v1429 = vmax.f32 %v1420, 0.0
  %v1430 = vmax.f32 %v1421, 0.0
  %v1431 = vmax.f32 %v1422, 0.0
  %v1432 = vmax.f32 %v1423, 0.0
  %v1433 = vmax.f32 %v1424, 0.0
  %v1434 = vmax.f32 %v1425, 0.0
  %v1435 = vmax.f32 %v1426, 0.0
  %v1436 = vld [vmem:[%s9] sm:$0xff]
  %v1437 = vld [vmem:[%s9 + $0x8] sm:$0xff]
  %v1438 = vld [vmem:[%s9 + $0x10] sm:$0xff]
  %v1439 = vld [vmem:[%s9 + $0x18] sm:$0xff]
  %v1440 = vld [vmem:[%s9 + $0x20] sm:$0xff]
  %v1441 = vld [vmem:[%s9 + $0x28] sm:$0xff]
  %v1442 = vld [vmem:[%s9 + $0x30] sm:$0xff]
  %v1443 = vld [vmem:[%s9 + $0x38] sm:$0xff]
  %v1444 = vld [vmem:[%s9 + $0x40] sm:$0xff]
  %v1445 = vld [vmem:[%s9 + $0x48] sm:$0xff]
  %v1446 = vld [vmem:[%s9 + $0x50] sm:$0xff]
  %v1447 = vld [vmem:[%s9 + $0x58] sm:$0xff]
  %v1448 = vld [vmem:[%s9 + $0x60] sm:$0xff]
  %v1449 = vld [vmem:[%s9 + $0x68] sm:$0xff]
  %v1450 = vld [vmem:[%s9 + $0x70] sm:$0xff]
  %v1451 = vld [vmem:[%s9 + $0x78] sm:$0xff]
  %v1452 = vld [vmem:[%s9 + $0x80] sm:$0xff]
  %v1453 = vld [vmem:[%s9 + $0x88] sm:$0xff]
  %v1454 = vld [vmem:[%s9 + $0x90] sm:$0xff]
  %v1455 = vld [vmem:[%s9 + $0x98] sm:$0xff]
  %v1456 = vld [vmem:[%s9 + $0xa0] sm:$0xff]
  %v1457 = vld [vmem:[%s9 + $0xa8] sm:$0xff]
  %v1458 = vld [vmem:[%s9 + $0xb0] sm:$0xff]
  %v1459 = vld [vmem:[%s9 + $0xb8] sm:$0xff]
  %v1460 = vld [vmem:[%s9 + $0xc0] sm:$0xff]
  %v1461 = vld [vmem:[%s9 + $0xc8] sm:$0xff]
  %v1462 = vld [vmem:[%s9 + $0xd0] sm:$0xff]
  %v1463 = vld [vmem:[%s9 + $0xd8] sm:$0xff]
  %v1464 = vld [vmem:[%s9 + $0xe0] sm:$0xff]
  %v1465 = vld [vmem:[%s9 + $0xe8] sm:$0xff]
  %v1466 = vld [vmem:[%s9 + $0xf0] sm:$0xff]
  %v1467 = vld [vmem:[%s9 + $0xf8] sm:$0xff]
  %v1468 = vld [vmem:[%s9 + $0x100] sm:$0xff]
  %v1469 = vld [vmem:[%s9 + $0x108] sm:$0xff]
  %v1470 = vld [vmem:[%s9 + $0x110] sm:$0xff]
  %v1471 = vld [vmem:[%s9 + $0x118] sm:$0xff]
  %vm1472 = vcmask 261120
  %v1474 = vsel %vm1472, %v1429, 0
  %v1477 = vsel %vm1472, %v1432, 0
  %v1480 = vsel %vm1472, %v1435, 0
  %1482 = vmatprep.subr.mxu0 0.0
  %1483 = vmatpush1.msra.mxu0 %v1436
  %1484 = vmatprep.subr.mxu0 0.0
  %1485 = vmatpush1.msra.mxu0 %v1437
  %1486 = vmatprep.subr.mxu0 0.0
  %1487 = vmatpush1.msra.mxu0 %v1438
  %1488 = vmatprep.subr.mxu0 0.0
  %1489 = vmatpush1.msra.mxu0 %v1439
  %1490 = vmatprep.subr.mxu0 0.0
  %1491 = vmatpush1.msra.mxu0 %v1440
  %1492 = vmatprep.subr.mxu0 0.0
  %1493 = vmatpush1.msra.mxu0 %v1441
  %1494 = vmatprep.subr.mxu0 0.0
  %1495 = vmatpush1.msra.mxu0 %v1442
  %1496 = vmatprep.subr.mxu0 0.0
  %1497 = vmatpush1.msra.mxu0 %v1443
  %1498 = vmatprep.subr.mxu0 0.0
  %1499 = vmatpush1.msra.mxu0 %v1444
  %1500 = vmatprep.subr.mxu0 0.0
  %1501 = vmatpush1.msra.mxu0 %v1445
  %1502 = vmatprep.subr.mxu0 0.0
  %1503 = vmatpush1.msra.mxu0 %v1446
  %1504 = vmatprep.subr.mxu0 0.0
  %1505 = vmatpush1.msra.mxu0 %v1447
  %1506 = vmatprep.subr.mxu0 0.0
  %1507 = vmatpush1.msra.mxu0 %v1448
  %1508 = vmatprep.subr.mxu0 0.0
  %1509 = vmatpush1.msra.mxu0 %v1449
  %1510 = vmatprep.subr.mxu0 0.0
  %1511 = vmatpush1.msra.mxu0 %v1450
  %1512 = vmatprep.subr.mxu0 0.0
  %1513 = vmatpush1.msra.mxu0 %v1451
  %1514 = vmatprep.subr.mxu0 0.0
  %1515 = vmatpush1.msra.mxu0 %v1452
  %1516 = vmatprep.subr.mxu0 0.0
  %1517 = vmatpush1.msra.mxu0 %v1453
  %1518 = vmatprep.subr.mxu0 0.0
  %1519 = vmatpush1.msra.mxu0 %v1454
  %1520 = vmatprep.subr.mxu0 0.0
  %1521 = vmatpush1.msra.mxu0 %v1455
  %1522 = vmatprep.subr.mxu0 0.0
  %1523 = vmatpush1.msra.mxu0 %v1456
  %1524 = vmatprep.subr.mxu0 0.0
  %1525 = vmatpush1.msra.mxu0 %v1457
  %1526 = vmatprep.subr.mxu0 0.0
  %1527 = vmatpush1.msra.mxu0 %v1458
  %1528 = vmatprep.subr.mxu0 0.0
  %1529 = vmatpush1.msra.mxu0 %v1459
  %1530 = vmatprep.subr.mxu0 0.0
  %1531 = vmatpush1.msra.mxu0 %v1460
  %1532 = vmatprep.subr.mxu0 0.0
  %1533 = vmatpush1.msra.mxu0 %v1461
  %1534 = vmatprep.subr.mxu0 0.0
  %1535 = vmatpush1.msra.mxu0 %v1462
  %1536 = vmatprep.subr.mxu0 0.0
  %1537 = vmatpush1.msra.mxu0 %v1463
  %1538 = vmatprep.subr.mxu0 0.0
  %1539 = vmatpush1.msra.mxu0 %v1464
  %1540 = vmatprep.subr.mxu0 0.0
  %1541 = vmatpush1.msra.mxu0 %v1465
  %1542 = vmatprep.subr.mxu0 0.0
  %1543 = vmatpush1.msra.mxu0 %v1466
  %1544 = vmatprep.subr.mxu0 0.0
  %1545 = vmatpush1.msra.mxu0 %v1467
  %1546 = vmatprep.mubr.f32.mxu0 %v1428
  %1547 = vmatmul.mubr.f32.gmra.mrb[0].mxu0 %v1427
  %v1548 = vpop.f32.mrb[0].mxu0
  %v1549 = vadd.f32 0.0, %v1548
  %v1550 = vpop.f32.mrb[0].mxu0
  %1551 = vmatprep.mubr.f32.mxu0 %v1431
  %1552 = vmatmul.mubr.f32.gmra.mrb[0].mxu0 %v1430
  %v1553 = vpop.f32.mrb[0].mxu0
  %v1554 = vadd.f32 0.0, %v1553
  %v1555 = vpop.f32.mrb[0].mxu0
  %1556 = vmatprep.mubr.f32.mxu0 %v1434
  %1557 = vmatmul.mubr.f32.gmra.mrb[0].mxu0 %v1433
  %v1558 = vpop.f32.mrb[0].mxu0
  %v1559 = vadd.f32 0.0, %v1558
  %v1560 = vpop.f32.mrb[0].mxu0
  %1561 = vdwg.mxu0
  %1562 = vmatprep.subr.mxu0 0.0
  %1563 = vmatpush1.msra.mxu0 %v1468
  %1564 = vmatprep.subr.mxu0 0.0
  %1565 = vmatpush1.msra.mxu0 %v1469
  %1566 = vmatprep.subr.mxu0 0.0
  %1567 = vmatpush1.msra.mxu0 %v1470
  %1568 = vmatprep.subr.mxu0 0.0
  %1569 = vmatpush1.msra.mxu0 %v1471
  %1570 = vmatprep.subr.mxu0 0.0
  %1571 = vmatpush1.msra.mxu0 0.0
  %1572 = vmatprep.subr.mxu0 0.0
  %1573 = vmatpush1.msra.mxu0 0.0
  %1574 = vmatprep.subr.mxu0 0.0
  %1575 = vmatpush1.msra.mxu0 0.0
  %1576 = vmatprep.subr.mxu0 0.0
  %1577 = vmatpush1.msra.mxu0 0.0
  %1578 = vmatprep.subr.mxu0 0.0
  %1579 = vmatpush1.msra.mxu0 0.0
  %1580 = vmatprep.subr.mxu0 0.0
  %1581 = vmatpush1.msra.mxu0 0.0
  %1582 = vmatprep.subr.mxu0 0.0
  %1583 = vmatpush1.msra.mxu0 0.0
  %1584 = vmatprep.subr.mxu0 0.0
  %1585 = vmatpush1.msra.mxu0 0.0
  %1586 = vmatprep.subr.mxu0 0.0
  %1587 = vmatpush1.msra.mxu0 0.0
  %1588 = vmatprep.subr.mxu0 0.0
  %1589 = vmatpush1.msra.mxu0 0.0
  %1590 = vmatprep.subr.mxu0 0.0
  %1591 = vmatpush1.msra.mxu0 0.0
  %1592 = vmatprep.subr.mxu0 0.0
  %1593 = vmatpush1.msra.mxu0 0.0
  %1594 = vmatprep.subr.mxu0 0.0
  %1595 = vmatpush1.msra.mxu0 0.0
  %1596 = vmatprep.subr.mxu0 0.0
  %1597 = vmatpush1.msra.mxu0 0.0
  %1598 = vmatprep.subr.mxu0 0.0
  %1599 = vmatpush1.msra.mxu0 0.0
  %1600 = vmatprep.subr.mxu0 0.0
  %1601 = vmatpush1.msra.mxu0 0.0
  %1602 = vmatprep.subr.mxu0 0.0
  %1603 = vmatpush1.msra.mxu0 0.0
  %1604 = vmatprep.subr.mxu0 0.0
  %1605 = vmatpush1.msra.mxu0 0.0
  %1606 = vmatprep.subr.mxu0 0.0
  %1607 = vmatpush1.msra.mxu0 0.0
  %1608 = vmatprep.subr.mxu0 0.0
  %1609 = vmatpush1.msra.mxu0 0.0
  %1610 = vmatprep.subr.mxu0 0.0
  %1611 = vmatpush1.msra.mxu0 0.0
  %1612 = vmatprep.subr.mxu0 0.0
  %1613 = vmatpush1.msra.mxu0 0.0
  %1614 = vmatprep.subr.mxu0 0.0
  %1615 = vmatpush1.msra.mxu0 0.0
  %1616 = vmatprep.subr.mxu0 0.0
  %1617 = vmatpush1.msra.mxu0 0.0
  %1618 = vmatprep.subr.mxu0 0.0
  %1619 = vmatpush1.msra.mxu0 0.0
  %1620 = vmatprep.subr.mxu0 0.0
  %1621 = vmatpush1.msra.mxu0 0.0
  %1622 = vmatprep.subr.mxu0 0.0
  %1623 = vmatpush1.msra.mxu0 0.0
  %1624 = vmatprep.subr.mxu0 0.0
  %1625 = vmatpush1.msra.mxu0 0.0
  %1626 = vmatprep.mubr.f32.mxu0 0.0
  %1627 = vmatmul.mubr.f32.gmra.mrb[0].mxu0 %v1474
  %v1628 = vpop.f32.mrb[0].mxu0
  %v1629 = vadd.f32 %v1549, %v1628
  %v1630 = vpop.f32.mrb[0].mxu0
  %1631 = vmatprep.mubr.f32.mxu0 0.0
  %1632 = vmatmul.mubr.f32.gmra.mrb[0].mxu0 %v1477
  %v1633 = vpop.f32.mrb[0].mxu0
  %v1634 = vadd.f32 %v1554, %v1633
  %v1635 = vpop.f32.mrb[0].mxu0
  %1636 = vmatprep.mubr.f32.mxu0 0.0
  %1637 = vmatmul.mubr.f32.gmra.mrb[0].mxu0 %v1480
  %v1638 = vpop.f32.mrb[0].mxu0
  %v1639 = vadd.f32 %v1559, %v1638
  %v1640 = vpop.f32.mrb[0].mxu0
  %1641 = vdwg.mxu0
  %v1642 = vld [vmem:[%s3] sm:$0xff]
  %v1643 = vld [vmem:[%s3 + $0x8] sm:$0x3]
  %v1644 = vld [vmem:[%s4] sm:$0xff]
  %v1645 = vld [vmem:[%s4 + $0x8] sm:$0x3]
  %1647 = vset.pattern.permute.xlu0 0
  %1648 = vperm.xlu0 %1647, %v1644
  %v1649 = vpop.permute.xlu0 %1648
  %1652 = vset.pattern.permute.xlu0 0
  %1653 = vperm.xlu0 %1652, %v1645
  %v1654 = vpop.permute.xlu0 %1653
  %vm1656 = vcmask 162816
  %v1658 = vsel %vm1656, %v1642, 0
  %v1661 = vsel %vm1656, %v1643, 0
  %vm1663 = vcmask 1043456
  %v1665 = vsel %vm1663, %v1639, 0
  %1667 = vmatprep.subr.mxu0 0.0
  %1668 = vmatpush1.msra.mxu0 %v1629
  %1669 = vmatprep.subr.mxu0 0.0
  %1670 = vmatpush1.msra.mxu0 %v1634
  %1671 = vmatprep.subr.mxu0 0.0
  %1672 = vmatpush1.msra.mxu0 %v1665
  %1673 = vmatprep.subr.mxu0 0.0
  %1674 = vmatpush1.msra.mxu0 0.0
  %1675 = vmatprep.subr.mxu0 0.0
  %1676 = vmatpush1.msra.mxu0 0.0
  %1677 = vmatprep.subr.mxu0 0.0
  %1678 = vmatpush1.msra.mxu0 0.0
  %1679 = vmatprep.subr.mxu0 0.0
  %1680 = vmatpush1.msra.mxu0 0.0
  %1681 = vmatprep.subr.mxu0 0.0
  %1682 = vmatpush1.msra.mxu0 0.0
  %1683 = vmatprep.subr.mxu0 0.0
  %1684 = vmatpush1.msra.mxu0 0.0
  %1685 = vmatprep.subr.mxu0 0.0
  %1686 = vmatpush1.msra.mxu0 0.0
  %1687 = vmatprep.subr.mxu0 0.0
  %1688 = vmatpush1.msra.mxu0 0.0
  %1689 = vmatprep.subr.mxu0 0.0
  %1690 = vmatpush1.msra.mxu0 0.0
  %1691 = vmatprep.subr.mxu0 0.0
  %1692 = vmatpush1.msra.mxu0 0.0
  %1693 = vmatprep.subr.mxu0 0.0
  %1694 = vmatpush1.msra.mxu0 0.0
  %1695 = vmatprep.subr.mxu0 0.0
  %1696 = vmatpush1.msra.mxu0 0.0
  %1697 = vmatprep.subr.mxu0 0.0
  %1698 = vmatpush1.msra.mxu0 0.0
  %1699 = vmatprep.subr.mxu0 0.0
  %1700 = vmatpush1.msra.mxu0 0.0
  %1701 = vmatprep.subr.mxu0 0.0
  %1702 = vmatpush1.msra.mxu0 0.0
  %1703 = vmatprep.subr.mxu0 0.0
  %1704 = vmatpush1.msra.mxu0 0.0
  %1705 = vmatprep.subr.mxu0 0.0
  %1706 = vmatpush1.msra.mxu0 0.0
  %1707 = vmatprep.subr.mxu0 0.0
  %1708 = vmatpush1.msra.mxu0 0.0
  %1709 = vmatprep.subr.mxu0 0.0
  %1710 = vmatpush1.msra.mxu0 0.0
  %1711 = vmatprep.subr.mxu0 0.0
  %1712 = vmatpush1.msra.mxu0 0.0
  %1713 = vmatprep.subr.mxu0 0.0
  %1714 = vmatpush1.msra.mxu0 0.0
  %1715 = vmatprep.subr.mxu0 0.0
  %1716 = vmatpush1.msra.mxu0 0.0
  %1717 = vmatprep.subr.mxu0 0.0
  %1718 = vmatpush1.msra.mxu0 0.0
  %1719 = vmatprep.subr.mxu0 0.0
  %1720 = vmatpush1.msra.mxu0 0.0
  %1721 = vmatprep.subr.mxu0 0.0
  %1722 = vmatpush1.msra.mxu0 0.0
  %1723 = vmatprep.subr.mxu0 0.0
  %1724 = vmatpush1.msra.mxu0 0.0
  %1725 = vmatprep.subr.mxu0 0.0
  %1726 = vmatpush1.msra.mxu0 0.0
  %1727 = vmatprep.subr.mxu0 0.0
  %1728 = vmatpush1.msra.mxu0 0.0
  %1729 = vmatprep.subr.mxu0 0.0
  %1730 = vmatpush1.msra.mxu0 0.0
  %1731 = vmatprep.mubr.f32.mxu0 0.0
  %1732 = vmatmul.mubr.f32.gmra.mrb[0].mxu0 %v1658
  %v1733 = vpop.f32.mrb[0].mxu0
  %v1734 = vadd.f32 %v1649, %v1733
  %v1735 = vpop.f32.mrb[0].mxu0
  %1736 = vmatprep.mubr.f32.mxu0 0.0
  %1737 = vmatmul.mubr.f32.gmra.mrb[0].mxu0 %v1661
  %v1738 = vpop.f32.mrb[0].mxu0
  %v1739 = vadd.f32 %v1654, %v1738
  %v1740 = vpop.f32.mrb[0].mxu0
  %1741 = vdwg.mxu0
  %v1742 = vmax.f32 %v1734, 0.0
  %v1743 = vmax.f32 %v1739, 0.0
  %v1744 = vld [vmem:[%s5] sm:$0xff]
  %v1745 = vld [vmem:[%s5 + $0x8] sm:$0xff]
  %v1746 = vld [vmem:[%s5 + $0x10] sm:$0xf]
  %v1747 = vld [vmem:[%s6] sm:$0xff]
  %v1748 = vld [vmem:[%s6 + $0x8] sm:$0xff]
  %v1749 = vld [vmem:[%s6 + $0x10] sm:$0xf]
  %1751 = vset.pattern.permute.xlu0 0
  %1752 = vperm.xlu0 %1751, %v1747
  %v1753 = vpop.permute.xlu0 %1752
  %1756 = vset.pattern.permute.xlu0 0
  %1757 = vperm.xlu0 %1756, %v1748
  %v1758 = vpop.permute.xlu0 %1757
  %1761 = vset.pattern.permute.xlu0 0
  %1762 = vperm.xlu0 %1761, %v1749
  %v1763 = vpop.permute.xlu0 %1762
  %vm1765 = vcmask 80896
  %v1767 = vsel %vm1765, %v1744, 0
  %v1770 = vsel %vm1765, %v1745, 0
  %v1773 = vsel %vm1765, %v1746, 0
  %vm1775 = vcmask 1041408
  %v1777 = vsel %vm1775, %v1743, 0
  %1779 = vmatprep.subr.mxu0 0.0
  %1780 = vmatpush1.msra.mxu0 %v1742
  %1781 = vmatprep.subr.mxu0 0.0
  %1782 = vmatpush1.msra.mxu0 %v1777
  %1783 = vmatprep.subr.mxu0 0.0
  %1784 = vmatpush1.msra.mxu0 0.0
  %1785 = vmatprep.subr.mxu0 0.0
  %1786 = vmatpush1.msra.mxu0 0.0
  %1787 = vmatprep.subr.mxu0 0.0
  %1788 = vmatpush1.msra.mxu0 0.0
  %1789 = vmatprep.subr.mxu0 0.0
  %1790 = vmatpush1.msra.mxu0 0.0
  %1791 = vmatprep.subr.mxu0 0.0
  %1792 = vmatpush1.msra.mxu0 0.0
  %1793 = vmatprep.subr.mxu0 0.0
  %1794 = vmatpush1.msra.mxu0 0.0
  %1795 = vmatprep.subr.mxu0 0.0
  %1796 = vmatpush1.msra.mxu0 0.0
  %1797 = vmatprep.subr.mxu0 0.0
  %1798 = vmatpush1.msra.mxu0 0.0
  %1799 = vmatprep.subr.mxu0 0.0
  %1800 = vmatpush1.msra.mxu0 0.0
  %1801 = vmatprep.subr.mxu0 0.0
  %1802 = vmatpush1.msra.mxu0 0.0
  %1803 = vmatprep.subr.mxu0 0.0
  %1804 = vmatpush1.msra.mxu0 0.0
  %1805 = vmatprep.subr.mxu0 0.0
  %1806 = vmatpush1.msra.mxu0 0.0
  %1807 = vmatprep.subr.mxu0 0.0
  %1808 = vmatpush1.msra.mxu0 0.0
  %1809 = vmatprep.subr.mxu0 0.0
  %1810 = vmatpush1.msra.mxu0 0.0
  %1811 = vmatprep.subr.mxu0 0.0
  %1812 = vmatpush1.msra.mxu0 0.0
  %1813 = vmatprep.subr.mxu0 0.0
  %1814 = vmatpush1.msra.mxu0 0.0
  %1815 = vmatprep.subr.mxu0 0.0
  %1816 = vmatpush1.msra.mxu0 0.0
  %1817 = vmatprep.subr.mxu0 0.0
  %1818 = vmatpush1.msra.mxu0 0.0
  %1819 = vmatprep.subr.mxu0 0.0
  %1820 = vmatpush1.msra.mxu0 0.0
  %1821 = vmatprep.subr.mxu0 0.0
  %1822 = vmatpush1.msra.mxu0 0.0
  %1823 = vmatprep.subr.mxu0 0.0
  %1824 = vmatpush1.msra.mxu0 0.0
  %1825 = vmatprep.subr.mxu0 0.0
  %1826 = vmatpush1.msra.mxu0 0.0
  %1827 = vmatprep.subr.mxu0 0.0
  %1828 = vmatpush1.msra.mxu0 0.0
  %1829 = vmatprep.subr.mxu0 0.0
  %1830 = vmatpush1.msra.mxu0 0.0
  %1831 = vmatprep.subr.mxu0 0.0
  %1832 = vmatpush1.msra.mxu0 0.0
  %1833 = vmatprep.subr.mxu0 0.0
  %1834 = vmatpush1.msra.mxu0 0.0
  %1835 = vmatprep.subr.mxu0 0.0
  %1836 = vmatpush1.msra.mxu0 0.0
  %1837 = vmatprep.subr.mxu0 0.0
  %1838 = vmatpush1.msra.mxu0 0.0
  %1839 = vmatprep.subr.mxu0 0.0
  %1840 = vmatpush1.msra.mxu0 0.0
  %1841 = vmatprep.subr.mxu0 0.0
  %1842 = vmatpush1.msra.mxu0 0.0
  %1843 = vmatprep.mubr.f32.mxu0 0.0
  %1844 = vmatmul.mubr.f32.gmra.mrb[0].mxu0 %v1767
  %v1845 = vpop.f32.mrb[0].mxu0
  %v1846 = vadd.f32 %v1753, %v1845
  %v1847 = vpop.f32.mrb[0].mxu0
  %1848 = vmatprep.mubr.f32.mxu0 0.0
  %1849 = vmatmul.mubr.f32.gmra.mrb[0].mxu0 %v1770
  %v1850 = vpop.f32.mrb[0].mxu0
  %v1851 = vadd.f32 %v1758, %v1850
  %v1852 = vpop.f32.mrb[0].mxu0
  %1853 = vmatprep.mubr.f32.mxu0 0.0
  %1854 = vmatmul.mubr.f32.gmra.mrb[0].mxu0 %v1773
  %v1855 = vpop.f32.mrb[0].mxu0
  %v1856 = vadd.f32 %v1763, %v1855
  %v1857 = vpop.f32.mrb[0].mxu0
  %1858 = vdwg.mxu0
  %v1859 = vsub.f32 0.0, %v1846
  %v1860 = vsub.f32 0.0, %v1851
  %v1861 = vsub.f32 0.0, %v1856
  %v1862 = vmul.f32 %v1859, 1.442695
  %v1863 = vpow.pop %v1862
  %v1864 = vmul.f32 %v1860, 1.442695
  %v1865 = vpow.pop %v1864
  %v1866 = vmul.f32 %v1861, 1.442695
  %v1867 = vpow.pop %v1866
  %v1868 = vadd.f32 %v1863, 1.0
  %v1869 = vadd.f32 %v1865, 1.0
  %v1870 = vadd.f32 %v1867, 1.0
  %v1871 = vrcp.pop %v1868
  %v1872 = vmul.f32 1.0, %v1871
  %v1873 = vrcp.pop %v1869
  %v1874 = vmul.f32 1.0, %v1873
  %v1875 = vrcp.pop %v1870
  %v1876 = vmul.f32 1.0, %v1875
  %v1877 = vld [vmem:[%s10] sm:$0xff]
  %v1878 = vld [vmem:[%s10 + $0x8] sm:$0xff]
  %v1879 = vld [vmem:[%s10 + $0x10] sm:$0xff]
  %v1880 = vld [vmem:[%s7] sm:$0x1]
  %v1881 = vld [vmem:[#allocation2] sm:$0x1]
  %1883 = vset.pattern.permute.xlu0 0
  %1884 = vperm.xlu0 %1883, %v1881
  %v1885 = vpop.permute.xlu0 %1884
  %v1887 = vlaneseq
  %v1888 = vshrl.u32 %v1887, 7
  %v1889 = vsub.s32 0, %v1888
  %v1890 = vrot.slane %v1885, %v1889
  %v1892 = vsel %vm1656, %v1880, 0
  %v1895 = vsel %vm1663, %v1433, 0
  %v1898 = vsel %vm1663, %v1434, 0
  %v1900 = vsel %vm1663, %v1435, 0
  %1902 = vmatprep.subr.mxu0 %v1428
  %1903 = vmatpush1.msra.mxu0 %v1427
  %1904 = vmatprep.subr.mxu0 %v1431
  %1905 = vmatpush1.msra.mxu0 %v1430
  %1906 = vmatprep.subr.mxu0 %v1898
  %1907 = vmatpush1.msra.mxu0 %v1895
  %1908 = vmatprep.subr.mxu0 0.0
  %1909 = vmatpush1.msra.mxu0 0.0
  %1910 = vmatprep.subr.mxu0 0.0
  %1911 = vmatpush1.msra.mxu0 0.0
  %1912 = vmatprep.subr.mxu0 0.0
  %1913 = vmatpush1.msra.mxu0 0.0
  %1914 = vmatprep.subr.mxu0 0.0
  %1915 = vmatpush1.msra.mxu0 0.0
  %1916 = vmatprep.subr.mxu0 0.0
  %1917 = vmatpush1.msra.mxu0 0.0
  %1918 = vmatprep.subr.mxu0 0.0
  %1919 = vmatpush1.msra.mxu0 0.0
  %1920 = vmatprep.subr.mxu0 0.0
  %1921 = vmatpush1.msra.mxu0 0.0
  %1922 = vmatprep.subr.mxu0 0.0
  %1923 = vmatpush1.msra.mxu0 0.0
  %1924 = vmatprep.subr.mxu0 0.0
  %1925 = vmatpush1.msra.mxu0 0.0
  %1926 = vmatprep.subr.mxu0 0.0
  %1927 = vmatpush1.msra.mxu0 0.0
  %1928 = vmatprep.subr.mxu0 0.0
  %1929 = vmatpush1.msra.mxu0 0.0
  %1930 = vmatprep.subr.mxu0 0.0
  %1931 = vmatpush1.msra.mxu0 0.0
  %1932 = vmatprep.subr.mxu0 0.0
  %1933 = vmatpush1.msra.mxu0 0.0
  %1934 = vmatprep.subr.mxu0 0.0
  %1935 = vmatpush1.msra.mxu0 0.0
  %1936 = vmatprep.subr.mxu0 0.0
  %1937 = vmatpush1.msra.mxu0 0.0
  %1938 = vmatprep.subr.mxu0 0.0
  %1939 = vmatpush1.msra.mxu0 0.0
  %1940 = vmatprep.subr.mxu0 0.0
  %1941 = vmatpush1.msra.mxu0 0.0
  %1942 = vmatprep.subr.mxu0 0.0
  %1943 = vmatpush1.msra.mxu0 0.0
  %1944 = vmatprep.subr.mxu0 0.0
  %1945 = vmatpush1.msra.mxu0 0.0
  %1946 = vmatprep.subr.mxu0 0.0
  %1947 = vmatpush1.msra.mxu0 0.0
  %1948 = vmatprep.subr.mxu0 0.0
  %1949 = vmatpush1.msra.mxu0 0.0
  %1950 = vmatprep.subr.mxu0 0.0
  %1951 = vmatpush1.msra.mxu0 0.0
  %1952 = vmatprep.subr.mxu0 0.0
  %1953 = vmatpush1.msra.mxu0 0.0
  %1954 = vmatprep.subr.mxu0 0.0
  %1955 = vmatpush1.msra.mxu0 0.0
  %1956 = vmatprep.subr.mxu0 0.0
  %1957 = vmatpush1.msra.mxu0 0.0
  %1958 = vmatprep.subr.mxu0 0.0
  %1959 = vmatpush1.msra.mxu0 0.0
  %1960 = vmatprep.subr.mxu0 0.0
  %1961 = vmatpush1.msra.mxu0 0.0
  %1962 = vmatprep.subr.mxu0 0.0
  %1963 = vmatpush1.msra.mxu0 0.0
  %1964 = vmatprep.subr.mxu0 0.0
  %1965 = vmatpush1.msra.mxu0 0.0
  %1966 = vmatprep.mubr.f32.mxu0 0.0
  %1967 = vmatmul.mubr.f32.gmra.mrb[0].mxu0 %v1892
  %v1968 = vpop.f32.mrb[0].mxu0
  %v1969 = vadd.f32 %v1890, %v1968
  %v1970 = vpop.f32.mrb[0].mxu0
  %v1971 = vadd.f32 %v1890, %v1970
  %1972 = vdwg.mxu0
  %1973 = vmatprep.subr.mxu0 0.0
  %1974 = vmatpush1.msra.mxu0 %v1429
  %1975 = vmatprep.subr.mxu0 0.0
  %1976 = vmatpush1.msra.mxu0 %v1432
  %1977 = vmatprep.subr.mxu0 0.0
  %1978 = vmatpush1.msra.mxu0 %v1900
  %1979 = vmatprep.subr.mxu0 0.0
  %1980 = vmatpush1.msra.mxu0 0.0
  %1981 = vmatprep.subr.mxu0 0.0
  %1982 = vmatpush1.msra.mxu0 0.0
  %1983 = vmatprep.subr.mxu0 0.0
  %1984 = vmatpush1.msra.mxu0 0.0
  %1985 = vmatprep.subr.mxu0 0.0
  %1986 = vmatpush1.msra.mxu0 0.0
  %1987 = vmatprep.subr.mxu0 0.0
  %1988 = vmatpush1.msra.mxu0 0.0
  %1989 = vmatprep.subr.mxu0 0.0
  %1990 = vmatpush1.msra.mxu0 0.0
  %1991 = vmatprep.subr.mxu0 0.0
  %1992 = vmatpush1.msra.mxu0 0.0
  %1993 = vmatprep.subr.mxu0 0.0
  %1994 = vmatpush1.msra.mxu0 0.0
  %1995 = vmatprep.subr.mxu0 0.0
  %1996 = vmatpush1.msra.mxu0 0.0
  %1997 = vmatprep.subr.mxu0 0.0
  %1998 = vmatpush1.msra.mxu0 0.0
  %1999 = vmatprep.subr.mxu0 0.0
  %2000 = vmatpush1.msra.mxu0 0.0
  %2001 = vmatprep.subr.mxu0 0.0
  %2002 = vmatpush1.msra.mxu0 0.0
  %2003 = vmatprep.subr.mxu0 0.0
  %2004 = vmatpush1.msra.mxu0 0.0
  %2005 = vmatprep.subr.mxu0 0.0
  %2006 = vmatpush1.msra.mxu0 0.0
  %2007 = vmatprep.subr.mxu0 0.0
  %2008 = vmatpush1.msra.mxu0 0.0
  %2009 = vmatprep.subr.mxu0 0.0
  %2010 = vmatpush1.msra.mxu0 0.0
  %2011 = vmatprep.subr.mxu0 0.0
  %2012 = vmatpush1.msra.mxu0 0.0
  %2013 = vmatprep.subr.mxu0 0.0
  %2014 = vmatpush1.msra.mxu0 0.0
  %2015 = vmatprep.subr.mxu0 0.0
  %2016 = vmatpush1.msra.mxu0 0.0
  %2017 = vmatprep.subr.mxu0 0.0
  %2018 = vmatpush1.msra.mxu0 0.0
  %2019 = vmatprep.subr.mxu0 0.0
  %2020 = vmatpush1.msra.mxu0 0.0
  %2021 = vmatprep.subr.mxu0 0.0
  %2022 = vmatpush1.msra.mxu0 0.0
  %2023 = vmatprep.subr.mxu0 0.0
  %2024 = vmatpush1.msra.mxu0 0.0
  %2025 = vmatprep.subr.mxu0 0.0
  %2026 = vmatpush1.msra.mxu0 0.0
  %2027 = vmatprep.subr.mxu0 0.0
  %2028 = vmatpush1.msra.mxu0 0.0
  %2029 = vmatprep.subr.mxu0 0.0
  %2030 = vmatpush1.msra.mxu0 0.0
  %2031 = vmatprep.subr.mxu0 0.0
  %2032 = vmatpush1.msra.mxu0 0.0
  %2033 = vmatprep.subr.mxu0 0.0
  %2034 = vmatpush1.msra.mxu0 0.0
  %2035 = vmatprep.subr.mxu0 0.0
  %2036 = vmatpush1.msra.mxu0 0.0
  %2037 = vmatprep.mubr.f32.mxu0 0.0
  %2038 = vmatmul.mubr.f32.gmra.mrb[0].mxu0 %v1892
  %v2039 = vpop.f32.mrb[0].mxu0
  %v2040 = vadd.f32 %v1890, %v2039
  %v2041 = vpop.f32.mrb[0].mxu0
  %2042 = vdwg.mxu0
  %v2043 = vsub.f32 0.0, %v1969
  %v2044 = vsub.f32 0.0, %v1971
  %v2045 = vsub.f32 0.0, %v2040
  %v2046 = vmul.f32 %v2043, 1.442695
  %v2047 = vpow.pop %v2046
  %v2048 = vmul.f32 %v2044, 1.442695
  %v2049 = vpow.pop %v2048
  %v2050 = vmul.f32 %v2045, 1.442695
  %v2051 = vpow.pop %v2050
  %v2052 = vadd.f32 %v2047, 1.0
  %v2053 = vadd.f32 %v2049, 1.0
  %v2054 = vadd.f32 %v2051, 1.0
  %v2055 = vrcp.pop %v2052
  %v2056 = vmul.f32 1.0, %v2055
  %v2057 = vrcp.pop %v2053
  %v2058 = vmul.f32 1.0, %v2057
  %v2059 = vrcp.pop %v2054
  %v2060 = vmul.f32 1.0, %v2059
  %v2061 = vlaneseq
  %v2062 = vshrl.u32 %v2061, 7
  %v2063 = vsub.s32 0, %v2062
  %v2064 = vrot.slane %v2056, %v2063
  %v2065 = vlaneseq
  %v2066 = vshrl.u32 %v2065, 7
  %v2067 = vsub.s32 0, %v2066
  %v2068 = vrot.slane %v2058, %v2067
  %v2069 = vlaneseq
  %v2070 = vshrl.u32 %v2069, 7
  %v2071 = vsub.s32 0, %v2070
  %v2072 = vrot.slane %v2060, %v2071
  %vm2073 = vcmask 64512
  %v2075 = vsel %vm2073, %v1872, 0
  %v2078 = vsel %vm2073, %v1874, 0
  %v2081 = vsel %vm2073, %v1876, 0
  %2083 = vmatprep.subr.mxu0 %v1878
  %2084 = vmatpush1.msra.mxu0 %v1877
  %2085 = vmatprep.subr.mxu0 0.0
  %2086 = vmatpush1.msra.mxu0 0.0
  %2087 = vmatprep.subr.mxu0 0.0
  %2088 = vmatpush1.msra.mxu0 0.0
  %2089 = vmatprep.subr.mxu0 0.0
  %2090 = vmatpush1.msra.mxu0 0.0
  %2091 = vmatprep.subr.mxu0 0.0
  %2092 = vmatpush1.msra.mxu0 0.0
  %2093 = vmatprep.subr.mxu0 0.0
  %2094 = vmatpush1.msra.mxu0 0.0
  %2095 = vmatprep.subr.mxu0 0.0
  %2096 = vmatpush1.msra.mxu0 0.0
  %2097 = vmatprep.subr.mxu0 0.0
  %2098 = vmatpush1.msra.mxu0 0.0
  %2099 = vmatprep.subr.mxu0 0.0
  %2100 = vmatpush1.msra.mxu0 0.0
  %2101 = vmatprep.subr.mxu0 0.0
  %2102 = vmatpush1.msra.mxu0 0.0
  %2103 = vmatprep.subr.mxu0 0.0
  %2104 = vmatpush1.msra.mxu0 0.0
  %2105 = vmatprep.subr.mxu0 0.0
  %2106 = vmatpush1.msra.mxu0 0.0
  %2107 = vmatprep.subr.mxu0 0.0
  %2108 = vmatpush1.msra.mxu0 0.0
  %2109 = vmatprep.subr.mxu0 0.0
  %2110 = vmatpush1.msra.mxu0 0.0
  %2111 = vmatprep.subr.mxu0 0.0
  %2112 = vmatpush1.msra.mxu0 0.0
  %2113 = vmatprep.subr.mxu0 0.0
  %2114 = vmatpush1.msra.mxu0 0.0
  %2115 = vmatprep.subr.mxu0 0.0
  %2116 = vmatpush1.msra.mxu0 0.0
  %2117 = vmatprep.subr.mxu0 0.0
  %2118 = vmatpush1.msra.mxu0 0.0
  %2119 = vmatprep.subr.mxu0 0.0
  %2120 = vmatpush1.msra.mxu0 0.0
  %2121 = vmatprep.subr.mxu0 0.0
  %2122 = vmatpush1.msra.mxu0 0.0
  %2123 = vmatprep.subr.mxu0 0.0
  %2124 = vmatpush1.msra.mxu0 0.0
  %2125 = vmatprep.subr.mxu0 0.0
  %2126 = vmatpush1.msra.mxu0 0.0
  %2127 = vmatprep.subr.mxu0 0.0
  %2128 = vmatpush1.msra.mxu0 0.0
  %2129 = vmatprep.subr.mxu0 0.0
  %2130 = vmatpush1.msra.mxu0 0.0
  %2131 = vmatprep.subr.mxu0 0.0
  %2132 = vmatpush1.msra.mxu0 0.0
  %2133 = vmatprep.subr.mxu0 0.0
  %2134 = vmatpush1.msra.mxu0 0.0
  %2135 = vmatprep.subr.mxu0 0.0
  %2136 = vmatpush1.msra.mxu0 0.0
  %2137 = vmatprep.subr.mxu0 0.0
  %2138 = vmatpush1.msra.mxu0 0.0
  %2139 = vmatprep.subr.mxu0 0.0
  %2140 = vmatpush1.msra.mxu0 0.0
  %2141 = vmatprep.subr.mxu0 0.0
  %2142 = vmatpush1.msra.mxu0 0.0
  %2143 = vmatprep.subr.mxu0 0.0
  %2144 = vmatpush1.msra.mxu0 0.0
  %2145 = vmatprep.subr.mxu0 0.0
  %2146 = vmatpush1.msra.mxu0 0.0
  %2147 = vmatprep.mubr.f32.mxu0 0.0
  %2148 = vmatmul.mubr.f32.gmra.mrb[0].mxu0 %v2075
  %v2149 = vpop.f32.mrb[0].mxu0
  %v2150 = vadd.f32 %v2064, %v2149
  %v2151 = vpop.f32.mrb[0].mxu0
  %v2152 = vadd.f32 %v2068, %v2151
  %2153 = vmatprep.mubr.f32.mxu0 0.0
  %2154 = vmatmul.mubr.f32.gmra.mrb[0].mxu0 %v2078
  %v2155 = vpop.f32.mrb[0].mxu0
  %v2156 = vadd.f32 %v2064, %v2155
  %v2157 = vpop.f32.mrb[0].mxu0
  %v2158 = vadd.f32 %v2068, %v2157
  %2159 = vmatprep.mubr.f32.mxu0 0.0
  %2160 = vmatmul.mubr.f32.gmra.mrb[0].mxu0 %v2081
  %v2161 = vpop.f32.mrb[0].mxu0
  %v2162 = vadd.f32 %v2064, %v2161
  %v2163 = vpop.f32.mrb[0].mxu0
  %v2164 = vadd.f32 %v2068, %v2163
  %2165 = vdwg.mxu0
  %2166 = vmatprep.subr.mxu0 0.0
  %2167 = vmatpush1.msra.mxu0 %v1879
  %2168 = vmatprep.subr.mxu0 0.0
  %2169 = vmatpush1.msra.mxu0 0.0
  %2170 = vmatprep.subr.mxu0 0.0
  %2171 = vmatpush1.msra.mxu0 0.0
  %2172 = vmatprep.subr.mxu0 0.0
  %2173 = vmatpush1.msra.mxu0 0.0
  %2174 = vmatprep.subr.mxu0 0.0
  %2175 = vmatpush1.msra.mxu0 0.0
  %2176 = vmatprep.subr.mxu0 0.0
  %2177 = vmatpush1.msra.mxu0 0.0
  %2178 = vmatprep.subr.mxu0 0.0
  %2179 = vmatpush1.msra.mxu0 0.0
  %2180 = vmatprep.subr.mxu0 0.0
  %2181 = vmatpush1.msra.mxu0 0.0
  %2182 = vmatprep.subr.mxu0 0.0
  %2183 = vmatpush1.msra.mxu0 0.0
  %2184 = vmatprep.subr.mxu0 0.0
  %2185 = vmatpush1.msra.mxu0 0.0
  %2186 = vmatprep.subr.mxu0 0.0
  %2187 = vmatpush1.msra.mxu0 0.0
  %2188 = vmatprep.subr.mxu0 0.0
  %2189 = vmatpush1.msra.mxu0 0.0
  %2190 = vmatprep.subr.mxu0 0.0
  %2191 = vmatpush1.msra.mxu0 0.0
  %2192 = vmatprep.subr.mxu0 0.0
  %2193 = vmatpush1.msra.mxu0 0.0
  %2194 = vmatprep.subr.mxu0 0.0
  %2195 = vmatpush1.msra.mxu0 0.0
  %2196 = vmatprep.subr.mxu0 0.0
  %2197 = vmatpush1.msra.mxu0 0.0
  %2198 = vmatprep.subr.mxu0 0.0
  %2199 = vmatpush1.msra.mxu0 0.0
  %2200 = vmatprep.subr.mxu0 0.0
  %2201 = vmatpush1.msra.mxu0 0.0
  %2202 = vmatprep.subr.mxu0 0.0
  %2203 = vmatpush1.msra.mxu0 0.0
  %2204 = vmatprep.subr.mxu0 0.0
  %2205 = vmatpush1.msra.mxu0 0.0
  %2206 = vmatprep.subr.mxu0 0.0
  %2207 = vmatpush1.msra.mxu0 0.0
  %2208 = vmatprep.subr.mxu0 0.0
  %2209 = vmatpush1.msra.mxu0 0.0
  %2210 = vmatprep.subr.mxu0 0.0
  %2211 = vmatpush1.msra.mxu0 0.0
  %2212 = vmatprep.subr.mxu0 0.0
  %2213 = vmatpush1.msra.mxu0 0.0
  %2214 = vmatprep.subr.mxu0 0.0
  %2215 = vmatpush1.msra.mxu0 0.0
  %2216 = vmatprep.subr.mxu0 0.0
  %2217 = vmatpush1.msra.mxu0 0.0
  %2218 = vmatprep.subr.mxu0 0.0
  %2219 = vmatpush1.msra.mxu0 0.0
  %2220 = vmatprep.subr.mxu0 0.0
  %2221 = vmatpush1.msra.mxu0 0.0
  %2222 = vmatprep.subr.mxu0 0.0
  %2223 = vmatpush1.msra.mxu0 0.0
  %2224 = vmatprep.subr.mxu0 0.0
  %2225 = vmatpush1.msra.mxu0 0.0
  %2226 = vmatprep.subr.mxu0 0.0
  %2227 = vmatpush1.msra.mxu0 0.0
  %2228 = vmatprep.subr.mxu0 0.0
  %2229 = vmatpush1.msra.mxu0 0.0
  %2230 = vmatprep.mubr.f32.mxu0 0.0
  %2231 = vmatmul.mubr.f32.gmra.mrb[0].mxu0 %v2075
  %v2232 = vpop.f32.mrb[0].mxu0
  %v2233 = vadd.f32 %v2072, %v2232
  %v2234 = vpop.f32.mrb[0].mxu0
  %2235 = vmatprep.mubr.f32.mxu0 0.0
  %2236 = vmatmul.mubr.f32.gmra.mrb[0].mxu0 %v2078
  %v2237 = vpop.f32.mrb[0].mxu0
  %v2238 = vadd.f32 %v2072, %v2237
  %v2239 = vpop.f32.mrb[0].mxu0
  %2240 = vmatprep.mubr.f32.mxu0 0.0
  %2241 = vmatmul.mubr.f32.gmra.mrb[0].mxu0 %v2081
  %v2242 = vpop.f32.mrb[0].mxu0
  %v2243 = vadd.f32 %v2072, %v2242
  %v2244 = vpop.f32.mrb[0].mxu0
  %2245 = vdwg.mxu0
  %v2246 = vmul.f32 %v1427, %v2150
  %v2247 = vmul.f32 %v1428, %v2152
  %v2248 = vmul.f32 %v1429, %v2233
  %v2249 = vmul.f32 %v1430, %v2156
  %v2250 = vmul.f32 %v1431, %v2158
  %v2251 = vmul.f32 %v1432, %v2238
  %v2252 = vmul.f32 %v1433, %v2162
  %v2253 = vmul.f32 %v1434, %v2164
  %v2254 = vmul.f32 %v1435, %v2243
  %v2255 = vpack.c.bf16 %v2249, %v2246
  %v2256 = vpack.c.bf16 %v2250, %v2247
  %v2257 = vpack.c.bf16 %v2251, %v2248
  %v2258 = vpack.c.bf16 %v2252, %v2252
  %v2259 = vpack.c.bf16 %v2253, %v2253
  %v2260 = vpack.c.bf16 %v2254, %v2254
  %v2261 = vld [vmem:[%s11] sm:$0xf]
  %v2262 = vld [vmem:[%s11 + $0x4] sm:$0xf]
  %v2263 = vld [vmem:[%s11 + $0x8] sm:$0xf]
  %v2264 = vld [vmem:[%s11 + $0xc] sm:$0xf]
  %v2265 = vld [vmem:[%s11 + $0x10] sm:$0xf]
  %v2266 = vld [vmem:[%s11 + $0x14] sm:$0xf]
  %v2267 = vld [vmem:[%s11 + $0x18] sm:$0x1]
  %s2268 = scalar_lea.vmem %s11, 28
  %v2269 = vld [vmem:[%s2268] sm:$0xf]
  %v2270 = vld [vmem:[%s2268 + $0x4] sm:$0xf]
  %v2271 = vld [vmem:[%s2268 + $0x8] sm:$0xf]
  %v2272 = vld [vmem:[%s2268 + $0xc] sm:$0xf]
  %v2273 = vld [vmem:[%s2268 + $0x10] sm:$0xf]
  %v2274 = vld [vmem:[%s2268 + $0x14] sm:$0xf]
  %v2275 = vld [vmem:[%s2268 + $0x18] sm:$0x1]
  %v2283 = vunpack.c.l.b16 %v2269
  %v2284 = vunpack.c.l.b16 %v2270
  %v2285 = vunpack.c.l.b16 %v2271
  %v2286 = vunpack.c.l.b16 %v2272
  %v2287 = vunpack.c.l.b16 %v2273
  %v2288 = vunpack.c.l.b16 %v2274
  %v2289 = vunpack.c.l.b16 %v2275
  %v2290 = vpack.c.b16 %v2284, %v2283
  %v2291 = vpack.c.b16 %v2286, %v2285
  %v2292 = vpack.c.b16 %v2288, %v2287
  %v2293 = vpack.c.b16 %v2289, %v2289
  %2296 = vrot.lane.b32.xlu0 %v2255, 120
  %v2297 = vpop.permute.xlu0 %2296
  %2298 = vrot.lane.b32.xlu0 %v2258, 120
  %v2299 = vpop.permute.xlu0 %2298
  %v2302 = vsel %vm1656, %v2290, 0
  %v2305 = vsel %vm1656, %v2291, 0
  %v2308 = vsel %vm1656, %v2292, 0
  %v2311 = vsel %vm1656, %v2293, 0
  %v2314 = vsel %vm1775, %v2299, 0
  %2316 = vmatprep.subr.bf16.mxu0 0
  %2317 = vmatpush1.bf16.msra.mxu0 %v2297
  %2318 = vmatprep.subr.bf16.mxu0 0
  %2319 = vmatpush1.bf16.msra.mxu0 %v2314
  %2320 = vmatprep.subr.bf16.mxu0 0
  %2321 = vmatpush1.bf16.msra.mxu0 0
  %2322 = vmatprep.subr.bf16.mxu0 0
  %2323 = vmatpush1.bf16.msra.mxu0 0
  %2324 = vmatprep.subr.bf16.mxu0 0
  %2325 = vmatpush1.bf16.msra.mxu0 0
  %2326 = vmatprep.subr.bf16.mxu0 0
  %2327 = vmatpush1.bf16.msra.mxu0 0
  %2328 = vmatprep.subr.bf16.mxu0 0
  %2329 = vmatpush1.bf16.msra.mxu0 0
  %2330 = vmatprep.subr.bf16.mxu0 0
  %2331 = vmatpush1.bf16.msra.mxu0 0
  %2332 = vmatprep.subr.bf16.mxu0 0
  %2333 = vmatpush1.bf16.msra.mxu0 0
  %2334 = vmatprep.subr.bf16.mxu0 0
  %2335 = vmatpush1.bf16.msra.mxu0 0
  %2336 = vmatprep.subr.bf16.mxu0 0
  %2337 = vmatpush1.bf16.msra.mxu0 0
  %2338 = vmatprep.subr.bf16.mxu0 0
  %2339 = vmatpush1.bf16.msra.mxu0 0
  %2340 = vmatprep.subr.bf16.mxu0 0
  %2341 = vmatpush1.bf16.msra.mxu0 0
  %2342 = vmatprep.subr.bf16.mxu0 0
  %2343 = vmatpush1.bf16.msra.mxu0 0
  %2344 = vmatprep.subr.bf16.mxu0 0
  %2345 = vmatpush1.bf16.msra.mxu0 0
  %2346 = vmatprep.subr.bf16.mxu0 0
  %2347 = vmatpush1.bf16.msra.mxu0 0
  %2348 = vmatprep.mubr.bf16.mxu0 0
  %2349 = vmatmul.mubr.bf16.gmra.mrb[0].mxu0 %v2302
  %v2350 = vpop.f32.mrb[0].mxu0
  %v2351 = vadd.f32 0.0, %v2350
  %v2352 = vpop.f32.mrb[0].mxu0
  %v2353 = vpop.f32.mrb[0].mxu0
  %v2354 = vadd.f32 0.0, %v2353
  %v2355 = vpop.f32.mrb[0].mxu0
  %2356 = vmatprep.mubr.bf16.mxu0 0
  %2357 = vmatmul.mubr.bf16.gmra.mrb[0].mxu0 %v2305
  %v2358 = vpop.f32.mrb[0].mxu0
  %v2359 = vadd.f32 0.0, %v2358
  %v2360 = vpop.f32.mrb[0].mxu0
  %v2361 = vpop.f32.mrb[0].mxu0
  %v2362 = vadd.f32 0.0, %v2361
  %v2363 = vpop.f32.mrb[0].mxu0
  %2364 = vmatprep.mubr.bf16.mxu0 0
  %2365 = vmatmul.mubr.bf16.gmra.mrb[0].mxu0 %v2308
  %v2366 = vpop.f32.mrb[0].mxu0
  %v2367 = vadd.f32 0.0, %v2366
  %v2368 = vpop.f32.mrb[0].mxu0
  %v2369 = vpop.f32.mrb[0].mxu0
  %v2370 = vadd.f32 0.0, %v2369
  %v2371 = vpop.f32.mrb[0].mxu0
  %2372 = vmatprep.mubr.bf16.mxu0 0
  %2373 = vmatmul.mubr.bf16.gmra.mrb[0].mxu0 %v2311
  %v2374 = vpop.f32.mrb[0].mxu0
  %v2375 = vadd.f32 0.0, %v2374
  %v2376 = vpop.f32.mrb[0].mxu0
  %v2377 = vpop.f32.mrb[0].mxu0
  %v2378 = vpop.f32.mrb[0].mxu0
  %2379 = vdwg.mxu0
  %v2387 = vunpack.c.l.b16 %v2261
  %v2388 = vunpack.c.l.b16 %v2262
  %v2389 = vunpack.c.l.b16 %v2263
  %v2390 = vunpack.c.l.b16 %v2264
  %v2391 = vunpack.c.l.b16 %v2265
  %v2392 = vunpack.c.l.b16 %v2266
  %v2393 = vunpack.c.l.b16 %v2267
  %v2394 = vpack.c.b16 %v2388, %v2387
  %v2395 = vpack.c.b16 %v2390, %v2389
  %v2396 = vpack.c.b16 %v2392, %v2391
  %v2397 = vpack.c.b16 %v2393, %v2393
  %v2399 = vsel %vm1656, %v2394, 0
  %v2402 = vsel %vm1656, %v2395, 0
  %v2405 = vsel %vm1656, %v2396, 0
  %v2408 = vsel %vm1656, %v2397, 0
  %v2411 = vsel %vm1775, %v2258, 0
  %2413 = vmatprep.subr.bf16.mxu0 0
  %2414 = vmatpush1.bf16.msra.mxu0 %v2255
  %2415 = vmatprep.subr.bf16.mxu0 0
  %2416 = vmatpush1.bf16.msra.mxu0 %v2411
  %2417 = vmatprep.subr.bf16.mxu0 0
  %2418 = vmatpush1.bf16.msra.mxu0 0
  %2419 = vmatprep.subr.bf16.mxu0 0
  %2420 = vmatpush1.bf16.msra.mxu0 0
  %2421 = vmatprep.subr.bf16.mxu0 0
  %2422 = vmatpush1.bf16.msra.mxu0 0
  %2423 = vmatprep.subr.bf16.mxu0 0
  %2424 = vmatpush1.bf16.msra.mxu0 0
  %2425 = vmatprep.subr.bf16.mxu0 0
  %2426 = vmatpush1.bf16.msra.mxu0 0
  %2427 = vmatprep.subr.bf16.mxu0 0
  %2428 = vmatpush1.bf16.msra.mxu0 0
  %2429 = vmatprep.subr.bf16.mxu0 0
  %2430 = vmatpush1.bf16.msra.mxu0 0
  %2431 = vmatprep.subr.bf16.mxu0 0
  %2432 = vmatpush1.bf16.msra.mxu0 0
  %2433 = vmatprep.subr.bf16.mxu0 0
  %2434 = vmatpush1.bf16.msra.mxu0 0
  %2435 = vmatprep.subr.bf16.mxu0 0
  %2436 = vmatpush1.bf16.msra.mxu0 0
  %2437 = vmatprep.subr.bf16.mxu0 0
  %2438 = vmatpush1.bf16.msra.mxu0 0
  %2439 = vmatprep.subr.bf16.mxu0 0
  %2440 = vmatpush1.bf16.msra.mxu0 0
  %2441 = vmatprep.subr.bf16.mxu0 0
  %2442 = vmatpush1.bf16.msra.mxu0 0
  %2443 = vmatprep.subr.bf16.mxu0 0
  %2444 = vmatpush1.bf16.msra.mxu0 0
  %2445 = vmatprep.mubr.bf16.mxu0 0
  %2446 = vmatmul.mubr.bf16.gmra.mrb[0].mxu0 %v2399
  %v2447 = vpop.f32.mrb[0].mxu0
  %v2448 = vadd.f32 %v2351, %v2447
  %v2449 = vpop.f32.mrb[0].mxu0
  %v2450 = vpop.f32.mrb[0].mxu0
  %v2451 = vadd.f32 %v2354, %v2450
  %v2452 = vpop.f32.mrb[0].mxu0
  %2453 = vmatprep.mubr.bf16.mxu0 0
  %2454 = vmatmul.mubr.bf16.gmra.mrb[0].mxu0 %v2402
  %v2455 = vpop.f32.mrb[0].mxu0
  %v2456 = vadd.f32 %v2359, %v2455
  %v2457 = vpop.f32.mrb[0].mxu0
  %v2458 = vpop.f32.mrb[0].mxu0
  %v2459 = vadd.f32 %v2362, %v2458
  %v2460 = vpop.f32.mrb[0].mxu0
  %2461 = vmatprep.mubr.bf16.mxu0 0
  %2462 = vmatmul.mubr.bf16.gmra.mrb[0].mxu0 %v2405
  %v2463 = vpop.f32.mrb[0].mxu0
  %v2464 = vadd.f32 %v2367, %v2463
  %v2465 = vpop.f32.mrb[0].mxu0
  %v2466 = vpop.f32.mrb[0].mxu0
  %v2467 = vadd.f32 %v2370, %v2466
  %v2468 = vpop.f32.mrb[0].mxu0
  %2469 = vmatprep.mubr.bf16.mxu0 0
  %2470 = vmatmul.mubr.bf16.gmra.mrb[0].mxu0 %v2408
  %v2471 = vpop.f32.mrb[0].mxu0
  %v2472 = vadd.f32 %v2375, %v2471
  %v2473 = vpop.f32.mrb[0].mxu0
  %v2474 = vpop.f32.mrb[0].mxu0
  %v2475 = vpop.f32.mrb[0].mxu0
  %2476 = vdwg.mxu0
  %s2477 = scalar_lea.vmem %s11, 56
  %v2478 = vld [vmem:[%s2477] sm:$0xf]
  %v2479 = vld [vmem:[%s2477 + $0x4] sm:$0xf]
  %v2480 = vld [vmem:[%s2477 + $0x8] sm:$0xf]
  %v2481 = vld [vmem:[%s2477 + $0xc] sm:$0xf]
  %v2482 = vld [vmem:[%s2477 + $0x10] sm:$0xf]
  %v2483 = vld [vmem:[%s2477 + $0x14] sm:$0xf]
  %v2484 = vld [vmem:[%s2477 + $0x18] sm:$0x1]
  %v2492 = vunpack.c.l.b16 %v2478
  %v2493 = vunpack.c.l.b16 %v2479
  %v2494 = vunpack.c.l.b16 %v2480
  %v2495 = vunpack.c.l.b16 %v2481
  %v2496 = vunpack.c.l.b16 %v2482
  %v2497 = vunpack.c.l.b16 %v2483
  %v2498 = vunpack.c.l.b16 %v2484
  %v2499 = vpack.c.b16 %v2493, %v2492
  %v2500 = vpack.c.b16 %v2495, %v2494
  %v2501 = vpack.c.b16 %v2497, %v2496
  %v2502 = vpack.c.b16 %v2498, %v2498
  %2503 = vrot.lane.b32.xlu0 %v2255, 112
  %v2504 = vpop.permute.xlu0 %2503
  %2505 = vrot.lane.b32.xlu0 %v2258, 112
  %v2506 = vpop.permute.xlu0 %2505
  %v2509 = vsel %vm1656, %v2499, 0
  %v2512 = vsel %vm1656, %v2500, 0
  %v2515 = vsel %vm1656, %v2501, 0
  %v2518 = vsel %vm1656, %v2502, 0
  %v2521 = vsel %vm1775, %v2506, 0
  %2523 = vmatprep.subr.bf16.mxu0 0
  %2524 = vmatpush1.bf16.msra.mxu0 %v2504
  %2525 = vmatprep.subr.bf16.mxu0 0
  %2526 = vmatpush1.bf16.msra.mxu0 %v2521
  %2527 = vmatprep.subr.bf16.mxu0 0
  %2528 = vmatpush1.bf16.msra.mxu0 0
  %2529 = vmatprep.subr.bf16.mxu0 0
  %2530 = vmatpush1.bf16.msra.mxu0 0
  %2531 = vmatprep.subr.bf16.mxu0 0
  %2532 = vmatpush1.bf16.msra.mxu0 0
  %2533 = vmatprep.subr.bf16.mxu0 0
  %2534 = vmatpush1.bf16.msra.mxu0 0
  %2535 = vmatprep.subr.bf16.mxu0 0
  %2536 = vmatpush1.bf16.msra.mxu0 0
  %2537 = vmatprep.subr.bf16.mxu0 0
  %2538 = vmatpush1.bf16.msra.mxu0 0
  %2539 = vmatprep.subr.bf16.mxu0 0
  %2540 = vmatpush1.bf16.msra.mxu0 0
  %2541 = vmatprep.subr.bf16.mxu0 0
  %2542 = vmatpush1.bf16.msra.mxu0 0
  %2543 = vmatprep.subr.bf16.mxu0 0
  %2544 = vmatpush1.bf16.msra.mxu0 0
  %2545 = vmatprep.subr.bf16.mxu0 0
  %2546 = vmatpush1.bf16.msra.mxu0 0
  %2547 = vmatprep.subr.bf16.mxu0 0
  %2548 = vmatpush1.bf16.msra.mxu0 0
  %2549 = vmatprep.subr.bf16.mxu0 0
  %2550 = vmatpush1.bf16.msra.mxu0 0
  %2551 = vmatprep.subr.bf16.mxu0 0
  %2552 = vmatpush1.bf16.msra.mxu0 0
  %2553 = vmatprep.subr.bf16.mxu0 0
  %2554 = vmatpush1.bf16.msra.mxu0 0
  %2555 = vmatprep.mubr.bf16.mxu0 0
  %2556 = vmatmul.mubr.bf16.gmra.mrb[0].mxu0 %v2509
  %v2557 = vpop.f32.mrb[0].mxu0
  %v2558 = vadd.f32 0.0, %v2557
  %v2559 = vpop.f32.mrb[0].mxu0
  %v2560 = vpop.f32.mrb[0].mxu0
  %v2561 = vadd.f32 0.0, %v2560
  %v2562 = vpop.f32.mrb[0].mxu0
  %2563 = vmatprep.mubr.bf16.mxu0 0
  %2564 = vmatmul.mubr.bf16.gmra.mrb[0].mxu0 %v2512
  %v2565 = vpop.f32.mrb[0].mxu0
  %v2566 = vadd.f32 0.0, %v2565
  %v2567 = vpop.f32.mrb[0].mxu0
  %v2568 = vpop.f32.mrb[0].mxu0
  %v2569 = vadd.f32 0.0, %v2568
  %v2570 = vpop.f32.mrb[0].mxu0
  %2571 = vmatprep.mubr.bf16.mxu0 0
  %2572 = vmatmul.mubr.bf16.gmra.mrb[0].mxu0 %v2515
  %v2573 = vpop.f32.mrb[0].mxu0
  %v2574 = vadd.f32 0.0, %v2573
  %v2575 = vpop.f32.mrb[0].mxu0
  %v2576 = vpop.f32.mrb[0].mxu0
  %v2577 = vadd.f32 0.0, %v2576
  %v2578 = vpop.f32.mrb[0].mxu0
  %2579 = vmatprep.mubr.bf16.mxu0 0
  %2580 = vmatmul.mubr.bf16.gmra.mrb[0].mxu0 %v2518
  %v2581 = vpop.f32.mrb[0].mxu0
  %v2582 = vadd.f32 0.0, %v2581
  %v2583 = vpop.f32.mrb[0].mxu0
  %v2584 = vpop.f32.mrb[0].mxu0
  %v2585 = vpop.f32.mrb[0].mxu0
  %2586 = vdwg.mxu0
  %v2587 = vadd.f32 %v2448, %v2558
  %v2588 = vadd.f32 %v2451, %v2561
  %v2589 = vadd.f32 %v2456, %v2566
  %v2590 = vadd.f32 %v2459, %v2569
  %v2591 = vadd.f32 %v2464, %v2574
  %v2592 = vadd.f32 %v2467, %v2577
  %v2593 = vadd.f32 %v2472, %v2582
  %s2594 = scalar_lea.vmem %s11, 84
  %v2595 = vld [vmem:[%s2594] sm:$0xf]
  %v2596 = vld [vmem:[%s2594 + $0x4] sm:$0xf]
  %v2597 = vld [vmem:[%s2594 + $0x8] sm:$0xf]
  %v2598 = vld [vmem:[%s2594 + $0xc] sm:$0xf]
  %v2599 = vld [vmem:[%s2594 + $0x10] sm:$0xf]
  %v2600 = vld [vmem:[%s2594 + $0x14] sm:$0xf]
  %v2601 = vld [vmem:[%s2594 + $0x18] sm:$0x1]
  %v2609 = vunpack.c.l.b16 %v2595
  %v2610 = vunpack.c.l.b16 %v2596
  %v2611 = vunpack.c.l.b16 %v2597
  %v2612 = vunpack.c.l.b16 %v2598
  %v2613 = vunpack.c.l.b16 %v2599
  %v2614 = vunpack.c.l.b16 %v2600
  %v2615 = vunpack.c.l.b16 %v2601
  %v2616 = vpack.c.b16 %v2610, %v2609
  %v2617 = vpack.c.b16 %v2612, %v2611
  %v2618 = vpack.c.b16 %v2614, %v2613
  %v2619 = vpack.c.b16 %v2615, %v2615
  %2620 = vrot.lane.b32.xlu0 %v2255, 104
  %v2621 = vpop.permute.xlu0 %2620
  %2622 = vrot.lane.b32.xlu0 %v2258, 104
  %v2623 = vpop.permute.xlu0 %2622
  %v2626 = vsel %vm1656, %v2616, 0
  %v2629 = vsel %vm1656, %v2617, 0
  %v2632 = vsel %vm1656, %v2618, 0
  %v2635 = vsel %vm1656, %v2619, 0
  %v2638 = vsel %vm1775, %v2623, 0
  %2640 = vmatprep.subr.bf16.mxu0 0
  %2641 = vmatpush1.bf16.msra.mxu0 %v2621
  %2642 = vmatprep.subr.bf16.mxu0 0
  %2643 = vmatpush1.bf16.msra.mxu0 %v2638
  %2644 = vmatprep.subr.bf16.mxu0 0
  %2645 = vmatpush1.bf16.msra.mxu0 0
  %2646 = vmatprep.subr.bf16.mxu0 0
  %2647 = vmatpush1.bf16.msra.mxu0 0
  %2648 = vmatprep.subr.bf16.mxu0 0
  %2649 = vmatpush1.bf16.msra.mxu0 0
  %2650 = vmatprep.subr.bf16.mxu0 0
  %2651 = vmatpush1.bf16.msra.mxu0 0
  %2652 = vmatprep.subr.bf16.mxu0 0
  %2653 = vmatpush1.bf16.msra.mxu0 0
  %2654 = vmatprep.subr.bf16.mxu0 0
  %2655 = vmatpush1.bf16.msra.mxu0 0
  %2656 = vmatprep.subr.bf16.mxu0 0
  %2657 = vmatpush1.bf16.msra.mxu0 0
  %2658 = vmatprep.subr.bf16.mxu0 0
  %2659 = vmatpush1.bf16.msra.mxu0 0
  %2660 = vmatprep.subr.bf16.mxu0 0
  %2661 = vmatpush1.bf16.msra.mxu0 0
  %2662 = vmatprep.subr.bf16.mxu0 0
  %2663 = vmatpush1.bf16.msra.mxu0 0
  %2664 = vmatprep.subr.bf16.mxu0 0
  %2665 = vmatpush1.bf16.msra.mxu0 0
  %2666 = vmatprep.subr.bf16.mxu0 0
  %2667 = vmatpush1.bf16.msra.mxu0 0
  %2668 = vmatprep.subr.bf16.mxu0 0
  %2669 = vmatpush1.bf16.msra.mxu0 0
  %2670 = vmatprep.subr.bf16.mxu0 0
  %2671 = vmatpush1.bf16.msra.mxu0 0
  %2672 = vmatprep.mubr.bf16.mxu0 0
  %2673 = vmatmul.mubr.bf16.gmra.mrb[0].mxu0 %v2626
  %v2674 = vpop.f32.mrb[0].mxu0
  %v2675 = vadd.f32 0.0, %v2674
  %v2676 = vpop.f32.mrb[0].mxu0
  %v2677 = vpop.f32.mrb[0].mxu0
  %v2678 = vadd.f32 0.0, %v2677
  %v2679 = vpop.f32.mrb[0].mxu0
  %2680 = vmatprep.mubr.bf16.mxu0 0
  %2681 = vmatmul.mubr.bf16.gmra.mrb[0].mxu0 %v2629
  %v2682 = vpop.f32.mrb[0].mxu0
  %v2683 = vadd.f32 0.0, %v2682
  %v2684 = vpop.f32.mrb[0].mxu0
  %v2685 = vpop.f32.mrb[0].mxu0
  %v2686 = vadd.f32 0.0, %v2685
  %v2687 = vpop.f32.mrb[0].mxu0
  %2688 = vmatprep.mubr.bf16.mxu0 0
  %2689 = vmatmul.mubr.bf16.gmra.mrb[0].mxu0 %v2632
  %v2690 = vpop.f32.mrb[0].mxu0
  %v2691 = vadd.f32 0.0, %v2690
  %v2692 = vpop.f32.mrb[0].mxu0
  %v2693 = vpop.f32.mrb[0].mxu0
  %v2694 = vadd.f32 0.0, %v2693
  %v2695 = vpop.f32.mrb[0].mxu0
  %2696 = vmatprep.mubr.bf16.mxu0 0
  %2697 = vmatmul.mubr.bf16.gmra.mrb[0].mxu0 %v2635
  %v2698 = vpop.f32.mrb[0].mxu0
  %v2699 = vadd.f32 0.0, %v2698
  %v2700 = vpop.f32.mrb[0].mxu0
  %v2701 = vpop.f32.mrb[0].mxu0
  %v2702 = vpop.f32.mrb[0].mxu0
  %2703 = vdwg.mxu0
  %v2704 = vadd.f32 %v2587, %v2675
  %v2705 = vadd.f32 %v2588, %v2678
  %v2706 = vadd.f32 %v2589, %v2683
  %v2707 = vadd.f32 %v2590, %v2686
  %v2708 = vadd.f32 %v2591, %v2691
  %v2709 = vadd.f32 %v2592, %v2694
  %v2710 = vadd.f32 %v2593, %v2699
  %s2711 = scalar_lea.vmem %s11, 112
  %v2712 = vld [vmem:[%s2711] sm:$0xf]
  %v2713 = vld [vmem:[%s2711 + $0x4] sm:$0xf]
  %v2714 = vld [vmem:[%s2711 + $0x8] sm:$0xf]
  %v2715 = vld [vmem:[%s2711 + $0xc] sm:$0xf]
  %v2716 = vld [vmem:[%s2711 + $0x10] sm:$0xf]
  %v2717 = vld [vmem:[%s2711 + $0x14] sm:$0xf]
  %v2718 = vld [vmem:[%s2711 + $0x18] sm:$0x1]
  %v2726 = vunpack.c.l.b16 %v2712
  %v2727 = vunpack.c.l.b16 %v2713
  %v2728 = vunpack.c.l.b16 %v2714
  %v2729 = vunpack.c.l.b16 %v2715
  %v2730 = vunpack.c.l.b16 %v2716
  %v2731 = vunpack.c.l.b16 %v2717
  %v2732 = vunpack.c.l.b16 %v2718
  %v2733 = vpack.c.b16 %v2727, %v2726
  %v2734 = vpack.c.b16 %v2729, %v2728
  %v2735 = vpack.c.b16 %v2731, %v2730
  %v2736 = vpack.c.b16 %v2732, %v2732
  %2737 = vrot.lane.b32.xlu0 %v2255, 96
  %v2738 = vpop.permute.xlu0 %2737
  %2739 = vrot.lane.b32.xlu0 %v2258, 96
  %v2740 = vpop.permute.xlu0 %2739
  %v2743 = vsel %vm1656, %v2733, 0
  %v2746 = vsel %vm1656, %v2734, 0
  %v2749 = vsel %vm1656, %v2735, 0
  %v2752 = vsel %vm1656, %v2736, 0
  %v2755 = vsel %vm1775, %v2740, 0
  %2757 = vmatprep.subr.bf16.mxu0 0
  %2758 = vmatpush1.bf16.msra.mxu0 %v2738
  %2759 = vmatprep.subr.bf16.mxu0 0
  %2760 = vmatpush1.bf16.msra.mxu0 %v2755
  %2761 = vmatprep.subr.bf16.mxu0 0
  %2762 = vmatpush1.bf16.msra.mxu0 0
  %2763 = vmatprep.subr.bf16.mxu0 0
  %2764 = vmatpush1.bf16.msra.mxu0 0
  %2765 = vmatprep.subr.bf16.mxu0 0
  %2766 = vmatpush1.bf16.msra.mxu0 0
  %2767 = vmatprep.subr.bf16.mxu0 0
  %2768 = vmatpush1.bf16.msra.mxu0 0
  %2769 = vmatprep.subr.bf16.mxu0 0
  %2770 = vmatpush1.bf16.msra.mxu0 0
  %2771 = vmatprep.subr.bf16.mxu0 0
  %2772 = vmatpush1.bf16.msra.mxu0 0
  %2773 = vmatprep.subr.bf16.mxu0 0
  %2774 = vmatpush1.bf16.msra.mxu0 0
  %2775 = vmatprep.subr.bf16.mxu0 0
  %2776 = vmatpush1.bf16.msra.mxu0 0
  %2777 = vmatprep.subr.bf16.mxu0 0
  %2778 = vmatpush1.bf16.msra.mxu0 0
  %2779 = vmatprep.subr.bf16.mxu0 0
  %2780 = vmatpush1.bf16.msra.mxu0 0
  %2781 = vmatprep.subr.bf16.mxu0 0
  %2782 = vmatpush1.bf16.msra.mxu0 0
  %2783 = vmatprep.subr.bf16.mxu0 0
  %2784 = vmatpush1.bf16.msra.mxu0 0
  %2785 = vmatprep.subr.bf16.mxu0 0
  %2786 = vmatpush1.bf16.msra.mxu0 0
  %2787 = vmatprep.subr.bf16.mxu0 0
  %2788 = vmatpush1.bf16.msra.mxu0 0
  %2789 = vmatprep.mubr.bf16.mxu0 0
  %2790 = vmatmul.mubr.bf16.gmra.mrb[0].mxu0 %v2743
  %v2791 = vpop.f32.mrb[0].mxu0
  %v2792 = vadd.f32 0.0, %v2791
  %v2793 = vpop.f32.mrb[0].mxu0
  %v2794 = vpop.f32.mrb[0].mxu0
  %v2795 = vadd.f32 0.0, %v2794
  %v2796 = vpop.f32.mrb[0].mxu0
  %2797 = vmatprep.mubr.bf16.mxu0 0
  %2798 = vmatmul.mubr.bf16.gmra.mrb[0].mxu0 %v2746
  %v2799 = vpop.f32.mrb[0].mxu0
  %v2800 = vadd.f32 0.0, %v2799
  %v2801 = vpop.f32.mrb[0].mxu0
  %v2802 = vpop.f32.mrb[0].mxu0
  %v2803 = vadd.f32 0.0, %v2802
  %v2804 = vpop.f32.mrb[0].mxu0
  %2805 = vmatprep.mubr.bf16.mxu0 0
  %2806 = vmatmul.mubr.bf16.gmra.mrb[0].mxu0 %v2749
  %v2807 = vpop.f32.mrb[0].mxu0
  %v2808 = vadd.f32 0.0, %v2807
  %v2809 = vpop.f32.mrb[0].mxu0
  %v2810 = vpop.f32.mrb[0].mxu0
  %v2811 = vadd.f32 0.0, %v2810
  %v2812 = vpop.f32.mrb[0].mxu0
  %2813 = vmatprep.mubr.bf16.mxu0 0
  %2814 = vmatmul.mubr.bf16.gmra.mrb[0].mxu0 %v2752
  %v2815 = vpop.f32.mrb[0].mxu0
  %v2816 = vadd.f32 0.0, %v2815
  %v2817 = vpop.f32.mrb[0].mxu0
  %v2818 = vpop.f32.mrb[0].mxu0
  %v2819 = vpop.f32.mrb[0].mxu0
  %2820 = vdwg.mxu0
  %v2821 = vadd.f32 %v2704, %v2792
  %v2822 = vadd.f32 %v2705, %v2795
  %v2823 = vadd.f32 %v2706, %v2800
  %v2824 = vadd.f32 %v2707, %v2803
  %v2825 = vadd.f32 %v2708, %v2808
  %v2826 = vadd.f32 %v2709, %v2811
  %v2827 = vadd.f32 %v2710, %v2816
  %s2828 = scalar_lea.vmem %s11, 140
  %v2829 = vld [vmem:[%s2828] sm:$0xf]
  %v2830 = vld [vmem:[%s2828 + $0x4] sm:$0xf]
  %v2831 = vld [vmem:[%s2828 + $0x8] sm:$0xf]
  %v2832 = vld [vmem:[%s2828 + $0xc] sm:$0xf]
  %v2833 = vld [vmem:[%s2828 + $0x10] sm:$0xf]
  %v2834 = vld [vmem:[%s2828 + $0x14] sm:$0xf]
  %v2835 = vld [vmem:[%s2828 + $0x18] sm:$0x1]
  %v2843 = vunpack.c.l.b16 %v2829
  %v2844 = vunpack.c.l.b16 %v2830
  %v2845 = vunpack.c.l.b16 %v2831
  %v2846 = vunpack.c.l.b16 %v2832
  %v2847 = vunpack.c.l.b16 %v2833
  %v2848 = vunpack.c.l.b16 %v2834
  %v2849 = vunpack.c.l.b16 %v2835
  %v2850 = vpack.c.b16 %v2844, %v2843
  %v2851 = vpack.c.b16 %v2846, %v2845
  %v2852 = vpack.c.b16 %v2848, %v2847
  %v2853 = vpack.c.b16 %v2849, %v2849
  %2854 = vrot.lane.b32.xlu0 %v2255, 88
  %v2855 = vpop.permute.xlu0 %2854
  %2856 = vrot.lane.b32.xlu0 %v2258, 88
  %v2857 = vpop.permute.xlu0 %2856
  %v2860 = vsel %vm1656, %v2850, 0
  %v2863 = vsel %vm1656, %v2851, 0
  %v2866 = vsel %vm1656, %v2852, 0
  %v2869 = vsel %vm1656, %v2853, 0
  %v2872 = vsel %vm1775, %v2857, 0
  %2874 = vmatprep.subr.bf16.mxu0 0
  %2875 = vmatpush1.bf16.msra.mxu0 %v2855
  %2876 = vmatprep.subr.bf16.mxu0 0
  %2877 = vmatpush1.bf16.msra.mxu0 %v2872
  %2878 = vmatprep.subr.bf16.mxu0 0
  %2879 = vmatpush1.bf16.msra.mxu0 0
  %2880 = vmatprep.subr.bf16.mxu0 0
  %2881 = vmatpush1.bf16.msra.mxu0 0
  %2882 = vmatprep.subr.bf16.mxu0 0
  %2883 = vmatpush1.bf16.msra.mxu0 0
  %2884 = vmatprep.subr.bf16.mxu0 0
  %2885 = vmatpush1.bf16.msra.mxu0 0
  %2886 = vmatprep.subr.bf16.mxu0 0
  %2887 = vmatpush1.bf16.msra.mxu0 0
  %2888 = vmatprep.subr.bf16.mxu0 0
  %2889 = vmatpush1.bf16.msra.mxu0 0
  %2890 = vmatprep.subr.bf16.mxu0 0
  %2891 = vmatpush1.bf16.msra.mxu0 0
  %2892 = vmatprep.subr.bf16.mxu0 0
  %2893 = vmatpush1.bf16.msra.mxu0 0
  %2894 = vmatprep.subr.bf16.mxu0 0
  %2895 = vmatpush1.bf16.msra.mxu0 0
  %2896 = vmatprep.subr.bf16.mxu0 0
  %2897 = vmatpush1.bf16.msra.mxu0 0
  %2898 = vmatprep.subr.bf16.mxu0 0
  %2899 = vmatpush1.bf16.msra.mxu0 0
  %2900 = vmatprep.subr.bf16.mxu0 0
  %2901 = vmatpush1.bf16.msra.mxu0 0
  %2902 = vmatprep.subr.bf16.mxu0 0
  %2903 = vmatpush1.bf16.msra.mxu0 0
  %2904 = vmatprep.subr.bf16.mxu0 0
  %2905 = vmatpush1.bf16.msra.mxu0 0
  %2906 = vmatprep.mubr.bf16.mxu0 0
  %2907 = vmatmul.mubr.bf16.gmra.mrb[0].mxu0 %v2860
  %v2908 = vpop.f32.mrb[0].mxu0
  %v2909 = vadd.f32 0.0, %v2908
  %v2910 = vpop.f32.mrb[0].mxu0
  %v2911 = vpop.f32.mrb[0].mxu0
  %v2912 = vadd.f32 0.0, %v2911
  %v2913 = vpop.f32.mrb[0].mxu0
  %2914 = vmatprep.mubr.bf16.mxu0 0
  %2915 = vmatmul.mubr.bf16.gmra.mrb[0].mxu0 %v2863
  %v2916 = vpop.f32.mrb[0].mxu0
  %v2917 = vadd.f32 0.0, %v2916
  %v2918 = vpop.f32.mrb[0].mxu0
  %v2919 = vpop.f32.mrb[0].mxu0
  %v2920 = vadd.f32 0.0, %v2919
  %v2921 = vpop.f32.mrb[0].mxu0
  %2922 = vmatprep.mubr.bf16.mxu0 0
  %2923 = vmatmul.mubr.bf16.gmra.mrb[0].mxu0 %v2866
  %v2924 = vpop.f32.mrb[0].mxu0
  %v2925 = vadd.f32 0.0, %v2924
  %v2926 = vpop.f32.mrb[0].mxu0
  %v2927 = vpop.f32.mrb[0].mxu0
  %v2928 = vadd.f32 0.0, %v2927
  %v2929 = vpop.f32.mrb[0].mxu0
  %2930 = vmatprep.mubr.bf16.mxu0 0
  %2931 = vmatmul.mubr.bf16.gmra.mrb[0].mxu0 %v2869
  %v2932 = vpop.f32.mrb[0].mxu0
  %v2933 = vadd.f32 0.0, %v2932
  %v2934 = vpop.f32.mrb[0].mxu0
  %v2935 = vpop.f32.mrb[0].mxu0
  %v2936 = vpop.f32.mrb[0].mxu0
  %2937 = vdwg.mxu0
  %v2938 = vadd.f32 %v2821, %v2909
  %v2939 = vadd.f32 %v2822, %v2912
  %v2940 = vadd.f32 %v2823, %v2917
  %v2941 = vadd.f32 %v2824, %v2920
  %v2942 = vadd.f32 %v2825, %v2925
  %v2943 = vadd.f32 %v2826, %v2928
  %v2944 = vadd.f32 %v2827, %v2933
  %s2945 = scalar_lea.vmem %s11, 168
  %v2946 = vld [vmem:[%s2945] sm:$0xf]
  %v2947 = vld [vmem:[%s2945 + $0x4] sm:$0xf]
  %v2948 = vld [vmem:[%s2945 + $0x8] sm:$0xf]
  %v2949 = vld [vmem:[%s2945 + $0xc] sm:$0xf]
  %v2950 = vld [vmem:[%s2945 + $0x10] sm:$0xf]
  %v2951 = vld [vmem:[%s2945 + $0x14] sm:$0xf]
  %v2952 = vld [vmem:[%s2945 + $0x18] sm:$0x1]
  %v2960 = vunpack.c.l.b16 %v2946
  %v2961 = vunpack.c.l.b16 %v2947
  %v2962 = vunpack.c.l.b16 %v2948
  %v2963 = vunpack.c.l.b16 %v2949
  %v2964 = vunpack.c.l.b16 %v2950
  %v2965 = vunpack.c.l.b16 %v2951
  %v2966 = vunpack.c.l.b16 %v2952
  %v2967 = vpack.c.b16 %v2961, %v2960
  %v2968 = vpack.c.b16 %v2963, %v2962
  %v2969 = vpack.c.b16 %v2965, %v2964
  %v2970 = vpack.c.b16 %v2966, %v2966
  %2971 = vrot.lane.b32.xlu0 %v2255, 80
  %v2972 = vpop.permute.xlu0 %2971
  %2973 = vrot.lane.b32.xlu0 %v2258, 80
  %v2974 = vpop.permute.xlu0 %2973
  %v2977 = vsel %vm1656, %v2967, 0
  %v2980 = vsel %vm1656, %v2968, 0
  %v2983 = vsel %vm1656, %v2969, 0
  %v2986 = vsel %vm1656, %v2970, 0
  %v2989 = vsel %vm1775, %v2974, 0
  %2991 = vmatprep.subr.bf16.mxu0 0
  %2992 = vmatpush1.bf16.msra.mxu0 %v2972
  %2993 = vmatprep.subr.bf16.mxu0 0
  %2994 = vmatpush1.bf16.msra.mxu0 %v2989
  %2995 = vmatprep.subr.bf16.mxu0 0
  %2996 = vmatpush1.bf16.msra.mxu0 0
  %2997 = vmatprep.subr.bf16.mxu0 0
  %2998 = vmatpush1.bf16.msra.mxu0 0
  %2999 = vmatprep.subr.bf16.mxu0 0
  %3000 = vmatpush1.bf16.msra.mxu0 0
  %3001 = vmatprep.subr.bf16.mxu0 0
  %3002 = vmatpush1.bf16.msra.mxu0 0
  %3003 = vmatprep.subr.bf16.mxu0 0
  %3004 = vmatpush1.bf16.msra.mxu0 0
  %3005 = vmatprep.subr.bf16.mxu0 0
  %3006 = vmatpush1.bf16.msra.mxu0 0
  %3007 = vmatprep.subr.bf16.mxu0 0
  %3008 = vmatpush1.bf16.msra.mxu0 0
  %3009 = vmatprep.subr.bf16.mxu0 0
  %3010 = vmatpush1.bf16.msra.mxu0 0
  %3011 = vmatprep.subr.bf16.mxu0 0
  %3012 = vmatpush1.bf16.msra.mxu0 0
  %3013 = vmatprep.subr.bf16.mxu0 0
  %3014 = vmatpush1.bf16.msra.mxu0 0
  %3015 = vmatprep.subr.bf16.mxu0 0
  %3016 = vmatpush1.bf16.msra.mxu0 0
  %3017 = vmatprep.subr.bf16.mxu0 0
  %3018 = vmatpush1.bf16.msra.mxu0 0
  %3019 = vmatprep.subr.bf16.mxu0 0
  %3020 = vmatpush1.bf16.msra.mxu0 0
  %3021 = vmatprep.subr.bf16.mxu0 0
  %3022 = vmatpush1.bf16.msra.mxu0 0
  %3023 = vmatprep.mubr.bf16.mxu0 0
  %3024 = vmatmul.mubr.bf16.gmra.mrb[0].mxu0 %v2977
  %v3025 = vpop.f32.mrb[0].mxu0
  %v3026 = vadd.f32 0.0, %v3025
  %v3027 = vpop.f32.mrb[0].mxu0
  %v3028 = vpop.f32.mrb[0].mxu0
  %v3029 = vadd.f32 0.0, %v3028
  %v3030 = vpop.f32.mrb[0].mxu0
  %3031 = vmatprep.mubr.bf16.mxu0 0
  %3032 = vmatmul.mubr.bf16.gmra.mrb[0].mxu0 %v2980
  %v3033 = vpop.f32.mrb[0].mxu0
  %v3034 = vadd.f32 0.0, %v3033
  %v3035 = vpop.f32.mrb[0].mxu0
  %v3036 = vpop.f32.mrb[0].mxu0
  %v3037 = vadd.f32 0.0, %v3036
  %v3038 = vpop.f32.mrb[0].mxu0
  %3039 = vmatprep.mubr.bf16.mxu0 0
  %3040 = vmatmul.mubr.bf16.gmra.mrb[0].mxu0 %v2983
  %v3041 = vpop.f32.mrb[0].mxu0
  %v3042 = vadd.f32 0.0, %v3041
  %v3043 = vpop.f32.mrb[0].mxu0
  %v3044 = vpop.f32.mrb[0].mxu0
  %v3045 = vadd.f32 0.0, %v3044
  %v3046 = vpop.f32.mrb[0].mxu0
  %3047 = vmatprep.mubr.bf16.mxu0 0
  %3048 = vmatmul.mubr.bf16.gmra.mrb[0].mxu0 %v2986
  %v3049 = vpop.f32.mrb[0].mxu0
  %v3050 = vadd.f32 0.0, %v3049
  %v3051 = vpop.f32.mrb[0].mxu0
  %v3052 = vpop.f32.mrb[0].mxu0
  %v3053 = vpop.f32.mrb[0].mxu0
  %3054 = vdwg.mxu0
  %v3055 = vadd.f32 %v2938, %v3026
  %v3056 = vadd.f32 %v2939, %v3029
  %v3057 = vadd.f32 %v2940, %v3034
  %v3058 = vadd.f32 %v2941, %v3037
  %v3059 = vadd.f32 %v2942, %v3042
  %v3060 = vadd.f32 %v2943, %v3045
  %v3061 = vadd.f32 %v2944, %v3050
  %s3062 = scalar_lea.vmem %s11, 196
  %v3063 = vld [vmem:[%s3062] sm:$0xf]
  %v3064 = vld [vmem:[%s3062 + $0x4] sm:$0xf]
  %v3065 = vld [vmem:[%s3062 + $0x8] sm:$0xf]
  %v3066 = vld [vmem:[%s3062 + $0xc] sm:$0xf]
  %v3067 = vld [vmem:[%s3062 + $0x10] sm:$0xf]
  %v3068 = vld [vmem:[%s3062 + $0x14] sm:$0xf]
  %v3069 = vld [vmem:[%s3062 + $0x18] sm:$0x1]
  %v3077 = vunpack.c.l.b16 %v3063
  %v3078 = vunpack.c.l.b16 %v3064
  %v3079 = vunpack.c.l.b16 %v3065
  %v3080 = vunpack.c.l.b16 %v3066
  %v3081 = vunpack.c.l.b16 %v3067
  %v3082 = vunpack.c.l.b16 %v3068
  %v3083 = vunpack.c.l.b16 %v3069
  %v3084 = vpack.c.b16 %v3078, %v3077
  %v3085 = vpack.c.b16 %v3080, %v3079
  %v3086 = vpack.c.b16 %v3082, %v3081
  %v3087 = vpack.c.b16 %v3083, %v3083
  %3088 = vrot.lane.b32.xlu0 %v2255, 72
  %v3089 = vpop.permute.xlu0 %3088
  %3090 = vrot.lane.b32.xlu0 %v2258, 72
  %v3091 = vpop.permute.xlu0 %3090
  %v3094 = vsel %vm1656, %v3084, 0
  %v3097 = vsel %vm1656, %v3085, 0
  %v3100 = vsel %vm1656, %v3086, 0
  %v3103 = vsel %vm1656, %v3087, 0
  %v3106 = vsel %vm1775, %v3091, 0
  %3108 = vmatprep.subr.bf16.mxu0 0
  %3109 = vmatpush1.bf16.msra.mxu0 %v3089
  %3110 = vmatprep.subr.bf16.mxu0 0
  %3111 = vmatpush1.bf16.msra.mxu0 %v3106
  %3112 = vmatprep.subr.bf16.mxu0 0
  %3113 = vmatpush1.bf16.msra.mxu0 0
  %3114 = vmatprep.subr.bf16.mxu0 0
  %3115 = vmatpush1.bf16.msra.mxu0 0
  %3116 = vmatprep.subr.bf16.mxu0 0
  %3117 = vmatpush1.bf16.msra.mxu0 0
  %3118 = vmatprep.subr.bf16.mxu0 0
  %3119 = vmatpush1.bf16.msra.mxu0 0
  %3120 = vmatprep.subr.bf16.mxu0 0
  %3121 = vmatpush1.bf16.msra.mxu0 0
  %3122 = vmatprep.subr.bf16.mxu0 0
  %3123 = vmatpush1.bf16.msra.mxu0 0
  %3124 = vmatprep.subr.bf16.mxu0 0
  %3125 = vmatpush1.bf16.msra.mxu0 0
  %3126 = vmatprep.subr.bf16.mxu0 0
  %3127 = vmatpush1.bf16.msra.mxu0 0
  %3128 = vmatprep.subr.bf16.mxu0 0
  %3129 = vmatpush1.bf16.msra.mxu0 0
  %3130 = vmatprep.subr.bf16.mxu0 0
  %3131 = vmatpush1.bf16.msra.mxu0 0
  %3132 = vmatprep.subr.bf16.mxu0 0
  %3133 = vmatpush1.bf16.msra.mxu0 0
  %3134 = vmatprep.subr.bf16.mxu0 0
  %3135 = vmatpush1.bf16.msra.mxu0 0
  %3136 = vmatprep.subr.bf16.mxu0 0
  %3137 = vmatpush1.bf16.msra.mxu0 0
  %3138 = vmatprep.subr.bf16.mxu0 0
  %3139 = vmatpush1.bf16.msra.mxu0 0
  %3140 = vmatprep.mubr.bf16.mxu0 0
  %3141 = vmatmul.mubr.bf16.gmra.mrb[0].mxu0 %v3094
  %v3142 = vpop.f32.mrb[0].mxu0
  %v3143 = vadd.f32 0.0, %v3142
  %v3144 = vpop.f32.mrb[0].mxu0
  %v3145 = vpop.f32.mrb[0].mxu0
  %v3146 = vadd.f32 0.0, %v3145
  %v3147 = vpop.f32.mrb[0].mxu0
  %3148 = vmatprep.mubr.bf16.mxu0 0
  %3149 = vmatmul.mubr.bf16.gmra.mrb[0].mxu0 %v3097
  %v3150 = vpop.f32.mrb[0].mxu0
  %v3151 = vadd.f32 0.0, %v3150
  %v3152 = vpop.f32.mrb[0].mxu0
  %v3153 = vpop.f32.mrb[0].mxu0
  %v3154 = vadd.f32 0.0, %v3153
  %v3155 = vpop.f32.mrb[0].mxu0
  %3156 = vmatprep.mubr.bf16.mxu0 0
  %3157 = vmatmul.mubr.bf16.gmra.mrb[0].mxu0 %v3100
  %v3158 = vpop.f32.mrb[0].mxu0
  %v3159 = vadd.f32 0.0, %v3158
  %v3160 = vpop.f32.mrb[0].mxu0
  %v3161 = vpop.f32.mrb[0].mxu0
  %v3162 = vadd.f32 0.0, %v3161
  %v3163 = vpop.f32.mrb[0].mxu0
  %3164 = vmatprep.mubr.bf16.mxu0 0
  %3165 = vmatmul.mubr.bf16.gmra.mrb[0].mxu0 %v3103
  %v3166 = vpop.f32.mrb[0].mxu0
  %v3167 = vadd.f32 0.0, %v3166
  %v3168 = vpop.f32.mrb[0].mxu0
  %v3169 = vpop.f32.mrb[0].mxu0
  %v3170 = vpop.f32.mrb[0].mxu0
  %3171 = vdwg.mxu0
  %v3172 = vadd.f32 %v3055, %v3143
  %v3173 = vadd.f32 %v3056, %v3146
  %v3174 = vadd.f32 %v3057, %v3151
  %v3175 = vadd.f32 %v3058, %v3154
  %v3176 = vadd.f32 %v3059, %v3159
  %v3177 = vadd.f32 %v3060, %v3162
  %v3178 = vadd.f32 %v3061, %v3167
  %s3179 = scalar_lea.vmem %s11, 224
  %v3180 = vld [vmem:[%s3179] sm:$0xf]
  %v3181 = vld [vmem:[%s3179 + $0x4] sm:$0xf]
  %v3182 = vld [vmem:[%s3179 + $0x8] sm:$0xf]
  %v3183 = vld [vmem:[%s3179 + $0xc] sm:$0xf]
  %v3184 = vld [vmem:[%s3179 + $0x10] sm:$0xf]
  %v3185 = vld [vmem:[%s3179 + $0x14] sm:$0xf]
  %v3186 = vld [vmem:[%s3179 + $0x18] sm:$0x1]
  %v3194 = vunpack.c.l.b16 %v3180
  %v3195 = vunpack.c.l.b16 %v3181
  %v3196 = vunpack.c.l.b16 %v3182
  %v3197 = vunpack.c.l.b16 %v3183
  %v3198 = vunpack.c.l.b16 %v3184
  %v3199 = vunpack.c.l.b16 %v3185
  %v3200 = vunpack.c.l.b16 %v3186
  %v3201 = vpack.c.b16 %v3195, %v3194
  %v3202 = vpack.c.b16 %v3197, %v3196
  %v3203 = vpack.c.b16 %v3199, %v3198
  %v3204 = vpack.c.b16 %v3200, %v3200
  %3205 = vrot.lane.b32.xlu0 %v2255, 64
  %v3206 = vpop.permute.xlu0 %3205
  %3207 = vrot.lane.b32.xlu0 %v2258, 64
  %v3208 = vpop.permute.xlu0 %3207
  %v3211 = vsel %vm1656, %v3201, 0
  %v3214 = vsel %vm1656, %v3202, 0
  %v3217 = vsel %vm1656, %v3203, 0
  %v3220 = vsel %vm1656, %v3204, 0
  %v3223 = vsel %vm1775, %v3208, 0
  %3225 = vmatprep.subr.bf16.mxu0 0
  %3226 = vmatpush1.bf16.msra.mxu0 %v3206
  %3227 = vmatprep.subr.bf16.mxu0 0
  %3228 = vmatpush1.bf16.msra.mxu0 %v3223
  %3229 = vmatprep.subr.bf16.mxu0 0
  %3230 = vmatpush1.bf16.msra.mxu0 0
  %3231 = vmatprep.subr.bf16.mxu0 0
  %3232 = vmatpush1.bf16.msra.mxu0 0
  %3233 = vmatprep.subr.bf16.mxu0 0
  %3234 = vmatpush1.bf16.msra.mxu0 0
  %3235 = vmatprep.subr.bf16.mxu0 0
  %3236 = vmatpush1.bf16.msra.mxu0 0
  %3237 = vmatprep.subr.bf16.mxu0 0
  %3238 = vmatpush1.bf16.msra.mxu0 0
  %3239 = vmatprep.subr.bf16.mxu0 0
  %3240 = vmatpush1.bf16.msra.mxu0 0
  %3241 = vmatprep.subr.bf16.mxu0 0
  %3242 = vmatpush1.bf16.msra.mxu0 0
  %3243 = vmatprep.subr.bf16.mxu0 0
  %3244 = vmatpush1.bf16.msra.mxu0 0
  %3245 = vmatprep.subr.bf16.mxu0 0
  %3246 = vmatpush1.bf16.msra.mxu0 0
  %3247 = vmatprep.subr.bf16.mxu0 0
  %3248 = vmatpush1.bf16.msra.mxu0 0
  %3249 = vmatprep.subr.bf16.mxu0 0
  %3250 = vmatpush1.bf16.msra.mxu0 0
  %3251 = vmatprep.subr.bf16.mxu0 0
  %3252 = vmatpush1.bf16.msra.mxu0 0
  %3253 = vmatprep.subr.bf16.mxu0 0
  %3254 = vmatpush1.bf16.msra.mxu0 0
  %3255 = vmatprep.subr.bf16.mxu0 0
  %3256 = vmatpush1.bf16.msra.mxu0 0
  %3257 = vmatprep.mubr.bf16.mxu0 0
  %3258 = vmatmul.mubr.bf16.gmra.mrb[0].mxu0 %v3211
  %v3259 = vpop.f32.mrb[0].mxu0
  %v3260 = vadd.f32 0.0, %v3259
  %v3261 = vpop.f32.mrb[0].mxu0
  %v3262 = vpop.f32.mrb[0].mxu0
  %v3263 = vadd.f32 0.0, %v3262
  %v3264 = vpop.f32.mrb[0].mxu0
  %3265 = vmatprep.mubr.bf16.mxu0 0
  %3266 = vmatmul.mubr.bf16.gmra.mrb[0].mxu0 %v3214
  %v3267 = vpop.f32.mrb[0].mxu0
  %v3268 = vadd.f32 0.0, %v3267
  %v3269 = vpop.f32.mrb[0].mxu0
  %v3270 = vpop.f32.mrb[0].mxu0
  %v3271 = vadd.f32 0.0, %v3270
  %v3272 = vpop.f32.mrb[0].mxu0
  %3273 = vmatprep.mubr.bf16.mxu0 0
  %3274 = vmatmul.mubr.bf16.gmra.mrb[0].mxu0 %v3217
  %v3275 = vpop.f32.mrb[0].mxu0
  %v3276 = vadd.f32 0.0, %v3275
  %v3277 = vpop.f32.mrb[0].mxu0
  %v3278 = vpop.f32.mrb[0].mxu0
  %v3279 = vadd.f32 0.0, %v3278
  %v3280 = vpop.f32.mrb[0].mxu0
  %3281 = vmatprep.mubr.bf16.mxu0 0
  %3282 = vmatmul.mubr.bf16.gmra.mrb[0].mxu0 %v3220
  %v3283 = vpop.f32.mrb[0].mxu0
  %v3284 = vadd.f32 0.0, %v3283
  %v3285 = vpop.f32.mrb[0].mxu0
  %v3286 = vpop.f32.mrb[0].mxu0
  %v3287 = vpop.f32.mrb[0].mxu0
  %3288 = vdwg.mxu0
  %v3289 = vadd.f32 %v3172, %v3260
  %v3290 = vadd.f32 %v3173, %v3263
  %v3291 = vadd.f32 %v3174, %v3268
  %v3292 = vadd.f32 %v3175, %v3271
  %v3293 = vadd.f32 %v3176, %v3276
  %v3294 = vadd.f32 %v3177, %v3279
  %v3295 = vadd.f32 %v3178, %v3284
  %s3296 = scalar_lea.vmem %s11, 252
  %v3297 = vld [vmem:[%s3296] sm:$0xf]
  %v3298 = vld [vmem:[%s3296 + $0x4] sm:$0xf]
  %v3299 = vld [vmem:[%s3296 + $0x8] sm:$0xf]
  %v3300 = vld [vmem:[%s3296 + $0xc] sm:$0xf]
  %v3301 = vld [vmem:[%s3296 + $0x10] sm:$0xf]
  %v3302 = vld [vmem:[%s3296 + $0x14] sm:$0xf]
  %v3303 = vld [vmem:[%s3296 + $0x18] sm:$0x1]
  %v3311 = vunpack.c.l.b16 %v3297
  %v3312 = vunpack.c.l.b16 %v3298
  %v3313 = vunpack.c.l.b16 %v3299
  %v3314 = vunpack.c.l.b16 %v3300
  %v3315 = vunpack.c.l.b16 %v3301
  %v3316 = vunpack.c.l.b16 %v3302
  %v3317 = vunpack.c.l.b16 %v3303
  %v3318 = vpack.c.b16 %v3312, %v3311
  %v3319 = vpack.c.b16 %v3314, %v3313
  %v3320 = vpack.c.b16 %v3316, %v3315
  %v3321 = vpack.c.b16 %v3317, %v3317
  %3322 = vrot.lane.b32.xlu0 %v2255, 56
  %v3323 = vpop.permute.xlu0 %3322
  %3324 = vrot.lane.b32.xlu0 %v2258, 56
  %v3325 = vpop.permute.xlu0 %3324
  %v3328 = vsel %vm1656, %v3318, 0
  %v3331 = vsel %vm1656, %v3319, 0
  %v3334 = vsel %vm1656, %v3320, 0
  %v3337 = vsel %vm1656, %v3321, 0
  %v3340 = vsel %vm1775, %v3325, 0
  %3342 = vmatprep.subr.bf16.mxu0 0
  %3343 = vmatpush1.bf16.msra.mxu0 %v3323
  %3344 = vmatprep.subr.bf16.mxu0 0
  %3345 = vmatpush1.bf16.msra.mxu0 %v3340
  %3346 = vmatprep.subr.bf16.mxu0 0
  %3347 = vmatpush1.bf16.msra.mxu0 0
  %3348 = vmatprep.subr.bf16.mxu0 0
  %3349 = vmatpush1.bf16.msra.mxu0 0
  %3350 = vmatprep.subr.bf16.mxu0 0
  %3351 = vmatpush1.bf16.msra.mxu0 0
  %3352 = vmatprep.subr.bf16.mxu0 0
  %3353 = vmatpush1.bf16.msra.mxu0 0
  %3354 = vmatprep.subr.bf16.mxu0 0
  %3355 = vmatpush1.bf16.msra.mxu0 0
  %3356 = vmatprep.subr.bf16.mxu0 0
  %3357 = vmatpush1.bf16.msra.mxu0 0
  %3358 = vmatprep.subr.bf16.mxu0 0
  %3359 = vmatpush1.bf16.msra.mxu0 0
  %3360 = vmatprep.subr.bf16.mxu0 0
  %3361 = vmatpush1.bf16.msra.mxu0 0
  %3362 = vmatprep.subr.bf16.mxu0 0
  %3363 = vmatpush1.bf16.msra.mxu0 0
  %3364 = vmatprep.subr.bf16.mxu0 0
  %3365 = vmatpush1.bf16.msra.mxu0 0
  %3366 = vmatprep.subr.bf16.mxu0 0
  %3367 = vmatpush1.bf16.msra.mxu0 0
  %3368 = vmatprep.subr.bf16.mxu0 0
  %3369 = vmatpush1.bf16.msra.mxu0 0
  %3370 = vmatprep.subr.bf16.mxu0 0
  %3371 = vmatpush1.bf16.msra.mxu0 0
  %3372 = vmatprep.subr.bf16.mxu0 0
  %3373 = vmatpush1.bf16.msra.mxu0 0
  %3374 = vmatprep.mubr.bf16.mxu0 0
  %3375 = vmatmul.mubr.bf16.gmra.mrb[0].mxu0 %v3328
  %v3376 = vpop.f32.mrb[0].mxu0
  %v3377 = vadd.f32 0.0, %v3376
  %v3378 = vpop.f32.mrb[0].mxu0
  %v3379 = vpop.f32.mrb[0].mxu0
  %v3380 = vadd.f32 0.0, %v3379
  %v3381 = vpop.f32.mrb[0].mxu0
  %3382 = vmatprep.mubr.bf16.mxu0 0
  %3383 = vmatmul.mubr.bf16.gmra.mrb[0].mxu0 %v3331
  %v3384 = vpop.f32.mrb[0].mxu0
  %v3385 = vadd.f32 0.0, %v3384
  %v3386 = vpop.f32.mrb[0].mxu0
  %v3387 = vpop.f32.mrb[0].mxu0
  %v3388 = vadd.f32 0.0, %v3387
  %v3389 = vpop.f32.mrb[0].mxu0
  %3390 = vmatprep.mubr.bf16.mxu0 0
  %3391 = vmatmul.mubr.bf16.gmra.mrb[0].mxu0 %v3334
  %v3392 = vpop.f32.mrb[0].mxu0
  %v3393 = vadd.f32 0.0, %v3392
  %v3394 = vpop.f32.mrb[0].mxu0
  %v3395 = vpop.f32.mrb[0].mxu0
  %v3396 = vadd.f32 0.0, %v3395
  %v3397 = vpop.f32.mrb[0].mxu0
  %3398 = vmatprep.mubr.bf16.mxu0 0
  %3399 = vmatmul.mubr.bf16.gmra.mrb[0].mxu0 %v3337
  %v3400 = vpop.f32.mrb[0].mxu0
  %v3401 = vadd.f32 0.0, %v3400
  %v3402 = vpop.f32.mrb[0].mxu0
  %v3403 = vpop.f32.mrb[0].mxu0
  %v3404 = vpop.f32.mrb[0].mxu0
  %3405 = vdwg.mxu0
  %v3406 = vadd.f32 %v3289, %v3377
  %v3407 = vadd.f32 %v3290, %v3380
  %v3408 = vadd.f32 %v3291, %v3385
  %v3409 = vadd.f32 %v3292, %v3388
  %v3410 = vadd.f32 %v3293, %v3393
  %v3411 = vadd.f32 %v3294, %v3396
  %v3412 = vadd.f32 %v3295, %v3401
  %s3413 = scalar_lea.vmem %s11, 280
  %v3414 = vld [vmem:[%s3413] sm:$0xf]
  %v3415 = vld [vmem:[%s3413 + $0x4] sm:$0xf]
  %v3416 = vld [vmem:[%s3413 + $0x8] sm:$0xf]
  %v3417 = vld [vmem:[%s3413 + $0xc] sm:$0xf]
  %v3418 = vld [vmem:[%s3413 + $0x10] sm:$0xf]
  %v3419 = vld [vmem:[%s3413 + $0x14] sm:$0xf]
  %v3420 = vld [vmem:[%s3413 + $0x18] sm:$0x1]
  %v3428 = vunpack.c.l.b16 %v3414
  %v3429 = vunpack.c.l.b16 %v3415
  %v3430 = vunpack.c.l.b16 %v3416
  %v3431 = vunpack.c.l.b16 %v3417
  %v3432 = vunpack.c.l.b16 %v3418
  %v3433 = vunpack.c.l.b16 %v3419
  %v3434 = vunpack.c.l.b16 %v3420
  %v3435 = vpack.c.b16 %v3429, %v3428
  %v3436 = vpack.c.b16 %v3431, %v3430
  %v3437 = vpack.c.b16 %v3433, %v3432
  %v3438 = vpack.c.b16 %v3434, %v3434
  %3439 = vrot.lane.b32.xlu0 %v2255, 48
  %v3440 = vpop.permute.xlu0 %3439
  %3441 = vrot.lane.b32.xlu0 %v2258, 48
  %v3442 = vpop.permute.xlu0 %3441
  %v3445 = vsel %vm1656, %v3435, 0
  %v3448 = vsel %vm1656, %v3436, 0
  %v3451 = vsel %vm1656, %v3437, 0
  %v3454 = vsel %vm1656, %v3438, 0
  %v3457 = vsel %vm1775, %v3442, 0
  %3459 = vmatprep.subr.bf16.mxu0 0
  %3460 = vmatpush1.bf16.msra.mxu0 %v3440
  %3461 = vmatprep.subr.bf16.mxu0 0
  %3462 = vmatpush1.bf16.msra.mxu0 %v3457
  %3463 = vmatprep.subr.bf16.mxu0 0
  %3464 = vmatpush1.bf16.msra.mxu0 0
  %3465 = vmatprep.subr.bf16.mxu0 0
  %3466 = vmatpush1.bf16.msra.mxu0 0
  %3467 = vmatprep.subr.bf16.mxu0 0
  %3468 = vmatpush1.bf16.msra.mxu0 0
  %3469 = vmatprep.subr.bf16.mxu0 0
  %3470 = vmatpush1.bf16.msra.mxu0 0
  %3471 = vmatprep.subr.bf16.mxu0 0
  %3472 = vmatpush1.bf16.msra.mxu0 0
  %3473 = vmatprep.subr.bf16.mxu0 0
  %3474 = vmatpush1.bf16.msra.mxu0 0
  %3475 = vmatprep.subr.bf16.mxu0 0
  %3476 = vmatpush1.bf16.msra.mxu0 0
  %3477 = vmatprep.subr.bf16.mxu0 0
  %3478 = vmatpush1.bf16.msra.mxu0 0
  %3479 = vmatprep.subr.bf16.mxu0 0
  %3480 = vmatpush1.bf16.msra.mxu0 0
  %3481 = vmatprep.subr.bf16.mxu0 0
  %3482 = vmatpush1.bf16.msra.mxu0 0
  %3483 = vmatprep.subr.bf16.mxu0 0
  %3484 = vmatpush1.bf16.msra.mxu0 0
  %3485 = vmatprep.subr.bf16.mxu0 0
  %3486 = vmatpush1.bf16.msra.mxu0 0
  %3487 = vmatprep.subr.bf16.mxu0 0
  %3488 = vmatpush1.bf16.msra.mxu0 0
  %3489 = vmatprep.subr.bf16.mxu0 0
  %3490 = vmatpush1.bf16.msra.mxu0 0
  %3491 = vmatprep.mubr.bf16.mxu0 0
  %3492 = vmatmul.mubr.bf16.gmra.mrb[0].mxu0 %v3445
  %v3493 = vpop.f32.mrb[0].mxu0
  %v3494 = vadd.f32 0.0, %v3493
  %v3495 = vpop.f32.mrb[0].mxu0
  %v3496 = vpop.f32.mrb[0].mxu0
  %v3497 = vadd.f32 0.0, %v3496
  %v3498 = vpop.f32.mrb[0].mxu0
  %3499 = vmatprep.mubr.bf16.mxu0 0
  %3500 = vmatmul.mubr.bf16.gmra.mrb[0].mxu0 %v3448
  %v3501 = vpop.f32.mrb[0].mxu0
  %v3502 = vadd.f32 0.0, %v3501
  %v3503 = vpop.f32.mrb[0].mxu0
  %v3504 = vpop.f32.mrb[0].mxu0
  %v3505 = vadd.f32 0.0, %v3504
  %v3506 = vpop.f32.mrb[0].mxu0
  %3507 = vmatprep.mubr.bf16.mxu0 0
  %3508 = vmatmul.mubr.bf16.gmra.mrb[0].mxu0 %v3451
  %v3509 = vpop.f32.mrb[0].mxu0
  %v3510 = vadd.f32 0.0, %v3509
  %v3511 = vpop.f32.mrb[0].mxu0
  %v3512 = vpop.f32.mrb[0].mxu0
  %v3513 = vadd.f32 0.0, %v3512
  %v3514 = vpop.f32.mrb[0].mxu0
  %3515 = vmatprep.mubr.bf16.mxu0 0
  %3516 = vmatmul.mubr.bf16.gmra.mrb[0].mxu0 %v3454
  %v3517 = vpop.f32.mrb[0].mxu0
  %v3518 = vadd.f32 0.0, %v3517
  %v3519 = vpop.f32.mrb[0].mxu0
  %v3520 = vpop.f32.mrb[0].mxu0
  %v3521 = vpop.f32.mrb[0].mxu0
  %3522 = vdwg.mxu0
  %v3523 = vadd.f32 %v3406, %v3494
  %v3524 = vadd.f32 %v3407, %v3497
  %v3525 = vadd.f32 %v3408, %v3502
  %v3526 = vadd.f32 %v3409, %v3505
  %v3527 = vadd.f32 %v3410, %v3510
  %v3528 = vadd.f32 %v3411, %v3513
  %v3529 = vadd.f32 %v3412, %v3518
  %s3530 = scalar_lea.vmem %s11, 308
  %v3531 = vld [vmem:[%s3530] sm:$0xf]
  %v3532 = vld [vmem:[%s3530 + $0x4] sm:$0xf]
  %v3533 = vld [vmem:[%s3530 + $0x8] sm:$0xf]
  %v3534 = vld [vmem:[%s3530 + $0xc] sm:$0xf]
  %v3535 = vld [vmem:[%s3530 + $0x10] sm:$0xf]
  %v3536 = vld [vmem:[%s3530 + $0x14] sm:$0xf]
  %v3537 = vld [vmem:[%s3530 + $0x18] sm:$0x1]
  %v3545 = vunpack.c.l.b16 %v3531
  %v3546 = vunpack.c.l.b16 %v3532
  %v3547 = vunpack.c.l.b16 %v3533
  %v3548 = vunpack.c.l.b16 %v3534
  %v3549 = vunpack.c.l.b16 %v3535
  %v3550 = vunpack.c.l.b16 %v3536
  %v3551 = vunpack.c.l.b16 %v3537
  %v3552 = vpack.c.b16 %v3546, %v3545
  %v3553 = vpack.c.b16 %v3548, %v3547
  %v3554 = vpack.c.b16 %v3550, %v3549
  %v3555 = vpack.c.b16 %v3551, %v3551
  %3556 = vrot.lane.b32.xlu0 %v2255, 40
  %v3557 = vpop.permute.xlu0 %3556
  %3558 = vrot.lane.b32.xlu0 %v2258, 40
  %v3559 = vpop.permute.xlu0 %3558
  %v3562 = vsel %vm1656, %v3552, 0
  %v3565 = vsel %vm1656, %v3553, 0
  %v3568 = vsel %vm1656, %v3554, 0
  %v3571 = vsel %vm1656, %v3555, 0
  %v3574 = vsel %vm1775, %v3559, 0
  %3576 = vmatprep.subr.bf16.mxu0 0
  %3577 = vmatpush1.bf16.msra.mxu0 %v3557
  %3578 = vmatprep.subr.bf16.mxu0 0
  %3579 = vmatpush1.bf16.msra.mxu0 %v3574
  %3580 = vmatprep.subr.bf16.mxu0 0
  %3581 = vmatpush1.bf16.msra.mxu0 0
  %3582 = vmatprep.subr.bf16.mxu0 0
  %3583 = vmatpush1.bf16.msra.mxu0 0
  %3584 = vmatprep.subr.bf16.mxu0 0
  %3585 = vmatpush1.bf16.msra.mxu0 0
  %3586 = vmatprep.subr.bf16.mxu0 0
  %3587 = vmatpush1.bf16.msra.mxu0 0
  %3588 = vmatprep.subr.bf16.mxu0 0
  %3589 = vmatpush1.bf16.msra.mxu0 0
  %3590 = vmatprep.subr.bf16.mxu0 0
  %3591 = vmatpush1.bf16.msra.mxu0 0
  %3592 = vmatprep.subr.bf16.mxu0 0
  %3593 = vmatpush1.bf16.msra.mxu0 0
  %3594 = vmatprep.subr.bf16.mxu0 0
  %3595 = vmatpush1.bf16.msra.mxu0 0
  %3596 = vmatprep.subr.bf16.mxu0 0
  %3597 = vmatpush1.bf16.msra.mxu0 0
  %3598 = vmatprep.subr.bf16.mxu0 0
  %3599 = vmatpush1.bf16.msra.mxu0 0
  %3600 = vmatprep.subr.bf16.mxu0 0
  %3601 = vmatpush1.bf16.msra.mxu0 0
  %3602 = vmatprep.subr.bf16.mxu0 0
  %3603 = vmatpush1.bf16.msra.mxu0 0
  %3604 = vmatprep.subr.bf16.mxu0 0
  %3605 = vmatpush1.bf16.msra.mxu0 0
  %3606 = vmatprep.subr.bf16.mxu0 0
  %3607 = vmatpush1.bf16.msra.mxu0 0
  %3608 = vmatprep.mubr.bf16.mxu0 0
  %3609 = vmatmul.mubr.bf16.gmra.mrb[0].mxu0 %v3562
  %v3610 = vpop.f32.mrb[0].mxu0
  %v3611 = vadd.f32 0.0, %v3610
  %v3612 = vpop.f32.mrb[0].mxu0
  %v3613 = vpop.f32.mrb[0].mxu0
  %v3614 = vadd.f32 0.0, %v3613
  %v3615 = vpop.f32.mrb[0].mxu0
  %3616 = vmatprep.mubr.bf16.mxu0 0
  %3617 = vmatmul.mubr.bf16.gmra.mrb[0].mxu0 %v3565
  %v3618 = vpop.f32.mrb[0].mxu0
  %v3619 = vadd.f32 0.0, %v3618
  %v3620 = vpop.f32.mrb[0].mxu0
  %v3621 = vpop.f32.mrb[0].mxu0
  %v3622 = vadd.f32 0.0, %v3621
  %v3623 = vpop.f32.mrb[0].mxu0
  %3624 = vmatprep.mubr.bf16.mxu0 0
  %3625 = vmatmul.mubr.bf16.gmra.mrb[0].mxu0 %v3568
  %v3626 = vpop.f32.mrb[0].mxu0
  %v3627 = vadd.f32 0.0, %v3626
  %v3628 = vpop.f32.mrb[0].mxu0
  %v3629 = vpop.f32.mrb[0].mxu0
  %v3630 = vadd.f32 0.0, %v3629
  %v3631 = vpop.f32.mrb[0].mxu0
  %3632 = vmatprep.mubr.bf16.mxu0 0
  %3633 = vmatmul.mubr.bf16.gmra.mrb[0].mxu0 %v3571
  %v3634 = vpop.f32.mrb[0].mxu0
  %v3635 = vadd.f32 0.0, %v3634
  %v3636 = vpop.f32.mrb[0].mxu0
  %v3637 = vpop.f32.mrb[0].mxu0
  %v3638 = vpop.f32.mrb[0].mxu0
  %3639 = vdwg.mxu0
  %v3640 = vadd.f32 %v3523, %v3611
  %v3641 = vadd.f32 %v3524, %v3614
  %v3642 = vadd.f32 %v3525, %v3619
  %v3643 = vadd.f32 %v3526, %v3622
  %v3644 = vadd.f32 %v3527, %v3627
  %v3645 = vadd.f32 %v3528, %v3630
  %v3646 = vadd.f32 %v3529, %v3635
  %s3647 = scalar_lea.vmem %s11, 336
  %v3648 = vld [vmem:[%s3647] sm:$0xf]
  %v3649 = vld [vmem:[%s3647 + $0x4] sm:$0xf]
  %v3650 = vld [vmem:[%s3647 + $0x8] sm:$0xf]
  %v3651 = vld [vmem:[%s3647 + $0xc] sm:$0xf]
  %v3652 = vld [vmem:[%s3647 + $0x10] sm:$0xf]
  %v3653 = vld [vmem:[%s3647 + $0x14] sm:$0xf]
  %v3654 = vld [vmem:[%s3647 + $0x18] sm:$0x1]
  %v3662 = vunpack.c.l.b16 %v3648
  %v3663 = vunpack.c.l.b16 %v3649
  %v3664 = vunpack.c.l.b16 %v3650
  %v3665 = vunpack.c.l.b16 %v3651
  %v3666 = vunpack.c.l.b16 %v3652
  %v3667 = vunpack.c.l.b16 %v3653
  %v3668 = vunpack.c.l.b16 %v3654
  %v3669 = vpack.c.b16 %v3663, %v3662
  %v3670 = vpack.c.b16 %v3665, %v3664
  %v3671 = vpack.c.b16 %v3667, %v3666
  %v3672 = vpack.c.b16 %v3668, %v3668
  %3673 = vrot.lane.b32.xlu0 %v2255, 32
  %v3674 = vpop.permute.xlu0 %3673
  %3675 = vrot.lane.b32.xlu0 %v2258, 32
  %v3676 = vpop.permute.xlu0 %3675
  %v3679 = vsel %vm1656, %v3669, 0
  %v3682 = vsel %vm1656, %v3670, 0
  %v3685 = vsel %vm1656, %v3671, 0
  %v3688 = vsel %vm1656, %v3672, 0
  %v3691 = vsel %vm1775, %v3676, 0
  %3693 = vmatprep.subr.bf16.mxu0 0
  %3694 = vmatpush1.bf16.msra.mxu0 %v3674
  %3695 = vmatprep.subr.bf16.mxu0 0
  %3696 = vmatpush1.bf16.msra.mxu0 %v3691
  %3697 = vmatprep.subr.bf16.mxu0 0
  %3698 = vmatpush1.bf16.msra.mxu0 0
  %3699 = vmatprep.subr.bf16.mxu0 0
  %3700 = vmatpush1.bf16.msra.mxu0 0
  %3701 = vmatprep.subr.bf16.mxu0 0
  %3702 = vmatpush1.bf16.msra.mxu0 0
  %3703 = vmatprep.subr.bf16.mxu0 0
  %3704 = vmatpush1.bf16.msra.mxu0 0
  %3705 = vmatprep.subr.bf16.mxu0 0
  %3706 = vmatpush1.bf16.msra.mxu0 0
  %3707 = vmatprep.subr.bf16.mxu0 0
  %3708 = vmatpush1.bf16.msra.mxu0 0
  %3709 = vmatprep.subr.bf16.mxu0 0
  %3710 = vmatpush1.bf16.msra.mxu0 0
  %3711 = vmatprep.subr.bf16.mxu0 0
  %3712 = vmatpush1.bf16.msra.mxu0 0
  %3713 = vmatprep.subr.bf16.mxu0 0
  %3714 = vmatpush1.bf16.msra.mxu0 0
  %3715 = vmatprep.subr.bf16.mxu0 0
  %3716 = vmatpush1.bf16.msra.mxu0 0
  %3717 = vmatprep.subr.bf16.mxu0 0
  %3718 = vmatpush1.bf16.msra.mxu0 0
  %3719 = vmatprep.subr.bf16.mxu0 0
  %3720 = vmatpush1.bf16.msra.mxu0 0
  %3721 = vmatprep.subr.bf16.mxu0 0
  %3722 = vmatpush1.bf16.msra.mxu0 0
  %3723 = vmatprep.subr.bf16.mxu0 0
  %3724 = vmatpush1.bf16.msra.mxu0 0
  %3725 = vmatprep.mubr.bf16.mxu0 0
  %3726 = vmatmul.mubr.bf16.gmra.mrb[0].mxu0 %v3679
  %v3727 = vpop.f32.mrb[0].mxu0
  %v3728 = vadd.f32 0.0, %v3727
  %v3729 = vpop.f32.mrb[0].mxu0
  %v3730 = vpop.f32.mrb[0].mxu0
  %v3731 = vadd.f32 0.0, %v3730
  %v3732 = vpop.f32.mrb[0].mxu0
  %3733 = vmatprep.mubr.bf16.mxu0 0
  %3734 = vmatmul.mubr.bf16.gmra.mrb[0].mxu0 %v3682
  %v3735 = vpop.f32.mrb[0].mxu0
  %v3736 = vadd.f32 0.0, %v3735
  %v3737 = vpop.f32.mrb[0].mxu0
  %v3738 = vpop.f32.mrb[0].mxu0
  %v3739 = vadd.f32 0.0, %v3738
  %v3740 = vpop.f32.mrb[0].mxu0
  %3741 = vmatprep.mubr.bf16.mxu0 0
  %3742 = vmatmul.mubr.bf16.gmra.mrb[0].mxu0 %v3685
  %v3743 = vpop.f32.mrb[0].mxu0
  %v3744 = vadd.f32 0.0, %v3743
  %v3745 = vpop.f32.mrb[0].mxu0
  %v3746 = vpop.f32.mrb[0].mxu0
  %v3747 = vadd.f32 0.0, %v3746
  %v3748 = vpop.f32.mrb[0].mxu0
  %3749 = vmatprep.mubr.bf16.mxu0 0
  %3750 = vmatmul.mubr.bf16.gmra.mrb[0].mxu0 %v3688
  %v3751 = vpop.f32.mrb[0].mxu0
  %v3752 = vadd.f32 0.0, %v3751
  %v3753 = vpop.f32.mrb[0].mxu0
  %v3754 = vpop.f32.mrb[0].mxu0
  %v3755 = vpop.f32.mrb[0].mxu0
  %3756 = vdwg.mxu0
  %v3757 = vadd.f32 %v3640, %v3728
  %v3758 = vadd.f32 %v3641, %v3731
  %v3759 = vadd.f32 %v3642, %v3736
  %v3760 = vadd.f32 %v3643, %v3739
  %v3761 = vadd.f32 %v3644, %v3744
  %v3762 = vadd.f32 %v3645, %v3747
  %v3763 = vadd.f32 %v3646, %v3752
  %s3764 = scalar_lea.vmem %s11, 364
  %v3765 = vld [vmem:[%s3764] sm:$0xf]
  %v3766 = vld [vmem:[%s3764 + $0x4] sm:$0xf]
  %v3767 = vld [vmem:[%s3764 + $0x8] sm:$0xf]
  %v3768 = vld [vmem:[%s3764 + $0xc] sm:$0xf]
  %v3769 = vld [vmem:[%s3764 + $0x10] sm:$0xf]
  %v3770 = vld [vmem:[%s3764 + $0x14] sm:$0xf]
  %v3771 = vld [vmem:[%s3764 + $0x18] sm:$0x1]
  %v3779 = vunpack.c.l.b16 %v3765
  %v3780 = vunpack.c.l.b16 %v3766
  %v3781 = vunpack.c.l.b16 %v3767
  %v3782 = vunpack.c.l.b16 %v3768
  %v3783 = vunpack.c.l.b16 %v3769
  %v3784 = vunpack.c.l.b16 %v3770
  %v3785 = vunpack.c.l.b16 %v3771
  %v3786 = vpack.c.b16 %v3780, %v3779
  %v3787 = vpack.c.b16 %v3782, %v3781
  %v3788 = vpack.c.b16 %v3784, %v3783
  %v3789 = vpack.c.b16 %v3785, %v3785
  %3790 = vrot.lane.b32.xlu0 %v2255, 24
  %v3791 = vpop.permute.xlu0 %3790
  %3792 = vrot.lane.b32.xlu0 %v2258, 24
  %v3793 = vpop.permute.xlu0 %3792
  %v3796 = vsel %vm1656, %v3786, 0
  %v3799 = vsel %vm1656, %v3787, 0
  %v3802 = vsel %vm1656, %v3788, 0
  %v3805 = vsel %vm1656, %v3789, 0
  %v3808 = vsel %vm1775, %v3793, 0
  %3810 = vmatprep.subr.bf16.mxu0 0
  %3811 = vmatpush1.bf16.msra.mxu0 %v3791
  %3812 = vmatprep.subr.bf16.mxu0 0
  %3813 = vmatpush1.bf16.msra.mxu0 %v3808
  %3814 = vmatprep.subr.bf16.mxu0 0
  %3815 = vmatpush1.bf16.msra.mxu0 0
  %3816 = vmatprep.subr.bf16.mxu0 0
  %3817 = vmatpush1.bf16.msra.mxu0 0
  %3818 = vmatprep.subr.bf16.mxu0 0
  %3819 = vmatpush1.bf16.msra.mxu0 0
  %3820 = vmatprep.subr.bf16.mxu0 0
  %3821 = vmatpush1.bf16.msra.mxu0 0
  %3822 = vmatprep.subr.bf16.mxu0 0
  %3823 = vmatpush1.bf16.msra.mxu0 0
  %3824 = vmatprep.subr.bf16.mxu0 0
  %3825 = vmatpush1.bf16.msra.mxu0 0
  %3826 = vmatprep.subr.bf16.mxu0 0
  %3827 = vmatpush1.bf16.msra.mxu0 0
  %3828 = vmatprep.subr.bf16.mxu0 0
  %3829 = vmatpush1.bf16.msra.mxu0 0
  %3830 = vmatprep.subr.bf16.mxu0 0
  %3831 = vmatpush1.bf16.msra.mxu0 0
  %3832 = vmatprep.subr.bf16.mxu0 0
  %3833 = vmatpush1.bf16.msra.mxu0 0
  %3834 = vmatprep.subr.bf16.mxu0 0
  %3835 = vmatpush1.bf16.msra.mxu0 0
  %3836 = vmatprep.subr.bf16.mxu0 0
  %3837 = vmatpush1.bf16.msra.mxu0 0
  %3838 = vmatprep.subr.bf16.mxu0 0
  %3839 = vmatpush1.bf16.msra.mxu0 0
  %3840 = vmatprep.subr.bf16.mxu0 0
  %3841 = vmatpush1.bf16.msra.mxu0 0
  %3842 = vmatprep.mubr.bf16.mxu0 0
  %3843 = vmatmul.mubr.bf16.gmra.mrb[0].mxu0 %v3796
  %v3844 = vpop.f32.mrb[0].mxu0
  %v3845 = vadd.f32 0.0, %v3844
  %v3846 = vpop.f32.mrb[0].mxu0
  %v3847 = vpop.f32.mrb[0].mxu0
  %v3848 = vadd.f32 0.0, %v3847
  %v3849 = vpop.f32.mrb[0].mxu0
  %3850 = vmatprep.mubr.bf16.mxu0 0
  %3851 = vmatmul.mubr.bf16.gmra.mrb[0].mxu0 %v3799
  %v3852 = vpop.f32.mrb[0].mxu0
  %v3853 = vadd.f32 0.0, %v3852
  %v3854 = vpop.f32.mrb[0].mxu0
  %v3855 = vpop.f32.mrb[0].mxu0
  %v3856 = vadd.f32 0.0, %v3855
  %v3857 = vpop.f32.mrb[0].mxu0
  %3858 = vmatprep.mubr.bf16.mxu0 0
  %3859 = vmatmul.mubr.bf16.gmra.mrb[0].mxu0 %v3802
  %v3860 = vpop.f32.mrb[0].mxu0
  %v3861 = vadd.f32 0.0, %v3860
  %v3862 = vpop.f32.mrb[0].mxu0
  %v3863 = vpop.f32.mrb[0].mxu0
  %v3864 = vadd.f32 0.0, %v3863
  %v3865 = vpop.f32.mrb[0].mxu0
  %3866 = vmatprep.mubr.bf16.mxu0 0
  %3867 = vmatmul.mubr.bf16.gmra.mrb[0].mxu0 %v3805
  %v3868 = vpop.f32.mrb[0].mxu0
  %v3869 = vadd.f32 0.0, %v3868
  %v3870 = vpop.f32.mrb[0].mxu0
  %v3871 = vpop.f32.mrb[0].mxu0
  %v3872 = vpop.f32.mrb[0].mxu0
  %3873 = vdwg.mxu0
  %v3874 = vadd.f32 %v3757, %v3845
  %v3875 = vadd.f32 %v3758, %v3848
  %v3876 = vadd.f32 %v3759, %v3853
  %v3877 = vadd.f32 %v3760, %v3856
  %v3878 = vadd.f32 %v3761, %v3861
  %v3879 = vadd.f32 %v3762, %v3864
  %v3880 = vadd.f32 %v3763, %v3869
  %s3881 = scalar_lea.vmem %s11, 392
  %v3882 = vld [vmem:[%s3881] sm:$0xf]
  %v3883 = vld [vmem:[%s3881 + $0x4] sm:$0xf]
  %v3884 = vld [vmem:[%s3881 + $0x8] sm:$0xf]
  %v3885 = vld [vmem:[%s3881 + $0xc] sm:$0xf]
  %v3886 = vld [vmem:[%s3881 + $0x10] sm:$0xf]
  %v3887 = vld [vmem:[%s3881 + $0x14] sm:$0xf]
  %v3888 = vld [vmem:[%s3881 + $0x18] sm:$0x1]
  %v3896 = vunpack.c.l.b16 %v3882
  %v3897 = vunpack.c.l.b16 %v3883
  %v3898 = vunpack.c.l.b16 %v3884
  %v3899 = vunpack.c.l.b16 %v3885
  %v3900 = vunpack.c.l.b16 %v3886
  %v3901 = vunpack.c.l.b16 %v3887
  %v3902 = vunpack.c.l.b16 %v3888
  %v3903 = vpack.c.b16 %v3897, %v3896
  %v3904 = vpack.c.b16 %v3899, %v3898
  %v3905 = vpack.c.b16 %v3901, %v3900
  %v3906 = vpack.c.b16 %v3902, %v3902
  %3907 = vrot.lane.b32.xlu0 %v2255, 16
  %v3908 = vpop.permute.xlu0 %3907
  %3909 = vrot.lane.b32.xlu0 %v2258, 16
  %v3910 = vpop.permute.xlu0 %3909
  %v3913 = vsel %vm1656, %v3903, 0
  %v3916 = vsel %vm1656, %v3904, 0
  %v3919 = vsel %vm1656, %v3905, 0
  %v3922 = vsel %vm1656, %v3906, 0
  %v3925 = vsel %vm1775, %v3910, 0
  %3927 = vmatprep.subr.bf16.mxu0 0
  %3928 = vmatpush1.bf16.msra.mxu0 %v3908
  %3929 = vmatprep.subr.bf16.mxu0 0
  %3930 = vmatpush1.bf16.msra.mxu0 %v3925
  %3931 = vmatprep.subr.bf16.mxu0 0
  %3932 = vmatpush1.bf16.msra.mxu0 0
  %3933 = vmatprep.subr.bf16.mxu0 0
  %3934 = vmatpush1.bf16.msra.mxu0 0
  %3935 = vmatprep.subr.bf16.mxu0 0
  %3936 = vmatpush1.bf16.msra.mxu0 0
  %3937 = vmatprep.subr.bf16.mxu0 0
  %3938 = vmatpush1.bf16.msra.mxu0 0
  %3939 = vmatprep.subr.bf16.mxu0 0
  %3940 = vmatpush1.bf16.msra.mxu0 0
  %3941 = vmatprep.subr.bf16.mxu0 0
  %3942 = vmatpush1.bf16.msra.mxu0 0
  %3943 = vmatprep.subr.bf16.mxu0 0
  %3944 = vmatpush1.bf16.msra.mxu0 0
  %3945 = vmatprep.subr.bf16.mxu0 0
  %3946 = vmatpush1.bf16.msra.mxu0 0
  %3947 = vmatprep.subr.bf16.mxu0 0
  %3948 = vmatpush1.bf16.msra.mxu0 0
  %3949 = vmatprep.subr.bf16.mxu0 0
  %3950 = vmatpush1.bf16.msra.mxu0 0
  %3951 = vmatprep.subr.bf16.mxu0 0
  %3952 = vmatpush1.bf16.msra.mxu0 0
  %3953 = vmatprep.subr.bf16.mxu0 0
  %3954 = vmatpush1.bf16.msra.mxu0 0
  %3955 = vmatprep.subr.bf16.mxu0 0
  %3956 = vmatpush1.bf16.msra.mxu0 0
  %3957 = vmatprep.subr.bf16.mxu0 0
  %3958 = vmatpush1.bf16.msra.mxu0 0
  %3959 = vmatprep.mubr.bf16.mxu0 0
  %3960 = vmatmul.mubr.bf16.gmra.mrb[0].mxu0 %v3913
  %v3961 = vpop.f32.mrb[0].mxu0
  %v3962 = vadd.f32 0.0, %v3961
  %v3963 = vpop.f32.mrb[0].mxu0
  %v3964 = vpop.f32.mrb[0].mxu0
  %v3965 = vadd.f32 0.0, %v3964
  %v3966 = vpop.f32.mrb[0].mxu0
  %3967 = vmatprep.mubr.bf16.mxu0 0
  %3968 = vmatmul.mubr.bf16.gmra.mrb[0].mxu0 %v3916
  %v3969 = vpop.f32.mrb[0].mxu0
  %v3970 = vadd.f32 0.0, %v3969
  %v3971 = vpop.f32.mrb[0].mxu0
  %v3972 = vpop.f32.mrb[0].mxu0
  %v3973 = vadd.f32 0.0, %v3972
  %v3974 = vpop.f32.mrb[0].mxu0
  %3975 = vmatprep.mubr.bf16.mxu0 0
  %3976 = vmatmul.mubr.bf16.gmra.mrb[0].mxu0 %v3919
  %v3977 = vpop.f32.mrb[0].mxu0
  %v3978 = vadd.f32 0.0, %v3977
  %v3979 = vpop.f32.mrb[0].mxu0
  %v3980 = vpop.f32.mrb[0].mxu0
  %v3981 = vadd.f32 0.0, %v3980
  %v3982 = vpop.f32.mrb[0].mxu0
  %3983 = vmatprep.mubr.bf16.mxu0 0
  %3984 = vmatmul.mubr.bf16.gmra.mrb[0].mxu0 %v3922
  %v3985 = vpop.f32.mrb[0].mxu0
  %v3986 = vadd.f32 0.0, %v3985
  %v3987 = vpop.f32.mrb[0].mxu0
  %v3988 = vpop.f32.mrb[0].mxu0
  %v3989 = vpop.f32.mrb[0].mxu0
  %3990 = vdwg.mxu0
  %v3991 = vadd.f32 %v3874, %v3962
  %v3992 = vadd.f32 %v3875, %v3965
  %v3993 = vadd.f32 %v3876, %v3970
  %v3994 = vadd.f32 %v3877, %v3973
  %v3995 = vadd.f32 %v3878, %v3978
  %v3996 = vadd.f32 %v3879, %v3981
  %v3997 = vadd.f32 %v3880, %v3986
  %s3998 = scalar_lea.vmem %s11, 420
  %v3999 = vld [vmem:[%s3998] sm:$0xf]
  %v4000 = vld [vmem:[%s3998 + $0x4] sm:$0xf]
  %v4001 = vld [vmem:[%s3998 + $0x8] sm:$0xf]
  %v4002 = vld [vmem:[%s3998 + $0xc] sm:$0xf]
  %v4003 = vld [vmem:[%s3998 + $0x10] sm:$0xf]
  %v4004 = vld [vmem:[%s3998 + $0x14] sm:$0xf]
  %v4005 = vld [vmem:[%s3998 + $0x18] sm:$0x1]
  %v4013 = vunpack.c.l.b16 %v3999
  %v4014 = vunpack.c.l.b16 %v4000
  %v4015 = vunpack.c.l.b16 %v4001
  %v4016 = vunpack.c.l.b16 %v4002
  %v4017 = vunpack.c.l.b16 %v4003
  %v4018 = vunpack.c.l.b16 %v4004
  %v4019 = vunpack.c.l.b16 %v4005
  %v4020 = vpack.c.b16 %v4014, %v4013
  %v4021 = vpack.c.b16 %v4016, %v4015
  %v4022 = vpack.c.b16 %v4018, %v4017
  %v4023 = vpack.c.b16 %v4019, %v4019
  %4024 = vrot.lane.b32.xlu0 %v2255, 8
  %v4025 = vpop.permute.xlu0 %4024
  %4026 = vrot.lane.b32.xlu0 %v2258, 8
  %v4027 = vpop.permute.xlu0 %4026
  %v4030 = vsel %vm1656, %v4020, 0
  %v4033 = vsel %vm1656, %v4021, 0
  %v4036 = vsel %vm1656, %v4022, 0
  %v4039 = vsel %vm1656, %v4023, 0
  %v4042 = vsel %vm1775, %v4027, 0
  %4044 = vmatprep.subr.bf16.mxu0 0
  %4045 = vmatpush1.bf16.msra.mxu0 %v4025
  %4046 = vmatprep.subr.bf16.mxu0 0
  %4047 = vmatpush1.bf16.msra.mxu0 %v4042
  %4048 = vmatprep.subr.bf16.mxu0 0
  %4049 = vmatpush1.bf16.msra.mxu0 0
  %4050 = vmatprep.subr.bf16.mxu0 0
  %4051 = vmatpush1.bf16.msra.mxu0 0
  %4052 = vmatprep.subr.bf16.mxu0 0
  %4053 = vmatpush1.bf16.msra.mxu0 0
  %4054 = vmatprep.subr.bf16.mxu0 0
  %4055 = vmatpush1.bf16.msra.mxu0 0
  %4056 = vmatprep.subr.bf16.mxu0 0
  %4057 = vmatpush1.bf16.msra.mxu0 0
  %4058 = vmatprep.subr.bf16.mxu0 0
  %4059 = vmatpush1.bf16.msra.mxu0 0
  %4060 = vmatprep.subr.bf16.mxu0 0
  %4061 = vmatpush1.bf16.msra.mxu0 0
  %4062 = vmatprep.subr.bf16.mxu0 0
  %4063 = vmatpush1.bf16.msra.mxu0 0
  %4064 = vmatprep.subr.bf16.mxu0 0
  %4065 = vmatpush1.bf16.msra.mxu0 0
  %4066 = vmatprep.subr.bf16.mxu0 0
  %4067 = vmatpush1.bf16.msra.mxu0 0
  %4068 = vmatprep.subr.bf16.mxu0 0
  %4069 = vmatpush1.bf16.msra.mxu0 0
  %4070 = vmatprep.subr.bf16.mxu0 0
  %4071 = vmatpush1.bf16.msra.mxu0 0
  %4072 = vmatprep.subr.bf16.mxu0 0
  %4073 = vmatpush1.bf16.msra.mxu0 0
  %4074 = vmatprep.subr.bf16.mxu0 0
  %4075 = vmatpush1.bf16.msra.mxu0 0
  %4076 = vmatprep.mubr.bf16.mxu0 0
  %4077 = vmatmul.mubr.bf16.gmra.mrb[0].mxu0 %v4030
  %v4078 = vpop.f32.mrb[0].mxu0
  %v4079 = vadd.f32 0.0, %v4078
  %v4080 = vpop.f32.mrb[0].mxu0
  %v4081 = vpop.f32.mrb[0].mxu0
  %v4082 = vadd.f32 0.0, %v4081
  %v4083 = vpop.f32.mrb[0].mxu0
  %4084 = vmatprep.mubr.bf16.mxu0 0
  %4085 = vmatmul.mubr.bf16.gmra.mrb[0].mxu0 %v4033
  %v4086 = vpop.f32.mrb[0].mxu0
  %v4087 = vadd.f32 0.0, %v4086
  %v4088 = vpop.f32.mrb[0].mxu0
  %v4089 = vpop.f32.mrb[0].mxu0
  %v4090 = vadd.f32 0.0, %v4089
  %v4091 = vpop.f32.mrb[0].mxu0
  %4092 = vmatprep.mubr.bf16.mxu0 0
  %4093 = vmatmul.mubr.bf16.gmra.mrb[0].mxu0 %v4036
  %v4094 = vpop.f32.mrb[0].mxu0
  %v4095 = vadd.f32 0.0, %v4094
  %v4096 = vpop.f32.mrb[0].mxu0
  %v4097 = vpop.f32.mrb[0].mxu0
  %v4098 = vadd.f32 0.0, %v4097
  %v4099 = vpop.f32.mrb[0].mxu0
  %4100 = vmatprep.mubr.bf16.mxu0 0
  %4101 = vmatmul.mubr.bf16.gmra.mrb[0].mxu0 %v4039
  %v4102 = vpop.f32.mrb[0].mxu0
  %v4103 = vadd.f32 0.0, %v4102
  %v4104 = vpop.f32.mrb[0].mxu0
  %v4105 = vpop.f32.mrb[0].mxu0
  %v4106 = vpop.f32.mrb[0].mxu0
  %4107 = vdwg.mxu0
  %v4108 = vadd.f32 %v3991, %v4079
  %v4109 = vadd.f32 %v3992, %v4082
  %v4110 = vadd.f32 %v3993, %v4087
  %v4111 = vadd.f32 %v3994, %v4090
  %v4112 = vadd.f32 %v3995, %v4095
  %v4113 = vadd.f32 %v3996, %v4098
  %v4114 = vadd.f32 %v3997, %v4103
  %s4115 = scalar_lea.vmem %s11, 448
  %v4116 = vld [vmem:[%s4115] sm:$0xf]
  %v4117 = vld [vmem:[%s4115 + $0x4] sm:$0xf]
  %v4118 = vld [vmem:[%s4115 + $0x8] sm:$0xf]
  %v4119 = vld [vmem:[%s4115 + $0xc] sm:$0xf]
  %v4120 = vld [vmem:[%s4115 + $0x10] sm:$0xf]
  %v4121 = vld [vmem:[%s4115 + $0x14] sm:$0xf]
  %v4122 = vld [vmem:[%s4115 + $0x18] sm:$0x1]
  %v4130 = vunpack.c.l.b16 %v4116
  %v4131 = vunpack.c.l.b16 %v4117
  %v4132 = vunpack.c.l.b16 %v4118
  %v4133 = vunpack.c.l.b16 %v4119
  %v4134 = vunpack.c.l.b16 %v4120
  %v4135 = vunpack.c.l.b16 %v4121
  %v4136 = vunpack.c.l.b16 %v4122
  %v4137 = vpack.c.b16 %v4131, %v4130
  %v4138 = vpack.c.b16 %v4133, %v4132
  %v4139 = vpack.c.b16 %v4135, %v4134
  %v4140 = vpack.c.b16 %v4136, %v4136
  %v4142 = vsel %vm1656, %v4137, 0
  %v4145 = vsel %vm1656, %v4138, 0
  %v4148 = vsel %vm1656, %v4139, 0
  %v4151 = vsel %vm1656, %v4140, 0
  %v4154 = vsel %vm1775, %v2259, 0
  %4156 = vmatprep.subr.bf16.mxu0 0
  %4157 = vmatpush1.bf16.msra.mxu0 %v2256
  %4158 = vmatprep.subr.bf16.mxu0 0
  %4159 = vmatpush1.bf16.msra.mxu0 %v4154
  %4160 = vmatprep.subr.bf16.mxu0 0
  %4161 = vmatpush1.bf16.msra.mxu0 0
  %4162 = vmatprep.subr.bf16.mxu0 0
  %4163 = vmatpush1.bf16.msra.mxu0 0
  %4164 = vmatprep.subr.bf16.mxu0 0
  %4165 = vmatpush1.bf16.msra.mxu0 0
  %4166 = vmatprep.subr.bf16.mxu0 0
  %4167 = vmatpush1.bf16.msra.mxu0 0
  %4168 = vmatprep.subr.bf16.mxu0 0
  %4169 = vmatpush1.bf16.msra.mxu0 0
  %4170 = vmatprep.subr.bf16.mxu0 0
  %4171 = vmatpush1.bf16.msra.mxu0 0
  %4172 = vmatprep.subr.bf16.mxu0 0
  %4173 = vmatpush1.bf16.msra.mxu0 0
  %4174 = vmatprep.subr.bf16.mxu0 0
  %4175 = vmatpush1.bf16.msra.mxu0 0
  %4176 = vmatprep.subr.bf16.mxu0 0
  %4177 = vmatpush1.bf16.msra.mxu0 0
  %4178 = vmatprep.subr.bf16.mxu0 0
  %4179 = vmatpush1.bf16.msra.mxu0 0
  %4180 = vmatprep.subr.bf16.mxu0 0
  %4181 = vmatpush1.bf16.msra.mxu0 0
  %4182 = vmatprep.subr.bf16.mxu0 0
  %4183 = vmatpush1.bf16.msra.mxu0 0
  %4184 = vmatprep.subr.bf16.mxu0 0
  %4185 = vmatpush1.bf16.msra.mxu0 0
  %4186 = vmatprep.subr.bf16.mxu0 0
  %4187 = vmatpush1.bf16.msra.mxu0 0
  %4188 = vmatprep.mubr.bf16.mxu0 0
  %4189 = vmatmul.mubr.bf16.gmra.mrb[0].mxu0 %v4142
  %v4190 = vpop.f32.mrb[0].mxu0
  %v4191 = vadd.f32 0.0, %v4190
  %v4192 = vpop.f32.mrb[0].mxu0
  %v4193 = vpop.f32.mrb[0].mxu0
  %v4194 = vadd.f32 0.0, %v4193
  %v4195 = vpop.f32.mrb[0].mxu0
  %4196 = vmatprep.mubr.bf16.mxu0 0
  %4197 = vmatmul.mubr.bf16.gmra.mrb[0].mxu0 %v4145
  %v4198 = vpop.f32.mrb[0].mxu0
  %v4199 = vadd.f32 0.0, %v4198
  %v4200 = vpop.f32.mrb[0].mxu0
  %v4201 = vpop.f32.mrb[0].mxu0
  %v4202 = vadd.f32 0.0, %v4201
  %v4203 = vpop.f32.mrb[0].mxu0
  %4204 = vmatprep.mubr.bf16.mxu0 0
  %4205 = vmatmul.mubr.bf16.gmra.mrb[0].mxu0 %v4148
  %v4206 = vpop.f32.mrb[0].mxu0
  %v4207 = vadd.f32 0.0, %v4206
  %v4208 = vpop.f32.mrb[0].mxu0
  %v4209 = vpop.f32.mrb[0].mxu0
  %v4210 = vadd.f32 0.0, %v4209
  %v4211 = vpop.f32.mrb[0].mxu0
  %4212 = vmatprep.mubr.bf16.mxu0 0
  %4213 = vmatmul.mubr.bf16.gmra.mrb[0].mxu0 %v4151
  %v4214 = vpop.f32.mrb[0].mxu0
  %v4215 = vadd.f32 0.0, %v4214
  %v4216 = vpop.f32.mrb[0].mxu0
  %v4217 = vpop.f32.mrb[0].mxu0
  %v4218 = vpop.f32.mrb[0].mxu0
  %4219 = vdwg.mxu0
  %v4220 = vadd.f32 %v4108, %v4191
  %v4221 = vadd.f32 %v4109, %v4194
  %v4222 = vadd.f32 %v4110, %v4199
  %v4223 = vadd.f32 %v4111, %v4202
  %v4224 = vadd.f32 %v4112, %v4207
  %v4225 = vadd.f32 %v4113, %v4210
  %v4226 = vadd.f32 %v4114, %v4215
  %s4227 = scalar_lea.vmem %s11, 476
  %v4228 = vld [vmem:[%s4227] sm:$0xf]
  %v4229 = vld [vmem:[%s4227 + $0x4] sm:$0xf]
  %v4230 = vld [vmem:[%s4227 + $0x8] sm:$0xf]
  %v4231 = vld [vmem:[%s4227 + $0xc] sm:$0xf]
  %v4232 = vld [vmem:[%s4227 + $0x10] sm:$0xf]
  %v4233 = vld [vmem:[%s4227 + $0x14] sm:$0xf]
  %v4234 = vld [vmem:[%s4227 + $0x18] sm:$0x1]
  %v4242 = vunpack.c.l.b16 %v4228
  %v4243 = vunpack.c.l.b16 %v4229
  %v4244 = vunpack.c.l.b16 %v4230
  %v4245 = vunpack.c.l.b16 %v4231
  %v4246 = vunpack.c.l.b16 %v4232
  %v4247 = vunpack.c.l.b16 %v4233
  %v4248 = vunpack.c.l.b16 %v4234
  %v4249 = vpack.c.b16 %v4243, %v4242
  %v4250 = vpack.c.b16 %v4245, %v4244
  %v4251 = vpack.c.b16 %v4247, %v4246
  %v4252 = vpack.c.b16 %v4248, %v4248
  %4255 = vrot.lane.b32.xlu0 %v2256, 120
  %v4256 = vpop.permute.xlu0 %4255
  %4257 = vrot.lane.b32.xlu0 %v2259, 120
  %v4258 = vpop.permute.xlu0 %4257
  %v4261 = vsel %vm1656, %v4249, 0
  %v4264 = vsel %vm1656, %v4250, 0
  %v4267 = vsel %vm1656, %v4251, 0
  %v4270 = vsel %vm1656, %v4252, 0
  %v4273 = vsel %vm1775, %v4258, 0
  %4275 = vmatprep.subr.bf16.mxu0 0
  %4276 = vmatpush1.bf16.msra.mxu0 %v4256
  %4277 = vmatprep.subr.bf16.mxu0 0
  %4278 = vmatpush1.bf16.msra.mxu0 %v4273
  %4279 = vmatprep.subr.bf16.mxu0 0
  %4280 = vmatpush1.bf16.msra.mxu0 0
  %4281 = vmatprep.subr.bf16.mxu0 0
  %4282 = vmatpush1.bf16.msra.mxu0 0
  %4283 = vmatprep.subr.bf16.mxu0 0
  %4284 = vmatpush1.bf16.msra.mxu0 0
  %4285 = vmatprep.subr.bf16.mxu0 0
  %4286 = vmatpush1.bf16.msra.mxu0 0
  %4287 = vmatprep.subr.bf16.mxu0 0
  %4288 = vmatpush1.bf16.msra.mxu0 0
  %4289 = vmatprep.subr.bf16.mxu0 0
  %4290 = vmatpush1.bf16.msra.mxu0 0
  %4291 = vmatprep.subr.bf16.mxu0 0
  %4292 = vmatpush1.bf16.msra.mxu0 0
  %4293 = vmatprep.subr.bf16.mxu0 0
  %4294 = vmatpush1.bf16.msra.mxu0 0
  %4295 = vmatprep.subr.bf16.mxu0 0
  %4296 = vmatpush1.bf16.msra.mxu0 0
  %4297 = vmatprep.subr.bf16.mxu0 0
  %4298 = vmatpush1.bf16.msra.mxu0 0
  %4299 = vmatprep.subr.bf16.mxu0 0
  %4300 = vmatpush1.bf16.msra.mxu0 0
  %4301 = vmatprep.subr.bf16.mxu0 0
  %4302 = vmatpush1.bf16.msra.mxu0 0
  %4303 = vmatprep.subr.bf16.mxu0 0
  %4304 = vmatpush1.bf16.msra.mxu0 0
  %4305 = vmatprep.subr.bf16.mxu0 0
  %4306 = vmatpush1.bf16.msra.mxu0 0
  %4307 = vmatprep.mubr.bf16.mxu0 0
  %4308 = vmatmul.mubr.bf16.gmra.mrb[0].mxu0 %v4261
  %v4309 = vpop.f32.mrb[0].mxu0
  %v4310 = vadd.f32 0.0, %v4309
  %v4311 = vpop.f32.mrb[0].mxu0
  %v4312 = vpop.f32.mrb[0].mxu0
  %v4313 = vadd.f32 0.0, %v4312
  %v4314 = vpop.f32.mrb[0].mxu0
  %4315 = vmatprep.mubr.bf16.mxu0 0
  %4316 = vmatmul.mubr.bf16.gmra.mrb[0].mxu0 %v4264
  %v4317 = vpop.f32.mrb[0].mxu0
  %v4318 = vadd.f32 0.0, %v4317
  %v4319 = vpop.f32.mrb[0].mxu0
  %v4320 = vpop.f32.mrb[0].mxu0
  %v4321 = vadd.f32 0.0, %v4320
  %v4322 = vpop.f32.mrb[0].mxu0
  %4323 = vmatprep.mubr.bf16.mxu0 0
  %4324 = vmatmul.mubr.bf16.gmra.mrb[0].mxu0 %v4267
  %v4325 = vpop.f32.mrb[0].mxu0
  %v4326 = vadd.f32 0.0, %v4325
  %v4327 = vpop.f32.mrb[0].mxu0
  %v4328 = vpop.f32.mrb[0].mxu0
  %v4329 = vadd.f32 0.0, %v4328
  %v4330 = vpop.f32.mrb[0].mxu0
  %4331 = vmatprep.mubr.bf16.mxu0 0
  %4332 = vmatmul.mubr.bf16.gmra.mrb[0].mxu0 %v4270
  %v4333 = vpop.f32.mrb[0].mxu0
  %v4334 = vadd.f32 0.0, %v4333
  %v4335 = vpop.f32.mrb[0].mxu0
  %v4336 = vpop.f32.mrb[0].mxu0
  %v4337 = vpop.f32.mrb[0].mxu0
  %4338 = vdwg.mxu0
  %v4339 = vadd.f32 %v4220, %v4310
  %v4340 = vadd.f32 %v4221, %v4313
  %v4341 = vadd.f32 %v4222, %v4318
  %v4342 = vadd.f32 %v4223, %v4321
  %v4343 = vadd.f32 %v4224, %v4326
  %v4344 = vadd.f32 %v4225, %v4329
  %v4345 = vadd.f32 %v4226, %v4334
  %s4346 = scalar_lea.vmem %s11, 504
  %v4347 = vld [vmem:[%s4346] sm:$0xf]
  %v4348 = vld [vmem:[%s4346 + $0x4] sm:$0xf]
  %v4349 = vld [vmem:[%s4346 + $0x8] sm:$0xf]
  %v4350 = vld [vmem:[%s4346 + $0xc] sm:$0xf]
  %v4351 = vld [vmem:[%s4346 + $0x10] sm:$0xf]
  %v4352 = vld [vmem:[%s4346 + $0x14] sm:$0xf]
  %v4353 = vld [vmem:[%s4346 + $0x18] sm:$0x1]
  %v4361 = vunpack.c.l.b16 %v4347
  %v4362 = vunpack.c.l.b16 %v4348
  %v4363 = vunpack.c.l.b16 %v4349
  %v4364 = vunpack.c.l.b16 %v4350
  %v4365 = vunpack.c.l.b16 %v4351
  %v4366 = vunpack.c.l.b16 %v4352
  %v4367 = vunpack.c.l.b16 %v4353
  %v4368 = vpack.c.b16 %v4362, %v4361
  %v4369 = vpack.c.b16 %v4364, %v4363
  %v4370 = vpack.c.b16 %v4366, %v4365
  %v4371 = vpack.c.b16 %v4367, %v4367
  %4372 = vrot.lane.b32.xlu0 %v2256, 112
  %v4373 = vpop.permute.xlu0 %4372
  %4374 = vrot.lane.b32.xlu0 %v2259, 112
  %v4375 = vpop.permute.xlu0 %4374
  %v4378 = vsel %vm1656, %v4368, 0
  %v4381 = vsel %vm1656, %v4369, 0
  %v4384 = vsel %vm1656, %v4370, 0
  %v4387 = vsel %vm1656, %v4371, 0
  %v4390 = vsel %vm1775, %v4375, 0
  %4392 = vmatprep.subr.bf16.mxu0 0
  %4393 = vmatpush1.bf16.msra.mxu0 %v4373
  %4394 = vmatprep.subr.bf16.mxu0 0
  %4395 = vmatpush1.bf16.msra.mxu0 %v4390
  %4396 = vmatprep.subr.bf16.mxu0 0
  %4397 = vmatpush1.bf16.msra.mxu0 0
  %4398 = vmatprep.subr.bf16.mxu0 0
  %4399 = vmatpush1.bf16.msra.mxu0 0
  %4400 = vmatprep.subr.bf16.mxu0 0
  %4401 = vmatpush1.bf16.msra.mxu0 0
  %4402 = vmatprep.subr.bf16.mxu0 0
  %4403 = vmatpush1.bf16.msra.mxu0 0
  %4404 = vmatprep.subr.bf16.mxu0 0
  %4405 = vmatpush1.bf16.msra.mxu0 0
  %4406 = vmatprep.subr.bf16.mxu0 0
  %4407 = vmatpush1.bf16.msra.mxu0 0
  %4408 = vmatprep.subr.bf16.mxu0 0
  %4409 = vmatpush1.bf16.msra.mxu0 0
  %4410 = vmatprep.subr.bf16.mxu0 0
  %4411 = vmatpush1.bf16.msra.mxu0 0
  %4412 = vmatprep.subr.bf16.mxu0 0
  %4413 = vmatpush1.bf16.msra.mxu0 0
  %4414 = vmatprep.subr.bf16.mxu0 0
  %4415 = vmatpush1.bf16.msra.mxu0 0
  %4416 = vmatprep.subr.bf16.mxu0 0
  %4417 = vmatpush1.bf16.msra.mxu0 0
  %4418 = vmatprep.subr.bf16.mxu0 0
  %4419 = vmatpush1.bf16.msra.mxu0 0
  %4420 = vmatprep.subr.bf16.mxu0 0
  %4421 = vmatpush1.bf16.msra.mxu0 0
  %4422 = vmatprep.subr.bf16.mxu0 0
  %4423 = vmatpush1.bf16.msra.mxu0 0
  %4424 = vmatprep.mubr.bf16.mxu0 0
  %4425 = vmatmul.mubr.bf16.gmra.mrb[0].mxu0 %v4378
  %v4426 = vpop.f32.mrb[0].mxu0
  %v4427 = vadd.f32 0.0, %v4426
  %v4428 = vpop.f32.mrb[0].mxu0
  %v4429 = vpop.f32.mrb[0].mxu0
  %v4430 = vadd.f32 0.0, %v4429
  %v4431 = vpop.f32.mrb[0].mxu0
  %4432 = vmatprep.mubr.bf16.mxu0 0
  %4433 = vmatmul.mubr.bf16.gmra.mrb[0].mxu0 %v4381
  %v4434 = vpop.f32.mrb[0].mxu0
  %v4435 = vadd.f32 0.0, %v4434
  %v4436 = vpop.f32.mrb[0].mxu0
  %v4437 = vpop.f32.mrb[0].mxu0
  %v4438 = vadd.f32 0.0, %v4437
  %v4439 = vpop.f32.mrb[0].mxu0
  %4440 = vmatprep.mubr.bf16.mxu0 0
  %4441 = vmatmul.mubr.bf16.gmra.mrb[0].mxu0 %v4384
  %v4442 = vpop.f32.mrb[0].mxu0
  %v4443 = vadd.f32 0.0, %v4442
  %v4444 = vpop.f32.mrb[0].mxu0
  %v4445 = vpop.f32.mrb[0].mxu0
  %v4446 = vadd.f32 0.0, %v4445
  %v4447 = vpop.f32.mrb[0].mxu0
  %4448 = vmatprep.mubr.bf16.mxu0 0
  %4449 = vmatmul.mubr.bf16.gmra.mrb[0].mxu0 %v4387
  %v4450 = vpop.f32.mrb[0].mxu0
  %v4451 = vadd.f32 0.0, %v4450
  %v4452 = vpop.f32.mrb[0].mxu0
  %v4453 = vpop.f32.mrb[0].mxu0
  %v4454 = vpop.f32.mrb[0].mxu0
  %4455 = vdwg.mxu0
  %v4456 = vadd.f32 %v4339, %v4427
  %v4457 = vadd.f32 %v4340, %v4430
  %v4458 = vadd.f32 %v4341, %v4435
  %v4459 = vadd.f32 %v4342, %v4438
  %v4460 = vadd.f32 %v4343, %v4443
  %v4461 = vadd.f32 %v4344, %v4446
  %v4462 = vadd.f32 %v4345, %v4451
  %s4463 = scalar_lea.vmem %s11, 532
  %v4464 = vld [vmem:[%s4463] sm:$0xf]
  %v4465 = vld [vmem:[%s4463 + $0x4] sm:$0xf]
  %v4466 = vld [vmem:[%s4463 + $0x8] sm:$0xf]
  %v4467 = vld [vmem:[%s4463 + $0xc] sm:$0xf]
  %v4468 = vld [vmem:[%s4463 + $0x10] sm:$0xf]
  %v4469 = vld [vmem:[%s4463 + $0x14] sm:$0xf]
  %v4470 = vld [vmem:[%s4463 + $0x18] sm:$0x1]
  %v4478 = vunpack.c.l.b16 %v4464
  %v4479 = vunpack.c.l.b16 %v4465
  %v4480 = vunpack.c.l.b16 %v4466
  %v4481 = vunpack.c.l.b16 %v4467
  %v4482 = vunpack.c.l.b16 %v4468
  %v4483 = vunpack.c.l.b16 %v4469
  %v4484 = vunpack.c.l.b16 %v4470
  %v4485 = vpack.c.b16 %v4479, %v4478
  %v4486 = vpack.c.b16 %v4481, %v4480
  %v4487 = vpack.c.b16 %v4483, %v4482
  %v4488 = vpack.c.b16 %v4484, %v4484
  %4489 = vrot.lane.b32.xlu0 %v2256, 104
  %v4490 = vpop.permute.xlu0 %4489
  %4491 = vrot.lane.b32.xlu0 %v2259, 104
  %v4492 = vpop.permute.xlu0 %4491
  %v4495 = vsel %vm1656, %v4485, 0
  %v4498 = vsel %vm1656, %v4486, 0
  %v4501 = vsel %vm1656, %v4487, 0
  %v4504 = vsel %vm1656, %v4488, 0
  %v4507 = vsel %vm1775, %v4492, 0
  %4509 = vmatprep.subr.bf16.mxu0 0
  %4510 = vmatpush1.bf16.msra.mxu0 %v4490
  %4511 = vmatprep.subr.bf16.mxu0 0
  %4512 = vmatpush1.bf16.msra.mxu0 %v4507
  %4513 = vmatprep.subr.bf16.mxu0 0
  %4514 = vmatpush1.bf16.msra.mxu0 0
  %4515 = vmatprep.subr.bf16.mxu0 0
  %4516 = vmatpush1.bf16.msra.mxu0 0
  %4517 = vmatprep.subr.bf16.mxu0 0
  %4518 = vmatpush1.bf16.msra.mxu0 0
  %4519 = vmatprep.subr.bf16.mxu0 0
  %4520 = vmatpush1.bf16.msra.mxu0 0
  %4521 = vmatprep.subr.bf16.mxu0 0
  %4522 = vmatpush1.bf16.msra.mxu0 0
  %4523 = vmatprep.subr.bf16.mxu0 0
  %4524 = vmatpush1.bf16.msra.mxu0 0
  %4525 = vmatprep.subr.bf16.mxu0 0
  %4526 = vmatpush1.bf16.msra.mxu0 0
  %4527 = vmatprep.subr.bf16.mxu0 0
  %4528 = vmatpush1.bf16.msra.mxu0 0
  %4529 = vmatprep.subr.bf16.mxu0 0
  %4530 = vmatpush1.bf16.msra.mxu0 0
  %4531 = vmatprep.subr.bf16.mxu0 0
  %4532 = vmatpush1.bf16.msra.mxu0 0
  %4533 = vmatprep.subr.bf16.mxu0 0
  %4534 = vmatpush1.bf16.msra.mxu0 0
  %4535 = vmatprep.subr.bf16.mxu0 0
  %4536 = vmatpush1.bf16.msra.mxu0 0
  %4537 = vmatprep.subr.bf16.mxu0 0
  %4538 = vmatpush1.bf16.msra.mxu0 0
  %4539 = vmatprep.subr.bf16.mxu0 0
  %4540 = vmatpush1.bf16.msra.mxu0 0
  %4541 = vmatprep.mubr.bf16.mxu0 0
  %4542 = vmatmul.mubr.bf16.gmra.mrb[0].mxu0 %v4495
  %v4543 = vpop.f32.mrb[0].mxu0
  %v4544 = vadd.f32 0.0, %v4543
  %v4545 = vpop.f32.mrb[0].mxu0
  %v4546 = vpop.f32.mrb[0].mxu0
  %v4547 = vadd.f32 0.0, %v4546
  %v4548 = vpop.f32.mrb[0].mxu0
  %4549 = vmatprep.mubr.bf16.mxu0 0
  %4550 = vmatmul.mubr.bf16.gmra.mrb[0].mxu0 %v4498
  %v4551 = vpop.f32.mrb[0].mxu0
  %v4552 = vadd.f32 0.0, %v4551
  %v4553 = vpop.f32.mrb[0].mxu0
  %v4554 = vpop.f32.mrb[0].mxu0
  %v4555 = vadd.f32 0.0, %v4554
  %v4556 = vpop.f32.mrb[0].mxu0
  %4557 = vmatprep.mubr.bf16.mxu0 0
  %4558 = vmatmul.mubr.bf16.gmra.mrb[0].mxu0 %v4501
  %v4559 = vpop.f32.mrb[0].mxu0
  %v4560 = vadd.f32 0.0, %v4559
  %v4561 = vpop.f32.mrb[0].mxu0
  %v4562 = vpop.f32.mrb[0].mxu0
  %v4563 = vadd.f32 0.0, %v4562
  %v4564 = vpop.f32.mrb[0].mxu0
  %4565 = vmatprep.mubr.bf16.mxu0 0
  %4566 = vmatmul.mubr.bf16.gmra.mrb[0].mxu0 %v4504
  %v4567 = vpop.f32.mrb[0].mxu0
  %v4568 = vadd.f32 0.0, %v4567
  %v4569 = vpop.f32.mrb[0].mxu0
  %v4570 = vpop.f32.mrb[0].mxu0
  %v4571 = vpop.f32.mrb[0].mxu0
  %4572 = vdwg.mxu0
  %v4573 = vadd.f32 %v4456, %v4544
  %v4574 = vadd.f32 %v4457, %v4547
  %v4575 = vadd.f32 %v4458, %v4552
  %v4576 = vadd.f32 %v4459, %v4555
  %v4577 = vadd.f32 %v4460, %v4560
  %v4578 = vadd.f32 %v4461, %v4563
  %v4579 = vadd.f32 %v4462, %v4568
  %s4580 = scalar_lea.vmem %s11, 560
  %v4581 = vld [vmem:[%s4580] sm:$0xf]
  %v4582 = vld [vmem:[%s4580 + $0x4] sm:$0xf]
  %v4583 = vld [vmem:[%s4580 + $0x8] sm:$0xf]
  %v4584 = vld [vmem:[%s4580 + $0xc] sm:$0xf]
  %v4585 = vld [vmem:[%s4580 + $0x10] sm:$0xf]
  %v4586 = vld [vmem:[%s4580 + $0x14] sm:$0xf]
  %v4587 = vld [vmem:[%s4580 + $0x18] sm:$0x1]
  %v4595 = vunpack.c.l.b16 %v4581
  %v4596 = vunpack.c.l.b16 %v4582
  %v4597 = vunpack.c.l.b16 %v4583
  %v4598 = vunpack.c.l.b16 %v4584
  %v4599 = vunpack.c.l.b16 %v4585
  %v4600 = vunpack.c.l.b16 %v4586
  %v4601 = vunpack.c.l.b16 %v4587
  %v4602 = vpack.c.b16 %v4596, %v4595
  %v4603 = vpack.c.b16 %v4598, %v4597
  %v4604 = vpack.c.b16 %v4600, %v4599
  %v4605 = vpack.c.b16 %v4601, %v4601
  %4606 = vrot.lane.b32.xlu0 %v2256, 96
  %v4607 = vpop.permute.xlu0 %4606
  %4608 = vrot.lane.b32.xlu0 %v2259, 96
  %v4609 = vpop.permute.xlu0 %4608
  %v4612 = vsel %vm1656, %v4602, 0
  %v4615 = vsel %vm1656, %v4603, 0
  %v4618 = vsel %vm1656, %v4604, 0
  %v4621 = vsel %vm1656, %v4605, 0
  %v4624 = vsel %vm1775, %v4609, 0
  %4626 = vmatprep.subr.bf16.mxu0 0
  %4627 = vmatpush1.bf16.msra.mxu0 %v4607
  %4628 = vmatprep.subr.bf16.mxu0 0
  %4629 = vmatpush1.bf16.msra.mxu0 %v4624
  %4630 = vmatprep.subr.bf16.mxu0 0
  %4631 = vmatpush1.bf16.msra.mxu0 0
  %4632 = vmatprep.subr.bf16.mxu0 0
  %4633 = vmatpush1.bf16.msra.mxu0 0
  %4634 = vmatprep.subr.bf16.mxu0 0
  %4635 = vmatpush1.bf16.msra.mxu0 0
  %4636 = vmatprep.subr.bf16.mxu0 0
  %4637 = vmatpush1.bf16.msra.mxu0 0
  %4638 = vmatprep.subr.bf16.mxu0 0
  %4639 = vmatpush1.bf16.msra.mxu0 0
  %4640 = vmatprep.subr.bf16.mxu0 0
  %4641 = vmatpush1.bf16.msra.mxu0 0
  %4642 = vmatprep.subr.bf16.mxu0 0
  %4643 = vmatpush1.bf16.msra.mxu0 0
  %4644 = vmatprep.subr.bf16.mxu0 0
  %4645 = vmatpush1.bf16.msra.mxu0 0
  %4646 = vmatprep.subr.bf16.mxu0 0
  %4647 = vmatpush1.bf16.msra.mxu0 0
  %4648 = vmatprep.subr.bf16.mxu0 0
  %4649 = vmatpush1.bf16.msra.mxu0 0
  %4650 = vmatprep.subr.bf16.mxu0 0
  %4651 = vmatpush1.bf16.msra.mxu0 0
  %4652 = vmatprep.subr.bf16.mxu0 0
  %4653 = vmatpush1.bf16.msra.mxu0 0
  %4654 = vmatprep.subr.bf16.mxu0 0
  %4655 = vmatpush1.bf16.msra.mxu0 0
  %4656 = vmatprep.subr.bf16.mxu0 0
  %4657 = vmatpush1.bf16.msra.mxu0 0
  %4658 = vmatprep.mubr.bf16.mxu0 0
  %4659 = vmatmul.mubr.bf16.gmra.mrb[0].mxu0 %v4612
  %v4660 = vpop.f32.mrb[0].mxu0
  %v4661 = vadd.f32 0.0, %v4660
  %v4662 = vpop.f32.mrb[0].mxu0
  %v4663 = vpop.f32.mrb[0].mxu0
  %v4664 = vadd.f32 0.0, %v4663
  %v4665 = vpop.f32.mrb[0].mxu0
  %4666 = vmatprep.mubr.bf16.mxu0 0
  %4667 = vmatmul.mubr.bf16.gmra.mrb[0].mxu0 %v4615
  %v4668 = vpop.f32.mrb[0].mxu0
  %v4669 = vadd.f32 0.0, %v4668
  %v4670 = vpop.f32.mrb[0].mxu0
  %v4671 = vpop.f32.mrb[0].mxu0
  %v4672 = vadd.f32 0.0, %v4671
  %v4673 = vpop.f32.mrb[0].mxu0
  %4674 = vmatprep.mubr.bf16.mxu0 0
  %4675 = vmatmul.mubr.bf16.gmra.mrb[0].mxu0 %v4618
  %v4676 = vpop.f32.mrb[0].mxu0
  %v4677 = vadd.f32 0.0, %v4676
  %v4678 = vpop.f32.mrb[0].mxu0
  %v4679 = vpop.f32.mrb[0].mxu0
  %v4680 = vadd.f32 0.0, %v4679
  %v4681 = vpop.f32.mrb[0].mxu0
  %4682 = vmatprep.mubr.bf16.mxu0 0
  %4683 = vmatmul.mubr.bf16.gmra.mrb[0].mxu0 %v4621
  %v4684 = vpop.f32.mrb[0].mxu0
  %v4685 = vadd.f32 0.0, %v4684
  %v4686 = vpop.f32.mrb[0].mxu0
  %v4687 = vpop.f32.mrb[0].mxu0
  %v4688 = vpop.f32.mrb[0].mxu0
  %4689 = vdwg.mxu0
  %v4690 = vadd.f32 %v4573, %v4661
  %v4691 = vadd.f32 %v4574, %v4664
  %v4692 = vadd.f32 %v4575, %v4669
  %v4693 = vadd.f32 %v4576, %v4672
  %v4694 = vadd.f32 %v4577, %v4677
  %v4695 = vadd.f32 %v4578, %v4680
  %v4696 = vadd.f32 %v4579, %v4685
  %s4697 = scalar_lea.vmem %s11, 588
  %v4698 = vld [vmem:[%s4697] sm:$0xf]
  %v4699 = vld [vmem:[%s4697 + $0x4] sm:$0xf]
  %v4700 = vld [vmem:[%s4697 + $0x8] sm:$0xf]
  %v4701 = vld [vmem:[%s4697 + $0xc] sm:$0xf]
  %v4702 = vld [vmem:[%s4697 + $0x10] sm:$0xf]
  %v4703 = vld [vmem:[%s4697 + $0x14] sm:$0xf]
  %v4704 = vld [vmem:[%s4697 + $0x18] sm:$0x1]
  %v4712 = vunpack.c.l.b16 %v4698
  %v4713 = vunpack.c.l.b16 %v4699
  %v4714 = vunpack.c.l.b16 %v4700
  %v4715 = vunpack.c.l.b16 %v4701
  %v4716 = vunpack.c.l.b16 %v4702
  %v4717 = vunpack.c.l.b16 %v4703
  %v4718 = vunpack.c.l.b16 %v4704
  %v4719 = vpack.c.b16 %v4713, %v4712
  %v4720 = vpack.c.b16 %v4715, %v4714
  %v4721 = vpack.c.b16 %v4717, %v4716
  %v4722 = vpack.c.b16 %v4718, %v4718
  %4723 = vrot.lane.b32.xlu0 %v2256, 88
  %v4724 = vpop.permute.xlu0 %4723
  %4725 = vrot.lane.b32.xlu0 %v2259, 88
  %v4726 = vpop.permute.xlu0 %4725
  %v4729 = vsel %vm1656, %v4719, 0
  %v4732 = vsel %vm1656, %v4720, 0
  %v4735 = vsel %vm1656, %v4721, 0
  %v4738 = vsel %vm1656, %v4722, 0
  %v4741 = vsel %vm1775, %v4726, 0
  %4743 = vmatprep.subr.bf16.mxu0 0
  %4744 = vmatpush1.bf16.msra.mxu0 %v4724
  %4745 = vmatprep.subr.bf16.mxu0 0
  %4746 = vmatpush1.bf16.msra.mxu0 %v4741
  %4747 = vmatprep.subr.bf16.mxu0 0
  %4748 = vmatpush1.bf16.msra.mxu0 0
  %4749 = vmatprep.subr.bf16.mxu0 0
  %4750 = vmatpush1.bf16.msra.mxu0 0
  %4751 = vmatprep.subr.bf16.mxu0 0
  %4752 = vmatpush1.bf16.msra.mxu0 0
  %4753 = vmatprep.subr.bf16.mxu0 0
  %4754 = vmatpush1.bf16.msra.mxu0 0
  %4755 = vmatprep.subr.bf16.mxu0 0
  %4756 = vmatpush1.bf16.msra.mxu0 0
  %4757 = vmatprep.subr.bf16.mxu0 0
  %4758 = vmatpush1.bf16.msra.mxu0 0
  %4759 = vmatprep.subr.bf16.mxu0 0
  %4760 = vmatpush1.bf16.msra.mxu0 0
  %4761 = vmatprep.subr.bf16.mxu0 0
  %4762 = vmatpush1.bf16.msra.mxu0 0
  %4763 = vmatprep.subr.bf16.mxu0 0
  %4764 = vmatpush1.bf16.msra.mxu0 0
  %4765 = vmatprep.subr.bf16.mxu0 0
  %4766 = vmatpush1.bf16.msra.mxu0 0
  %4767 = vmatprep.subr.bf16.mxu0 0
  %4768 = vmatpush1.bf16.msra.mxu0 0
  %4769 = vmatprep.subr.bf16.mxu0 0
  %4770 = vmatpush1.bf16.msra.mxu0 0
  %4771 = vmatprep.subr.bf16.mxu0 0
  %4772 = vmatpush1.bf16.msra.mxu0 0
  %4773 = vmatprep.subr.bf16.mxu0 0
  %4774 = vmatpush1.bf16.msra.mxu0 0
  %4775 = vmatprep.mubr.bf16.mxu0 0
  %4776 = vmatmul.mubr.bf16.gmra.mrb[0].mxu0 %v4729
  %v4777 = vpop.f32.mrb[0].mxu0
  %v4778 = vadd.f32 0.0, %v4777
  %v4779 = vpop.f32.mrb[0].mxu0
  %v4780 = vpop.f32.mrb[0].mxu0
  %v4781 = vadd.f32 0.0, %v4780
  %v4782 = vpop.f32.mrb[0].mxu0
  %4783 = vmatprep.mubr.bf16.mxu0 0
  %4784 = vmatmul.mubr.bf16.gmra.mrb[0].mxu0 %v4732
  %v4785 = vpop.f32.mrb[0].mxu0
  %v4786 = vadd.f32 0.0, %v4785
  %v4787 = vpop.f32.mrb[0].mxu0
  %v4788 = vpop.f32.mrb[0].mxu0
  %v4789 = vadd.f32 0.0, %v4788
  %v4790 = vpop.f32.mrb[0].mxu0
  %4791 = vmatprep.mubr.bf16.mxu0 0
  %4792 = vmatmul.mubr.bf16.gmra.mrb[0].mxu0 %v4735
  %v4793 = vpop.f32.mrb[0].mxu0
  %v4794 = vadd.f32 0.0, %v4793
  %v4795 = vpop.f32.mrb[0].mxu0
  %v4796 = vpop.f32.mrb[0].mxu0
  %v4797 = vadd.f32 0.0, %v4796
  %v4798 = vpop.f32.mrb[0].mxu0
  %4799 = vmatprep.mubr.bf16.mxu0 0
  %4800 = vmatmul.mubr.bf16.gmra.mrb[0].mxu0 %v4738
  %v4801 = vpop.f32.mrb[0].mxu0
  %v4802 = vadd.f32 0.0, %v4801
  %v4803 = vpop.f32.mrb[0].mxu0
  %v4804 = vpop.f32.mrb[0].mxu0
  %v4805 = vpop.f32.mrb[0].mxu0
  %4806 = vdwg.mxu0
  %v4807 = vadd.f32 %v4690, %v4778
  %v4808 = vadd.f32 %v4691, %v4781
  %v4809 = vadd.f32 %v4692, %v4786
  %v4810 = vadd.f32 %v4693, %v4789
  %v4811 = vadd.f32 %v4694, %v4794
  %v4812 = vadd.f32 %v4695, %v4797
  %v4813 = vadd.f32 %v4696, %v4802
  %s4814 = scalar_lea.vmem %s11, 616
  %v4815 = vld [vmem:[%s4814] sm:$0xf]
  %v4816 = vld [vmem:[%s4814 + $0x4] sm:$0xf]
  %v4817 = vld [vmem:[%s4814 + $0x8] sm:$0xf]
  %v4818 = vld [vmem:[%s4814 + $0xc] sm:$0xf]
  %v4819 = vld [vmem:[%s4814 + $0x10] sm:$0xf]
  %v4820 = vld [vmem:[%s4814 + $0x14] sm:$0xf]
  %v4821 = vld [vmem:[%s4814 + $0x18] sm:$0x1]
  %v4829 = vunpack.c.l.b16 %v4815
  %v4830 = vunpack.c.l.b16 %v4816
  %v4831 = vunpack.c.l.b16 %v4817
  %v4832 = vunpack.c.l.b16 %v4818
  %v4833 = vunpack.c.l.b16 %v4819
  %v4834 = vunpack.c.l.b16 %v4820
  %v4835 = vunpack.c.l.b16 %v4821
  %v4836 = vpack.c.b16 %v4830, %v4829
  %v4837 = vpack.c.b16 %v4832, %v4831
  %v4838 = vpack.c.b16 %v4834, %v4833
  %v4839 = vpack.c.b16 %v4835, %v4835
  %4840 = vrot.lane.b32.xlu0 %v2256, 80
  %v4841 = vpop.permute.xlu0 %4840
  %4842 = vrot.lane.b32.xlu0 %v2259, 80
  %v4843 = vpop.permute.xlu0 %4842
  %v4846 = vsel %vm1656, %v4836, 0
  %v4849 = vsel %vm1656, %v4837, 0
  %v4852 = vsel %vm1656, %v4838, 0
  %v4855 = vsel %vm1656, %v4839, 0
  %v4858 = vsel %vm1775, %v4843, 0
  %4860 = vmatprep.subr.bf16.mxu0 0
  %4861 = vmatpush1.bf16.msra.mxu0 %v4841
  %4862 = vmatprep.subr.bf16.mxu0 0
  %4863 = vmatpush1.bf16.msra.mxu0 %v4858
  %4864 = vmatprep.subr.bf16.mxu0 0
  %4865 = vmatpush1.bf16.msra.mxu0 0
  %4866 = vmatprep.subr.bf16.mxu0 0
  %4867 = vmatpush1.bf16.msra.mxu0 0
  %4868 = vmatprep.subr.bf16.mxu0 0
  %4869 = vmatpush1.bf16.msra.mxu0 0
  %4870 = vmatprep.subr.bf16.mxu0 0
  %4871 = vmatpush1.bf16.msra.mxu0 0
  %4872 = vmatprep.subr.bf16.mxu0 0
  %4873 = vmatpush1.bf16.msra.mxu0 0
  %4874 = vmatprep.subr.bf16.mxu0 0
  %4875 = vmatpush1.bf16.msra.mxu0 0
  %4876 = vmatprep.subr.bf16.mxu0 0
  %4877 = vmatpush1.bf16.msra.mxu0 0
  %4878 = vmatprep.subr.bf16.mxu0 0
  %4879 = vmatpush1.bf16.msra.mxu0 0
  %4880 = vmatprep.subr.bf16.mxu0 0
  %4881 = vmatpush1.bf16.msra.mxu0 0
  %4882 = vmatprep.subr.bf16.mxu0 0
  %4883 = vmatpush1.bf16.msra.mxu0 0
  %4884 = vmatprep.subr.bf16.mxu0 0
  %4885 = vmatpush1.bf16.msra.mxu0 0
  %4886 = vmatprep.subr.bf16.mxu0 0
  %4887 = vmatpush1.bf16.msra.mxu0 0
  %4888 = vmatprep.subr.bf16.mxu0 0
  %4889 = vmatpush1.bf16.msra.mxu0 0
  %4890 = vmatprep.subr.bf16.mxu0 0
  %4891 = vmatpush1.bf16.msra.mxu0 0
  %4892 = vmatprep.mubr.bf16.mxu0 0
  %4893 = vmatmul.mubr.bf16.gmra.mrb[0].mxu0 %v4846
  %v4894 = vpop.f32.mrb[0].mxu0
  %v4895 = vadd.f32 0.0, %v4894
  %v4896 = vpop.f32.mrb[0].mxu0
  %v4897 = vpop.f32.mrb[0].mxu0
  %v4898 = vadd.f32 0.0, %v4897
  %v4899 = vpop.f32.mrb[0].mxu0
  %4900 = vmatprep.mubr.bf16.mxu0 0
  %4901 = vmatmul.mubr.bf16.gmra.mrb[0].mxu0 %v4849
  %v4902 = vpop.f32.mrb[0].mxu0
  %v4903 = vadd.f32 0.0, %v4902
  %v4904 = vpop.f32.mrb[0].mxu0
  %v4905 = vpop.f32.mrb[0].mxu0
  %v4906 = vadd.f32 0.0, %v4905
  %v4907 = vpop.f32.mrb[0].mxu0
  %4908 = vmatprep.mubr.bf16.mxu0 0
  %4909 = vmatmul.mubr.bf16.gmra.mrb[0].mxu0 %v4852
  %v4910 = vpop.f32.mrb[0].mxu0
  %v4911 = vadd.f32 0.0, %v4910
  %v4912 = vpop.f32.mrb[0].mxu0
  %v4913 = vpop.f32.mrb[0].mxu0
  %v4914 = vadd.f32 0.0, %v4913
  %v4915 = vpop.f32.mrb[0].mxu0
  %4916 = vmatprep.mubr.bf16.mxu0 0
  %4917 = vmatmul.mubr.bf16.gmra.mrb[0].mxu0 %v4855
  %v4918 = vpop.f32.mrb[0].mxu0
  %v4919 = vadd.f32 0.0, %v4918
  %v4920 = vpop.f32.mrb[0].mxu0
  %v4921 = vpop.f32.mrb[0].mxu0
  %v4922 = vpop.f32.mrb[0].mxu0
  %4923 = vdwg.mxu0
  %v4924 = vadd.f32 %v4807, %v4895
  %v4925 = vadd.f32 %v4808, %v4898
  %v4926 = vadd.f32 %v4809, %v4903
  %v4927 = vadd.f32 %v4810, %v4906
  %v4928 = vadd.f32 %v4811, %v4911
  %v4929 = vadd.f32 %v4812, %v4914
  %v4930 = vadd.f32 %v4813, %v4919
  %s4931 = scalar_lea.vmem %s11, 644
  %v4932 = vld [vmem:[%s4931] sm:$0xf]
  %v4933 = vld [vmem:[%s4931 + $0x4] sm:$0xf]
  %v4934 = vld [vmem:[%s4931 + $0x8] sm:$0xf]
  %v4935 = vld [vmem:[%s4931 + $0xc] sm:$0xf]
  %v4936 = vld [vmem:[%s4931 + $0x10] sm:$0xf]
  %v4937 = vld [vmem:[%s4931 + $0x14] sm:$0xf]
  %v4938 = vld [vmem:[%s4931 + $0x18] sm:$0x1]
  %v4946 = vunpack.c.l.b16 %v4932
  %v4947 = vunpack.c.l.b16 %v4933
  %v4948 = vunpack.c.l.b16 %v4934
  %v4949 = vunpack.c.l.b16 %v4935
  %v4950 = vunpack.c.l.b16 %v4936
  %v4951 = vunpack.c.l.b16 %v4937
  %v4952 = vunpack.c.l.b16 %v4938
  %v4953 = vpack.c.b16 %v4947, %v4946
  %v4954 = vpack.c.b16 %v4949, %v4948
  %v4955 = vpack.c.b16 %v4951, %v4950
  %v4956 = vpack.c.b16 %v4952, %v4952
  %4957 = vrot.lane.b32.xlu0 %v2256, 72
  %v4958 = vpop.permute.xlu0 %4957
  %4959 = vrot.lane.b32.xlu0 %v2259, 72
  %v4960 = vpop.permute.xlu0 %4959
  %v4963 = vsel %vm1656, %v4953, 0
  %v4966 = vsel %vm1656, %v4954, 0
  %v4969 = vsel %vm1656, %v4955, 0
  %v4972 = vsel %vm1656, %v4956, 0
  %v4975 = vsel %vm1775, %v4960, 0
  %4977 = vmatprep.subr.bf16.mxu0 0
  %4978 = vmatpush1.bf16.msra.mxu0 %v4958
  %4979 = vmatprep.subr.bf16.mxu0 0
  %4980 = vmatpush1.bf16.msra.mxu0 %v4975
  %4981 = vmatprep.subr.bf16.mxu0 0
  %4982 = vmatpush1.bf16.msra.mxu0 0
  %4983 = vmatprep.subr.bf16.mxu0 0
  %4984 = vmatpush1.bf16.msra.mxu0 0
  %4985 = vmatprep.subr.bf16.mxu0 0
  %4986 = vmatpush1.bf16.msra.mxu0 0
  %4987 = vmatprep.subr.bf16.mxu0 0
  %4988 = vmatpush1.bf16.msra.mxu0 0
  %4989 = vmatprep.subr.bf16.mxu0 0
  %4990 = vmatpush1.bf16.msra.mxu0 0
  %4991 = vmatprep.subr.bf16.mxu0 0
  %4992 = vmatpush1.bf16.msra.mxu0 0
  %4993 = vmatprep.subr.bf16.mxu0 0
  %4994 = vmatpush1.bf16.msra.mxu0 0
  %4995 = vmatprep.subr.bf16.mxu0 0
  %4996 = vmatpush1.bf16.msra.mxu0 0
  %4997 = vmatprep.subr.bf16.mxu0 0
  %4998 = vmatpush1.bf16.msra.mxu0 0
  %4999 = vmatprep.subr.bf16.mxu0 0
  %5000 = vmatpush1.bf16.msra.mxu0 0
  %5001 = vmatprep.subr.bf16.mxu0 0
  %5002 = vmatpush1.bf16.msra.mxu0 0
  %5003 = vmatprep.subr.bf16.mxu0 0
  %5004 = vmatpush1.bf16.msra.mxu0 0
  %5005 = vmatprep.subr.bf16.mxu0 0
  %5006 = vmatpush1.bf16.msra.mxu0 0
  %5007 = vmatprep.subr.bf16.mxu0 0
  %5008 = vmatpush1.bf16.msra.mxu0 0
  %5009 = vmatprep.mubr.bf16.mxu0 0
  %5010 = vmatmul.mubr.bf16.gmra.mrb[0].mxu0 %v4963
  %v5011 = vpop.f32.mrb[0].mxu0
  %v5012 = vadd.f32 0.0, %v5011
  %v5013 = vpop.f32.mrb[0].mxu0
  %v5014 = vpop.f32.mrb[0].mxu0
  %v5015 = vadd.f32 0.0, %v5014
  %v5016 = vpop.f32.mrb[0].mxu0
  %5017 = vmatprep.mubr.bf16.mxu0 0
  %5018 = vmatmul.mubr.bf16.gmra.mrb[0].mxu0 %v4966
  %v5019 = vpop.f32.mrb[0].mxu0
  %v5020 = vadd.f32 0.0, %v5019
  %v5021 = vpop.f32.mrb[0].mxu0
  %v5022 = vpop.f32.mrb[0].mxu0
  %v5023 = vadd.f32 0.0, %v5022
  %v5024 = vpop.f32.mrb[0].mxu0
  %5025 = vmatprep.mubr.bf16.mxu0 0
  %5026 = vmatmul.mubr.bf16.gmra.mrb[0].mxu0 %v4969
  %v5027 = vpop.f32.mrb[0].mxu0
  %v5028 = vadd.f32 0.0, %v5027
  %v5029 = vpop.f32.mrb[0].mxu0
  %v5030 = vpop.f32.mrb[0].mxu0
  %v5031 = vadd.f32 0.0, %v5030
  %v5032 = vpop.f32.mrb[0].mxu0
  %5033 = vmatprep.mubr.bf16.mxu0 0
  %5034 = vmatmul.mubr.bf16.gmra.mrb[0].mxu0 %v4972
  %v5035 = vpop.f32.mrb[0].mxu0
  %v5036 = vadd.f32 0.0, %v5035
  %v5037 = vpop.f32.mrb[0].mxu0
  %v5038 = vpop.f32.mrb[0].mxu0
  %v5039 = vpop.f32.mrb[0].mxu0
  %5040 = vdwg.mxu0
  %v5041 = vadd.f32 %v4924, %v5012
  %v5042 = vadd.f32 %v4925, %v5015
  %v5043 = vadd.f32 %v4926, %v5020
  %v5044 = vadd.f32 %v4927, %v5023
  %v5045 = vadd.f32 %v4928, %v5028
  %v5046 = vadd.f32 %v4929, %v5031
  %v5047 = vadd.f32 %v4930, %v5036
  %s5048 = scalar_lea.vmem %s11, 672
  %v5049 = vld [vmem:[%s5048] sm:$0xf]
  %v5050 = vld [vmem:[%s5048 + $0x4] sm:$0xf]
  %v5051 = vld [vmem:[%s5048 + $0x8] sm:$0xf]
  %v5052 = vld [vmem:[%s5048 + $0xc] sm:$0xf]
  %v5053 = vld [vmem:[%s5048 + $0x10] sm:$0xf]
  %v5054 = vld [vmem:[%s5048 + $0x14] sm:$0xf]
  %v5055 = vld [vmem:[%s5048 + $0x18] sm:$0x1]
  %v5063 = vunpack.c.l.b16 %v5049
  %v5064 = vunpack.c.l.b16 %v5050
  %v5065 = vunpack.c.l.b16 %v5051
  %v5066 = vunpack.c.l.b16 %v5052
  %v5067 = vunpack.c.l.b16 %v5053
  %v5068 = vunpack.c.l.b16 %v5054
  %v5069 = vunpack.c.l.b16 %v5055
  %v5070 = vpack.c.b16 %v5064, %v5063
  %v5071 = vpack.c.b16 %v5066, %v5065
  %v5072 = vpack.c.b16 %v5068, %v5067
  %v5073 = vpack.c.b16 %v5069, %v5069
  %5074 = vrot.lane.b32.xlu0 %v2256, 64
  %v5075 = vpop.permute.xlu0 %5074
  %5076 = vrot.lane.b32.xlu0 %v2259, 64
  %v5077 = vpop.permute.xlu0 %5076
  %v5080 = vsel %vm1656, %v5070, 0
  %v5083 = vsel %vm1656, %v5071, 0
  %v5086 = vsel %vm1656, %v5072, 0
  %v5089 = vsel %vm1656, %v5073, 0
  %v5092 = vsel %vm1775, %v5077, 0
  %5094 = vmatprep.subr.bf16.mxu0 0
  %5095 = vmatpush1.bf16.msra.mxu0 %v5075
  %5096 = vmatprep.subr.bf16.mxu0 0
  %5097 = vmatpush1.bf16.msra.mxu0 %v5092
  %5098 = vmatprep.subr.bf16.mxu0 0
  %5099 = vmatpush1.bf16.msra.mxu0 0
  %5100 = vmatprep.subr.bf16.mxu0 0
  %5101 = vmatpush1.bf16.msra.mxu0 0
  %5102 = vmatprep.subr.bf16.mxu0 0
  %5103 = vmatpush1.bf16.msra.mxu0 0
  %5104 = vmatprep.subr.bf16.mxu0 0
  %5105 = vmatpush1.bf16.msra.mxu0 0
  %5106 = vmatprep.subr.bf16.mxu0 0
  %5107 = vmatpush1.bf16.msra.mxu0 0
  %5108 = vmatprep.subr.bf16.mxu0 0
  %5109 = vmatpush1.bf16.msra.mxu0 0
  %5110 = vmatprep.subr.bf16.mxu0 0
  %5111 = vmatpush1.bf16.msra.mxu0 0
  %5112 = vmatprep.subr.bf16.mxu0 0
  %5113 = vmatpush1.bf16.msra.mxu0 0
  %5114 = vmatprep.subr.bf16.mxu0 0
  %5115 = vmatpush1.bf16.msra.mxu0 0
  %5116 = vmatprep.subr.bf16.mxu0 0
  %5117 = vmatpush1.bf16.msra.mxu0 0
  %5118 = vmatprep.subr.bf16.mxu0 0
  %5119 = vmatpush1.bf16.msra.mxu0 0
  %5120 = vmatprep.subr.bf16.mxu0 0
  %5121 = vmatpush1.bf16.msra.mxu0 0
  %5122 = vmatprep.subr.bf16.mxu0 0
  %5123 = vmatpush1.bf16.msra.mxu0 0
  %5124 = vmatprep.subr.bf16.mxu0 0
  %5125 = vmatpush1.bf16.msra.mxu0 0
  %5126 = vmatprep.mubr.bf16.mxu0 0
  %5127 = vmatmul.mubr.bf16.gmra.mrb[0].mxu0 %v5080
  %v5128 = vpop.f32.mrb[0].mxu0
  %v5129 = vadd.f32 0.0, %v5128
  %v5130 = vpop.f32.mrb[0].mxu0
  %v5131 = vpop.f32.mrb[0].mxu0
  %v5132 = vadd.f32 0.0, %v5131
  %v5133 = vpop.f32.mrb[0].mxu0
  %5134 = vmatprep.mubr.bf16.mxu0 0
  %5135 = vmatmul.mubr.bf16.gmra.mrb[0].mxu0 %v5083
  %v5136 = vpop.f32.mrb[0].mxu0
  %v5137 = vadd.f32 0.0, %v5136
  %v5138 = vpop.f32.mrb[0].mxu0
  %v5139 = vpop.f32.mrb[0].mxu0
  %v5140 = vadd.f32 0.0, %v5139
  %v5141 = vpop.f32.mrb[0].mxu0
  %5142 = vmatprep.mubr.bf16.mxu0 0
  %5143 = vmatmul.mubr.bf16.gmra.mrb[0].mxu0 %v5086
  %v5144 = vpop.f32.mrb[0].mxu0
  %v5145 = vadd.f32 0.0, %v5144
  %v5146 = vpop.f32.mrb[0].mxu0
  %v5147 = vpop.f32.mrb[0].mxu0
  %v5148 = vadd.f32 0.0, %v5147
  %v5149 = vpop.f32.mrb[0].mxu0
  %5150 = vmatprep.mubr.bf16.mxu0 0
  %5151 = vmatmul.mubr.bf16.gmra.mrb[0].mxu0 %v5089
  %v5152 = vpop.f32.mrb[0].mxu0
  %v5153 = vadd.f32 0.0, %v5152
  %v5154 = vpop.f32.mrb[0].mxu0
  %v5155 = vpop.f32.mrb[0].mxu0
  %v5156 = vpop.f32.mrb[0].mxu0
  %5157 = vdwg.mxu0
  %v5158 = vadd.f32 %v5041, %v5129
  %v5159 = vadd.f32 %v5042, %v5132
  %v5160 = vadd.f32 %v5043, %v5137
  %v5161 = vadd.f32 %v5044, %v5140
  %v5162 = vadd.f32 %v5045, %v5145
  %v5163 = vadd.f32 %v5046, %v5148
  %v5164 = vadd.f32 %v5047, %v5153
  %s5165 = scalar_lea.vmem %s11, 700
  %v5166 = vld [vmem:[%s5165] sm:$0xf]
  %v5167 = vld [vmem:[%s5165 + $0x4] sm:$0xf]
  %v5168 = vld [vmem:[%s5165 + $0x8] sm:$0xf]
  %v5169 = vld [vmem:[%s5165 + $0xc] sm:$0xf]
  %v5170 = vld [vmem:[%s5165 + $0x10] sm:$0xf]
  %v5171 = vld [vmem:[%s5165 + $0x14] sm:$0xf]
  %v5172 = vld [vmem:[%s5165 + $0x18] sm:$0x1]
  %v5180 = vunpack.c.l.b16 %v5166
  %v5181 = vunpack.c.l.b16 %v5167
  %v5182 = vunpack.c.l.b16 %v5168
  %v5183 = vunpack.c.l.b16 %v5169
  %v5184 = vunpack.c.l.b16 %v5170
  %v5185 = vunpack.c.l.b16 %v5171
  %v5186 = vunpack.c.l.b16 %v5172
  %v5187 = vpack.c.b16 %v5181, %v5180
  %v5188 = vpack.c.b16 %v5183, %v5182
  %v5189 = vpack.c.b16 %v5185, %v5184
  %v5190 = vpack.c.b16 %v5186, %v5186
  %5191 = vrot.lane.b32.xlu0 %v2256, 56
  %v5192 = vpop.permute.xlu0 %5191
  %5193 = vrot.lane.b32.xlu0 %v2259, 56
  %v5194 = vpop.permute.xlu0 %5193
  %v5197 = vsel %vm1656, %v5187, 0
  %v5200 = vsel %vm1656, %v5188, 0
  %v5203 = vsel %vm1656, %v5189, 0
  %v5206 = vsel %vm1656, %v5190, 0
  %v5209 = vsel %vm1775, %v5194, 0
  %5211 = vmatprep.subr.bf16.mxu0 0
  %5212 = vmatpush1.bf16.msra.mxu0 %v5192
  %5213 = vmatprep.subr.bf16.mxu0 0
  %5214 = vmatpush1.bf16.msra.mxu0 %v5209
  %5215 = vmatprep.subr.bf16.mxu0 0
  %5216 = vmatpush1.bf16.msra.mxu0 0
  %5217 = vmatprep.subr.bf16.mxu0 0
  %5218 = vmatpush1.bf16.msra.mxu0 0
  %5219 = vmatprep.subr.bf16.mxu0 0
  %5220 = vmatpush1.bf16.msra.mxu0 0
  %5221 = vmatprep.subr.bf16.mxu0 0
  %5222 = vmatpush1.bf16.msra.mxu0 0
  %5223 = vmatprep.subr.bf16.mxu0 0
  %5224 = vmatpush1.bf16.msra.mxu0 0
  %5225 = vmatprep.subr.bf16.mxu0 0
  %5226 = vmatpush1.bf16.msra.mxu0 0
  %5227 = vmatprep.subr.bf16.mxu0 0
  %5228 = vmatpush1.bf16.msra.mxu0 0
  %5229 = vmatprep.subr.bf16.mxu0 0
  %5230 = vmatpush1.bf16.msra.mxu0 0
  %5231 = vmatprep.subr.bf16.mxu0 0
  %5232 = vmatpush1.bf16.msra.mxu0 0
  %5233 = vmatprep.subr.bf16.mxu0 0
  %5234 = vmatpush1.bf16.msra.mxu0 0
  %5235 = vmatprep.subr.bf16.mxu0 0
  %5236 = vmatpush1.bf16.msra.mxu0 0
  %5237 = vmatprep.subr.bf16.mxu0 0
  %5238 = vmatpush1.bf16.msra.mxu0 0
  %5239 = vmatprep.subr.bf16.mxu0 0
  %5240 = vmatpush1.bf16.msra.mxu0 0
  %5241 = vmatprep.subr.bf16.mxu0 0
  %5242 = vmatpush1.bf16.msra.mxu0 0
  %5243 = vmatprep.mubr.bf16.mxu0 0
  %5244 = vmatmul.mubr.bf16.gmra.mrb[0].mxu0 %v5197
  %v5245 = vpop.f32.mrb[0].mxu0
  %v5246 = vadd.f32 0.0, %v5245
  %v5247 = vpop.f32.mrb[0].mxu0
  %v5248 = vpop.f32.mrb[0].mxu0
  %v5249 = vadd.f32 0.0, %v5248
  %v5250 = vpop.f32.mrb[0].mxu0
  %5251 = vmatprep.mubr.bf16.mxu0 0
  %5252 = vmatmul.mubr.bf16.gmra.mrb[0].mxu0 %v5200
  %v5253 = vpop.f32.mrb[0].mxu0
  %v5254 = vadd.f32 0.0, %v5253
  %v5255 = vpop.f32.mrb[0].mxu0
  %v5256 = vpop.f32.mrb[0].mxu0
  %v5257 = vadd.f32 0.0, %v5256
  %v5258 = vpop.f32.mrb[0].mxu0
  %5259 = vmatprep.mubr.bf16.mxu0 0
  %5260 = vmatmul.mubr.bf16.gmra.mrb[0].mxu0 %v5203
  %v5261 = vpop.f32.mrb[0].mxu0
  %v5262 = vadd.f32 0.0, %v5261
  %v5263 = vpop.f32.mrb[0].mxu0
  %v5264 = vpop.f32.mrb[0].mxu0
  %v5265 = vadd.f32 0.0, %v5264
  %v5266 = vpop.f32.mrb[0].mxu0
  %5267 = vmatprep.mubr.bf16.mxu0 0
  %5268 = vmatmul.mubr.bf16.gmra.mrb[0].mxu0 %v5206
  %v5269 = vpop.f32.mrb[0].mxu0
  %v5270 = vadd.f32 0.0, %v5269
  %v5271 = vpop.f32.mrb[0].mxu0
  %v5272 = vpop.f32.mrb[0].mxu0
  %v5273 = vpop.f32.mrb[0].mxu0
  %5274 = vdwg.mxu0
  %v5275 = vadd.f32 %v5158, %v5246
  %v5276 = vadd.f32 %v5159, %v5249
  %v5277 = vadd.f32 %v5160, %v5254
  %v5278 = vadd.f32 %v5161, %v5257
  %v5279 = vadd.f32 %v5162, %v5262
  %v5280 = vadd.f32 %v5163, %v5265
  %v5281 = vadd.f32 %v5164, %v5270
  %s5282 = scalar_lea.vmem %s11, 728
  %v5283 = vld [vmem:[%s5282] sm:$0xf]
  %v5284 = vld [vmem:[%s5282 + $0x4] sm:$0xf]
  %v5285 = vld [vmem:[%s5282 + $0x8] sm:$0xf]
  %v5286 = vld [vmem:[%s5282 + $0xc] sm:$0xf]
  %v5287 = vld [vmem:[%s5282 + $0x10] sm:$0xf]
  %v5288 = vld [vmem:[%s5282 + $0x14] sm:$0xf]
  %v5289 = vld [vmem:[%s5282 + $0x18] sm:$0x1]
  %v5297 = vunpack.c.l.b16 %v5283
  %v5298 = vunpack.c.l.b16 %v5284
  %v5299 = vunpack.c.l.b16 %v5285
  %v5300 = vunpack.c.l.b16 %v5286
  %v5301 = vunpack.c.l.b16 %v5287
  %v5302 = vunpack.c.l.b16 %v5288
  %v5303 = vunpack.c.l.b16 %v5289
  %v5304 = vpack.c.b16 %v5298, %v5297
  %v5305 = vpack.c.b16 %v5300, %v5299
  %v5306 = vpack.c.b16 %v5302, %v5301
  %v5307 = vpack.c.b16 %v5303, %v5303
  %5308 = vrot.lane.b32.xlu0 %v2256, 48
  %v5309 = vpop.permute.xlu0 %5308
  %5310 = vrot.lane.b32.xlu0 %v2259, 48
  %v5311 = vpop.permute.xlu0 %5310
  %v5314 = vsel %vm1656, %v5304, 0
  %v5317 = vsel %vm1656, %v5305, 0
  %v5320 = vsel %vm1656, %v5306, 0
  %v5323 = vsel %vm1656, %v5307, 0
  %v5326 = vsel %vm1775, %v5311, 0
  %5328 = vmatprep.subr.bf16.mxu0 0
  %5329 = vmatpush1.bf16.msra.mxu0 %v5309
  %5330 = vmatprep.subr.bf16.mxu0 0
  %5331 = vmatpush1.bf16.msra.mxu0 %v5326
  %5332 = vmatprep.subr.bf16.mxu0 0
  %5333 = vmatpush1.bf16.msra.mxu0 0
  %5334 = vmatprep.subr.bf16.mxu0 0
  %5335 = vmatpush1.bf16.msra.mxu0 0
  %5336 = vmatprep.subr.bf16.mxu0 0
  %5337 = vmatpush1.bf16.msra.mxu0 0
  %5338 = vmatprep.subr.bf16.mxu0 0
  %5339 = vmatpush1.bf16.msra.mxu0 0
  %5340 = vmatprep.subr.bf16.mxu0 0
  %5341 = vmatpush1.bf16.msra.mxu0 0
  %5342 = vmatprep.subr.bf16.mxu0 0
  %5343 = vmatpush1.bf16.msra.mxu0 0
  %5344 = vmatprep.subr.bf16.mxu0 0
  %5345 = vmatpush1.bf16.msra.mxu0 0
  %5346 = vmatprep.subr.bf16.mxu0 0
  %5347 = vmatpush1.bf16.msra.mxu0 0
  %5348 = vmatprep.subr.bf16.mxu0 0
  %5349 = vmatpush1.bf16.msra.mxu0 0
  %5350 = vmatprep.subr.bf16.mxu0 0
  %5351 = vmatpush1.bf16.msra.mxu0 0
  %5352 = vmatprep.subr.bf16.mxu0 0
  %5353 = vmatpush1.bf16.msra.mxu0 0
  %5354 = vmatprep.subr.bf16.mxu0 0
  %5355 = vmatpush1.bf16.msra.mxu0 0
  %5356 = vmatprep.subr.bf16.mxu0 0
  %5357 = vmatpush1.bf16.msra.mxu0 0
  %5358 = vmatprep.subr.bf16.mxu0 0
  %5359 = vmatpush1.bf16.msra.mxu0 0
  %5360 = vmatprep.mubr.bf16.mxu0 0
  %5361 = vmatmul.mubr.bf16.gmra.mrb[0].mxu0 %v5314
  %v5362 = vpop.f32.mrb[0].mxu0
  %v5363 = vadd.f32 0.0, %v5362
  %v5364 = vpop.f32.mrb[0].mxu0
  %v5365 = vpop.f32.mrb[0].mxu0
  %v5366 = vadd.f32 0.0, %v5365
  %v5367 = vpop.f32.mrb[0].mxu0
  %5368 = vmatprep.mubr.bf16.mxu0 0
  %5369 = vmatmul.mubr.bf16.gmra.mrb[0].mxu0 %v5317
  %v5370 = vpop.f32.mrb[0].mxu0
  %v5371 = vadd.f32 0.0, %v5370
  %v5372 = vpop.f32.mrb[0].mxu0
  %v5373 = vpop.f32.mrb[0].mxu0
  %v5374 = vadd.f32 0.0, %v5373
  %v5375 = vpop.f32.mrb[0].mxu0
  %5376 = vmatprep.mubr.bf16.mxu0 0
  %5377 = vmatmul.mubr.bf16.gmra.mrb[0].mxu0 %v5320
  %v5378 = vpop.f32.mrb[0].mxu0
  %v5379 = vadd.f32 0.0, %v5378
  %v5380 = vpop.f32.mrb[0].mxu0
  %v5381 = vpop.f32.mrb[0].mxu0
  %v5382 = vadd.f32 0.0, %v5381
  %v5383 = vpop.f32.mrb[0].mxu0
  %5384 = vmatprep.mubr.bf16.mxu0 0
  %5385 = vmatmul.mubr.bf16.gmra.mrb[0].mxu0 %v5323
  %v5386 = vpop.f32.mrb[0].mxu0
  %v5387 = vadd.f32 0.0, %v5386
  %v5388 = vpop.f32.mrb[0].mxu0
  %v5389 = vpop.f32.mrb[0].mxu0
  %v5390 = vpop.f32.mrb[0].mxu0
  %5391 = vdwg.mxu0
  %v5392 = vadd.f32 %v5275, %v5363
  %v5393 = vadd.f32 %v5276, %v5366
  %v5394 = vadd.f32 %v5277, %v5371
  %v5395 = vadd.f32 %v5278, %v5374
  %v5396 = vadd.f32 %v5279, %v5379
  %v5397 = vadd.f32 %v5280, %v5382
  %v5398 = vadd.f32 %v5281, %v5387
  %s5399 = scalar_lea.vmem %s11, 756
  %v5400 = vld [vmem:[%s5399] sm:$0xf]
  %v5401 = vld [vmem:[%s5399 + $0x4] sm:$0xf]
  %v5402 = vld [vmem:[%s5399 + $0x8] sm:$0xf]
  %v5403 = vld [vmem:[%s5399 + $0xc] sm:$0xf]
  %v5404 = vld [vmem:[%s5399 + $0x10] sm:$0xf]
  %v5405 = vld [vmem:[%s5399 + $0x14] sm:$0xf]
  %v5406 = vld [vmem:[%s5399 + $0x18] sm:$0x1]
  %v5414 = vunpack.c.l.b16 %v5400
  %v5415 = vunpack.c.l.b16 %v5401
  %v5416 = vunpack.c.l.b16 %v5402
  %v5417 = vunpack.c.l.b16 %v5403
  %v5418 = vunpack.c.l.b16 %v5404
  %v5419 = vunpack.c.l.b16 %v5405
  %v5420 = vunpack.c.l.b16 %v5406
  %v5421 = vpack.c.b16 %v5415, %v5414
  %v5422 = vpack.c.b16 %v5417, %v5416
  %v5423 = vpack.c.b16 %v5419, %v5418
  %v5424 = vpack.c.b16 %v5420, %v5420
  %5425 = vrot.lane.b32.xlu0 %v2256, 40
  %v5426 = vpop.permute.xlu0 %5425
  %5427 = vrot.lane.b32.xlu0 %v2259, 40
  %v5428 = vpop.permute.xlu0 %5427
  %v5431 = vsel %vm1656, %v5421, 0
  %v5434 = vsel %vm1656, %v5422, 0
  %v5437 = vsel %vm1656, %v5423, 0
  %v5440 = vsel %vm1656, %v5424, 0
  %v5443 = vsel %vm1775, %v5428, 0
  %5445 = vmatprep.subr.bf16.mxu0 0
  %5446 = vmatpush1.bf16.msra.mxu0 %v5426
  %5447 = vmatprep.subr.bf16.mxu0 0
  %5448 = vmatpush1.bf16.msra.mxu0 %v5443
  %5449 = vmatprep.subr.bf16.mxu0 0
  %5450 = vmatpush1.bf16.msra.mxu0 0
  %5451 = vmatprep.subr.bf16.mxu0 0
  %5452 = vmatpush1.bf16.msra.mxu0 0
  %5453 = vmatprep.subr.bf16.mxu0 0
  %5454 = vmatpush1.bf16.msra.mxu0 0
  %5455 = vmatprep.subr.bf16.mxu0 0
  %5456 = vmatpush1.bf16.msra.mxu0 0
  %5457 = vmatprep.subr.bf16.mxu0 0
  %5458 = vmatpush1.bf16.msra.mxu0 0
  %5459 = vmatprep.subr.bf16.mxu0 0
  %5460 = vmatpush1.bf16.msra.mxu0 0
  %5461 = vmatprep.subr.bf16.mxu0 0
  %5462 = vmatpush1.bf16.msra.mxu0 0
  %5463 = vmatprep.subr.bf16.mxu0 0
  %5464 = vmatpush1.bf16.msra.mxu0 0
  %5465 = vmatprep.subr.bf16.mxu0 0
  %5466 = vmatpush1.bf16.msra.mxu0 0
  %5467 = vmatprep.subr.bf16.mxu0 0
  %5468 = vmatpush1.bf16.msra.mxu0 0
  %5469 = vmatprep.subr.bf16.mxu0 0
  %5470 = vmatpush1.bf16.msra.mxu0 0
  %5471 = vmatprep.subr.bf16.mxu0 0
  %5472 = vmatpush1.bf16.msra.mxu0 0
  %5473 = vmatprep.subr.bf16.mxu0 0
  %5474 = vmatpush1.bf16.msra.mxu0 0
  %5475 = vmatprep.subr.bf16.mxu0 0
  %5476 = vmatpush1.bf16.msra.mxu0 0
  %5477 = vmatprep.mubr.bf16.mxu0 0
  %5478 = vmatmul.mubr.bf16.gmra.mrb[0].mxu0 %v5431
  %v5479 = vpop.f32.mrb[0].mxu0
  %v5480 = vadd.f32 0.0, %v5479
  %v5481 = vpop.f32.mrb[0].mxu0
  %v5482 = vpop.f32.mrb[0].mxu0
  %v5483 = vadd.f32 0.0, %v5482
  %v5484 = vpop.f32.mrb[0].mxu0
  %5485 = vmatprep.mubr.bf16.mxu0 0
  %5486 = vmatmul.mubr.bf16.gmra.mrb[0].mxu0 %v5434
  %v5487 = vpop.f32.mrb[0].mxu0
  %v5488 = vadd.f32 0.0, %v5487
  %v5489 = vpop.f32.mrb[0].mxu0
  %v5490 = vpop.f32.mrb[0].mxu0
  %v5491 = vadd.f32 0.0, %v5490
  %v5492 = vpop.f32.mrb[0].mxu0
  %5493 = vmatprep.mubr.bf16.mxu0 0
  %5494 = vmatmul.mubr.bf16.gmra.mrb[0].mxu0 %v5437
  %v5495 = vpop.f32.mrb[0].mxu0
  %v5496 = vadd.f32 0.0, %v5495
  %v5497 = vpop.f32.mrb[0].mxu0
  %v5498 = vpop.f32.mrb[0].mxu0
  %v5499 = vadd.f32 0.0, %v5498
  %v5500 = vpop.f32.mrb[0].mxu0
  %5501 = vmatprep.mubr.bf16.mxu0 0
  %5502 = vmatmul.mubr.bf16.gmra.mrb[0].mxu0 %v5440
  %v5503 = vpop.f32.mrb[0].mxu0
  %v5504 = vadd.f32 0.0, %v5503
  %v5505 = vpop.f32.mrb[0].mxu0
  %v5506 = vpop.f32.mrb[0].mxu0
  %v5507 = vpop.f32.mrb[0].mxu0
  %5508 = vdwg.mxu0
  %v5509 = vadd.f32 %v5392, %v5480
  %v5510 = vadd.f32 %v5393, %v5483
  %v5511 = vadd.f32 %v5394, %v5488
  %v5512 = vadd.f32 %v5395, %v5491
  %v5513 = vadd.f32 %v5396, %v5496
  %v5514 = vadd.f32 %v5397, %v5499
  %v5515 = vadd.f32 %v5398, %v5504
  %s5516 = scalar_lea.vmem %s11, 784
  %v5517 = vld [vmem:[%s5516] sm:$0xf]
  %v5518 = vld [vmem:[%s5516 + $0x4] sm:$0xf]
  %v5519 = vld [vmem:[%s5516 + $0x8] sm:$0xf]
  %v5520 = vld [vmem:[%s5516 + $0xc] sm:$0xf]
  %v5521 = vld [vmem:[%s5516 + $0x10] sm:$0xf]
  %v5522 = vld [vmem:[%s5516 + $0x14] sm:$0xf]
  %v5523 = vld [vmem:[%s5516 + $0x18] sm:$0x1]
  %v5531 = vunpack.c.l.b16 %v5517
  %v5532 = vunpack.c.l.b16 %v5518
  %v5533 = vunpack.c.l.b16 %v5519
  %v5534 = vunpack.c.l.b16 %v5520
  %v5535 = vunpack.c.l.b16 %v5521
  %v5536 = vunpack.c.l.b16 %v5522
  %v5537 = vunpack.c.l.b16 %v5523
  %v5538 = vpack.c.b16 %v5532, %v5531
  %v5539 = vpack.c.b16 %v5534, %v5533
  %v5540 = vpack.c.b16 %v5536, %v5535
  %v5541 = vpack.c.b16 %v5537, %v5537
  %5542 = vrot.lane.b32.xlu0 %v2256, 32
  %v5543 = vpop.permute.xlu0 %5542
  %5544 = vrot.lane.b32.xlu0 %v2259, 32
  %v5545 = vpop.permute.xlu0 %5544
  %v5548 = vsel %vm1656, %v5538, 0
  %v5551 = vsel %vm1656, %v5539, 0
  %v5554 = vsel %vm1656, %v5540, 0
  %v5557 = vsel %vm1656, %v5541, 0
  %v5560 = vsel %vm1775, %v5545, 0
  %5562 = vmatprep.subr.bf16.mxu0 0
  %5563 = vmatpush1.bf16.msra.mxu0 %v5543
  %5564 = vmatprep.subr.bf16.mxu0 0
  %5565 = vmatpush1.bf16.msra.mxu0 %v5560
  %5566 = vmatprep.subr.bf16.mxu0 0
  %5567 = vmatpush1.bf16.msra.mxu0 0
  %5568 = vmatprep.subr.bf16.mxu0 0
  %5569 = vmatpush1.bf16.msra.mxu0 0
  %5570 = vmatprep.subr.bf16.mxu0 0
  %5571 = vmatpush1.bf16.msra.mxu0 0
  %5572 = vmatprep.subr.bf16.mxu0 0
  %5573 = vmatpush1.bf16.msra.mxu0 0
  %5574 = vmatprep.subr.bf16.mxu0 0
  %5575 = vmatpush1.bf16.msra.mxu0 0
  %5576 = vmatprep.subr.bf16.mxu0 0
  %5577 = vmatpush1.bf16.msra.mxu0 0
  %5578 = vmatprep.subr.bf16.mxu0 0
  %5579 = vmatpush1.bf16.msra.mxu0 0
  %5580 = vmatprep.subr.bf16.mxu0 0
  %5581 = vmatpush1.bf16.msra.mxu0 0
  %5582 = vmatprep.subr.bf16.mxu0 0
  %5583 = vmatpush1.bf16.msra.mxu0 0
  %5584 = vmatprep.subr.bf16.mxu0 0
  %5585 = vmatpush1.bf16.msra.mxu0 0
  %5586 = vmatprep.subr.bf16.mxu0 0
  %5587 = vmatpush1.bf16.msra.mxu0 0
  %5588 = vmatprep.subr.bf16.mxu0 0
  %5589 = vmatpush1.bf16.msra.mxu0 0
  %5590 = vmatprep.subr.bf16.mxu0 0
  %5591 = vmatpush1.bf16.msra.mxu0 0
  %5592 = vmatprep.subr.bf16.mxu0 0
  %5593 = vmatpush1.bf16.msra.mxu0 0
  %5594 = vmatprep.mubr.bf16.mxu0 0
  %5595 = vmatmul.mubr.bf16.gmra.mrb[0].mxu0 %v5548
  %v5596 = vpop.f32.mrb[0].mxu0
  %v5597 = vadd.f32 0.0, %v5596
  %v5598 = vpop.f32.mrb[0].mxu0
  %v5599 = vpop.f32.mrb[0].mxu0
  %v5600 = vadd.f32 0.0, %v5599
  %v5601 = vpop.f32.mrb[0].mxu0
  %5602 = vmatprep.mubr.bf16.mxu0 0
  %5603 = vmatmul.mubr.bf16.gmra.mrb[0].mxu0 %v5551
  %v5604 = vpop.f32.mrb[0].mxu0
  %v5605 = vadd.f32 0.0, %v5604
  %v5606 = vpop.f32.mrb[0].mxu0
  %v5607 = vpop.f32.mrb[0].mxu0
  %v5608 = vadd.f32 0.0, %v5607
  %v5609 = vpop.f32.mrb[0].mxu0
  %5610 = vmatprep.mubr.bf16.mxu0 0
  %5611 = vmatmul.mubr.bf16.gmra.mrb[0].mxu0 %v5554
  %v5612 = vpop.f32.mrb[0].mxu0
  %v5613 = vadd.f32 0.0, %v5612
  %v5614 = vpop.f32.mrb[0].mxu0
  %v5615 = vpop.f32.mrb[0].mxu0
  %v5616 = vadd.f32 0.0, %v5615
  %v5617 = vpop.f32.mrb[0].mxu0
  %5618 = vmatprep.mubr.bf16.mxu0 0
  %5619 = vmatmul.mubr.bf16.gmra.mrb[0].mxu0 %v5557
  %v5620 = vpop.f32.mrb[0].mxu0
  %v5621 = vadd.f32 0.0, %v5620
  %v5622 = vpop.f32.mrb[0].mxu0
  %v5623 = vpop.f32.mrb[0].mxu0
  %v5624 = vpop.f32.mrb[0].mxu0
  %5625 = vdwg.mxu0
  %v5626 = vadd.f32 %v5509, %v5597
  %v5627 = vadd.f32 %v5510, %v5600
  %v5628 = vadd.f32 %v5511, %v5605
  %v5629 = vadd.f32 %v5512, %v5608
  %v5630 = vadd.f32 %v5513, %v5613
  %v5631 = vadd.f32 %v5514, %v5616
  %v5632 = vadd.f32 %v5515, %v5621
  %s5633 = scalar_lea.vmem %s11, 812
  %v5634 = vld [vmem:[%s5633] sm:$0xf]
  %v5635 = vld [vmem:[%s5633 + $0x4] sm:$0xf]
  %v5636 = vld [vmem:[%s5633 + $0x8] sm:$0xf]
  %v5637 = vld [vmem:[%s5633 + $0xc] sm:$0xf]
  %v5638 = vld [vmem:[%s5633 + $0x10] sm:$0xf]
  %v5639 = vld [vmem:[%s5633 + $0x14] sm:$0xf]
  %v5640 = vld [vmem:[%s5633 + $0x18] sm:$0x1]
  %v5648 = vunpack.c.l.b16 %v5634
  %v5649 = vunpack.c.l.b16 %v5635
  %v5650 = vunpack.c.l.b16 %v5636
  %v5651 = vunpack.c.l.b16 %v5637
  %v5652 = vunpack.c.l.b16 %v5638
  %v5653 = vunpack.c.l.b16 %v5639
  %v5654 = vunpack.c.l.b16 %v5640
  %v5655 = vpack.c.b16 %v5649, %v5648
  %v5656 = vpack.c.b16 %v5651, %v5650
  %v5657 = vpack.c.b16 %v5653, %v5652
  %v5658 = vpack.c.b16 %v5654, %v5654
  %5659 = vrot.lane.b32.xlu0 %v2256, 24
  %v5660 = vpop.permute.xlu0 %5659
  %5661 = vrot.lane.b32.xlu0 %v2259, 24
  %v5662 = vpop.permute.xlu0 %5661
  %v5665 = vsel %vm1656, %v5655, 0
  %v5668 = vsel %vm1656, %v5656, 0
  %v5671 = vsel %vm1656, %v5657, 0
  %v5674 = vsel %vm1656, %v5658, 0
  %v5677 = vsel %vm1775, %v5662, 0
  %5679 = vmatprep.subr.bf16.mxu0 0
  %5680 = vmatpush1.bf16.msra.mxu0 %v5660
  %5681 = vmatprep.subr.bf16.mxu0 0
  %5682 = vmatpush1.bf16.msra.mxu0 %v5677
  %5683 = vmatprep.subr.bf16.mxu0 0
  %5684 = vmatpush1.bf16.msra.mxu0 0
  %5685 = vmatprep.subr.bf16.mxu0 0
  %5686 = vmatpush1.bf16.msra.mxu0 0
  %5687 = vmatprep.subr.bf16.mxu0 0
  %5688 = vmatpush1.bf16.msra.mxu0 0
  %5689 = vmatprep.subr.bf16.mxu0 0
  %5690 = vmatpush1.bf16.msra.mxu0 0
  %5691 = vmatprep.subr.bf16.mxu0 0
  %5692 = vmatpush1.bf16.msra.mxu0 0
  %5693 = vmatprep.subr.bf16.mxu0 0
  %5694 = vmatpush1.bf16.msra.mxu0 0
  %5695 = vmatprep.subr.bf16.mxu0 0
  %5696 = vmatpush1.bf16.msra.mxu0 0
  %5697 = vmatprep.subr.bf16.mxu0 0
  %5698 = vmatpush1.bf16.msra.mxu0 0
  %5699 = vmatprep.subr.bf16.mxu0 0
  %5700 = vmatpush1.bf16.msra.mxu0 0
  %5701 = vmatprep.subr.bf16.mxu0 0
  %5702 = vmatpush1.bf16.msra.mxu0 0
  %5703 = vmatprep.subr.bf16.mxu0 0
  %5704 = vmatpush1.bf16.msra.mxu0 0
  %5705 = vmatprep.subr.bf16.mxu0 0
  %5706 = vmatpush1.bf16.msra.mxu0 0
  %5707 = vmatprep.subr.bf16.mxu0 0
  %5708 = vmatpush1.bf16.msra.mxu0 0
  %5709 = vmatprep.subr.bf16.mxu0 0
  %5710 = vmatpush1.bf16.msra.mxu0 0
  %5711 = vmatprep.mubr.bf16.mxu0 0
  %5712 = vmatmul.mubr.bf16.gmra.mrb[0].mxu0 %v5665
  %v5713 = vpop.f32.mrb[0].mxu0
  %v5714 = vadd.f32 0.0, %v5713
  %v5715 = vpop.f32.mrb[0].mxu0
  %v5716 = vpop.f32.mrb[0].mxu0
  %v5717 = vadd.f32 0.0, %v5716
  %v5718 = vpop.f32.mrb[0].mxu0
  %5719 = vmatprep.mubr.bf16.mxu0 0
  %5720 = vmatmul.mubr.bf16.gmra.mrb[0].mxu0 %v5668
  %v5721 = vpop.f32.mrb[0].mxu0
  %v5722 = vadd.f32 0.0, %v5721
  %v5723 = vpop.f32.mrb[0].mxu0
  %v5724 = vpop.f32.mrb[0].mxu0
  %v5725 = vadd.f32 0.0, %v5724
  %v5726 = vpop.f32.mrb[0].mxu0
  %5727 = vmatprep.mubr.bf16.mxu0 0
  %5728 = vmatmul.mubr.bf16.gmra.mrb[0].mxu0 %v5671
  %v5729 = vpop.f32.mrb[0].mxu0
  %v5730 = vadd.f32 0.0, %v5729
  %v5731 = vpop.f32.mrb[0].mxu0
  %v5732 = vpop.f32.mrb[0].mxu0
  %v5733 = vadd.f32 0.0, %v5732
  %v5734 = vpop.f32.mrb[0].mxu0
  %5735 = vmatprep.mubr.bf16.mxu0 0
  %5736 = vmatmul.mubr.bf16.gmra.mrb[0].mxu0 %v5674
  %v5737 = vpop.f32.mrb[0].mxu0
  %v5738 = vadd.f32 0.0, %v5737
  %v5739 = vpop.f32.mrb[0].mxu0
  %v5740 = vpop.f32.mrb[0].mxu0
  %v5741 = vpop.f32.mrb[0].mxu0
  %5742 = vdwg.mxu0
  %v5743 = vadd.f32 %v5626, %v5714
  %v5744 = vadd.f32 %v5627, %v5717
  %v5745 = vadd.f32 %v5628, %v5722
  %v5746 = vadd.f32 %v5629, %v5725
  %v5747 = vadd.f32 %v5630, %v5730
  %v5748 = vadd.f32 %v5631, %v5733
  %v5749 = vadd.f32 %v5632, %v5738
  %s5750 = scalar_lea.vmem %s11, 840
  %v5751 = vld [vmem:[%s5750] sm:$0xf]
  %v5752 = vld [vmem:[%s5750 + $0x4] sm:$0xf]
  %v5753 = vld [vmem:[%s5750 + $0x8] sm:$0xf]
  %v5754 = vld [vmem:[%s5750 + $0xc] sm:$0xf]
  %v5755 = vld [vmem:[%s5750 + $0x10] sm:$0xf]
  %v5756 = vld [vmem:[%s5750 + $0x14] sm:$0xf]
  %v5757 = vld [vmem:[%s5750 + $0x18] sm:$0x1]
  %v5765 = vunpack.c.l.b16 %v5751
  %v5766 = vunpack.c.l.b16 %v5752
  %v5767 = vunpack.c.l.b16 %v5753
  %v5768 = vunpack.c.l.b16 %v5754
  %v5769 = vunpack.c.l.b16 %v5755
  %v5770 = vunpack.c.l.b16 %v5756
  %v5771 = vunpack.c.l.b16 %v5757
  %v5772 = vpack.c.b16 %v5766, %v5765
  %v5773 = vpack.c.b16 %v5768, %v5767
  %v5774 = vpack.c.b16 %v5770, %v5769
  %v5775 = vpack.c.b16 %v5771, %v5771
  %5776 = vrot.lane.b32.xlu0 %v2256, 16
  %v5777 = vpop.permute.xlu0 %5776
  %5778 = vrot.lane.b32.xlu0 %v2259, 16
  %v5779 = vpop.permute.xlu0 %5778
  %v5782 = vsel %vm1656, %v5772, 0
  %v5785 = vsel %vm1656, %v5773, 0
  %v5788 = vsel %vm1656, %v5774, 0
  %v5791 = vsel %vm1656, %v5775, 0
  %v5794 = vsel %vm1775, %v5779, 0
  %5796 = vmatprep.subr.bf16.mxu0 0
  %5797 = vmatpush1.bf16.msra.mxu0 %v5777
  %5798 = vmatprep.subr.bf16.mxu0 0
  %5799 = vmatpush1.bf16.msra.mxu0 %v5794
  %5800 = vmatprep.subr.bf16.mxu0 0
  %5801 = vmatpush1.bf16.msra.mxu0 0
  %5802 = vmatprep.subr.bf16.mxu0 0
  %5803 = vmatpush1.bf16.msra.mxu0 0
  %5804 = vmatprep.subr.bf16.mxu0 0
  %5805 = vmatpush1.bf16.msra.mxu0 0
  %5806 = vmatprep.subr.bf16.mxu0 0
  %5807 = vmatpush1.bf16.msra.mxu0 0
  %5808 = vmatprep.subr.bf16.mxu0 0
  %5809 = vmatpush1.bf16.msra.mxu0 0
  %5810 = vmatprep.subr.bf16.mxu0 0
  %5811 = vmatpush1.bf16.msra.mxu0 0
  %5812 = vmatprep.subr.bf16.mxu0 0
  %5813 = vmatpush1.bf16.msra.mxu0 0
  %5814 = vmatprep.subr.bf16.mxu0 0
  %5815 = vmatpush1.bf16.msra.mxu0 0
  %5816 = vmatprep.subr.bf16.mxu0 0
  %5817 = vmatpush1.bf16.msra.mxu0 0
  %5818 = vmatprep.subr.bf16.mxu0 0
  %5819 = vmatpush1.bf16.msra.mxu0 0
  %5820 = vmatprep.subr.bf16.mxu0 0
  %5821 = vmatpush1.bf16.msra.mxu0 0
  %5822 = vmatprep.subr.bf16.mxu0 0
  %5823 = vmatpush1.bf16.msra.mxu0 0
  %5824 = vmatprep.subr.bf16.mxu0 0
  %5825 = vmatpush1.bf16.msra.mxu0 0
  %5826 = vmatprep.subr.bf16.mxu0 0
  %5827 = vmatpush1.bf16.msra.mxu0 0
  %5828 = vmatprep.mubr.bf16.mxu0 0
  %5829 = vmatmul.mubr.bf16.gmra.mrb[0].mxu0 %v5782
  %v5830 = vpop.f32.mrb[0].mxu0
  %v5831 = vadd.f32 0.0, %v5830
  %v5832 = vpop.f32.mrb[0].mxu0
  %v5833 = vpop.f32.mrb[0].mxu0
  %v5834 = vadd.f32 0.0, %v5833
  %v5835 = vpop.f32.mrb[0].mxu0
  %5836 = vmatprep.mubr.bf16.mxu0 0
  %5837 = vmatmul.mubr.bf16.gmra.mrb[0].mxu0 %v5785
  %v5838 = vpop.f32.mrb[0].mxu0
  %v5839 = vadd.f32 0.0, %v5838
  %v5840 = vpop.f32.mrb[0].mxu0
  %v5841 = vpop.f32.mrb[0].mxu0
  %v5842 = vadd.f32 0.0, %v5841
  %v5843 = vpop.f32.mrb[0].mxu0
  %5844 = vmatprep.mubr.bf16.mxu0 0
  %5845 = vmatmul.mubr.bf16.gmra.mrb[0].mxu0 %v5788
  %v5846 = vpop.f32.mrb[0].mxu0
  %v5847 = vadd.f32 0.0, %v5846
  %v5848 = vpop.f32.mrb[0].mxu0
  %v5849 = vpop.f32.mrb[0].mxu0
  %v5850 = vadd.f32 0.0, %v5849
  %v5851 = vpop.f32.mrb[0].mxu0
  %5852 = vmatprep.mubr.bf16.mxu0 0
  %5853 = vmatmul.mubr.bf16.gmra.mrb[0].mxu0 %v5791
  %v5854 = vpop.f32.mrb[0].mxu0
  %v5855 = vadd.f32 0.0, %v5854
  %v5856 = vpop.f32.mrb[0].mxu0
  %v5857 = vpop.f32.mrb[0].mxu0
  %v5858 = vpop.f32.mrb[0].mxu0
  %5859 = vdwg.mxu0
  %v5860 = vadd.f32 %v5743, %v5831
  %v5861 = vadd.f32 %v5744, %v5834
  %v5862 = vadd.f32 %v5745, %v5839
  %v5863 = vadd.f32 %v5746, %v5842
  %v5864 = vadd.f32 %v5747, %v5847
  %v5865 = vadd.f32 %v5748, %v5850
  %v5866 = vadd.f32 %v5749, %v5855
  %s5867 = scalar_lea.vmem %s11, 868
  %v5868 = vld [vmem:[%s5867] sm:$0xf]
  %v5869 = vld [vmem:[%s5867 + $0x4] sm:$0xf]
  %v5870 = vld [vmem:[%s5867 + $0x8] sm:$0xf]
  %v5871 = vld [vmem:[%s5867 + $0xc] sm:$0xf]
  %v5872 = vld [vmem:[%s5867 + $0x10] sm:$0xf]
  %v5873 = vld [vmem:[%s5867 + $0x14] sm:$0xf]
  %v5874 = vld [vmem:[%s5867 + $0x18] sm:$0x1]
  %v5882 = vunpack.c.l.b16 %v5868
  %v5883 = vunpack.c.l.b16 %v5869
  %v5884 = vunpack.c.l.b16 %v5870
  %v5885 = vunpack.c.l.b16 %v5871
  %v5886 = vunpack.c.l.b16 %v5872
  %v5887 = vunpack.c.l.b16 %v5873
  %v5888 = vunpack.c.l.b16 %v5874
  %v5889 = vpack.c.b16 %v5883, %v5882
  %v5890 = vpack.c.b16 %v5885, %v5884
  %v5891 = vpack.c.b16 %v5887, %v5886
  %v5892 = vpack.c.b16 %v5888, %v5888
  %5893 = vrot.lane.b32.xlu0 %v2256, 8
  %v5894 = vpop.permute.xlu0 %5893
  %5895 = vrot.lane.b32.xlu0 %v2259, 8
  %v5896 = vpop.permute.xlu0 %5895
  %v5899 = vsel %vm1656, %v5889, 0
  %v5902 = vsel %vm1656, %v5890, 0
  %v5905 = vsel %vm1656, %v5891, 0
  %v5908 = vsel %vm1656, %v5892, 0
  %v5911 = vsel %vm1775, %v5896, 0
  %5913 = vmatprep.subr.bf16.mxu0 0
  %5914 = vmatpush1.bf16.msra.mxu0 %v5894
  %5915 = vmatprep.subr.bf16.mxu0 0
  %5916 = vmatpush1.bf16.msra.mxu0 %v5911
  %5917 = vmatprep.subr.bf16.mxu0 0
  %5918 = vmatpush1.bf16.msra.mxu0 0
  %5919 = vmatprep.subr.bf16.mxu0 0
  %5920 = vmatpush1.bf16.msra.mxu0 0
  %5921 = vmatprep.subr.bf16.mxu0 0
  %5922 = vmatpush1.bf16.msra.mxu0 0
  %5923 = vmatprep.subr.bf16.mxu0 0
  %5924 = vmatpush1.bf16.msra.mxu0 0
  %5925 = vmatprep.subr.bf16.mxu0 0
  %5926 = vmatpush1.bf16.msra.mxu0 0
  %5927 = vmatprep.subr.bf16.mxu0 0
  %5928 = vmatpush1.bf16.msra.mxu0 0
  %5929 = vmatprep.subr.bf16.mxu0 0
  %5930 = vmatpush1.bf16.msra.mxu0 0
  %5931 = vmatprep.subr.bf16.mxu0 0
  %5932 = vmatpush1.bf16.msra.mxu0 0
  %5933 = vmatprep.subr.bf16.mxu0 0
  %5934 = vmatpush1.bf16.msra.mxu0 0
  %5935 = vmatprep.subr.bf16.mxu0 0
  %5936 = vmatpush1.bf16.msra.mxu0 0
  %5937 = vmatprep.subr.bf16.mxu0 0
  %5938 = vmatpush1.bf16.msra.mxu0 0
  %5939 = vmatprep.subr.bf16.mxu0 0
  %5940 = vmatpush1.bf16.msra.mxu0 0
  %5941 = vmatprep.subr.bf16.mxu0 0
  %5942 = vmatpush1.bf16.msra.mxu0 0
  %5943 = vmatprep.subr.bf16.mxu0 0
  %5944 = vmatpush1.bf16.msra.mxu0 0
  %5945 = vmatprep.mubr.bf16.mxu0 0
  %5946 = vmatmul.mubr.bf16.gmra.mrb[0].mxu0 %v5899
  %v5947 = vpop.f32.mrb[0].mxu0
  %v5948 = vadd.f32 0.0, %v5947
  %v5949 = vpop.f32.mrb[0].mxu0
  %v5950 = vpop.f32.mrb[0].mxu0
  %v5951 = vadd.f32 0.0, %v5950
  %v5952 = vpop.f32.mrb[0].mxu0
  %5953 = vmatprep.mubr.bf16.mxu0 0
  %5954 = vmatmul.mubr.bf16.gmra.mrb[0].mxu0 %v5902
  %v5955 = vpop.f32.mrb[0].mxu0
  %v5956 = vadd.f32 0.0, %v5955
  %v5957 = vpop.f32.mrb[0].mxu0
  %v5958 = vpop.f32.mrb[0].mxu0
  %v5959 = vadd.f32 0.0, %v5958
  %v5960 = vpop.f32.mrb[0].mxu0
  %5961 = vmatprep.mubr.bf16.mxu0 0
  %5962 = vmatmul.mubr.bf16.gmra.mrb[0].mxu0 %v5905
  %v5963 = vpop.f32.mrb[0].mxu0
  %v5964 = vadd.f32 0.0, %v5963
  %v5965 = vpop.f32.mrb[0].mxu0
  %v5966 = vpop.f32.mrb[0].mxu0
  %v5967 = vadd.f32 0.0, %v5966
  %v5968 = vpop.f32.mrb[0].mxu0
  %5969 = vmatprep.mubr.bf16.mxu0 0
  %5970 = vmatmul.mubr.bf16.gmra.mrb[0].mxu0 %v5908
  %v5971 = vpop.f32.mrb[0].mxu0
  %v5972 = vadd.f32 0.0, %v5971
  %v5973 = vpop.f32.mrb[0].mxu0
  %v5974 = vpop.f32.mrb[0].mxu0
  %v5975 = vpop.f32.mrb[0].mxu0
  %5976 = vdwg.mxu0
  %v5977 = vadd.f32 %v5860, %v5948
  %v5978 = vadd.f32 %v5861, %v5951
  %v5979 = vadd.f32 %v5862, %v5956
  %v5980 = vadd.f32 %v5863, %v5959
  %v5981 = vadd.f32 %v5864, %v5964
  %v5982 = vadd.f32 %v5865, %v5967
  %v5983 = vadd.f32 %v5866, %v5972
  %s5984 = scalar_lea.vmem %s11, 896
  %v5985 = vld [vmem:[%s5984] sm:$0xf]
  %v5986 = vld [vmem:[%s5984 + $0x4] sm:$0xf]
  %v5987 = vld [vmem:[%s5984 + $0x8] sm:$0xf]
  %v5988 = vld [vmem:[%s5984 + $0xc] sm:$0xf]
  %v5989 = vld [vmem:[%s5984 + $0x10] sm:$0xf]
  %v5990 = vld [vmem:[%s5984 + $0x14] sm:$0xf]
  %v5991 = vld [vmem:[%s5984 + $0x18] sm:$0x1]
  %v5999 = vunpack.c.l.b16 %v5985
  %v6000 = vunpack.c.l.b16 %v5986
  %v6001 = vunpack.c.l.b16 %v5987
  %v6002 = vunpack.c.l.b16 %v5988
  %v6003 = vunpack.c.l.b16 %v5989
  %v6004 = vunpack.c.l.b16 %v5990
  %v6005 = vunpack.c.l.b16 %v5991
  %v6006 = vpack.c.b16 %v6000, %v5999
  %v6007 = vpack.c.b16 %v6002, %v6001
  %v6008 = vpack.c.b16 %v6004, %v6003
  %v6009 = vpack.c.b16 %v6005, %v6005
  %v6011 = vsel %vm1656, %v6006, 0
  %v6014 = vsel %vm1656, %v6007, 0
  %v6017 = vsel %vm1656, %v6008, 0
  %v6020 = vsel %vm1656, %v6009, 0
  %v6023 = vsel %vm1775, %v2260, 0
  %6025 = vmatprep.subr.bf16.mxu0 0
  %6026 = vmatpush1.bf16.msra.mxu0 %v2257
  %6027 = vmatprep.subr.bf16.mxu0 0
  %6028 = vmatpush1.bf16.msra.mxu0 %v6023
  %6029 = vmatprep.subr.bf16.mxu0 0
  %6030 = vmatpush1.bf16.msra.mxu0 0
  %6031 = vmatprep.subr.bf16.mxu0 0
  %6032 = vmatpush1.bf16.msra.mxu0 0
  %6033 = vmatprep.subr.bf16.mxu0 0
  %6034 = vmatpush1.bf16.msra.mxu0 0
  %6035 = vmatprep.subr.bf16.mxu0 0
  %6036 = vmatpush1.bf16.msra.mxu0 0
  %6037 = vmatprep.subr.bf16.mxu0 0
  %6038 = vmatpush1.bf16.msra.mxu0 0
  %6039 = vmatprep.subr.bf16.mxu0 0
  %6040 = vmatpush1.bf16.msra.mxu0 0
  %6041 = vmatprep.subr.bf16.mxu0 0
  %6042 = vmatpush1.bf16.msra.mxu0 0
  %6043 = vmatprep.subr.bf16.mxu0 0
  %6044 = vmatpush1.bf16.msra.mxu0 0
  %6045 = vmatprep.subr.bf16.mxu0 0
  %6046 = vmatpush1.bf16.msra.mxu0 0
  %6047 = vmatprep.subr.bf16.mxu0 0
  %6048 = vmatpush1.bf16.msra.mxu0 0
  %6049 = vmatprep.subr.bf16.mxu0 0
  %6050 = vmatpush1.bf16.msra.mxu0 0
  %6051 = vmatprep.subr.bf16.mxu0 0
  %6052 = vmatpush1.bf16.msra.mxu0 0
  %6053 = vmatprep.subr.bf16.mxu0 0
  %6054 = vmatpush1.bf16.msra.mxu0 0
  %6055 = vmatprep.subr.bf16.mxu0 0
  %6056 = vmatpush1.bf16.msra.mxu0 0
  %6057 = vmatprep.mubr.bf16.mxu0 0
  %6058 = vmatmul.mubr.bf16.gmra.mrb[0].mxu0 %v6011
  %v6059 = vpop.f32.mrb[0].mxu0
  %v6060 = vadd.f32 0.0, %v6059
  %v6061 = vpop.f32.mrb[0].mxu0
  %v6062 = vpop.f32.mrb[0].mxu0
  %v6063 = vadd.f32 0.0, %v6062
  %v6064 = vpop.f32.mrb[0].mxu0
  %6065 = vmatprep.mubr.bf16.mxu0 0
  %6066 = vmatmul.mubr.bf16.gmra.mrb[0].mxu0 %v6014
  %v6067 = vpop.f32.mrb[0].mxu0
  %v6068 = vadd.f32 0.0, %v6067
  %v6069 = vpop.f32.mrb[0].mxu0
  %v6070 = vpop.f32.mrb[0].mxu0
  %v6071 = vadd.f32 0.0, %v6070
  %v6072 = vpop.f32.mrb[0].mxu0
  %6073 = vmatprep.mubr.bf16.mxu0 0
  %6074 = vmatmul.mubr.bf16.gmra.mrb[0].mxu0 %v6017
  %v6075 = vpop.f32.mrb[0].mxu0
  %v6076 = vadd.f32 0.0, %v6075
  %v6077 = vpop.f32.mrb[0].mxu0
  %v6078 = vpop.f32.mrb[0].mxu0
  %v6079 = vadd.f32 0.0, %v6078
  %v6080 = vpop.f32.mrb[0].mxu0
  %6081 = vmatprep.mubr.bf16.mxu0 0
  %6082 = vmatmul.mubr.bf16.gmra.mrb[0].mxu0 %v6020
  %v6083 = vpop.f32.mrb[0].mxu0
  %v6084 = vadd.f32 0.0, %v6083
  %v6085 = vpop.f32.mrb[0].mxu0
  %v6086 = vpop.f32.mrb[0].mxu0
  %v6087 = vpop.f32.mrb[0].mxu0
  %6088 = vdwg.mxu0
  %v6089 = vadd.f32 %v5977, %v6060
  %v6090 = vadd.f32 %v5978, %v6063
  %v6091 = vadd.f32 %v5979, %v6068
  %v6092 = vadd.f32 %v5980, %v6071
  %v6093 = vadd.f32 %v5981, %v6076
  %v6094 = vadd.f32 %v5982, %v6079
  %v6095 = vadd.f32 %v5983, %v6084
  %s6096 = scalar_lea.vmem %s11, 924
  %v6097 = vld [vmem:[%s6096] sm:$0xf]
  %v6098 = vld [vmem:[%s6096 + $0x4] sm:$0xf]
  %v6099 = vld [vmem:[%s6096 + $0x8] sm:$0xf]
  %v6100 = vld [vmem:[%s6096 + $0xc] sm:$0xf]
  %v6101 = vld [vmem:[%s6096 + $0x10] sm:$0xf]
  %v6102 = vld [vmem:[%s6096 + $0x14] sm:$0xf]
  %v6103 = vld [vmem:[%s6096 + $0x18] sm:$0x1]
  %v6111 = vunpack.c.l.b16 %v6097
  %v6112 = vunpack.c.l.b16 %v6098
  %v6113 = vunpack.c.l.b16 %v6099
  %v6114 = vunpack.c.l.b16 %v6100
  %v6115 = vunpack.c.l.b16 %v6101
  %v6116 = vunpack.c.l.b16 %v6102
  %v6117 = vunpack.c.l.b16 %v6103
  %v6118 = vpack.c.b16 %v6112, %v6111
  %v6119 = vpack.c.b16 %v6114, %v6113
  %v6120 = vpack.c.b16 %v6116, %v6115
  %v6121 = vpack.c.b16 %v6117, %v6117
  %6124 = vrot.lane.b32.xlu0 %v2257, 120
  %v6125 = vpop.permute.xlu0 %6124
  %6126 = vrot.lane.b32.xlu0 %v2260, 120
  %v6127 = vpop.permute.xlu0 %6126
  %v6130 = vsel %vm1656, %v6118, 0
  %v6133 = vsel %vm1656, %v6119, 0
  %v6136 = vsel %vm1656, %v6120, 0
  %v6139 = vsel %vm1656, %v6121, 0
  %v6142 = vsel %vm1775, %v6127, 0
  %6144 = vmatprep.subr.bf16.mxu0 0
  %6145 = vmatpush1.bf16.msra.mxu0 %v6125
  %6146 = vmatprep.subr.bf16.mxu0 0
  %6147 = vmatpush1.bf16.msra.mxu0 %v6142
  %6148 = vmatprep.subr.bf16.mxu0 0
  %6149 = vmatpush1.bf16.msra.mxu0 0
  %6150 = vmatprep.subr.bf16.mxu0 0
  %6151 = vmatpush1.bf16.msra.mxu0 0
  %6152 = vmatprep.subr.bf16.mxu0 0
  %6153 = vmatpush1.bf16.msra.mxu0 0
  %6154 = vmatprep.subr.bf16.mxu0 0
  %6155 = vmatpush1.bf16.msra.mxu0 0
  %6156 = vmatprep.subr.bf16.mxu0 0
  %6157 = vmatpush1.bf16.msra.mxu0 0
  %6158 = vmatprep.subr.bf16.mxu0 0
  %6159 = vmatpush1.bf16.msra.mxu0 0
  %6160 = vmatprep.subr.bf16.mxu0 0
  %6161 = vmatpush1.bf16.msra.mxu0 0
  %6162 = vmatprep.subr.bf16.mxu0 0
  %6163 = vmatpush1.bf16.msra.mxu0 0
  %6164 = vmatprep.subr.bf16.mxu0 0
  %6165 = vmatpush1.bf16.msra.mxu0 0
  %6166 = vmatprep.subr.bf16.mxu0 0
  %6167 = vmatpush1.bf16.msra.mxu0 0
  %6168 = vmatprep.subr.bf16.mxu0 0
  %6169 = vmatpush1.bf16.msra.mxu0 0
  %6170 = vmatprep.subr.bf16.mxu0 0
  %6171 = vmatpush1.bf16.msra.mxu0 0
  %6172 = vmatprep.subr.bf16.mxu0 0
  %6173 = vmatpush1.bf16.msra.mxu0 0
  %6174 = vmatprep.subr.bf16.mxu0 0
  %6175 = vmatpush1.bf16.msra.mxu0 0
  %6176 = vmatprep.mubr.bf16.mxu0 0
  %6177 = vmatmul.mubr.bf16.gmra.mrb[0].mxu0 %v6130
  %v6178 = vpop.f32.mrb[0].mxu0
  %v6179 = vadd.f32 0.0, %v6178
  %v6180 = vpop.f32.mrb[0].mxu0
  %v6181 = vpop.f32.mrb[0].mxu0
  %v6182 = vadd.f32 0.0, %v6181
  %v6183 = vpop.f32.mrb[0].mxu0
  %6184 = vmatprep.mubr.bf16.mxu0 0
  %6185 = vmatmul.mubr.bf16.gmra.mrb[0].mxu0 %v6133
  %v6186 = vpop.f32.mrb[0].mxu0
  %v6187 = vadd.f32 0.0, %v6186
  %v6188 = vpop.f32.mrb[0].mxu0
  %v6189 = vpop.f32.mrb[0].mxu0
  %v6190 = vadd.f32 0.0, %v6189
  %v6191 = vpop.f32.mrb[0].mxu0
  %6192 = vmatprep.mubr.bf16.mxu0 0
  %6193 = vmatmul.mubr.bf16.gmra.mrb[0].mxu0 %v6136
  %v6194 = vpop.f32.mrb[0].mxu0
  %v6195 = vadd.f32 0.0, %v6194
  %v6196 = vpop.f32.mrb[0].mxu0
  %v6197 = vpop.f32.mrb[0].mxu0
  %v6198 = vadd.f32 0.0, %v6197
  %v6199 = vpop.f32.mrb[0].mxu0
  %6200 = vmatprep.mubr.bf16.mxu0 0
  %6201 = vmatmul.mubr.bf16.gmra.mrb[0].mxu0 %v6139
  %v6202 = vpop.f32.mrb[0].mxu0
  %v6203 = vadd.f32 0.0, %v6202
  %v6204 = vpop.f32.mrb[0].mxu0
  %v6205 = vpop.f32.mrb[0].mxu0
  %v6206 = vpop.f32.mrb[0].mxu0
  %6207 = vdwg.mxu0
  %v6208 = vadd.f32 %v6089, %v6179
  %v6209 = vadd.f32 %v6090, %v6182
  %v6210 = vadd.f32 %v6091, %v6187
  %v6211 = vadd.f32 %v6092, %v6190
  %v6212 = vadd.f32 %v6093, %v6195
  %v6213 = vadd.f32 %v6094, %v6198
  %v6214 = vadd.f32 %v6095, %v6203
  %s6215 = scalar_lea.vmem %s11, 952
  %v6216 = vld [vmem:[%s6215] sm:$0xf]
  %v6217 = vld [vmem:[%s6215 + $0x4] sm:$0xf]
  %v6218 = vld [vmem:[%s6215 + $0x8] sm:$0xf]
  %v6219 = vld [vmem:[%s6215 + $0xc] sm:$0xf]
  %v6220 = vld [vmem:[%s6215 + $0x10] sm:$0xf]
  %v6221 = vld [vmem:[%s6215 + $0x14] sm:$0xf]
  %v6222 = vld [vmem:[%s6215 + $0x18] sm:$0x1]
  %v6230 = vunpack.c.l.b16 %v6216
  %v6231 = vunpack.c.l.b16 %v6217
  %v6232 = vunpack.c.l.b16 %v6218
  %v6233 = vunpack.c.l.b16 %v6219
  %v6234 = vunpack.c.l.b16 %v6220
  %v6235 = vunpack.c.l.b16 %v6221
  %v6236 = vunpack.c.l.b16 %v6222
  %v6237 = vpack.c.b16 %v6231, %v6230
  %v6238 = vpack.c.b16 %v6233, %v6232
  %v6239 = vpack.c.b16 %v6235, %v6234
  %v6240 = vpack.c.b16 %v6236, %v6236
  %6241 = vrot.lane.b32.xlu0 %v2257, 112
  %v6242 = vpop.permute.xlu0 %6241
  %6243 = vrot.lane.b32.xlu0 %v2260, 112
  %v6244 = vpop.permute.xlu0 %6243
  %v6247 = vsel %vm1656, %v6237, 0
  %v6250 = vsel %vm1656, %v6238, 0
  %v6253 = vsel %vm1656, %v6239, 0
  %v6256 = vsel %vm1656, %v6240, 0
  %v6259 = vsel %vm1775, %v6244, 0
  %6261 = vmatprep.subr.bf16.mxu0 0
  %6262 = vmatpush1.bf16.msra.mxu0 %v6242
  %6263 = vmatprep.subr.bf16.mxu0 0
  %6264 = vmatpush1.bf16.msra.mxu0 %v6259
  %6265 = vmatprep.subr.bf16.mxu0 0
  %6266 = vmatpush1.bf16.msra.mxu0 0
  %6267 = vmatprep.subr.bf16.mxu0 0
  %6268 = vmatpush1.bf16.msra.mxu0 0
  %6269 = vmatprep.subr.bf16.mxu0 0
  %6270 = vmatpush1.bf16.msra.mxu0 0
  %6271 = vmatprep.subr.bf16.mxu0 0
  %6272 = vmatpush1.bf16.msra.mxu0 0
  %6273 = vmatprep.subr.bf16.mxu0 0
  %6274 = vmatpush1.bf16.msra.mxu0 0
  %6275 = vmatprep.subr.bf16.mxu0 0
  %6276 = vmatpush1.bf16.msra.mxu0 0
  %6277 = vmatprep.subr.bf16.mxu0 0
  %6278 = vmatpush1.bf16.msra.mxu0 0
  %6279 = vmatprep.subr.bf16.mxu0 0
  %6280 = vmatpush1.bf16.msra.mxu0 0
  %6281 = vmatprep.subr.bf16.mxu0 0
  %6282 = vmatpush1.bf16.msra.mxu0 0
  %6283 = vmatprep.subr.bf16.mxu0 0
  %6284 = vmatpush1.bf16.msra.mxu0 0
  %6285 = vmatprep.subr.bf16.mxu0 0
  %6286 = vmatpush1.bf16.msra.mxu0 0
  %6287 = vmatprep.subr.bf16.mxu0 0
  %6288 = vmatpush1.bf16.msra.mxu0 0
  %6289 = vmatprep.subr.bf16.mxu0 0
  %6290 = vmatpush1.bf16.msra.mxu0 0
  %6291 = vmatprep.subr.bf16.mxu0 0
  %6292 = vmatpush1.bf16.msra.mxu0 0
  %6293 = vmatprep.mubr.bf16.mxu0 0
  %6294 = vmatmul.mubr.bf16.gmra.mrb[0].mxu0 %v6247
  %v6295 = vpop.f32.mrb[0].mxu0
  %v6296 = vadd.f32 0.0, %v6295
  %v6297 = vpop.f32.mrb[0].mxu0
  %v6298 = vpop.f32.mrb[0].mxu0
  %v6299 = vadd.f32 0.0, %v6298
  %v6300 = vpop.f32.mrb[0].mxu0
  %6301 = vmatprep.mubr.bf16.mxu0 0
  %6302 = vmatmul.mubr.bf16.gmra.mrb[0].mxu0 %v6250
  %v6303 = vpop.f32.mrb[0].mxu0
  %v6304 = vadd.f32 0.0, %v6303
  %v6305 = vpop.f32.mrb[0].mxu0
  %v6306 = vpop.f32.mrb[0].mxu0
  %v6307 = vadd.f32 0.0, %v6306
  %v6308 = vpop.f32.mrb[0].mxu0
  %6309 = vmatprep.mubr.bf16.mxu0 0
  %6310 = vmatmul.mubr.bf16.gmra.mrb[0].mxu0 %v6253
  %v6311 = vpop.f32.mrb[0].mxu0
  %v6312 = vadd.f32 0.0, %v6311
  %v6313 = vpop.f32.mrb[0].mxu0
  %v6314 = vpop.f32.mrb[0].mxu0
  %v6315 = vadd.f32 0.0, %v6314
  %v6316 = vpop.f32.mrb[0].mxu0
  %6317 = vmatprep.mubr.bf16.mxu0 0
  %6318 = vmatmul.mubr.bf16.gmra.mrb[0].mxu0 %v6256
  %v6319 = vpop.f32.mrb[0].mxu0
  %v6320 = vadd.f32 0.0, %v6319
  %v6321 = vpop.f32.mrb[0].mxu0
  %v6322 = vpop.f32.mrb[0].mxu0
  %v6323 = vpop.f32.mrb[0].mxu0
  %6324 = vdwg.mxu0
  %v6325 = vadd.f32 %v6208, %v6296
  %v6326 = vadd.f32 %v6209, %v6299
  %v6327 = vadd.f32 %v6210, %v6304
  %v6328 = vadd.f32 %v6211, %v6307
  %v6329 = vadd.f32 %v6212, %v6312
  %v6330 = vadd.f32 %v6213, %v6315
  %v6331 = vadd.f32 %v6214, %v6320
  %s6332 = scalar_lea.vmem %s11, 980
  %v6333 = vld [vmem:[%s6332] sm:$0xf]
  %v6334 = vld [vmem:[%s6332 + $0x4] sm:$0xf]
  %v6335 = vld [vmem:[%s6332 + $0x8] sm:$0xf]
  %v6336 = vld [vmem:[%s6332 + $0xc] sm:$0xf]
  %v6337 = vld [vmem:[%s6332 + $0x10] sm:$0xf]
  %v6338 = vld [vmem:[%s6332 + $0x14] sm:$0xf]
  %v6339 = vld [vmem:[%s6332 + $0x18] sm:$0x1]
  %v6347 = vunpack.c.l.b16 %v6333
  %v6348 = vunpack.c.l.b16 %v6334
  %v6349 = vunpack.c.l.b16 %v6335
  %v6350 = vunpack.c.l.b16 %v6336
  %v6351 = vunpack.c.l.b16 %v6337
  %v6352 = vunpack.c.l.b16 %v6338
  %v6353 = vunpack.c.l.b16 %v6339
  %v6354 = vpack.c.b16 %v6348, %v6347
  %v6355 = vpack.c.b16 %v6350, %v6349
  %v6356 = vpack.c.b16 %v6352, %v6351
  %v6357 = vpack.c.b16 %v6353, %v6353
  %6358 = vrot.lane.b32.xlu0 %v2257, 104
  %v6359 = vpop.permute.xlu0 %6358
  %6360 = vrot.lane.b32.xlu0 %v2260, 104
  %v6361 = vpop.permute.xlu0 %6360
  %v6364 = vsel %vm1656, %v6354, 0
  %v6367 = vsel %vm1656, %v6355, 0
  %v6370 = vsel %vm1656, %v6356, 0
  %v6373 = vsel %vm1656, %v6357, 0
  %v6376 = vsel %vm1775, %v6361, 0
  %6378 = vmatprep.subr.bf16.mxu0 0
  %6379 = vmatpush1.bf16.msra.mxu0 %v6359
  %6380 = vmatprep.subr.bf16.mxu0 0
  %6381 = vmatpush1.bf16.msra.mxu0 %v6376
  %6382 = vmatprep.subr.bf16.mxu0 0
  %6383 = vmatpush1.bf16.msra.mxu0 0
  %6384 = vmatprep.subr.bf16.mxu0 0
  %6385 = vmatpush1.bf16.msra.mxu0 0
  %6386 = vmatprep.subr.bf16.mxu0 0
  %6387 = vmatpush1.bf16.msra.mxu0 0
  %6388 = vmatprep.subr.bf16.mxu0 0
  %6389 = vmatpush1.bf16.msra.mxu0 0
  %6390 = vmatprep.subr.bf16.mxu0 0
  %6391 = vmatpush1.bf16.msra.mxu0 0
  %6392 = vmatprep.subr.bf16.mxu0 0
  %6393 = vmatpush1.bf16.msra.mxu0 0
  %6394 = vmatprep.subr.bf16.mxu0 0
  %6395 = vmatpush1.bf16.msra.mxu0 0
  %6396 = vmatprep.subr.bf16.mxu0 0
  %6397 = vmatpush1.bf16.msra.mxu0 0
  %6398 = vmatprep.subr.bf16.mxu0 0
  %6399 = vmatpush1.bf16.msra.mxu0 0
  %6400 = vmatprep.subr.bf16.mxu0 0
  %6401 = vmatpush1.bf16.msra.mxu0 0
  %6402 = vmatprep.subr.bf16.mxu0 0
  %6403 = vmatpush1.bf16.msra.mxu0 0
  %6404 = vmatprep.subr.bf16.mxu0 0
  %6405 = vmatpush1.bf16.msra.mxu0 0
  %6406 = vmatprep.subr.bf16.mxu0 0
  %6407 = vmatpush1.bf16.msra.mxu0 0
  %6408 = vmatprep.subr.bf16.mxu0 0
  %6409 = vmatpush1.bf16.msra.mxu0 0
  %6410 = vmatprep.mubr.bf16.mxu0 0
  %6411 = vmatmul.mubr.bf16.gmra.mrb[0].mxu0 %v6364
  %v6412 = vpop.f32.mrb[0].mxu0
  %v6413 = vadd.f32 0.0, %v6412
  %v6414 = vpop.f32.mrb[0].mxu0
  %v6415 = vpop.f32.mrb[0].mxu0
  %v6416 = vadd.f32 0.0, %v6415
  %v6417 = vpop.f32.mrb[0].mxu0
  %6418 = vmatprep.mubr.bf16.mxu0 0
  %6419 = vmatmul.mubr.bf16.gmra.mrb[0].mxu0 %v6367
  %v6420 = vpop.f32.mrb[0].mxu0
  %v6421 = vadd.f32 0.0, %v6420
  %v6422 = vpop.f32.mrb[0].mxu0
  %v6423 = vpop.f32.mrb[0].mxu0
  %v6424 = vadd.f32 0.0, %v6423
  %v6425 = vpop.f32.mrb[0].mxu0
  %6426 = vmatprep.mubr.bf16.mxu0 0
  %6427 = vmatmul.mubr.bf16.gmra.mrb[0].mxu0 %v6370
  %v6428 = vpop.f32.mrb[0].mxu0
  %v6429 = vadd.f32 0.0, %v6428
  %v6430 = vpop.f32.mrb[0].mxu0
  %v6431 = vpop.f32.mrb[0].mxu0
  %v6432 = vadd.f32 0.0, %v6431
  %v6433 = vpop.f32.mrb[0].mxu0
  %6434 = vmatprep.mubr.bf16.mxu0 0
  %6435 = vmatmul.mubr.bf16.gmra.mrb[0].mxu0 %v6373
  %v6436 = vpop.f32.mrb[0].mxu0
  %v6437 = vadd.f32 0.0, %v6436
  %v6438 = vpop.f32.mrb[0].mxu0
  %v6439 = vpop.f32.mrb[0].mxu0
  %v6440 = vpop.f32.mrb[0].mxu0
  %6441 = vdwg.mxu0
  %v6442 = vadd.f32 %v6325, %v6413
  %v6443 = vadd.f32 %v6326, %v6416
  %v6444 = vadd.f32 %v6327, %v6421
  %v6445 = vadd.f32 %v6328, %v6424
  %v6446 = vadd.f32 %v6329, %v6429
  %v6447 = vadd.f32 %v6330, %v6432
  %v6448 = vadd.f32 %v6331, %v6437
  %v6449 = vld [vmem:[%s12] sm:$0xff]
  %v6450 = vld [vmem:[%s12 + $0x8] sm:$0xff]
  %v6451 = vld [vmem:[%s12 + $0x10] sm:$0xff]
  %v6452 = vld [vmem:[%s12 + $0x18] sm:$0xff]
  %v6453 = vld [vmem:[%s12 + $0x20] sm:$0xff]
  %v6454 = vld [vmem:[%s12 + $0x28] sm:$0xff]
  %v6455 = vld [vmem:[%s12 + $0x30] sm:$0x3]
  %6457 = vset.pattern.permute.xlu0 0
  %6458 = vperm.xlu0 %6457, %v6449
  %v6459 = vpop.permute.xlu0 %6458
  %6462 = vset.pattern.permute.xlu0 0
  %6463 = vperm.xlu0 %6462, %v6450
  %v6464 = vpop.permute.xlu0 %6463
  %6467 = vset.pattern.permute.xlu0 0
  %6468 = vperm.xlu0 %6467, %v6451
  %v6469 = vpop.permute.xlu0 %6468
  %6472 = vset.pattern.permute.xlu0 0
  %6473 = vperm.xlu0 %6472, %v6452
  %v6474 = vpop.permute.xlu0 %6473
  %6477 = vset.pattern.permute.xlu0 0
  %6478 = vperm.xlu0 %6477, %v6453
  %v6479 = vpop.permute.xlu0 %6478
  %6482 = vset.pattern.permute.xlu0 0
  %6483 = vperm.xlu0 %6482, %v6454
  %v6484 = vpop.permute.xlu0 %6483
  %6487 = vset.pattern.permute.xlu0 0
  %6488 = vperm.xlu0 %6487, %v6455
  %v6489 = vpop.permute.xlu0 %6488
  %v6491 = vadd.f32 %v6442, %v6459
  %v6492 = vadd.f32 %v6443, %v6464
  %v6493 = vadd.f32 %v6444, %v6469
  %v6494 = vadd.f32 %v6445, %v6474
  %v6495 = vadd.f32 %v6446, %v6479
  %v6496 = vadd.f32 %v6447, %v6484
  %v6497 = vadd.f32 %v6448, %v6489
  %v6498 = vmax.f32 %v6491, 0.0
  %v6499 = vmax.f32 %v6492, 0.0
  %v6500 = vmax.f32 %v6493, 0.0
  %v6501 = vmax.f32 %v6494, 0.0
  %v6502 = vmax.f32 %v6495, 0.0
  %v6503 = vmax.f32 %v6496, 0.0
  %v6504 = vmax.f32 %v6497, 0.0
  %v6505 = vpack.c.bf16 %v6499, %v6498
  %v6506 = vpack.c.bf16 %v6501, %v6500
  %v6507 = vpack.c.bf16 %v6503, %v6502
  %v6508 = vpack.c.bf16 %v6504, %v6504
  %v6509 = vld [vmem:[%s13] sm:$0xf]
  %v6510 = vld [vmem:[%s13 + $0x4] sm:$0xf]
  %v6511 = vld [vmem:[%s13 + $0x8] sm:$0x3]
  %v6512 = vld [vmem:[%s14] sm:$0xff]
  %v6513 = vld [vmem:[%s14 + $0x8] sm:$0xff]
  %v6514 = vld [vmem:[%s14 + $0x10] sm:$0xf]
  %6516 = vset.pattern.permute.xlu0 0
  %6517 = vperm.xlu0 %6516, %v6512
  %v6518 = vpop.permute.xlu0 %6517
  %6521 = vset.pattern.permute.xlu0 0
  %6522 = vperm.xlu0 %6521, %v6513
  %v6523 = vpop.permute.xlu0 %6522
  %6526 = vset.pattern.permute.xlu0 0
  %6527 = vperm.xlu0 %6526, %v6514
  %v6528 = vpop.permute.xlu0 %6527
  %v6533 = vunpack.c.l.b16 %v6509
  %v6534 = vunpack.c.l.b16 %v6510
  %v6535 = vunpack.c.l.b16 %v6511
  %v6536 = vpack.c.b16 %v6534, %v6533
  %v6537 = vpack.c.b16 %v6535, %v6535
  %vm6538 = vcmask 408576
  %v6540 = vsel %vm6538, %v6536, 0
  %v6543 = vsel %vm6538, %v6537, 0
  %vm6545 = vcmask 1040384
  %v6547 = vsel %vm6545, %v6508, 0
  %6549 = vmatprep.subr.bf16.mxu0 0
  %6550 = vmatpush1.bf16.msra.mxu0 %v6505
  %6551 = vmatprep.subr.bf16.mxu0 0
  %6552 = vmatpush1.bf16.msra.mxu0 %v6506
  %6553 = vmatprep.subr.bf16.mxu0 0
  %6554 = vmatpush1.bf16.msra.mxu0 %v6507
  %6555 = vmatprep.subr.bf16.mxu0 0
  %6556 = vmatpush1.bf16.msra.mxu0 %v6547
  %6557 = vmatprep.subr.bf16.mxu0 0
  %6558 = vmatpush1.bf16.msra.mxu0 0
  %6559 = vmatprep.subr.bf16.mxu0 0
  %6560 = vmatpush1.bf16.msra.mxu0 0
  %6561 = vmatprep.subr.bf16.mxu0 0
  %6562 = vmatpush1.bf16.msra.mxu0 0
  %6563 = vmatprep.subr.bf16.mxu0 0
  %6564 = vmatpush1.bf16.msra.mxu0 0
  %6565 = vmatprep.subr.bf16.mxu0 0
  %6566 = vmatpush1.bf16.msra.mxu0 0
  %6567 = vmatprep.subr.bf16.mxu0 0
  %6568 = vmatpush1.bf16.msra.mxu0 0
  %6569 = vmatprep.subr.bf16.mxu0 0
  %6570 = vmatpush1.bf16.msra.mxu0 0
  %6571 = vmatprep.subr.bf16.mxu0 0
  %6572 = vmatpush1.bf16.msra.mxu0 0
  %6573 = vmatprep.subr.bf16.mxu0 0
  %6574 = vmatpush1.bf16.msra.mxu0 0
  %6575 = vmatprep.subr.bf16.mxu0 0
  %6576 = vmatpush1.bf16.msra.mxu0 0
  %6577 = vmatprep.subr.bf16.mxu0 0
  %6578 = vmatpush1.bf16.msra.mxu0 0
  %6579 = vmatprep.subr.bf16.mxu0 0
  %6580 = vmatpush1.bf16.msra.mxu0 0
  %6581 = vmatprep.mubr.bf16.mxu0 0
  %6582 = vmatmul.mubr.bf16.gmra.mrb[0].mxu0 %v6540
  %v6583 = vpop.f32.mrb[0].mxu0
  %v6584 = vadd.f32 %v6518, %v6583
  %v6585 = vpop.f32.mrb[0].mxu0
  %v6586 = vpop.f32.mrb[0].mxu0
  %v6587 = vadd.f32 %v6523, %v6586
  %v6588 = vpop.f32.mrb[0].mxu0
  %6589 = vmatprep.mubr.bf16.mxu0 0
  %6590 = vmatmul.mubr.bf16.gmra.mrb[0].mxu0 %v6543
  %v6591 = vpop.f32.mrb[0].mxu0
  %v6592 = vadd.f32 %v6528, %v6591
  %v6593 = vpop.f32.mrb[0].mxu0
  %v6594 = vpop.f32.mrb[0].mxu0
  %v6595 = vpop.f32.mrb[0].mxu0
  %6596 = vdwg.mxu0
  %6597 = vst.msk [vmem:[%s15] sm:$0xff] %vm2073, %v6584
  %6598 = vst.msk [vmem:[%s15 + $0x8] sm:$0xff] %vm2073, %v6587
  %vm6599 = vcmask 60416
  %6600 = vst.msk [vmem:[%s15 + $0x10] sm:$0xf] %vm6599, %v6592
  // Predicated region
  $region62: #{_lambda_.3} parent=0 // pred_check
    _
  $region63: #{_lambda_.3} parent=0 // pred_check_branch
    %6602 = sbr.rel (0) target = $region65
  $region64: #{_lambda_.3} parent=0 // pred_region
    _
  $region65: #{_lambda_.3} parent=0 // pred_fallthru
    _
  // Predicated region
  $region66: #{_lambda_.3} parent=0 // pred_check
    _
  $region67: #{_lambda_.3} parent=0 // pred_check_branch
    %6604 = sbr.rel (0) target = $region69
  $region68: #{_lambda_.3} parent=0 // pred_region
    _
  $region69: #{_lambda_.3} parent=0 // pred_fallthru
    _

</llo_original>
